<compile_context>
chip_gen: v7x
topology: tpu7x:2x2x1
jax: 0.10.0
libtpu: 0.0.40
codegen_flags: <defaults>
</compile_context>

<pallas_src>
import jax
import jax.numpy as jnp
from jax.experimental import pallas as pl
from jax.experimental.pallas import tpu as pltpu

OUT_PAD = 128  # lane-dense output width (multiple of 128)


def _round_up(n, m):
    return ((n + m - 1) // m) * m


def ode_dnn_kernel(x_ref, w_in_ref, w_pack_ref, b_pack_ref, w_out_ref, b_out_ref,
                   out_ref):
    relu = lambda v: jnp.maximum(v, 0.0)

    def linear(h, w, b):
        return jnp.dot(h, w, preferred_element_type=jnp.float32) + b

    def ode_func(h, w1, b1, w2, b2):
        # ODEFunc.net = Linear -> ReLU -> Linear -> ReLU  (t is unused)
        return relu(linear(relu(linear(h, w1, b1)), w2, b2))

    def ode_block(h0, w1, b1, w2, b2):
        f = lambda h: ode_func(h, w1, b1, w2, b2)
        # one 3/8-rule RK4 step with dt = 1 (torchdiffeq fixed-grid 'rk4')
        k1 = f(h0)
        k1_third = k1 * (1.0 / 3.0)            # hoisted: reused by k2 and k3
        k2 = f(h0 + k1_third)
        k3 = f(h0 + (k2 - k1_third))
        k4 = f(h0 + (k1 - k2 + k3))
        return h0 + (k1 + 3.0 * (k2 + k3) + k4) * 0.125

    # Parameters (~32 KB total) are resident in VMEM across all grid steps.
    b = b_pack_ref[...]                        # (7, H) packed biases
    w0 = w_pack_ref[0]                         # ODE block 0, layer 1
    w1 = w_pack_ref[1]                         # ODE block 0, layer 2
    w2 = w_pack_ref[2]                         # hidden_1
    w3 = w_pack_ref[3]                         # ODE block 1, layer 1
    w4 = w_pack_ref[4]                         # ODE block 1, layer 2
    w5 = w_pack_ref[5]                         # hidden_3

    x = x_ref[...].astype(jnp.float32)
    h = relu(linear(x, w_in_ref[...], b[0:1, :]))        # input + ReLU
    h = ode_block(h, w0, b[1:2, :], w1, b[2:3, :])       # ODE block 0
    h = relu(linear(h, w2, b[3:4, :]))                   # hidden_1 + ReLU
    h = ode_block(h, w3, b[4:5, :], w4, b[5:6, :])       # ODE block 1
    h = relu(linear(h, w5, b[6:7, :]))                   # hidden_3 + ReLU
    # lane-dense (128-wide, zero-padded) output -> full-width stores
    out_ref[...] = linear(h, w_out_ref[...], b_out_ref[...]).astype(out_ref.dtype)


def ode_dnn_forward(x, params, *, tile_b=256):
    batch, in_features = x.shape
    hidden = params["w_in"].shape[1]
    out_features = params["w_out"].shape[1]

    # --- pack the 16 tiny parameter arrays into 5 operands (fewer entry DMAs) ---
    w_pack = jnp.stack([params["o0_w1"], params["o0_w2"], params["w_h1"],
                        params["o1_w1"], params["o1_w2"], params["w_h3"]])      # (6,H,H)
    b_pack = jnp.stack([params[k].reshape(-1) for k in
                        ("b_in", "o0_b1", "o0_b2", "b_h1",
                         "o1_b1", "o1_b2", "b_h3")])                            # (7,H)
    # lane-dense output head: zero-pad to 128 lanes, slice back outside the kernel
    w_out_pad = jnp.zeros((hidden, OUT_PAD), jnp.float32
                          ).at[:, :out_features].set(params["w_out"])
    b_out_pad = jnp.zeros((1, OUT_PAD), jnp.float32
                          ).at[:, :out_features].set(params["b_out"].reshape(1, -1))

    # --- batch tiling: tile_b multiple of 8; pad batch to a multiple of tile_b ---
    tile_b = max(8, min(tile_b, _round_up(batch, 8)))
    padded_batch = _round_up(batch, tile_b)
    if padded_batch != batch:
        x = jnp.pad(x, ((0, padded_batch - batch), (0, 0)))

    grid = (padded_batch // tile_b,)

    out = pl.pallas_call(
        ode_dnn_kernel,
        out_shape=jax.ShapeDtypeStruct((padded_batch, OUT_PAD), jnp.float32),
        grid=grid,
        in_specs=[
            pl.BlockSpec((tile_b, in_features), lambda i: (i, 0)),   # x: pipelined
            pl.BlockSpec((in_features, hidden), lambda i: (0, 0)),   # weights: resident
            pl.BlockSpec((6, hidden, hidden), lambda i: (0, 0, 0)),
            pl.BlockSpec((7, hidden), lambda i: (0, 0)),
            pl.BlockSpec((hidden, OUT_PAD), lambda i: (0, 0)),
            pl.BlockSpec((1, OUT_PAD), lambda i: (0, 0)),
        ],
        out_specs=pl.BlockSpec((tile_b, OUT_PAD), lambda i: (i, 0)),
        compiler_params=pltpu.CompilerParams(
            dimension_semantics=("parallel",)),
    )(x, params["w_in"], w_pack, b_pack, w_out_pad, b_out_pad)

    return out[:batch, :out_features]


def init_params(key, input_size, hidden_size, output_size):
    """Deterministic PyTorch-Linear-style init: U(-1/sqrt(fan_in), 1/sqrt(fan_in))."""
    def linear_init(k, fan_in, fan_out):
        kw, kb = jax.random.split(k)
        bound = 1.0 / jnp.sqrt(fan_in)
        w = jax.random.uniform(kw, (fan_in, fan_out), jnp.float32, -bound, bound)
        b = jax.random.uniform(kb, (1, fan_out), jnp.float32, -bound, bound)
        return w, b

    keys = jax.random.split(key, 8)
    p = {}
    p["w_in"], p["b_in"] = linear_init(keys[0], input_size, hidden_size)
    p["o0_w1"], p["o0_b1"] = linear_init(keys[1], hidden_size, hidden_size)
    p["o0_w2"], p["o0_b2"] = linear_init(keys[2], hidden_size, hidden_size)
    p["w_h1"], p["b_h1"] = linear_init(keys[3], hidden_size, hidden_size)
    p["o1_w1"], p["o1_b1"] = linear_init(keys[4], hidden_size, hidden_size)
    p["o1_w2"], p["o1_b2"] = linear_init(keys[5], hidden_size, hidden_size)
    p["w_h3"], p["b_h3"] = linear_init(keys[6], hidden_size, hidden_size)
    p["w_out"], p["b_out"] = linear_init(keys[7], hidden_size, output_size)
    return p


def ode_dnn_reference(x, p):
    """Pure-JAX reference for correctness checking."""
    relu = lambda v: jnp.maximum(v, 0.0)
    lin = lambda h, w, b: h @ w + b

    def ode_func(h, w1, b1, w2, b2):
        return relu(lin(relu(lin(h, w1, b1)), w2, b2))

    def ode_block(h0, w1, b1, w2, b2):
        f = lambda h: ode_func(h, w1, b1, w2, b2)
        k1 = f(h0)
        k2 = f(h0 + k1 / 3.0)
        k3 = f(h0 + (k2 - k1 / 3.0))
        k4 = f(h0 + (k1 - k2 + k3))
        return h0 + (k1 + 3.0 * (k2 + k3) + k4) / 8.0

    h = relu(lin(x, p["w_in"], p["b_in"]))
    h = ode_block(h, p["o0_w1"], p["o0_b1"], p["o0_w2"], p["o0_b2"])
    h = relu(lin(h, p["w_h1"], p["b_h1"]))
    h = ode_block(h, p["o1_w1"], p["o1_b1"], p["o1_w2"], p["o1_b2"])
    h = relu(lin(h, p["w_h3"], p["b_h3"]))
    return lin(h, p["w_out"], p["b_out"])


if __name__ == "__main__":
    # Shapes consistent with the module:
    # ODE_DNN(input_size=16, hidden_size=32, output_size=8, depth=4, num_ode_blocks=2)
    # batch=500 (not a multiple of tile_b) exercises the padding + 2-step grid.
    batch, input_size, hidden_size, output_size = 500, 16, 32, 8

    key = jax.random.PRNGKey(0)
    k_x, k_p = jax.random.split(key)
    x = jax.random.normal(k_x, (batch, input_size), jnp.float32)
    params = init_params(k_p, input_size, hidden_size, output_size)

    out = ode_dnn_forward(x, params, tile_b=256)
    out = jax.block_until_ready(out)

    ref = ode_dnn_reference(x, params)
    assert out.shape == (batch, output_size)
    assert jnp.allclose(out, ref, atol=1e-4, rtol=1e-4), "mismatch vs JAX reference"

    print("KERNEL_OK")
</pallas_src>

<mosaic_0001>
module attributes {stable_mosaic.version = 11 : i64} {
  func.func @ode_dnn_kernel(%arg0: i32, %arg1: memref<256x16xf32, #tpu.memory_space<vmem>>, %arg2: memref<16x32xf32, #tpu.memory_space<vmem>>, %arg3: memref<6x32x32xf32, #tpu.memory_space<vmem>>, %arg4: memref<7x32xf32, #tpu.memory_space<vmem>>, %arg5: memref<32x128xf32, #tpu.memory_space<vmem>>, %arg6: memref<1x128xf32, #tpu.memory_space<vmem>>, %arg7: memref<256x128xf32, #tpu.memory_space<vmem>>) attributes {dimension_semantics = [#tpu.dimension_semantics<parallel>], iteration_bounds = array<i64: 2>, scalar_prefetch = 0 : i64, scratch_operands = 0 : i64, tpu.core_type = #tpu.core_type<tc>, window_params = [{transform_indices = @transform_0, window_bounds = array<i64: 256, 16>}, {pipeline_mode = #tpu.pipeline_mode<synchronous>, transform_indices = @transform_1, window_bounds = array<i64: 16, 32>}, {pipeline_mode = #tpu.pipeline_mode<synchronous>, transform_indices = @transform_2, window_bounds = array<i64: 6, 32, 32>}, {pipeline_mode = #tpu.pipeline_mode<synchronous>, transform_indices = @transform_3, window_bounds = array<i64: 7, 32>}, {pipeline_mode = #tpu.pipeline_mode<synchronous>, transform_indices = @transform_4, window_bounds = array<i64: 32, 128>}, {pipeline_mode = #tpu.pipeline_mode<synchronous>, transform_indices = @transform_5, window_bounds = array<i64: 1, 128>}, {transform_indices = @transform_6, window_bounds = array<i64: 256, 128>}]} {
    %c0 = arith.constant 0 : index
    %c0_0 = arith.constant 0 : index
    %0 = vector.load %arg4[%c0, %c0_0] : memref<7x32xf32, #tpu.memory_space<vmem>>, vector<7x32xf32>
    %c0_1 = arith.constant 0 : index
    %c0_2 = arith.constant 0 : index
    %c0_3 = arith.constant 0 : index
    %1 = vector.load %arg3[%c0_1, %c0_2, %c0_3] : memref<6x32x32xf32, #tpu.memory_space<vmem>>, vector<1x32x32xf32>
    %2 = vector.shape_cast %1 : vector<1x32x32xf32> to vector<32x32xf32>
    %c1 = arith.constant 1 : index
    %c0_4 = arith.constant 0 : index
    %c0_5 = arith.constant 0 : index
    %3 = vector.load %arg3[%c1, %c0_4, %c0_5] : memref<6x32x32xf32, #tpu.memory_space<vmem>>, vector<1x32x32xf32>
    %4 = vector.shape_cast %3 : vector<1x32x32xf32> to vector<32x32xf32>
    %c2 = arith.constant 2 : index
    %c0_6 = arith.constant 0 : index
    %c0_7 = arith.constant 0 : index
    %5 = vector.load %arg3[%c2, %c0_6, %c0_7] : memref<6x32x32xf32, #tpu.memory_space<vmem>>, vector<1x32x32xf32>
    %6 = vector.shape_cast %5 : vector<1x32x32xf32> to vector<32x32xf32>
    %c3 = arith.constant 3 : index
    %c0_8 = arith.constant 0 : index
    %c0_9 = arith.constant 0 : index
    %7 = vector.load %arg3[%c3, %c0_8, %c0_9] : memref<6x32x32xf32, #tpu.memory_space<vmem>>, vector<1x32x32xf32>
    %8 = vector.shape_cast %7 : vector<1x32x32xf32> to vector<32x32xf32>
    %c4 = arith.constant 4 : index
    %c0_10 = arith.constant 0 : index
    %c0_11 = arith.constant 0 : index
    %9 = vector.load %arg3[%c4, %c0_10, %c0_11] : memref<6x32x32xf32, #tpu.memory_space<vmem>>, vector<1x32x32xf32>
    %10 = vector.shape_cast %9 : vector<1x32x32xf32> to vector<32x32xf32>
    %c5 = arith.constant 5 : index
    %c0_12 = arith.constant 0 : index
    %c0_13 = arith.constant 0 : index
    %11 = vector.load %arg3[%c5, %c0_12, %c0_13] : memref<6x32x32xf32, #tpu.memory_space<vmem>>, vector<1x32x32xf32>
    %12 = vector.shape_cast %11 : vector<1x32x32xf32> to vector<32x32xf32>
    %c0_14 = arith.constant 0 : index
    %c0_15 = arith.constant 0 : index
    %13 = vector.load %arg1[%c0_14, %c0_15] : memref<256x16xf32, #tpu.memory_space<vmem>>, vector<256x16xf32>
    %c0_16 = arith.constant 0 : index
    %c0_17 = arith.constant 0 : index
    %14 = vector.load %arg2[%c0_16, %c0_17] : memref<16x32xf32, #tpu.memory_space<vmem>>, vector<16x32xf32>
    %15 = vector.extract_strided_slice %0 {offsets = [0, 0], sizes = [1, 32], strides = [1, 1]} : vector<7x32xf32> to vector<1x32xf32>
    %cst = arith.constant dense<0.000000e+00> : vector<256x32xf32>
    %16 = tpu.matmul %13, %14, %cst {dimension_numbers = #tpu.dot_dimension_numbers<[1], [0], [0], [1], [0, 0, 1, 1], [], []>} : vector<256x16xf32>, vector<16x32xf32>, vector<256x32xf32> -> vector<256x32xf32>
    %17 = vector.broadcast %15 : vector<1x32xf32> to vector<256x32xf32>
    %18 = arith.addf %16, %17 : vector<256x32xf32>
    %cst_18 = arith.constant 0.000000e+00 : f32
    %19 = vector.broadcast %cst_18 : f32 to vector<256x32xf32>
    %20 = arith.maximumf %18, %19 : vector<256x32xf32>
    %21 = vector.extract_strided_slice %0 {offsets = [1, 0], sizes = [1, 32], strides = [1, 1]} : vector<7x32xf32> to vector<1x32xf32>
    %22 = vector.extract_strided_slice %0 {offsets = [2, 0], sizes = [1, 32], strides = [1, 1]} : vector<7x32xf32> to vector<1x32xf32>
    %cst_19 = arith.constant dense<0.000000e+00> : vector<256x32xf32>
    %23 = tpu.matmul %20, %2, %cst_19 {dimension_numbers = #tpu.dot_dimension_numbers<[1], [0], [0], [1], [0, 0, 1, 1], [], []>} : vector<256x32xf32>, vector<32x32xf32>, vector<256x32xf32> -> vector<256x32xf32>
    %24 = vector.broadcast %21 : vector<1x32xf32> to vector<256x32xf32>
    %25 = arith.addf %23, %24 : vector<256x32xf32>
    %cst_20 = arith.constant 0.000000e+00 : f32
    %26 = vector.broadcast %cst_20 : f32 to vector<256x32xf32>
    %27 = arith.maximumf %25, %26 : vector<256x32xf32>
    %cst_21 = arith.constant dense<0.000000e+00> : vector<256x32xf32>
    %28 = tpu.matmul %27, %4, %cst_21 {dimension_numbers = #tpu.dot_dimension_numbers<[1], [0], [0], [1], [0, 0, 1, 1], [], []>} : vector<256x32xf32>, vector<32x32xf32>, vector<256x32xf32> -> vector<256x32xf32>
    %29 = vector.broadcast %22 : vector<1x32xf32> to vector<256x32xf32>
    %30 = arith.addf %28, %29 : vector<256x32xf32>
    %cst_22 = arith.constant 0.000000e+00 : f32
    %31 = vector.broadcast %cst_22 : f32 to vector<256x32xf32>
    %32 = arith.maximumf %30, %31 : vector<256x32xf32>
    %cst_23 = arith.constant 0.333333343 : f32
    %33 = vector.broadcast %cst_23 : f32 to vector<256x32xf32>
    %34 = arith.mulf %32, %33 : vector<256x32xf32>
    %35 = arith.addf %20, %34 : vector<256x32xf32>
    %cst_24 = arith.constant dense<0.000000e+00> : vector<256x32xf32>
    %36 = tpu.matmul %35, %2, %cst_24 {dimension_numbers = #tpu.dot_dimension_numbers<[1], [0], [0], [1], [0, 0, 1, 1], [], []>} : vector<256x32xf32>, vector<32x32xf32>, vector<256x32xf32> -> vector<256x32xf32>
    %37 = vector.broadcast %21 : vector<1x32xf32> to vector<256x32xf32>
    %38 = arith.addf %36, %37 : vector<256x32xf32>
    %cst_25 = arith.constant 0.000000e+00 : f32
    %39 = vector.broadcast %cst_25 : f32 to vector<256x32xf32>
    %40 = arith.maximumf %38, %39 : vector<256x32xf32>
    %cst_26 = arith.constant dense<0.000000e+00> : vector<256x32xf32>
    %41 = tpu.matmul %40, %4, %cst_26 {dimension_numbers = #tpu.dot_dimension_numbers<[1], [0], [0], [1], [0, 0, 1, 1], [], []>} : vector<256x32xf32>, vector<32x32xf32>, vector<256x32xf32> -> vector<256x32xf32>
    %42 = vector.broadcast %22 : vector<1x32xf32> to vector<256x32xf32>
    %43 = arith.addf %41, %42 : vector<256x32xf32>
    %cst_27 = arith.constant 0.000000e+00 : f32
    %44 = vector.broadcast %cst_27 : f32 to vector<256x32xf32>
    %45 = arith.maximumf %43, %44 : vector<256x32xf32>
    %46 = arith.subf %45, %34 : vector<256x32xf32>
    %47 = arith.addf %20, %46 : vector<256x32xf32>
    %cst_28 = arith.constant dense<0.000000e+00> : vector<256x32xf32>
    %48 = tpu.matmul %47, %2, %cst_28 {dimension_numbers = #tpu.dot_dimension_numbers<[1], [0], [0], [1], [0, 0, 1, 1], [], []>} : vector<256x32xf32>, vector<32x32xf32>, vector<256x32xf32> -> vector<256x32xf32>
    %49 = vector.broadcast %21 : vector<1x32xf32> to vector<256x32xf32>
    %50 = arith.addf %48, %49 : vector<256x32xf32>
    %cst_29 = arith.constant 0.000000e+00 : f32
    %51 = vector.broadcast %cst_29 : f32 to vector<256x32xf32>
    %52 = arith.maximumf %50, %51 : vector<256x32xf32>
    %cst_30 = arith.constant dense<0.000000e+00> : vector<256x32xf32>
    %53 = tpu.matmul %52, %4, %cst_30 {dimension_numbers = #tpu.dot_dimension_numbers<[1], [0], [0], [1], [0, 0, 1, 1], [], []>} : vector<256x32xf32>, vector<32x32xf32>, vector<256x32xf32> -> vector<256x32xf32>
    %54 = vector.broadcast %22 : vector<1x32xf32> to vector<256x32xf32>
    %55 = arith.addf %53, %54 : vector<256x32xf32>
    %cst_31 = arith.constant 0.000000e+00 : f32
    %56 = vector.broadcast %cst_31 : f32 to vector<256x32xf32>
    %57 = arith.maximumf %55, %56 : vector<256x32xf32>
    %58 = arith.subf %32, %45 : vector<256x32xf32>
    %59 = arith.addf %58, %57 : vector<256x32xf32>
    %60 = arith.addf %20, %59 : vector<256x32xf32>
    %cst_32 = arith.constant dense<0.000000e+00> : vector<256x32xf32>
    %61 = tpu.matmul %60, %2, %cst_32 {dimension_numbers = #tpu.dot_dimension_numbers<[1], [0], [0], [1], [0, 0, 1, 1], [], []>} : vector<256x32xf32>, vector<32x32xf32>, vector<256x32xf32> -> vector<256x32xf32>
    %62 = vector.broadcast %21 : vector<1x32xf32> to vector<256x32xf32>
    %63 = arith.addf %61, %62 : vector<256x32xf32>
    %cst_33 = arith.constant 0.000000e+00 : f32
    %64 = vector.broadcast %cst_33 : f32 to vector<256x32xf32>
    %65 = arith.maximumf %63, %64 : vector<256x32xf32>
    %cst_34 = arith.constant dense<0.000000e+00> : vector<256x32xf32>
    %66 = tpu.matmul %65, %4, %cst_34 {dimension_numbers = #tpu.dot_dimension_numbers<[1], [0], [0], [1], [0, 0, 1, 1], [], []>} : vector<256x32xf32>, vector<32x32xf32>, vector<256x32xf32> -> vector<256x32xf32>
    %67 = vector.broadcast %22 : vector<1x32xf32> to vector<256x32xf32>
    %68 = arith.addf %66, %67 : vector<256x32xf32>
    %cst_35 = arith.constant 0.000000e+00 : f32
    %69 = vector.broadcast %cst_35 : f32 to vector<256x32xf32>
    %70 = arith.maximumf %68, %69 : vector<256x32xf32>
    %71 = arith.addf %45, %57 : vector<256x32xf32>
    %cst_36 = arith.constant 3.000000e+00 : f32
    %72 = vector.broadcast %cst_36 : f32 to vector<256x32xf32>
    %73 = arith.mulf %72, %71 : vector<256x32xf32>
    %74 = arith.addf %32, %73 : vector<256x32xf32>
    %75 = arith.addf %74, %70 : vector<256x32xf32>
    %cst_37 = arith.constant 1.250000e-01 : f32
    %76 = vector.broadcast %cst_37 : f32 to vector<256x32xf32>
    %77 = arith.mulf %75, %76 : vector<256x32xf32>
    %78 = arith.addf %20, %77 : vector<256x32xf32>
    %79 = vector.extract_strided_slice %0 {offsets = [3, 0], sizes = [1, 32], strides = [1, 1]} : vector<7x32xf32> to vector<1x32xf32>
    %cst_38 = arith.constant dense<0.000000e+00> : vector<256x32xf32>
    %80 = tpu.matmul %78, %6, %cst_38 {dimension_numbers = #tpu.dot_dimension_numbers<[1], [0], [0], [1], [0, 0, 1, 1], [], []>} : vector<256x32xf32>, vector<32x32xf32>, vector<256x32xf32> -> vector<256x32xf32>
    %81 = vector.broadcast %79 : vector<1x32xf32> to vector<256x32xf32>
    %82 = arith.addf %80, %81 : vector<256x32xf32>
    %cst_39 = arith.constant 0.000000e+00 : f32
    %83 = vector.broadcast %cst_39 : f32 to vector<256x32xf32>
    %84 = arith.maximumf %82, %83 : vector<256x32xf32>
    %85 = vector.extract_strided_slice %0 {offsets = [4, 0], sizes = [1, 32], strides = [1, 1]} : vector<7x32xf32> to vector<1x32xf32>
    %86 = vector.extract_strided_slice %0 {offsets = [5, 0], sizes = [1, 32], strides = [1, 1]} : vector<7x32xf32> to vector<1x32xf32>
    %cst_40 = arith.constant dense<0.000000e+00> : vector<256x32xf32>
    %87 = tpu.matmul %84, %8, %cst_40 {dimension_numbers = #tpu.dot_dimension_numbers<[1], [0], [0], [1], [0, 0, 1, 1], [], []>} : vector<256x32xf32>, vector<32x32xf32>, vector<256x32xf32> -> vector<256x32xf32>
    %88 = vector.broadcast %85 : vector<1x32xf32> to vector<256x32xf32>
    %89 = arith.addf %87, %88 : vector<256x32xf32>
    %cst_41 = arith.constant 0.000000e+00 : f32
    %90 = vector.broadcast %cst_41 : f32 to vector<256x32xf32>
    %91 = arith.maximumf %89, %90 : vector<256x32xf32>
    %cst_42 = arith.constant dense<0.000000e+00> : vector<256x32xf32>
    %92 = tpu.matmul %91, %10, %cst_42 {dimension_numbers = #tpu.dot_dimension_numbers<[1], [0], [0], [1], [0, 0, 1, 1], [], []>} : vector<256x32xf32>, vector<32x32xf32>, vector<256x32xf32> -> vector<256x32xf32>
    %93 = vector.broadcast %86 : vector<1x32xf32> to vector<256x32xf32>
    %94 = arith.addf %92, %93 : vector<256x32xf32>
    %cst_43 = arith.constant 0.000000e+00 : f32
    %95 = vector.broadcast %cst_43 : f32 to vector<256x32xf32>
    %96 = arith.maximumf %94, %95 : vector<256x32xf32>
    %cst_44 = arith.constant 0.333333343 : f32
    %97 = vector.broadcast %cst_44 : f32 to vector<256x32xf32>
    %98 = arith.mulf %96, %97 : vector<256x32xf32>
    %99 = arith.addf %84, %98 : vector<256x32xf32>
    %cst_45 = arith.constant dense<0.000000e+00> : vector<256x32xf32>
    %100 = tpu.matmul %99, %8, %cst_45 {dimension_numbers = #tpu.dot_dimension_numbers<[1], [0], [0], [1], [0, 0, 1, 1], [], []>} : vector<256x32xf32>, vector<32x32xf32>, vector<256x32xf32> -> vector<256x32xf32>
    %101 = vector.broadcast %85 : vector<1x32xf32> to vector<256x32xf32>
    %102 = arith.addf %100, %101 : vector<256x32xf32>
    %cst_46 = arith.constant 0.000000e+00 : f32
    %103 = vector.broadcast %cst_46 : f32 to vector<256x32xf32>
    %104 = arith.maximumf %102, %103 : vector<256x32xf32>
    %cst_47 = arith.constant dense<0.000000e+00> : vector<256x32xf32>
    %105 = tpu.matmul %104, %10, %cst_47 {dimension_numbers = #tpu.dot_dimension_numbers<[1], [0], [0], [1], [0, 0, 1, 1], [], []>} : vector<256x32xf32>, vector<32x32xf32>, vector<256x32xf32> -> vector<256x32xf32>
    %106 = vector.broadcast %86 : vector<1x32xf32> to vector<256x32xf32>
    %107 = arith.addf %105, %106 : vector<256x32xf32>
    %cst_48 = arith.constant 0.000000e+00 : f32
    %108 = vector.broadcast %cst_48 : f32 to vector<256x32xf32>
    %109 = arith.maximumf %107, %108 : vector<256x32xf32>
    %110 = arith.subf %109, %98 : vector<256x32xf32>
    %111 = arith.addf %84, %110 : vector<256x32xf32>
    %cst_49 = arith.constant dense<0.000000e+00> : vector<256x32xf32>
    %112 = tpu.matmul %111, %8, %cst_49 {dimension_numbers = #tpu.dot_dimension_numbers<[1], [0], [0], [1], [0, 0, 1, 1], [], []>} : vector<256x32xf32>, vector<32x32xf32>, vector<256x32xf32> -> vector<256x32xf32>
    %113 = vector.broadcast %85 : vector<1x32xf32> to vector<256x32xf32>
    %114 = arith.addf %112, %113 : vector<256x32xf32>
    %cst_50 = arith.constant 0.000000e+00 : f32
    %115 = vector.broadcast %cst_50 : f32 to vector<256x32xf32>
    %116 = arith.maximumf %114, %115 : vector<256x32xf32>
    %cst_51 = arith.constant dense<0.000000e+00> : vector<256x32xf32>
    %117 = tpu.matmul %116, %10, %cst_51 {dimension_numbers = #tpu.dot_dimension_numbers<[1], [0], [0], [1], [0, 0, 1, 1], [], []>} : vector<256x32xf32>, vector<32x32xf32>, vector<256x32xf32> -> vector<256x32xf32>
    %118 = vector.broadcast %86 : vector<1x32xf32> to vector<256x32xf32>
    %119 = arith.addf %117, %118 : vector<256x32xf32>
    %cst_52 = arith.constant 0.000000e+00 : f32
    %120 = vector.broadcast %cst_52 : f32 to vector<256x32xf32>
    %121 = arith.maximumf %119, %120 : vector<256x32xf32>
    %122 = arith.subf %96, %109 : vector<256x32xf32>
    %123 = arith.addf %122, %121 : vector<256x32xf32>
    %124 = arith.addf %84, %123 : vector<256x32xf32>
    %cst_53 = arith.constant dense<0.000000e+00> : vector<256x32xf32>
    %125 = tpu.matmul %124, %8, %cst_53 {dimension_numbers = #tpu.dot_dimension_numbers<[1], [0], [0], [1], [0, 0, 1, 1], [], []>} : vector<256x32xf32>, vector<32x32xf32>, vector<256x32xf32> -> vector<256x32xf32>
    %126 = vector.broadcast %85 : vector<1x32xf32> to vector<256x32xf32>
    %127 = arith.addf %125, %126 : vector<256x32xf32>
    %cst_54 = arith.constant 0.000000e+00 : f32
    %128 = vector.broadcast %cst_54 : f32 to vector<256x32xf32>
    %129 = arith.maximumf %127, %128 : vector<256x32xf32>
    %cst_55 = arith.constant dense<0.000000e+00> : vector<256x32xf32>
    %130 = tpu.matmul %129, %10, %cst_55 {dimension_numbers = #tpu.dot_dimension_numbers<[1], [0], [0], [1], [0, 0, 1, 1], [], []>} : vector<256x32xf32>, vector<32x32xf32>, vector<256x32xf32> -> vector<256x32xf32>
    %131 = vector.broadcast %86 : vector<1x32xf32> to vector<256x32xf32>
    %132 = arith.addf %130, %131 : vector<256x32xf32>
    %cst_56 = arith.constant 0.000000e+00 : f32
    %133 = vector.broadcast %cst_56 : f32 to vector<256x32xf32>
    %134 = arith.maximumf %132, %133 : vector<256x32xf32>
    %135 = arith.addf %109, %121 : vector<256x32xf32>
    %cst_57 = arith.constant 3.000000e+00 : f32
    %136 = vector.broadcast %cst_57 : f32 to vector<256x32xf32>
    %137 = arith.mulf %136, %135 : vector<256x32xf32>
    %138 = arith.addf %96, %137 : vector<256x32xf32>
    %139 = arith.addf %138, %134 : vector<256x32xf32>
    %cst_58 = arith.constant 1.250000e-01 : f32
    %140 = vector.broadcast %cst_58 : f32 to vector<256x32xf32>
    %141 = arith.mulf %139, %140 : vector<256x32xf32>
    %142 = arith.addf %84, %141 : vector<256x32xf32>
    %143 = vector.extract_strided_slice %0 {offsets = [6, 0], sizes = [1, 32], strides = [1, 1]} : vector<7x32xf32> to vector<1x32xf32>
    %cst_59 = arith.constant dense<0.000000e+00> : vector<256x32xf32>
    %144 = tpu.matmul %142, %12, %cst_59 {dimension_numbers = #tpu.dot_dimension_numbers<[1], [0], [0], [1], [0, 0, 1, 1], [], []>} : vector<256x32xf32>, vector<32x32xf32>, vector<256x32xf32> -> vector<256x32xf32>
    %145 = vector.broadcast %143 : vector<1x32xf32> to vector<256x32xf32>
    %146 = arith.addf %144, %145 : vector<256x32xf32>
    %cst_60 = arith.constant 0.000000e+00 : f32
    %147 = vector.broadcast %cst_60 : f32 to vector<256x32xf32>
    %148 = arith.maximumf %146, %147 : vector<256x32xf32>
    %c0_61 = arith.constant 0 : index
    %c0_62 = arith.constant 0 : index
    %149 = vector.load %arg5[%c0_61, %c0_62] : memref<32x128xf32, #tpu.memory_space<vmem>>, vector<32x128xf32>
    %c0_63 = arith.constant 0 : index
    %c0_64 = arith.constant 0 : index
    %150 = vector.load %arg6[%c0_63, %c0_64] : memref<1x128xf32, #tpu.memory_space<vmem>>, vector<1x128xf32>
    %cst_65 = arith.constant dense<0.000000e+00> : vector<256x128xf32>
    %151 = tpu.matmul %148, %149, %cst_65 {dimension_numbers = #tpu.dot_dimension_numbers<[1], [0], [0], [1], [0, 0, 1, 1], [], []>} : vector<256x32xf32>, vector<32x128xf32>, vector<256x128xf32> -> vector<256x128xf32>
    %152 = vector.broadcast %150 : vector<1x128xf32> to vector<256x128xf32>
    %153 = arith.addf %151, %152 : vector<256x128xf32>
    %c0_66 = arith.constant 0 : index
    %c0_67 = arith.constant 0 : index
    %154 = vector.load %arg7[%c0_66, %c0_67] : memref<256x128xf32, #tpu.memory_space<vmem>>, vector<256x128xf32>
    tpu.vector_store %arg7[%c0_66, %c0_67], %153 {strides = array<i32>} : memref<256x128xf32, #tpu.memory_space<vmem>>, vector<256x128xf32>,
    return
  }
  func.func @transform_0(%arg0: i32) -> (i32, i32) {
    %c0_i32 = arith.constant 0 : i32
    %c0_i32_0 = arith.constant 0 : i32
    return %arg0, %c0_i32 : i32, i32
  }
  func.func @transform_1(%arg0: i32) -> (i32, i32) {
    %c0_i32 = arith.constant 0 : i32
    %c0_i32_0 = arith.constant 0 : i32
    %c0_i32_1 = arith.constant 0 : i32
    return %c0_i32, %c0_i32_0 : i32, i32
  }
  func.func @transform_2(%arg0: i32) -> (i32, i32, i32) {
    %c0_i32 = arith.constant 0 : i32
    %c0_i32_0 = arith.constant 0 : i32
    %c0_i32_1 = arith.constant 0 : i32
    %c0_i32_2 = arith.constant 0 : i32
    return %c0_i32, %c0_i32_0, %c0_i32_1 : i32, i32, i32
  }
  func.func @transform_3(%arg0: i32) -> (i32, i32) {
    %c0_i32 = arith.constant 0 : i32
    %c0_i32_0 = arith.constant 0 : i32
    %c0_i32_1 = arith.constant 0 : i32
    return %c0_i32, %c0_i32_0 : i32, i32
  }
  func.func @transform_4(%arg0: i32) -> (i32, i32) {
    %c0_i32 = arith.constant 0 : i32
    %c0_i32_0 = arith.constant 0 : i32
    %c0_i32_1 = arith.constant 0 : i32
    return %c0_i32, %c0_i32_0 : i32, i32
  }
  func.func @transform_5(%arg0: i32) -> (i32, i32) {
    %c0_i32 = arith.constant 0 : i32
    %c0_i32_0 = arith.constant 0 : i32
    %c0_i32_1 = arith.constant 0 : i32
    return %c0_i32, %c0_i32_0 : i32, i32
  }
  func.func @transform_6(%arg0: i32) -> (i32, i32) {
    %c0_i32 = arith.constant 0 : i32
    %c0_i32_0 = arith.constant 0 : i32
    return %arg0, %c0_i32 : i32, i32
  }
}

</mosaic_0001>

<llo_original>
// kernel: tpu_custom_call.1
$region0: #{tpu_custom_call.1}
  #allocation0 [shape = 'u32[]', space=smem, size = 0x4, offset = 0x4, fixed_abs, tag = 'smem constant byte address 0x4 - core index']
  #allocation1 [shape = 'u32[144,128]{1,0:T(1,128)}', space=vmem, size = 0x12000, scoped, tag = 'internal scratch']
  %s0 = inlined_call_operand.vmem [shape: f32[512,16], index: 0, kind: input, shape index: {}]
  %s1 = inlined_call_operand.vmem [shape: f32[16,32], index: 1, kind: input, shape index: {}]
  %s2 = inlined_call_operand.vmem [shape: f32[6,32,32], index: 2, kind: input, shape index: {}]
  %s3 = inlined_call_operand.vmem [shape: f32[7,32], index: 3, kind: input, shape index: {}]
  %s4 = inlined_call_operand.vmem [shape: f32[32,128], index: 4, kind: input, shape index: {}]
  %s5 = inlined_call_operand.vmem [shape: f32[1,128], index: 5, kind: input, shape index: {}]
  %s6 = inlined_call_operand.hbm [shape: f32[512,128], index: 6, kind: output, shape index: {}]
  %s7 = sld [smem:[#allocation0]]
  $region57: #{tpu_custom_call.1} parent=0
    _
  %s9 = ssub.s32 1, %s7
  %s10 = scalar_select 0, %s9, %s7
  $region1: #{tpu_custom_call.1} parent=0
    #allocation2 [shape = 'u8[262144]{0}', space=vmem, size = 0x40000, scoped, tag = 'output window, operand 0']
    #allocation3 [shape = 's32[2]{0}', space=sflag, size = 0x8, scoped, tag = 'scoped memory for tpu_custom_call.1']
    %11 = vsyncpa [#allocation3], 0
    %s12 = scalar_lea.sflag [#allocation3], 1
    %13 = vsyncpa %s12, 0
    loop: start=0, step=1, limit=4
    $region2: #{tpu_custom_call.1} parent=1 // loop_pre_header
      _
    $region3: #{tpu_custom_call.1} parent=1 // loop_header
      %s15 = sphi 0, %s19
      %p16 = scmp.ge.s32.totalorder %s15, 4
      %s25 = sphi 0, %s27
      %s28 = sphi 0, %s25
      %s29 = sphi 0, %s28
      %s45 = sphi 0, %s29
      %s49 = sphi 0, %s49
      %s51 = sphi 0, %s49
      %s52 = sphi 0, %s51
      %s66 = sphi 0, %s52
      %s70 = sphi 0, %s70
      %s72 = sphi 0, %s70
      %s73 = sphi 0, %s72
      %s87 = sphi 0, %s73
      %s91 = sphi 0, %s91
      %s93 = sphi 0, %s91
      %s94 = sphi 0, %s93
      %s108 = sphi 0, %s94
      %s112 = sphi 0, %s112
      %s114 = sphi 0, %s112
      %s115 = sphi 0, %s114
      %s129 = sphi 0, %s115
      %s133 = sphi 0, %s133
      %s135 = sphi 0, %s133
      %s136 = sphi 0, %s135
      %s150 = sphi 0, %s136
      %s156 = sphi 0, %s158
      %s159 = sphi 0, %s156
      %s160 = sphi 0, %s159
      %s176 = sphi 0, %s160
    $region4: #{tpu_custom_call.1} parent=1 // loop_header_branch
      %18 = sbr.rel (%p16) target = $region8
    $region5: #{tpu_custom_call.1} parent=1 // loop_body
      %s20 = ssub.s32 %s15, 1
      %s21 = ssub.s32 %s15, 2
      %s22 = sadd.s32 %s15, 1
      %s23 = ssub.s32 %s15, %s22
      %p24 = scmp.eq.s32.totalorder %s23, 0
      %s26 = sadd.s32 %s25, 1
      %s27 = scalar_select %p24, %s25, %s26
      %p30 = pneg %p24
      %p31 = scmp.eq.s32.totalorder %s15, 1
      %p32 = por %p30, %p31
      %p33 = scmp.ne.s32.totalorder %s25, %s28
      %p34 = scmp.eq.s32.totalorder %s15, 0
      %p35 = por %p33, %p34
      %p36 = scmp.ne.s32.totalorder %s25, %s28
      %p37 = scmp.eq.s32.totalorder %s20, 1
      %p38 = por %p36, %p37
      %p39 = scmp.ne.s32.totalorder %s28, %s29
      %p40 = scmp.eq.s32.totalorder %s20, 0
      %p41 = por %p39, %p40
      %p42 = scmp.ne.s32.totalorder %s28, %s29
      %p43 = scmp.eq.s32.totalorder %s21, 1
      %p44 = por %p42, %p43
      %p46 = scmp.ne.s32.totalorder %s29, %s45
      %p47 = scmp.eq.s32.totalorder %s21, 0
      %p48 = por %p46, %p47
      %s50 = sadd.s32 %s49, 1
      %p53 = scmp.eq.s32.totalorder %s15, 1
      %p54 = scmp.ne.s32.totalorder %s49, %s51
      %p55 = scmp.eq.s32.totalorder %s15, 0
      %p56 = por %p54, %p55
      %p57 = scmp.ne.s32.totalorder %s49, %s51
      %p58 = scmp.eq.s32.totalorder %s20, 1
      %p59 = por %p57, %p58
      %p60 = scmp.ne.s32.totalorder %s51, %s52
      %p61 = scmp.eq.s32.totalorder %s20, 0
      %p62 = por %p60, %p61
      %p63 = scmp.ne.s32.totalorder %s51, %s52
      %p64 = scmp.eq.s32.totalorder %s21, 1
      %p65 = por %p63, %p64
      %p67 = scmp.ne.s32.totalorder %s52, %s66
      %p68 = scmp.eq.s32.totalorder %s21, 0
      %p69 = por %p67, %p68
      %s71 = sadd.s32 %s70, 1
      %p74 = scmp.eq.s32.totalorder %s15, 1
      %p75 = scmp.ne.s32.totalorder %s70, %s72
      %p76 = scmp.eq.s32.totalorder %s15, 0
      %p77 = por %p75, %p76
      %p78 = scmp.ne.s32.totalorder %s70, %s72
      %p79 = scmp.eq.s32.totalorder %s20, 1
      %p80 = por %p78, %p79
      %p81 = scmp.ne.s32.totalorder %s72, %s73
      %p82 = scmp.eq.s32.totalorder %s20, 0
      %p83 = por %p81, %p82
      %p84 = scmp.ne.s32.totalorder %s72, %s73
      %p85 = scmp.eq.s32.totalorder %s21, 1
      %p86 = por %p84, %p85
      %p88 = scmp.ne.s32.totalorder %s73, %s87
      %p89 = scmp.eq.s32.totalorder %s21, 0
      %p90 = por %p88, %p89
      %s92 = sadd.s32 %s91, 1
      %p95 = scmp.eq.s32.totalorder %s15, 1
      %p96 = scmp.ne.s32.totalorder %s91, %s93
      %p97 = scmp.eq.s32.totalorder %s15, 0
      %p98 = por %p96, %p97
      %p99 = scmp.ne.s32.totalorder %s91, %s93
      %p100 = scmp.eq.s32.totalorder %s20, 1
      %p101 = por %p99, %p100
      %p102 = scmp.ne.s32.totalorder %s93, %s94
      %p103 = scmp.eq.s32.totalorder %s20, 0
      %p104 = por %p102, %p103
      %p105 = scmp.ne.s32.totalorder %s93, %s94
      %p106 = scmp.eq.s32.totalorder %s21, 1
      %p107 = por %p105, %p106
      %p109 = scmp.ne.s32.totalorder %s94, %s108
      %p110 = scmp.eq.s32.totalorder %s21, 0
      %p111 = por %p109, %p110
      %s113 = sadd.s32 %s112, 1
      %p116 = scmp.eq.s32.totalorder %s15, 1
      %p117 = scmp.ne.s32.totalorder %s112, %s114
      %p118 = scmp.eq.s32.totalorder %s15, 0
      %p119 = por %p117, %p118
      %p120 = scmp.ne.s32.totalorder %s112, %s114
      %p121 = scmp.eq.s32.totalorder %s20, 1
      %p122 = por %p120, %p121
      %p123 = scmp.ne.s32.totalorder %s114, %s115
      %p124 = scmp.eq.s32.totalorder %s20, 0
      %p125 = por %p123, %p124
      %p126 = scmp.ne.s32.totalorder %s114, %s115
      %p127 = scmp.eq.s32.totalorder %s21, 1
      %p128 = por %p126, %p127
      %p130 = scmp.ne.s32.totalorder %s115, %s129
      %p131 = scmp.eq.s32.totalorder %s21, 0
      %p132 = por %p130, %p131
      %s134 = sadd.s32 %s133, 1
      %p137 = scmp.eq.s32.totalorder %s15, 1
      %p138 = scmp.ne.s32.totalorder %s133, %s135
      %p139 = scmp.eq.s32.totalorder %s15, 0
      %p140 = por %p138, %p139
      %p141 = scmp.ne.s32.totalorder %s133, %s135
      %p142 = scmp.eq.s32.totalorder %s20, 1
      %p143 = por %p141, %p142
      %p144 = scmp.ne.s32.totalorder %s135, %s136
      %p145 = scmp.eq.s32.totalorder %s20, 0
      %p146 = por %p144, %p145
      %p147 = scmp.ne.s32.totalorder %s135, %s136
      %p148 = scmp.eq.s32.totalorder %s21, 1
      %p149 = por %p147, %p148
      %p151 = scmp.ne.s32.totalorder %s136, %s150
      %p152 = scmp.eq.s32.totalorder %s21, 0
      %p153 = por %p151, %p152
      %s154 = ssub.s32 %s15, %s22
      %p155 = scmp.eq.s32.totalorder %s154, 0
      %s157 = sadd.s32 %s156, 1
      %s158 = scalar_select %p155, %s156, %s157
      %p161 = pneg %p155
      %p162 = scmp.eq.s32.totalorder %s15, 1
      %p163 = por %p161, %p162
      %p164 = scmp.ne.s32.totalorder %s156, %s159
      %p165 = scmp.eq.s32.totalorder %s15, 0
      %p166 = por %p164, %p165
      %p167 = scmp.ne.s32.totalorder %s156, %s159
      %p168 = scmp.eq.s32.totalorder %s20, 1
      %p169 = por %p167, %p168
      %p170 = scmp.ne.s32.totalorder %s159, %s160
      %p171 = scmp.eq.s32.totalorder %s20, 0
      %p172 = por %p170, %p171
      %p173 = scmp.ne.s32.totalorder %s159, %s160
      %p174 = scmp.eq.s32.totalorder %s21, 1
      %p175 = por %p173, %p174
      %p177 = scmp.ne.s32.totalorder %s160, %s176
      %p178 = scmp.eq.s32.totalorder %s21, 0
      %p179 = por %p177, %p178
      %p180 = scmp.le.s32.totalorder 1, %s15
      %p181 = scmp.lt.s32.totalorder %s15, 3
      %p182 = pnand %p180, %p181
      %p183 = pneg %p182
      // Predicated region
      $region9: #{tpu_custom_call.1} parent=5 // pred_check
        _
      $region10: #{tpu_custom_call.1} parent=5 // pred_check_branch
        %185 = sbr.rel (%p182) target = $region12
      $region11: #{tpu_custom_call.1} parent=5 // pred_region
        %s186 = ssub.s32 %s15, 1
        // Predicated region
        $region13: #{tpu_custom_call.1} parent=11 // pred_check
          %p187 = pneg %p62
        $region14: #{tpu_custom_call.1} parent=11 // pred_check_branch
          %189 = sbr.rel (%p187) target = $region16
        $region15: #{tpu_custom_call.1} parent=11 // pred_region
          _
        $region16: #{tpu_custom_call.1} parent=11 // pred_fallthru
          _
        // Predicated region
        $region17: #{tpu_custom_call.1} parent=11 // pred_check
          %p190 = pneg %p83
        $region18: #{tpu_custom_call.1} parent=11 // pred_check_branch
          %192 = sbr.rel (%p190) target = $region20
        $region19: #{tpu_custom_call.1} parent=11 // pred_region
          _
        $region20: #{tpu_custom_call.1} parent=11 // pred_fallthru
          _
        // Predicated region
        $region21: #{tpu_custom_call.1} parent=11 // pred_check
          %p193 = pneg %p104
        $region22: #{tpu_custom_call.1} parent=11 // pred_check_branch
          %195 = sbr.rel (%p193) target = $region24
        $region23: #{tpu_custom_call.1} parent=11 // pred_region
          _
        $region24: #{tpu_custom_call.1} parent=11 // pred_fallthru
          _
        // Predicated region
        $region25: #{tpu_custom_call.1} parent=11 // pred_check
          %p196 = pneg %p125
        $region26: #{tpu_custom_call.1} parent=11 // pred_check_branch
          %198 = sbr.rel (%p196) target = $region28
        $region27: #{tpu_custom_call.1} parent=11 // pred_region
          _
        $region28: #{tpu_custom_call.1} parent=11 // pred_fallthru
          _
        // Predicated region
        $region29: #{tpu_custom_call.1} parent=11 // pred_check
          %p199 = pneg %p146
        $region30: #{tpu_custom_call.1} parent=11 // pred_check_branch
          %201 = sbr.rel (%p199) target = $region32
        $region31: #{tpu_custom_call.1} parent=11 // pred_region
          _
        $region32: #{tpu_custom_call.1} parent=11 // pred_fallthru
          _
      $region12: #{tpu_custom_call.1} parent=5 // pred_fallthru
        _
      %p202 = scmp.lt.s32.totalorder %s15, 2
      // Predicated region
      $region33: #{tpu_custom_call.1} parent=5 // pred_check
        %p203 = pneg %p202
      $region34: #{tpu_custom_call.1} parent=5 // pred_check_branch
        %205 = sbr.rel (%p203) target = $region36
      $region35: #{tpu_custom_call.1} parent=5 // pred_region
        // Predicated region
        $region37: #{tpu_custom_call.1} parent=35 // pred_check
          %p206 = pneg %p35
        $region38: #{tpu_custom_call.1} parent=35 // pred_check_branch
          %208 = sbr.rel (%p206) target = $region40
        $region39: #{tpu_custom_call.1} parent=35 // pred_region
          %s209 = smul.u32 32, %s15
          %p210 = scmp.lt.s32.totalorder %s209, 63
          %s211 = scalar_select %p210, %s209, 63
          %s212 = smul.addr %s211, 8
          %s213 = scalar_lea.vmem %s0, %s212
          %s214 = smul.u32 32, %s15
        $region40: #{tpu_custom_call.1} parent=35 // pred_fallthru
          _
      $region36: #{tpu_custom_call.1} parent=5 // pred_fallthru
        _
      %p215 = scmp.le.s32.totalorder 1, %s15
      %p216 = scmp.lt.s32.totalorder %s15, 3
      %p217 = pnand %p215, %p216
      %p218 = pneg %p217
      // Predicated region
      $region41: #{tpu_custom_call.1} parent=5 // pred_check
        _
      $region42: #{tpu_custom_call.1} parent=5 // pred_check_branch
        %220 = sbr.rel (%p217) target = $region44
      $region43: #{tpu_custom_call.1} parent=5 // pred_region
        %s221 = ssub.s32 %s15, 1
        %s222 = smul.u32 32, %s20
        %p223 = scmp.lt.s32.totalorder %s222, 63
        %s224 = scalar_select %p223, %s222, 63
        %s225 = smul.addr %s224, 8
        %s226 = scalar_lea.vmem %s0, %s225
        %p227 = pneg %p41
        %p228 = pneg %p38
        %p229 = pneg %p62
        %p230 = pneg %p59
        %p231 = pneg %p83
        %p232 = pneg %p80
        %p233 = pneg %p104
        %p234 = pneg %p101
        %p235 = pneg %p125
        %p236 = pneg %p122
        %p237 = pneg %p146
        %p238 = pneg %p143
        %p239 = pneg %p172
        %p240 = pneg %p169
        %s241 = sand.u32 %s159, 1
        %s242 = scalar_lea.sflag [#allocation3], %s241
        %s243 = sand.u32 %s159, 1
        %s244 = smul.addr %s243, 256
        %s245 = scalar_lea.vmem [#allocation2], %s244
        %s246 = smul.u32 32, %s20
        %p247 = scmp.lt.s32.totalorder %s246, 63
        %s248 = scalar_select %p247, %s246, 63
        %s249 = smul.addr %s248, 8
        %s250 = scalar_lea.vmem %s0, %s249
        %s251 = smul.u32 32, %s20
        %s252 = smul.u32 32, %s20
        %v253 = vld [vmem:[%s3] sm:$0x7f]
        %v254 = vld [vmem:[%s2] sm:$0xff]
        %v255 = vld [vmem:[%s2 + $0x8] sm:$0xff]
        %v256 = vld [vmem:[%s2 + $0x10] sm:$0xff]
        %v257 = vld [vmem:[%s2 + $0x18] sm:$0xff]
        %s258 = scalar_lea.vmem %s2, 32
        %v259 = vld [vmem:[%s258] sm:$0xff]
        %v260 = vld [vmem:[%s258 + $0x8] sm:$0xff]
        %v261 = vld [vmem:[%s258 + $0x10] sm:$0xff]
        %v262 = vld [vmem:[%s258 + $0x18] sm:$0xff]
        %s263 = scalar_lea.vmem %s2, 64
        %v264 = vld [vmem:[%s263] sm:$0xff]
        %v265 = vld [vmem:[%s263 + $0x8] sm:$0xff]
        %v266 = vld [vmem:[%s263 + $0x10] sm:$0xff]
        %v267 = vld [vmem:[%s263 + $0x18] sm:$0xff]
        %s268 = scalar_lea.vmem %s2, 96
        %v269 = vld [vmem:[%s268] sm:$0xff]
        %v270 = vld [vmem:[%s268 + $0x8] sm:$0xff]
        %v271 = vld [vmem:[%s268 + $0x10] sm:$0xff]
        %v272 = vld [vmem:[%s268 + $0x18] sm:$0xff]
        %s273 = scalar_lea.vmem %s2, 128
        %v274 = vld [vmem:[%s273] sm:$0xff]
        %v275 = vld [vmem:[%s273 + $0x8] sm:$0xff]
        %v276 = vld [vmem:[%s273 + $0x10] sm:$0xff]
        %v277 = vld [vmem:[%s273 + $0x18] sm:$0xff]
        %s278 = scalar_lea.vmem %s2, 160
        %v279 = vld [vmem:[%s278] sm:$0xff]
        %v280 = vld [vmem:[%s278 + $0x8] sm:$0xff]
        %v281 = vld [vmem:[%s278 + $0x10] sm:$0xff]
        %v282 = vld [vmem:[%s278 + $0x18] sm:$0xff]
        %v283 = vld [vmem:[%s250] sm:$0xff]
        %v284 = vld [vmem:[%s250 + $0x8] sm:$0xff]
        %v285 = vld [vmem:[%s250 + $0x10] sm:$0xff]
        %v286 = vld [vmem:[%s250 + $0x18] sm:$0xff]
        %v287 = vld [vmem:[%s250 + $0x20] sm:$0xff]
        %v288 = vld [vmem:[%s250 + $0x28] sm:$0xff]
        %v289 = vld [vmem:[%s250 + $0x30] sm:$0xff]
        %v290 = vld [vmem:[%s250 + $0x38] sm:$0xff]
        %v291 = vld [vmem:[%s250 + $0x40] sm:$0xff]
        %v292 = vld [vmem:[%s250 + $0x48] sm:$0xff]
        %v293 = vld [vmem:[%s250 + $0x50] sm:$0xff]
        %v294 = vld [vmem:[%s250 + $0x58] sm:$0xff]
        %v295 = vld [vmem:[%s250 + $0x60] sm:$0xff]
        %v296 = vld [vmem:[%s250 + $0x68] sm:$0xff]
        %v297 = vld [vmem:[%s250 + $0x70] sm:$0xff]
        %v298 = vld [vmem:[%s250 + $0x78] sm:$0xff]
        %v299 = vld [vmem:[%s250 + $0x80] sm:$0xff]
        %v300 = vld [vmem:[%s250 + $0x88] sm:$0xff]
        %v301 = vld [vmem:[%s250 + $0x90] sm:$0xff]
        %v302 = vld [vmem:[%s250 + $0x98] sm:$0xff]
        %v303 = vld [vmem:[%s250 + $0xa0] sm:$0xff]
        %v304 = vld [vmem:[%s250 + $0xa8] sm:$0xff]
        %v305 = vld [vmem:[%s250 + $0xb0] sm:$0xff]
        %v306 = vld [vmem:[%s250 + $0xb8] sm:$0xff]
        %v307 = vld [vmem:[%s250 + $0xc0] sm:$0xff]
        %v308 = vld [vmem:[%s250 + $0xc8] sm:$0xff]
        %v309 = vld [vmem:[%s250 + $0xd0] sm:$0xff]
        %v310 = vld [vmem:[%s250 + $0xd8] sm:$0xff]
        %v311 = vld [vmem:[%s250 + $0xe0] sm:$0xff]
        %v312 = vld [vmem:[%s250 + $0xe8] sm:$0xff]
        %v313 = vld [vmem:[%s250 + $0xf0] sm:$0xff]
        %v314 = vld [vmem:[%s250 + $0xf8] sm:$0xff]
        %v315 = vld [vmem:[%s1] sm:$0xff]
        %v316 = vld [vmem:[%s1 + $0x8] sm:$0xff]
        %v317 = vlaneseq
        %v318 = vshrl.u32 %v317, 7
        %v319 = vsub.s32 0, %v318
        %v320 = vrot.slane %v253, %v319
        %vm321 = vcmask 130048
        %v323 = vsel %vm321, %v283, 0
        %v326 = vsel %vm321, %v284, 0
        %v329 = vsel %vm321, %v285, 0
        %v332 = vsel %vm321, %v286, 0
        %v335 = vsel %vm321, %v287, 0
        %v338 = vsel %vm321, %v288, 0
        %v341 = vsel %vm321, %v289, 0
        %v344 = vsel %vm321, %v290, 0
        %v347 = vsel %vm321, %v291, 0
        %v350 = vsel %vm321, %v292, 0
        %v353 = vsel %vm321, %v293, 0
        %v356 = vsel %vm321, %v294, 0
        %v359 = vsel %vm321, %v295, 0
        %v362 = vsel %vm321, %v296, 0
        %v365 = vsel %vm321, %v297, 0
        %v368 = vsel %vm321, %v298, 0
        %v371 = vsel %vm321, %v299, 0
        %v374 = vsel %vm321, %v300, 0
        %v377 = vsel %vm321, %v301, 0
        %v380 = vsel %vm321, %v302, 0
        %v383 = vsel %vm321, %v303, 0
        %v386 = vsel %vm321, %v304, 0
        %v389 = vsel %vm321, %v305, 0
        %v392 = vsel %vm321, %v306, 0
        %v395 = vsel %vm321, %v307, 0
        %v398 = vsel %vm321, %v308, 0
        %v401 = vsel %vm321, %v309, 0
        %v404 = vsel %vm321, %v310, 0
        %v407 = vsel %vm321, %v311, 0
        %v410 = vsel %vm321, %v312, 0
        %v413 = vsel %vm321, %v313, 0
        %v416 = vsel %vm321, %v314, 0
        %418 = vmatprep.subr.mxu0 0.0
        %419 = vmatpush1.msra.mxu0 %v315
        %420 = vmatprep.subr.mxu0 0.0
        %421 = vmatpush1.msra.mxu0 %v316
        %422 = vmatprep.subr.mxu0 0.0
        %423 = vmatpush1.msra.mxu0 0.0
        %424 = vmatprep.subr.mxu0 0.0
        %425 = vmatpush1.msra.mxu0 0.0
        %426 = vmatprep.subr.mxu0 0.0
        %427 = vmatpush1.msra.mxu0 0.0
        %428 = vmatprep.subr.mxu0 0.0
        %429 = vmatpush1.msra.mxu0 0.0
        %430 = vmatprep.subr.mxu0 0.0
        %431 = vmatpush1.msra.mxu0 0.0
        %432 = vmatprep.subr.mxu0 0.0
        %433 = vmatpush1.msra.mxu0 0.0
        %434 = vmatprep.subr.mxu0 0.0
        %435 = vmatpush1.msra.mxu0 0.0
        %436 = vmatprep.subr.mxu0 0.0
        %437 = vmatpush1.msra.mxu0 0.0
        %438 = vmatprep.subr.mxu0 0.0
        %439 = vmatpush1.msra.mxu0 0.0
        %440 = vmatprep.subr.mxu0 0.0
        %441 = vmatpush1.msra.mxu0 0.0
        %442 = vmatprep.subr.mxu0 0.0
        %443 = vmatpush1.msra.mxu0 0.0
        %444 = vmatprep.subr.mxu0 0.0
        %445 = vmatpush1.msra.mxu0 0.0
        %446 = vmatprep.subr.mxu0 0.0
        %447 = vmatpush1.msra.mxu0 0.0
        %448 = vmatprep.subr.mxu0 0.0
        %449 = vmatpush1.msra.mxu0 0.0
        %450 = vmatprep.subr.mxu0 0.0
        %451 = vmatpush1.msra.mxu0 0.0
        %452 = vmatprep.subr.mxu0 0.0
        %453 = vmatpush1.msra.mxu0 0.0
        %454 = vmatprep.subr.mxu0 0.0
        %455 = vmatpush1.msra.mxu0 0.0
        %456 = vmatprep.subr.mxu0 0.0
        %457 = vmatpush1.msra.mxu0 0.0
        %458 = vmatprep.subr.mxu0 0.0
        %459 = vmatpush1.msra.mxu0 0.0
        %460 = vmatprep.subr.mxu0 0.0
        %461 = vmatpush1.msra.mxu0 0.0
        %462 = vmatprep.subr.mxu0 0.0
        %463 = vmatpush1.msra.mxu0 0.0
        %464 = vmatprep.subr.mxu0 0.0
        %465 = vmatpush1.msra.mxu0 0.0
        %466 = vmatprep.subr.mxu0 0.0
        %467 = vmatpush1.msra.mxu0 0.0
        %468 = vmatprep.subr.mxu0 0.0
        %469 = vmatpush1.msra.mxu0 0.0
        %470 = vmatprep.subr.mxu0 0.0
        %471 = vmatpush1.msra.mxu0 0.0
        %472 = vmatprep.subr.mxu0 0.0
        %473 = vmatpush1.msra.mxu0 0.0
        %474 = vmatprep.subr.mxu0 0.0
        %475 = vmatpush1.msra.mxu0 0.0
        %476 = vmatprep.subr.mxu0 0.0
        %477 = vmatpush1.msra.mxu0 0.0
        %478 = vmatprep.subr.mxu0 0.0
        %479 = vmatpush1.msra.mxu0 0.0
        %480 = vmatprep.subr.mxu0 0.0
        %481 = vmatpush1.msra.mxu0 0.0
        %482 = vmatprep.mubr.f32.mxu0 0.0
        %483 = vmatmul.mubr.f32.gmra.mrb[0].mxu0 %v323
        %v484 = vpop.f32.mrb[0].mxu0
        %v485 = vadd.f32 %v320, %v484
        %v486 = vpop.f32.mrb[0].mxu0
        %487 = vmatprep.mubr.f32.mxu0 0.0
        %488 = vmatmul.mubr.f32.gmra.mrb[0].mxu0 %v326
        %v489 = vpop.f32.mrb[0].mxu0
        %v490 = vadd.f32 %v320, %v489
        %v491 = vpop.f32.mrb[0].mxu0
        %492 = vmatprep.mubr.f32.mxu0 0.0
        %493 = vmatmul.mubr.f32.gmra.mrb[0].mxu0 %v329
        %v494 = vpop.f32.mrb[0].mxu0
        %v495 = vadd.f32 %v320, %v494
        %v496 = vpop.f32.mrb[0].mxu0
        %497 = vmatprep.mubr.f32.mxu0 0.0
        %498 = vmatmul.mubr.f32.gmra.mrb[0].mxu0 %v332
        %v499 = vpop.f32.mrb[0].mxu0
        %v500 = vadd.f32 %v320, %v499
        %v501 = vpop.f32.mrb[0].mxu0
        %502 = vmatprep.mubr.f32.mxu0 0.0
        %503 = vmatmul.mubr.f32.gmra.mrb[0].mxu0 %v335
        %v504 = vpop.f32.mrb[0].mxu0
        %v505 = vadd.f32 %v320, %v504
        %v506 = vpop.f32.mrb[0].mxu0
        %507 = vmatprep.mubr.f32.mxu0 0.0
        %508 = vmatmul.mubr.f32.gmra.mrb[0].mxu0 %v338
        %v509 = vpop.f32.mrb[0].mxu0
        %v510 = vadd.f32 %v320, %v509
        %v511 = vpop.f32.mrb[0].mxu0
        %512 = vmatprep.mubr.f32.mxu0 0.0
        %513 = vmatmul.mubr.f32.gmra.mrb[0].mxu0 %v341
        %v514 = vpop.f32.mrb[0].mxu0
        %v515 = vadd.f32 %v320, %v514
        %v516 = vpop.f32.mrb[0].mxu0
        %517 = vmatprep.mubr.f32.mxu0 0.0
        %518 = vmatmul.mubr.f32.gmra.mrb[0].mxu0 %v344
        %v519 = vpop.f32.mrb[0].mxu0
        %v520 = vadd.f32 %v320, %v519
        %v521 = vpop.f32.mrb[0].mxu0
        %522 = vmatprep.mubr.f32.mxu0 0.0
        %523 = vmatmul.mubr.f32.gmra.mrb[0].mxu0 %v347
        %v524 = vpop.f32.mrb[0].mxu0
        %v525 = vadd.f32 %v320, %v524
        %v526 = vpop.f32.mrb[0].mxu0
        %527 = vmatprep.mubr.f32.mxu0 0.0
        %528 = vmatmul.mubr.f32.gmra.mrb[0].mxu0 %v350
        %v529 = vpop.f32.mrb[0].mxu0
        %v530 = vadd.f32 %v320, %v529
        %v531 = vpop.f32.mrb[0].mxu0
        %532 = vmatprep.mubr.f32.mxu0 0.0
        %533 = vmatmul.mubr.f32.gmra.mrb[0].mxu0 %v353
        %v534 = vpop.f32.mrb[0].mxu0
        %v535 = vadd.f32 %v320, %v534
        %v536 = vpop.f32.mrb[0].mxu0
        %537 = vmatprep.mubr.f32.mxu0 0.0
        %538 = vmatmul.mubr.f32.gmra.mrb[0].mxu0 %v356
        %v539 = vpop.f32.mrb[0].mxu0
        %v540 = vadd.f32 %v320, %v539
        %v541 = vpop.f32.mrb[0].mxu0
        %542 = vmatprep.mubr.f32.mxu0 0.0
        %543 = vmatmul.mubr.f32.gmra.mrb[0].mxu0 %v359
        %v544 = vpop.f32.mrb[0].mxu0
        %v545 = vadd.f32 %v320, %v544
        %v546 = vpop.f32.mrb[0].mxu0
        %547 = vmatprep.mubr.f32.mxu0 0.0
        %548 = vmatmul.mubr.f32.gmra.mrb[0].mxu0 %v362
        %v549 = vpop.f32.mrb[0].mxu0
        %v550 = vadd.f32 %v320, %v549
        %v551 = vpop.f32.mrb[0].mxu0
        %552 = vmatprep.mubr.f32.mxu0 0.0
        %553 = vmatmul.mubr.f32.gmra.mrb[0].mxu0 %v365
        %v554 = vpop.f32.mrb[0].mxu0
        %v555 = vadd.f32 %v320, %v554
        %v556 = vpop.f32.mrb[0].mxu0
        %557 = vmatprep.mubr.f32.mxu0 0.0
        %558 = vmatmul.mubr.f32.gmra.mrb[0].mxu0 %v368
        %v559 = vpop.f32.mrb[0].mxu0
        %v560 = vadd.f32 %v320, %v559
        %v561 = vpop.f32.mrb[0].mxu0
        %562 = vmatprep.mubr.f32.mxu0 0.0
        %563 = vmatmul.mubr.f32.gmra.mrb[0].mxu0 %v371
        %v564 = vpop.f32.mrb[0].mxu0
        %v565 = vadd.f32 %v320, %v564
        %v566 = vpop.f32.mrb[0].mxu0
        %567 = vmatprep.mubr.f32.mxu0 0.0
        %568 = vmatmul.mubr.f32.gmra.mrb[0].mxu0 %v374
        %v569 = vpop.f32.mrb[0].mxu0
        %v570 = vadd.f32 %v320, %v569
        %v571 = vpop.f32.mrb[0].mxu0
        %572 = vmatprep.mubr.f32.mxu0 0.0
        %573 = vmatmul.mubr.f32.gmra.mrb[0].mxu0 %v377
        %v574 = vpop.f32.mrb[0].mxu0
        %v575 = vadd.f32 %v320, %v574
        %v576 = vpop.f32.mrb[0].mxu0
        %577 = vmatprep.mubr.f32.mxu0 0.0
        %578 = vmatmul.mubr.f32.gmra.mrb[0].mxu0 %v380
        %v579 = vpop.f32.mrb[0].mxu0
        %v580 = vadd.f32 %v320, %v579
        %v581 = vpop.f32.mrb[0].mxu0
        %582 = vmatprep.mubr.f32.mxu0 0.0
        %583 = vmatmul.mubr.f32.gmra.mrb[0].mxu0 %v383
        %v584 = vpop.f32.mrb[0].mxu0
        %v585 = vadd.f32 %v320, %v584
        %v586 = vpop.f32.mrb[0].mxu0
        %587 = vmatprep.mubr.f32.mxu0 0.0
        %588 = vmatmul.mubr.f32.gmra.mrb[0].mxu0 %v386
        %v589 = vpop.f32.mrb[0].mxu0
        %v590 = vadd.f32 %v320, %v589
        %v591 = vpop.f32.mrb[0].mxu0
        %592 = vmatprep.mubr.f32.mxu0 0.0
        %593 = vmatmul.mubr.f32.gmra.mrb[0].mxu0 %v389
        %v594 = vpop.f32.mrb[0].mxu0
        %v595 = vadd.f32 %v320, %v594
        %v596 = vpop.f32.mrb[0].mxu0
        %597 = vmatprep.mubr.f32.mxu0 0.0
        %598 = vmatmul.mubr.f32.gmra.mrb[0].mxu0 %v392
        %v599 = vpop.f32.mrb[0].mxu0
        %v600 = vadd.f32 %v320, %v599
        %v601 = vpop.f32.mrb[0].mxu0
        %602 = vmatprep.mubr.f32.mxu0 0.0
        %603 = vmatmul.mubr.f32.gmra.mrb[0].mxu0 %v395
        %v604 = vpop.f32.mrb[0].mxu0
        %v605 = vadd.f32 %v320, %v604
        %v606 = vpop.f32.mrb[0].mxu0
        %607 = vmatprep.mubr.f32.mxu0 0.0
        %608 = vmatmul.mubr.f32.gmra.mrb[0].mxu0 %v398
        %v609 = vpop.f32.mrb[0].mxu0
        %v610 = vadd.f32 %v320, %v609
        %v611 = vpop.f32.mrb[0].mxu0
        %612 = vmatprep.mubr.f32.mxu0 0.0
        %613 = vmatmul.mubr.f32.gmra.mrb[0].mxu0 %v401
        %v614 = vpop.f32.mrb[0].mxu0
        %v615 = vadd.f32 %v320, %v614
        %v616 = vpop.f32.mrb[0].mxu0
        %617 = vmatprep.mubr.f32.mxu0 0.0
        %618 = vmatmul.mubr.f32.gmra.mrb[0].mxu0 %v404
        %v619 = vpop.f32.mrb[0].mxu0
        %v620 = vadd.f32 %v320, %v619
        %v621 = vpop.f32.mrb[0].mxu0
        %622 = vmatprep.mubr.f32.mxu0 0.0
        %623 = vmatmul.mubr.f32.gmra.mrb[0].mxu0 %v407
        %v624 = vpop.f32.mrb[0].mxu0
        %v625 = vadd.f32 %v320, %v624
        %v626 = vpop.f32.mrb[0].mxu0
        %627 = vmatprep.mubr.f32.mxu0 0.0
        %628 = vmatmul.mubr.f32.gmra.mrb[0].mxu0 %v410
        %v629 = vpop.f32.mrb[0].mxu0
        %v630 = vadd.f32 %v320, %v629
        %v631 = vpop.f32.mrb[0].mxu0
        %632 = vmatprep.mubr.f32.mxu0 0.0
        %633 = vmatmul.mubr.f32.gmra.mrb[0].mxu0 %v413
        %v634 = vpop.f32.mrb[0].mxu0
        %v635 = vadd.f32 %v320, %v634
        %v636 = vpop.f32.mrb[0].mxu0
        %637 = vmatprep.mubr.f32.mxu0 0.0
        %638 = vmatmul.mubr.f32.gmra.mrb[0].mxu0 %v416
        %v639 = vpop.f32.mrb[0].mxu0
        %v640 = vadd.f32 %v320, %v639
        %v641 = vpop.f32.mrb[0].mxu0
        %642 = vdwg.mxu0
        %v643 = vmax.f32 %v485, 0.0
        %v644 = vmax.f32 %v490, 0.0
        %v645 = vmax.f32 %v495, 0.0
        %v646 = vmax.f32 %v500, 0.0
        %v647 = vmax.f32 %v505, 0.0
        %v648 = vmax.f32 %v510, 0.0
        %v649 = vmax.f32 %v515, 0.0
        %v650 = vmax.f32 %v520, 0.0
        %v651 = vmax.f32 %v525, 0.0
        %v652 = vmax.f32 %v530, 0.0
        %v653 = vmax.f32 %v535, 0.0
        %v654 = vmax.f32 %v540, 0.0
        %v655 = vmax.f32 %v545, 0.0
        %v656 = vmax.f32 %v550, 0.0
        %v657 = vmax.f32 %v555, 0.0
        %v658 = vmax.f32 %v560, 0.0
        %v659 = vmax.f32 %v565, 0.0
        %v660 = vmax.f32 %v570, 0.0
        %v661 = vmax.f32 %v575, 0.0
        %v662 = vmax.f32 %v580, 0.0
        %v663 = vmax.f32 %v585, 0.0
        %v664 = vmax.f32 %v590, 0.0
        %v665 = vmax.f32 %v595, 0.0
        %v666 = vmax.f32 %v600, 0.0
        %v667 = vmax.f32 %v605, 0.0
        %v668 = vmax.f32 %v610, 0.0
        %v669 = vmax.f32 %v615, 0.0
        %v670 = vmax.f32 %v620, 0.0
        %v671 = vmax.f32 %v625, 0.0
        %v672 = vmax.f32 %v630, 0.0
        %v673 = vmax.f32 %v635, 0.0
        %v674 = vmax.f32 %v640, 0.0
        %v675 = vlaneseq
        %v676 = vshrl.u32 %v675, 7
        %v677 = vsub.s32 1, %v676
        %v678 = vrot.slane %v253, %v677
        %vm679 = vcmask 261120
        %v681 = vsel %vm679, %v643, 0
        %v684 = vsel %vm679, %v644, 0
        %v687 = vsel %vm679, %v645, 0
        %v690 = vsel %vm679, %v646, 0
        %v693 = vsel %vm679, %v647, 0
        %v696 = vsel %vm679, %v648, 0
        %v699 = vsel %vm679, %v649, 0
        %v702 = vsel %vm679, %v650, 0
        %v705 = vsel %vm679, %v651, 0
        %v708 = vsel %vm679, %v652, 0
        %v711 = vsel %vm679, %v653, 0
        %v714 = vsel %vm679, %v654, 0
        %v717 = vsel %vm679, %v655, 0
        %v720 = vsel %vm679, %v656, 0
        %v723 = vsel %vm679, %v657, 0
        %v726 = vsel %vm679, %v658, 0
        %v729 = vsel %vm679, %v659, 0
        %v732 = vsel %vm679, %v660, 0
        %v735 = vsel %vm679, %v661, 0
        %v738 = vsel %vm679, %v662, 0
        %v741 = vsel %vm679, %v663, 0
        %v744 = vsel %vm679, %v664, 0
        %v747 = vsel %vm679, %v665, 0
        %v750 = vsel %vm679, %v666, 0
        %v753 = vsel %vm679, %v667, 0
        %v756 = vsel %vm679, %v668, 0
        %v759 = vsel %vm679, %v669, 0
        %v762 = vsel %vm679, %v670, 0
        %v765 = vsel %vm679, %v671, 0
        %v768 = vsel %vm679, %v672, 0
        %v771 = vsel %vm679, %v673, 0
        %v774 = vsel %vm679, %v674, 0
        %776 = vmatprep.subr.mxu0 0.0
        %777 = vmatpush1.msra.mxu0 %v254
        %778 = vmatprep.subr.mxu0 0.0
        %779 = vmatpush1.msra.mxu0 %v255
        %780 = vmatprep.subr.mxu0 0.0
        %781 = vmatpush1.msra.mxu0 %v256
        %782 = vmatprep.subr.mxu0 0.0
        %783 = vmatpush1.msra.mxu0 %v257
        %784 = vmatprep.subr.mxu0 0.0
        %785 = vmatpush1.msra.mxu0 0.0
        %786 = vmatprep.subr.mxu0 0.0
        %787 = vmatpush1.msra.mxu0 0.0
        %788 = vmatprep.subr.mxu0 0.0
        %789 = vmatpush1.msra.mxu0 0.0
        %790 = vmatprep.subr.mxu0 0.0
        %791 = vmatpush1.msra.mxu0 0.0
        %792 = vmatprep.subr.mxu0 0.0
        %793 = vmatpush1.msra.mxu0 0.0
        %794 = vmatprep.subr.mxu0 0.0
        %795 = vmatpush1.msra.mxu0 0.0
        %796 = vmatprep.subr.mxu0 0.0
        %797 = vmatpush1.msra.mxu0 0.0
        %798 = vmatprep.subr.mxu0 0.0
        %799 = vmatpush1.msra.mxu0 0.0
        %800 = vmatprep.subr.mxu0 0.0
        %801 = vmatpush1.msra.mxu0 0.0
        %802 = vmatprep.subr.mxu0 0.0
        %803 = vmatpush1.msra.mxu0 0.0
        %804 = vmatprep.subr.mxu0 0.0
        %805 = vmatpush1.msra.mxu0 0.0
        %806 = vmatprep.subr.mxu0 0.0
        %807 = vmatpush1.msra.mxu0 0.0
        %808 = vmatprep.subr.mxu0 0.0
        %809 = vmatpush1.msra.mxu0 0.0
        %810 = vmatprep.subr.mxu0 0.0
        %811 = vmatpush1.msra.mxu0 0.0
        %812 = vmatprep.subr.mxu0 0.0
        %813 = vmatpush1.msra.mxu0 0.0
        %814 = vmatprep.subr.mxu0 0.0
        %815 = vmatpush1.msra.mxu0 0.0
        %816 = vmatprep.subr.mxu0 0.0
        %817 = vmatpush1.msra.mxu0 0.0
        %818 = vmatprep.subr.mxu0 0.0
        %819 = vmatpush1.msra.mxu0 0.0
        %820 = vmatprep.subr.mxu0 0.0
        %821 = vmatpush1.msra.mxu0 0.0
        %822 = vmatprep.subr.mxu0 0.0
        %823 = vmatpush1.msra.mxu0 0.0
        %824 = vmatprep.subr.mxu0 0.0
        %825 = vmatpush1.msra.mxu0 0.0
        %826 = vmatprep.subr.mxu0 0.0
        %827 = vmatpush1.msra.mxu0 0.0
        %828 = vmatprep.subr.mxu0 0.0
        %829 = vmatpush1.msra.mxu0 0.0
        %830 = vmatprep.subr.mxu0 0.0
        %831 = vmatpush1.msra.mxu0 0.0
        %832 = vmatprep.subr.mxu0 0.0
        %833 = vmatpush1.msra.mxu0 0.0
        %834 = vmatprep.subr.mxu0 0.0
        %835 = vmatpush1.msra.mxu0 0.0
        %836 = vmatprep.subr.mxu0 0.0
        %837 = vmatpush1.msra.mxu0 0.0
        %838 = vmatprep.subr.mxu0 0.0
        %839 = vmatpush1.msra.mxu0 0.0
        %840 = vmatprep.mubr.f32.mxu0 0.0
        %841 = vmatmul.mubr.f32.gmra.mrb[0].mxu0 %v681
        %v842 = vpop.f32.mrb[0].mxu0
        %v843 = vadd.f32 %v678, %v842
        %v844 = vpop.f32.mrb[0].mxu0
        %845 = vmatprep.mubr.f32.mxu0 0.0
        %846 = vmatmul.mubr.f32.gmra.mrb[0].mxu0 %v684
        %v847 = vpop.f32.mrb[0].mxu0
        %v848 = vadd.f32 %v678, %v847
        %v849 = vpop.f32.mrb[0].mxu0
        %850 = vmatprep.mubr.f32.mxu0 0.0
        %851 = vmatmul.mubr.f32.gmra.mrb[0].mxu0 %v687
        %v852 = vpop.f32.mrb[0].mxu0
        %v853 = vadd.f32 %v678, %v852
        %v854 = vpop.f32.mrb[0].mxu0
        %855 = vmatprep.mubr.f32.mxu0 0.0
        %856 = vmatmul.mubr.f32.gmra.mrb[0].mxu0 %v690
        %v857 = vpop.f32.mrb[0].mxu0
        %v858 = vadd.f32 %v678, %v857
        %v859 = vpop.f32.mrb[0].mxu0
        %860 = vmatprep.mubr.f32.mxu0 0.0
        %861 = vmatmul.mubr.f32.gmra.mrb[0].mxu0 %v693
        %v862 = vpop.f32.mrb[0].mxu0
        %v863 = vadd.f32 %v678, %v862
        %v864 = vpop.f32.mrb[0].mxu0
        %865 = vmatprep.mubr.f32.mxu0 0.0
        %866 = vmatmul.mubr.f32.gmra.mrb[0].mxu0 %v696
        %v867 = vpop.f32.mrb[0].mxu0
        %v868 = vadd.f32 %v678, %v867
        %v869 = vpop.f32.mrb[0].mxu0
        %870 = vmatprep.mubr.f32.mxu0 0.0
        %871 = vmatmul.mubr.f32.gmra.mrb[0].mxu0 %v699
        %v872 = vpop.f32.mrb[0].mxu0
        %v873 = vadd.f32 %v678, %v872
        %v874 = vpop.f32.mrb[0].mxu0
        %875 = vmatprep.mubr.f32.mxu0 0.0
        %876 = vmatmul.mubr.f32.gmra.mrb[0].mxu0 %v702
        %v877 = vpop.f32.mrb[0].mxu0
        %v878 = vadd.f32 %v678, %v877
        %v879 = vpop.f32.mrb[0].mxu0
        %880 = vmatprep.mubr.f32.mxu0 0.0
        %881 = vmatmul.mubr.f32.gmra.mrb[0].mxu0 %v705
        %v882 = vpop.f32.mrb[0].mxu0
        %v883 = vadd.f32 %v678, %v882
        %v884 = vpop.f32.mrb[0].mxu0
        %885 = vmatprep.mubr.f32.mxu0 0.0
        %886 = vmatmul.mubr.f32.gmra.mrb[0].mxu0 %v708
        %v887 = vpop.f32.mrb[0].mxu0
        %v888 = vadd.f32 %v678, %v887
        %v889 = vpop.f32.mrb[0].mxu0
        %890 = vmatprep.mubr.f32.mxu0 0.0
        %891 = vmatmul.mubr.f32.gmra.mrb[0].mxu0 %v711
        %v892 = vpop.f32.mrb[0].mxu0
        %v893 = vadd.f32 %v678, %v892
        %v894 = vpop.f32.mrb[0].mxu0
        %895 = vmatprep.mubr.f32.mxu0 0.0
        %896 = vmatmul.mubr.f32.gmra.mrb[0].mxu0 %v714
        %v897 = vpop.f32.mrb[0].mxu0
        %v898 = vadd.f32 %v678, %v897
        %v899 = vpop.f32.mrb[0].mxu0
        %900 = vmatprep.mubr.f32.mxu0 0.0
        %901 = vmatmul.mubr.f32.gmra.mrb[0].mxu0 %v717
        %v902 = vpop.f32.mrb[0].mxu0
        %v903 = vadd.f32 %v678, %v902
        %v904 = vpop.f32.mrb[0].mxu0
        %905 = vmatprep.mubr.f32.mxu0 0.0
        %906 = vmatmul.mubr.f32.gmra.mrb[0].mxu0 %v720
        %v907 = vpop.f32.mrb[0].mxu0
        %v908 = vadd.f32 %v678, %v907
        %v909 = vpop.f32.mrb[0].mxu0
        %910 = vmatprep.mubr.f32.mxu0 0.0
        %911 = vmatmul.mubr.f32.gmra.mrb[0].mxu0 %v723
        %v912 = vpop.f32.mrb[0].mxu0
        %v913 = vadd.f32 %v678, %v912
        %v914 = vpop.f32.mrb[0].mxu0
        %915 = vmatprep.mubr.f32.mxu0 0.0
        %916 = vmatmul.mubr.f32.gmra.mrb[0].mxu0 %v726
        %v917 = vpop.f32.mrb[0].mxu0
        %v918 = vadd.f32 %v678, %v917
        %v919 = vpop.f32.mrb[0].mxu0
        %920 = vmatprep.mubr.f32.mxu0 0.0
        %921 = vmatmul.mubr.f32.gmra.mrb[0].mxu0 %v729
        %v922 = vpop.f32.mrb[0].mxu0
        %v923 = vadd.f32 %v678, %v922
        %v924 = vpop.f32.mrb[0].mxu0
        %925 = vmatprep.mubr.f32.mxu0 0.0
        %926 = vmatmul.mubr.f32.gmra.mrb[0].mxu0 %v732
        %v927 = vpop.f32.mrb[0].mxu0
        %v928 = vadd.f32 %v678, %v927
        %v929 = vpop.f32.mrb[0].mxu0
        %930 = vmatprep.mubr.f32.mxu0 0.0
        %931 = vmatmul.mubr.f32.gmra.mrb[0].mxu0 %v735
        %v932 = vpop.f32.mrb[0].mxu0
        %v933 = vadd.f32 %v678, %v932
        %v934 = vpop.f32.mrb[0].mxu0
        %935 = vmatprep.mubr.f32.mxu0 0.0
        %936 = vmatmul.mubr.f32.gmra.mrb[0].mxu0 %v738
        %v937 = vpop.f32.mrb[0].mxu0
        %v938 = vadd.f32 %v678, %v937
        %v939 = vpop.f32.mrb[0].mxu0
        %940 = vmatprep.mubr.f32.mxu0 0.0
        %941 = vmatmul.mubr.f32.gmra.mrb[0].mxu0 %v741
        %v942 = vpop.f32.mrb[0].mxu0
        %v943 = vadd.f32 %v678, %v942
        %v944 = vpop.f32.mrb[0].mxu0
        %945 = vmatprep.mubr.f32.mxu0 0.0
        %946 = vmatmul.mubr.f32.gmra.mrb[0].mxu0 %v744
        %v947 = vpop.f32.mrb[0].mxu0
        %v948 = vadd.f32 %v678, %v947
        %v949 = vpop.f32.mrb[0].mxu0
        %950 = vmatprep.mubr.f32.mxu0 0.0
        %951 = vmatmul.mubr.f32.gmra.mrb[0].mxu0 %v747
        %v952 = vpop.f32.mrb[0].mxu0
        %v953 = vadd.f32 %v678, %v952
        %v954 = vpop.f32.mrb[0].mxu0
        %955 = vmatprep.mubr.f32.mxu0 0.0
        %956 = vmatmul.mubr.f32.gmra.mrb[0].mxu0 %v750
        %v957 = vpop.f32.mrb[0].mxu0
        %v958 = vadd.f32 %v678, %v957
        %v959 = vpop.f32.mrb[0].mxu0
        %960 = vmatprep.mubr.f32.mxu0 0.0
        %961 = vmatmul.mubr.f32.gmra.mrb[0].mxu0 %v753
        %v962 = vpop.f32.mrb[0].mxu0
        %v963 = vadd.f32 %v678, %v962
        %v964 = vpop.f32.mrb[0].mxu0
        %965 = vmatprep.mubr.f32.mxu0 0.0
        %966 = vmatmul.mubr.f32.gmra.mrb[0].mxu0 %v756
        %v967 = vpop.f32.mrb[0].mxu0
        %v968 = vadd.f32 %v678, %v967
        %v969 = vpop.f32.mrb[0].mxu0
        %970 = vmatprep.mubr.f32.mxu0 0.0
        %971 = vmatmul.mubr.f32.gmra.mrb[0].mxu0 %v759
        %v972 = vpop.f32.mrb[0].mxu0
        %v973 = vadd.f32 %v678, %v972
        %v974 = vpop.f32.mrb[0].mxu0
        %975 = vmatprep.mubr.f32.mxu0 0.0
        %976 = vmatmul.mubr.f32.gmra.mrb[0].mxu0 %v762
        %v977 = vpop.f32.mrb[0].mxu0
        %v978 = vadd.f32 %v678, %v977
        %v979 = vpop.f32.mrb[0].mxu0
        %980 = vmatprep.mubr.f32.mxu0 0.0
        %981 = vmatmul.mubr.f32.gmra.mrb[0].mxu0 %v765
        %v982 = vpop.f32.mrb[0].mxu0
        %v983 = vadd.f32 %v678, %v982
        %v984 = vpop.f32.mrb[0].mxu0
        %985 = vmatprep.mubr.f32.mxu0 0.0
        %986 = vmatmul.mubr.f32.gmra.mrb[0].mxu0 %v768
        %v987 = vpop.f32.mrb[0].mxu0
        %v988 = vadd.f32 %v678, %v987
        %v989 = vpop.f32.mrb[0].mxu0
        %990 = vmatprep.mubr.f32.mxu0 0.0
        %991 = vmatmul.mubr.f32.gmra.mrb[0].mxu0 %v771
        %v992 = vpop.f32.mrb[0].mxu0
        %v993 = vadd.f32 %v678, %v992
        %v994 = vpop.f32.mrb[0].mxu0
        %995 = vmatprep.mubr.f32.mxu0 0.0
        %996 = vmatmul.mubr.f32.gmra.mrb[0].mxu0 %v774
        %v997 = vpop.f32.mrb[0].mxu0
        %v998 = vadd.f32 %v678, %v997
        %v999 = vpop.f32.mrb[0].mxu0
        %1000 = vdwg.mxu0
        %v1001 = vmax.f32 %v843, 0.0
        %v1002 = vmax.f32 %v848, 0.0
        %v1003 = vmax.f32 %v853, 0.0
        %v1004 = vmax.f32 %v858, 0.0
        %v1005 = vmax.f32 %v863, 0.0
        %v1006 = vmax.f32 %v868, 0.0
        %v1007 = vmax.f32 %v873, 0.0
        %v1008 = vmax.f32 %v878, 0.0
        %v1009 = vmax.f32 %v883, 0.0
        %v1010 = vmax.f32 %v888, 0.0
        %v1011 = vmax.f32 %v893, 0.0
        %v1012 = vmax.f32 %v898, 0.0
        %v1013 = vmax.f32 %v903, 0.0
        %v1014 = vmax.f32 %v908, 0.0
        %v1015 = vmax.f32 %v913, 0.0
        %v1016 = vmax.f32 %v918, 0.0
        %v1017 = vmax.f32 %v923, 0.0
        %v1018 = vmax.f32 %v928, 0.0
        %v1019 = vmax.f32 %v933, 0.0
        %v1020 = vmax.f32 %v938, 0.0
        %v1021 = vmax.f32 %v943, 0.0
        %v1022 = vmax.f32 %v948, 0.0
        %v1023 = vmax.f32 %v953, 0.0
        %v1024 = vmax.f32 %v958, 0.0
        %v1025 = vmax.f32 %v963, 0.0
        %v1026 = vmax.f32 %v968, 0.0
        %v1027 = vmax.f32 %v973, 0.0
        %v1028 = vmax.f32 %v978, 0.0
        %v1029 = vmax.f32 %v983, 0.0
        %v1030 = vmax.f32 %v988, 0.0
        %v1031 = vmax.f32 %v993, 0.0
        %v1032 = vmax.f32 %v998, 0.0
        %v1033 = vlaneseq
        %v1034 = vshrl.u32 %v1033, 7
        %v1035 = vsub.s32 2, %v1034
        %v1036 = vrot.slane %v253, %v1035
        %v1038 = vsel %vm679, %v1001, 0
        %v1041 = vsel %vm679, %v1002, 0
        %v1044 = vsel %vm679, %v1003, 0
        %v1047 = vsel %vm679, %v1004, 0
        %v1050 = vsel %vm679, %v1005, 0
        %v1053 = vsel %vm679, %v1006, 0
        %v1056 = vsel %vm679, %v1007, 0
        %v1059 = vsel %vm679, %v1008, 0
        %v1062 = vsel %vm679, %v1009, 0
        %v1065 = vsel %vm679, %v1010, 0
        %v1068 = vsel %vm679, %v1011, 0
        %v1071 = vsel %vm679, %v1012, 0
        %v1074 = vsel %vm679, %v1013, 0
        %v1077 = vsel %vm679, %v1014, 0
        %v1080 = vsel %vm679, %v1015, 0
        %v1083 = vsel %vm679, %v1016, 0
        %v1086 = vsel %vm679, %v1017, 0
        %v1089 = vsel %vm679, %v1018, 0
        %v1092 = vsel %vm679, %v1019, 0
        %v1095 = vsel %vm679, %v1020, 0
        %v1098 = vsel %vm679, %v1021, 0
        %v1101 = vsel %vm679, %v1022, 0
        %v1104 = vsel %vm679, %v1023, 0
        %v1107 = vsel %vm679, %v1024, 0
        %v1110 = vsel %vm679, %v1025, 0
        %v1113 = vsel %vm679, %v1026, 0
        %v1116 = vsel %vm679, %v1027, 0
        %v1119 = vsel %vm679, %v1028, 0
        %v1122 = vsel %vm679, %v1029, 0
        %v1125 = vsel %vm679, %v1030, 0
        %v1128 = vsel %vm679, %v1031, 0
        %v1131 = vsel %vm679, %v1032, 0
        %1133 = vmatprep.subr.mxu0 0.0
        %1134 = vmatpush1.msra.mxu0 %v259
        %1135 = vmatprep.subr.mxu0 0.0
        %1136 = vmatpush1.msra.mxu0 %v260
        %1137 = vmatprep.subr.mxu0 0.0
        %1138 = vmatpush1.msra.mxu0 %v261
        %1139 = vmatprep.subr.mxu0 0.0
        %1140 = vmatpush1.msra.mxu0 %v262
        %1141 = vmatprep.subr.mxu0 0.0
        %1142 = vmatpush1.msra.mxu0 0.0
        %1143 = vmatprep.subr.mxu0 0.0
        %1144 = vmatpush1.msra.mxu0 0.0
        %1145 = vmatprep.subr.mxu0 0.0
        %1146 = vmatpush1.msra.mxu0 0.0
        %1147 = vmatprep.subr.mxu0 0.0
        %1148 = vmatpush1.msra.mxu0 0.0
        %1149 = vmatprep.subr.mxu0 0.0
        %1150 = vmatpush1.msra.mxu0 0.0
        %1151 = vmatprep.subr.mxu0 0.0
        %1152 = vmatpush1.msra.mxu0 0.0
        %1153 = vmatprep.subr.mxu0 0.0
        %1154 = vmatpush1.msra.mxu0 0.0
        %1155 = vmatprep.subr.mxu0 0.0
        %1156 = vmatpush1.msra.mxu0 0.0
        %1157 = vmatprep.subr.mxu0 0.0
        %1158 = vmatpush1.msra.mxu0 0.0
        %1159 = vmatprep.subr.mxu0 0.0
        %1160 = vmatpush1.msra.mxu0 0.0
        %1161 = vmatprep.subr.mxu0 0.0
        %1162 = vmatpush1.msra.mxu0 0.0
        %1163 = vmatprep.subr.mxu0 0.0
        %1164 = vmatpush1.msra.mxu0 0.0
        %1165 = vmatprep.subr.mxu0 0.0
        %1166 = vmatpush1.msra.mxu0 0.0
        %1167 = vmatprep.subr.mxu0 0.0
        %1168 = vmatpush1.msra.mxu0 0.0
        %1169 = vmatprep.subr.mxu0 0.0
        %1170 = vmatpush1.msra.mxu0 0.0
        %1171 = vmatprep.subr.mxu0 0.0
        %1172 = vmatpush1.msra.mxu0 0.0
        %1173 = vmatprep.subr.mxu0 0.0
        %1174 = vmatpush1.msra.mxu0 0.0
        %1175 = vmatprep.subr.mxu0 0.0
        %1176 = vmatpush1.msra.mxu0 0.0
        %1177 = vmatprep.subr.mxu0 0.0
        %1178 = vmatpush1.msra.mxu0 0.0
        %1179 = vmatprep.subr.mxu0 0.0
        %1180 = vmatpush1.msra.mxu0 0.0
        %1181 = vmatprep.subr.mxu0 0.0
        %1182 = vmatpush1.msra.mxu0 0.0
        %1183 = vmatprep.subr.mxu0 0.0
        %1184 = vmatpush1.msra.mxu0 0.0
        %1185 = vmatprep.subr.mxu0 0.0
        %1186 = vmatpush1.msra.mxu0 0.0
        %1187 = vmatprep.subr.mxu0 0.0
        %1188 = vmatpush1.msra.mxu0 0.0
        %1189 = vmatprep.subr.mxu0 0.0
        %1190 = vmatpush1.msra.mxu0 0.0
        %1191 = vmatprep.subr.mxu0 0.0
        %1192 = vmatpush1.msra.mxu0 0.0
        %1193 = vmatprep.subr.mxu0 0.0
        %1194 = vmatpush1.msra.mxu0 0.0
        %1195 = vmatprep.subr.mxu0 0.0
        %1196 = vmatpush1.msra.mxu0 0.0
        %1197 = vmatprep.mubr.f32.mxu0 0.0
        %1198 = vmatmul.mubr.f32.gmra.mrb[0].mxu0 %v1038
        %v1199 = vpop.f32.mrb[0].mxu0
        %v1200 = vadd.f32 %v1036, %v1199
        %v1201 = vpop.f32.mrb[0].mxu0
        %1202 = vmatprep.mubr.f32.mxu0 0.0
        %1203 = vmatmul.mubr.f32.gmra.mrb[0].mxu0 %v1041
        %v1204 = vpop.f32.mrb[0].mxu0
        %v1205 = vadd.f32 %v1036, %v1204
        %v1206 = vpop.f32.mrb[0].mxu0
        %1207 = vmatprep.mubr.f32.mxu0 0.0
        %1208 = vmatmul.mubr.f32.gmra.mrb[0].mxu0 %v1044
        %v1209 = vpop.f32.mrb[0].mxu0
        %v1210 = vadd.f32 %v1036, %v1209
        %v1211 = vpop.f32.mrb[0].mxu0
        %1212 = vmatprep.mubr.f32.mxu0 0.0
        %1213 = vmatmul.mubr.f32.gmra.mrb[0].mxu0 %v1047
        %v1214 = vpop.f32.mrb[0].mxu0
        %v1215 = vadd.f32 %v1036, %v1214
        %v1216 = vpop.f32.mrb[0].mxu0
        %1217 = vmatprep.mubr.f32.mxu0 0.0
        %1218 = vmatmul.mubr.f32.gmra.mrb[0].mxu0 %v1050
        %v1219 = vpop.f32.mrb[0].mxu0
        %v1220 = vadd.f32 %v1036, %v1219
        %v1221 = vpop.f32.mrb[0].mxu0
        %1222 = vmatprep.mubr.f32.mxu0 0.0
        %1223 = vmatmul.mubr.f32.gmra.mrb[0].mxu0 %v1053
        %v1224 = vpop.f32.mrb[0].mxu0
        %v1225 = vadd.f32 %v1036, %v1224
        %v1226 = vpop.f32.mrb[0].mxu0
        %1227 = vmatprep.mubr.f32.mxu0 0.0
        %1228 = vmatmul.mubr.f32.gmra.mrb[0].mxu0 %v1056
        %v1229 = vpop.f32.mrb[0].mxu0
        %v1230 = vadd.f32 %v1036, %v1229
        %v1231 = vpop.f32.mrb[0].mxu0
        %1232 = vmatprep.mubr.f32.mxu0 0.0
        %1233 = vmatmul.mubr.f32.gmra.mrb[0].mxu0 %v1059
        %v1234 = vpop.f32.mrb[0].mxu0
        %v1235 = vadd.f32 %v1036, %v1234
        %v1236 = vpop.f32.mrb[0].mxu0
        %1237 = vmatprep.mubr.f32.mxu0 0.0
        %1238 = vmatmul.mubr.f32.gmra.mrb[0].mxu0 %v1062
        %v1239 = vpop.f32.mrb[0].mxu0
        %v1240 = vadd.f32 %v1036, %v1239
        %v1241 = vpop.f32.mrb[0].mxu0
        %1242 = vmatprep.mubr.f32.mxu0 0.0
        %1243 = vmatmul.mubr.f32.gmra.mrb[0].mxu0 %v1065
        %v1244 = vpop.f32.mrb[0].mxu0
        %v1245 = vadd.f32 %v1036, %v1244
        %v1246 = vpop.f32.mrb[0].mxu0
        %1247 = vmatprep.mubr.f32.mxu0 0.0
        %1248 = vmatmul.mubr.f32.gmra.mrb[0].mxu0 %v1068
        %v1249 = vpop.f32.mrb[0].mxu0
        %v1250 = vadd.f32 %v1036, %v1249
        %v1251 = vpop.f32.mrb[0].mxu0
        %1252 = vmatprep.mubr.f32.mxu0 0.0
        %1253 = vmatmul.mubr.f32.gmra.mrb[0].mxu0 %v1071
        %v1254 = vpop.f32.mrb[0].mxu0
        %v1255 = vadd.f32 %v1036, %v1254
        %v1256 = vpop.f32.mrb[0].mxu0
        %1257 = vmatprep.mubr.f32.mxu0 0.0
        %1258 = vmatmul.mubr.f32.gmra.mrb[0].mxu0 %v1074
        %v1259 = vpop.f32.mrb[0].mxu0
        %v1260 = vadd.f32 %v1036, %v1259
        %v1261 = vpop.f32.mrb[0].mxu0
        %1262 = vmatprep.mubr.f32.mxu0 0.0
        %1263 = vmatmul.mubr.f32.gmra.mrb[0].mxu0 %v1077
        %v1264 = vpop.f32.mrb[0].mxu0
        %v1265 = vadd.f32 %v1036, %v1264
        %v1266 = vpop.f32.mrb[0].mxu0
        %1267 = vmatprep.mubr.f32.mxu0 0.0
        %1268 = vmatmul.mubr.f32.gmra.mrb[0].mxu0 %v1080
        %v1269 = vpop.f32.mrb[0].mxu0
        %v1270 = vadd.f32 %v1036, %v1269
        %v1271 = vpop.f32.mrb[0].mxu0
        %1272 = vmatprep.mubr.f32.mxu0 0.0
        %1273 = vmatmul.mubr.f32.gmra.mrb[0].mxu0 %v1083
        %v1274 = vpop.f32.mrb[0].mxu0
        %v1275 = vadd.f32 %v1036, %v1274
        %v1276 = vpop.f32.mrb[0].mxu0
        %1277 = vmatprep.mubr.f32.mxu0 0.0
        %1278 = vmatmul.mubr.f32.gmra.mrb[0].mxu0 %v1086
        %v1279 = vpop.f32.mrb[0].mxu0
        %v1280 = vadd.f32 %v1036, %v1279
        %v1281 = vpop.f32.mrb[0].mxu0
        %1282 = vmatprep.mubr.f32.mxu0 0.0
        %1283 = vmatmul.mubr.f32.gmra.mrb[0].mxu0 %v1089
        %v1284 = vpop.f32.mrb[0].mxu0
        %v1285 = vadd.f32 %v1036, %v1284
        %v1286 = vpop.f32.mrb[0].mxu0
        %1287 = vmatprep.mubr.f32.mxu0 0.0
        %1288 = vmatmul.mubr.f32.gmra.mrb[0].mxu0 %v1092
        %v1289 = vpop.f32.mrb[0].mxu0
        %v1290 = vadd.f32 %v1036, %v1289
        %v1291 = vpop.f32.mrb[0].mxu0
        %1292 = vmatprep.mubr.f32.mxu0 0.0
        %1293 = vmatmul.mubr.f32.gmra.mrb[0].mxu0 %v1095
        %v1294 = vpop.f32.mrb[0].mxu0
        %v1295 = vadd.f32 %v1036, %v1294
        %v1296 = vpop.f32.mrb[0].mxu0
        %1297 = vmatprep.mubr.f32.mxu0 0.0
        %1298 = vmatmul.mubr.f32.gmra.mrb[0].mxu0 %v1098
        %v1299 = vpop.f32.mrb[0].mxu0
        %v1300 = vadd.f32 %v1036, %v1299
        %v1301 = vpop.f32.mrb[0].mxu0
        %1302 = vmatprep.mubr.f32.mxu0 0.0
        %1303 = vmatmul.mubr.f32.gmra.mrb[0].mxu0 %v1101
        %v1304 = vpop.f32.mrb[0].mxu0
        %v1305 = vadd.f32 %v1036, %v1304
        %v1306 = vpop.f32.mrb[0].mxu0
        %1307 = vmatprep.mubr.f32.mxu0 0.0
        %1308 = vmatmul.mubr.f32.gmra.mrb[0].mxu0 %v1104
        %v1309 = vpop.f32.mrb[0].mxu0
        %v1310 = vadd.f32 %v1036, %v1309
        %v1311 = vpop.f32.mrb[0].mxu0
        %1312 = vmatprep.mubr.f32.mxu0 0.0
        %1313 = vmatmul.mubr.f32.gmra.mrb[0].mxu0 %v1107
        %v1314 = vpop.f32.mrb[0].mxu0
        %v1315 = vadd.f32 %v1036, %v1314
        %v1316 = vpop.f32.mrb[0].mxu0
        %1317 = vmatprep.mubr.f32.mxu0 0.0
        %1318 = vmatmul.mubr.f32.gmra.mrb[0].mxu0 %v1110
        %v1319 = vpop.f32.mrb[0].mxu0
        %v1320 = vadd.f32 %v1036, %v1319
        %v1321 = vpop.f32.mrb[0].mxu0
        %1322 = vmatprep.mubr.f32.mxu0 0.0
        %1323 = vmatmul.mubr.f32.gmra.mrb[0].mxu0 %v1113
        %v1324 = vpop.f32.mrb[0].mxu0
        %v1325 = vadd.f32 %v1036, %v1324
        %v1326 = vpop.f32.mrb[0].mxu0
        %1327 = vmatprep.mubr.f32.mxu0 0.0
        %1328 = vmatmul.mubr.f32.gmra.mrb[0].mxu0 %v1116
        %v1329 = vpop.f32.mrb[0].mxu0
        %v1330 = vadd.f32 %v1036, %v1329
        %v1331 = vpop.f32.mrb[0].mxu0
        %1332 = vmatprep.mubr.f32.mxu0 0.0
        %1333 = vmatmul.mubr.f32.gmra.mrb[0].mxu0 %v1119
        %v1334 = vpop.f32.mrb[0].mxu0
        %v1335 = vadd.f32 %v1036, %v1334
        %v1336 = vpop.f32.mrb[0].mxu0
        %1337 = vmatprep.mubr.f32.mxu0 0.0
        %1338 = vmatmul.mubr.f32.gmra.mrb[0].mxu0 %v1122
        %v1339 = vpop.f32.mrb[0].mxu0
        %v1340 = vadd.f32 %v1036, %v1339
        %v1341 = vpop.f32.mrb[0].mxu0
        %1342 = vmatprep.mubr.f32.mxu0 0.0
        %1343 = vmatmul.mubr.f32.gmra.mrb[0].mxu0 %v1125
        %v1344 = vpop.f32.mrb[0].mxu0
        %v1345 = vadd.f32 %v1036, %v1344
        %v1346 = vpop.f32.mrb[0].mxu0
        %1347 = vmatprep.mubr.f32.mxu0 0.0
        %1348 = vmatmul.mubr.f32.gmra.mrb[0].mxu0 %v1128
        %v1349 = vpop.f32.mrb[0].mxu0
        %v1350 = vadd.f32 %v1036, %v1349
        %v1351 = vpop.f32.mrb[0].mxu0
        %1352 = vmatprep.mubr.f32.mxu0 0.0
        %1353 = vmatmul.mubr.f32.gmra.mrb[0].mxu0 %v1131
        %v1354 = vpop.f32.mrb[0].mxu0
        %v1355 = vadd.f32 %v1036, %v1354
        %v1356 = vpop.f32.mrb[0].mxu0
        %1357 = vdwg.mxu0
        %v1358 = vmax.f32 %v1200, 0.0
        %v1359 = vmax.f32 %v1205, 0.0
        %v1360 = vmax.f32 %v1210, 0.0
        %v1361 = vmax.f32 %v1215, 0.0
        %v1362 = vmax.f32 %v1220, 0.0
        %v1363 = vmax.f32 %v1225, 0.0
        %v1364 = vmax.f32 %v1230, 0.0
        %v1365 = vmax.f32 %v1235, 0.0
        %v1366 = vmax.f32 %v1240, 0.0
        %v1367 = vmax.f32 %v1245, 0.0
        %v1368 = vmax.f32 %v1250, 0.0
        %v1369 = vmax.f32 %v1255, 0.0
        %v1370 = vmax.f32 %v1260, 0.0
        %v1371 = vmax.f32 %v1265, 0.0
        %v1372 = vmax.f32 %v1270, 0.0
        %v1373 = vmax.f32 %v1275, 0.0
        %v1374 = vmax.f32 %v1280, 0.0
        %v1375 = vmax.f32 %v1285, 0.0
        %v1376 = vmax.f32 %v1290, 0.0
        %v1377 = vmax.f32 %v1295, 0.0
        %v1378 = vmax.f32 %v1300, 0.0
        %v1379 = vmax.f32 %v1305, 0.0
        %v1380 = vmax.f32 %v1310, 0.0
        %v1381 = vmax.f32 %v1315, 0.0
        %v1382 = vmax.f32 %v1320, 0.0
        %v1383 = vmax.f32 %v1325, 0.0
        %v1384 = vmax.f32 %v1330, 0.0
        %v1385 = vmax.f32 %v1335, 0.0
        %v1386 = vmax.f32 %v1340, 0.0
        %v1387 = vmax.f32 %v1345, 0.0
        %v1388 = vmax.f32 %v1350, 0.0
        %v1389 = vmax.f32 %v1355, 0.0
        %v1390 = vmul.f32 %v1358, 0.33333334
        %v1391 = vmul.f32 %v1359, 0.33333334
        %v1392 = vmul.f32 %v1360, 0.33333334
        %v1393 = vmul.f32 %v1361, 0.33333334
        %v1394 = vmul.f32 %v1362, 0.33333334
        %v1395 = vmul.f32 %v1363, 0.33333334
        %v1396 = vmul.f32 %v1364, 0.33333334
        %v1397 = vmul.f32 %v1365, 0.33333334
        %v1398 = vmul.f32 %v1366, 0.33333334
        %v1399 = vmul.f32 %v1367, 0.33333334
        %v1400 = vmul.f32 %v1368, 0.33333334
        %v1401 = vmul.f32 %v1369, 0.33333334
        %v1402 = vmul.f32 %v1370, 0.33333334
        %v1403 = vmul.f32 %v1371, 0.33333334
        %v1404 = vmul.f32 %v1372, 0.33333334
        %v1405 = vmul.f32 %v1373, 0.33333334
        %v1406 = vmul.f32 %v1374, 0.33333334
        %v1407 = vmul.f32 %v1375, 0.33333334
        %v1408 = vmul.f32 %v1376, 0.33333334
        %v1409 = vmul.f32 %v1377, 0.33333334
        %v1410 = vmul.f32 %v1378, 0.33333334
        %v1411 = vmul.f32 %v1379, 0.33333334
        %v1412 = vmul.f32 %v1380, 0.33333334
        %v1413 = vmul.f32 %v1381, 0.33333334
        %v1414 = vmul.f32 %v1382, 0.33333334
        %v1415 = vmul.f32 %v1383, 0.33333334
        %v1416 = vmul.f32 %v1384, 0.33333334
        %v1417 = vmul.f32 %v1385, 0.33333334
        %v1418 = vmul.f32 %v1386, 0.33333334
        %v1419 = vmul.f32 %v1387, 0.33333334
        %v1420 = vmul.f32 %v1388, 0.33333334
        %v1421 = vmul.f32 %v1389, 0.33333334
        %v1422 = vadd.f32 %v643, %v1390
        %v1423 = vadd.f32 %v644, %v1391
        %v1424 = vadd.f32 %v645, %v1392
        %v1425 = vadd.f32 %v646, %v1393
        %v1426 = vadd.f32 %v647, %v1394
        %v1427 = vadd.f32 %v648, %v1395
        %v1428 = vadd.f32 %v649, %v1396
        %v1429 = vadd.f32 %v650, %v1397
        %v1430 = vadd.f32 %v651, %v1398
        %v1431 = vadd.f32 %v652, %v1399
        %v1432 = vadd.f32 %v653, %v1400
        %v1433 = vadd.f32 %v654, %v1401
        %v1434 = vadd.f32 %v655, %v1402
        %v1435 = vadd.f32 %v656, %v1403
        %v1436 = vadd.f32 %v657, %v1404
        %v1437 = vadd.f32 %v658, %v1405
        %v1438 = vadd.f32 %v659, %v1406
        %v1439 = vadd.f32 %v660, %v1407
        %v1440 = vadd.f32 %v661, %v1408
        %v1441 = vadd.f32 %v662, %v1409
        %v1442 = vadd.f32 %v663, %v1410
        %v1443 = vadd.f32 %v664, %v1411
        %v1444 = vadd.f32 %v665, %v1412
        %v1445 = vadd.f32 %v666, %v1413
        %v1446 = vadd.f32 %v667, %v1414
        %v1447 = vadd.f32 %v668, %v1415
        %v1448 = vadd.f32 %v669, %v1416
        %v1449 = vadd.f32 %v670, %v1417
        %v1450 = vadd.f32 %v671, %v1418
        %v1451 = vadd.f32 %v672, %v1419
        %v1452 = vadd.f32 %v673, %v1420
        %v1453 = vadd.f32 %v674, %v1421
        %v1455 = vsel %vm679, %v1422, 0
        %v1458 = vsel %vm679, %v1423, 0
        %v1461 = vsel %vm679, %v1424, 0
        %v1464 = vsel %vm679, %v1425, 0
        %v1467 = vsel %vm679, %v1426, 0
        %v1470 = vsel %vm679, %v1427, 0
        %v1473 = vsel %vm679, %v1428, 0
        %v1476 = vsel %vm679, %v1429, 0
        %v1479 = vsel %vm679, %v1430, 0
        %v1482 = vsel %vm679, %v1431, 0
        %v1485 = vsel %vm679, %v1432, 0
        %v1488 = vsel %vm679, %v1433, 0
        %v1491 = vsel %vm679, %v1434, 0
        %v1494 = vsel %vm679, %v1435, 0
        %v1497 = vsel %vm679, %v1436, 0
        %v1500 = vsel %vm679, %v1437, 0
        %v1503 = vsel %vm679, %v1438, 0
        %v1506 = vsel %vm679, %v1439, 0
        %v1509 = vsel %vm679, %v1440, 0
        %v1512 = vsel %vm679, %v1441, 0
        %v1515 = vsel %vm679, %v1442, 0
        %v1518 = vsel %vm679, %v1443, 0
        %v1521 = vsel %vm679, %v1444, 0
        %v1524 = vsel %vm679, %v1445, 0
        %v1527 = vsel %vm679, %v1446, 0
        %v1530 = vsel %vm679, %v1447, 0
        %v1533 = vsel %vm679, %v1448, 0
        %v1536 = vsel %vm679, %v1449, 0
        %v1539 = vsel %vm679, %v1450, 0
        %v1542 = vsel %vm679, %v1451, 0
        %v1545 = vsel %vm679, %v1452, 0
        %v1548 = vsel %vm679, %v1453, 0
        %1550 = vmatprep.subr.mxu0 0.0
        %1551 = vmatpush1.msra.mxu0 %v254
        %1552 = vmatprep.subr.mxu0 0.0
        %1553 = vmatpush1.msra.mxu0 %v255
        %1554 = vmatprep.subr.mxu0 0.0
        %1555 = vmatpush1.msra.mxu0 %v256
        %1556 = vmatprep.subr.mxu0 0.0
        %1557 = vmatpush1.msra.mxu0 %v257
        %1558 = vmatprep.subr.mxu0 0.0
        %1559 = vmatpush1.msra.mxu0 0.0
        %1560 = vmatprep.subr.mxu0 0.0
        %1561 = vmatpush1.msra.mxu0 0.0
        %1562 = vmatprep.subr.mxu0 0.0
        %1563 = vmatpush1.msra.mxu0 0.0
        %1564 = vmatprep.subr.mxu0 0.0
        %1565 = vmatpush1.msra.mxu0 0.0
        %1566 = vmatprep.subr.mxu0 0.0
        %1567 = vmatpush1.msra.mxu0 0.0
        %1568 = vmatprep.subr.mxu0 0.0
        %1569 = vmatpush1.msra.mxu0 0.0
        %1570 = vmatprep.subr.mxu0 0.0
        %1571 = vmatpush1.msra.mxu0 0.0
        %1572 = vmatprep.subr.mxu0 0.0
        %1573 = vmatpush1.msra.mxu0 0.0
        %1574 = vmatprep.subr.mxu0 0.0
        %1575 = vmatpush1.msra.mxu0 0.0
        %1576 = vmatprep.subr.mxu0 0.0
        %1577 = vmatpush1.msra.mxu0 0.0
        %1578 = vmatprep.subr.mxu0 0.0
        %1579 = vmatpush1.msra.mxu0 0.0
        %1580 = vmatprep.subr.mxu0 0.0
        %1581 = vmatpush1.msra.mxu0 0.0
        %1582 = vmatprep.subr.mxu0 0.0
        %1583 = vmatpush1.msra.mxu0 0.0
        %1584 = vmatprep.subr.mxu0 0.0
        %1585 = vmatpush1.msra.mxu0 0.0
        %1586 = vmatprep.subr.mxu0 0.0
        %1587 = vmatpush1.msra.mxu0 0.0
        %1588 = vmatprep.subr.mxu0 0.0
        %1589 = vmatpush1.msra.mxu0 0.0
        %1590 = vmatprep.subr.mxu0 0.0
        %1591 = vmatpush1.msra.mxu0 0.0
        %1592 = vmatprep.subr.mxu0 0.0
        %1593 = vmatpush1.msra.mxu0 0.0
        %1594 = vmatprep.subr.mxu0 0.0
        %1595 = vmatpush1.msra.mxu0 0.0
        %1596 = vmatprep.subr.mxu0 0.0
        %1597 = vmatpush1.msra.mxu0 0.0
        %1598 = vmatprep.subr.mxu0 0.0
        %1599 = vmatpush1.msra.mxu0 0.0
        %1600 = vmatprep.subr.mxu0 0.0
        %1601 = vmatpush1.msra.mxu0 0.0
        %1602 = vmatprep.subr.mxu0 0.0
        %1603 = vmatpush1.msra.mxu0 0.0
        %1604 = vmatprep.subr.mxu0 0.0
        %1605 = vmatpush1.msra.mxu0 0.0
        %1606 = vmatprep.subr.mxu0 0.0
        %1607 = vmatpush1.msra.mxu0 0.0
        %1608 = vmatprep.subr.mxu0 0.0
        %1609 = vmatpush1.msra.mxu0 0.0
        %1610 = vmatprep.subr.mxu0 0.0
        %1611 = vmatpush1.msra.mxu0 0.0
        %1612 = vmatprep.subr.mxu0 0.0
        %1613 = vmatpush1.msra.mxu0 0.0
        %1614 = vmatprep.mubr.f32.mxu0 0.0
        %1615 = vmatmul.mubr.f32.gmra.mrb[0].mxu0 %v1455
        %v1616 = vpop.f32.mrb[0].mxu0
        %v1617 = vadd.f32 %v678, %v1616
        %v1618 = vpop.f32.mrb[0].mxu0
        %1619 = vmatprep.mubr.f32.mxu0 0.0
        %1620 = vmatmul.mubr.f32.gmra.mrb[0].mxu0 %v1458
        %v1621 = vpop.f32.mrb[0].mxu0
        %v1622 = vadd.f32 %v678, %v1621
        %v1623 = vpop.f32.mrb[0].mxu0
        %1624 = vmatprep.mubr.f32.mxu0 0.0
        %1625 = vmatmul.mubr.f32.gmra.mrb[0].mxu0 %v1461
        %v1626 = vpop.f32.mrb[0].mxu0
        %v1627 = vadd.f32 %v678, %v1626
        %v1628 = vpop.f32.mrb[0].mxu0
        %1629 = vmatprep.mubr.f32.mxu0 0.0
        %1630 = vmatmul.mubr.f32.gmra.mrb[0].mxu0 %v1464
        %v1631 = vpop.f32.mrb[0].mxu0
        %v1632 = vadd.f32 %v678, %v1631
        %v1633 = vpop.f32.mrb[0].mxu0
        %1634 = vmatprep.mubr.f32.mxu0 0.0
        %1635 = vmatmul.mubr.f32.gmra.mrb[0].mxu0 %v1467
        %v1636 = vpop.f32.mrb[0].mxu0
        %v1637 = vadd.f32 %v678, %v1636
        %v1638 = vpop.f32.mrb[0].mxu0
        %1639 = vmatprep.mubr.f32.mxu0 0.0
        %1640 = vmatmul.mubr.f32.gmra.mrb[0].mxu0 %v1470
        %v1641 = vpop.f32.mrb[0].mxu0
        %v1642 = vadd.f32 %v678, %v1641
        %v1643 = vpop.f32.mrb[0].mxu0
        %1644 = vmatprep.mubr.f32.mxu0 0.0
        %1645 = vmatmul.mubr.f32.gmra.mrb[0].mxu0 %v1473
        %v1646 = vpop.f32.mrb[0].mxu0
        %v1647 = vadd.f32 %v678, %v1646
        %v1648 = vpop.f32.mrb[0].mxu0
        %1649 = vmatprep.mubr.f32.mxu0 0.0
        %1650 = vmatmul.mubr.f32.gmra.mrb[0].mxu0 %v1476
        %v1651 = vpop.f32.mrb[0].mxu0
        %v1652 = vadd.f32 %v678, %v1651
        %v1653 = vpop.f32.mrb[0].mxu0
        %1654 = vmatprep.mubr.f32.mxu0 0.0
        %1655 = vmatmul.mubr.f32.gmra.mrb[0].mxu0 %v1479
        %v1656 = vpop.f32.mrb[0].mxu0
        %v1657 = vadd.f32 %v678, %v1656
        %v1658 = vpop.f32.mrb[0].mxu0
        %1659 = vmatprep.mubr.f32.mxu0 0.0
        %1660 = vmatmul.mubr.f32.gmra.mrb[0].mxu0 %v1482
        %v1661 = vpop.f32.mrb[0].mxu0
        %v1662 = vadd.f32 %v678, %v1661
        %v1663 = vpop.f32.mrb[0].mxu0
        %1664 = vmatprep.mubr.f32.mxu0 0.0
        %1665 = vmatmul.mubr.f32.gmra.mrb[0].mxu0 %v1485
        %v1666 = vpop.f32.mrb[0].mxu0
        %v1667 = vadd.f32 %v678, %v1666
        %v1668 = vpop.f32.mrb[0].mxu0
        %1669 = vmatprep.mubr.f32.mxu0 0.0
        %1670 = vmatmul.mubr.f32.gmra.mrb[0].mxu0 %v1488
        %v1671 = vpop.f32.mrb[0].mxu0
        %v1672 = vadd.f32 %v678, %v1671
        %v1673 = vpop.f32.mrb[0].mxu0
        %1674 = vmatprep.mubr.f32.mxu0 0.0
        %1675 = vmatmul.mubr.f32.gmra.mrb[0].mxu0 %v1491
        %v1676 = vpop.f32.mrb[0].mxu0
        %v1677 = vadd.f32 %v678, %v1676
        %v1678 = vpop.f32.mrb[0].mxu0
        %1679 = vmatprep.mubr.f32.mxu0 0.0
        %1680 = vmatmul.mubr.f32.gmra.mrb[0].mxu0 %v1494
        %v1681 = vpop.f32.mrb[0].mxu0
        %v1682 = vadd.f32 %v678, %v1681
        %v1683 = vpop.f32.mrb[0].mxu0
        %1684 = vmatprep.mubr.f32.mxu0 0.0
        %1685 = vmatmul.mubr.f32.gmra.mrb[0].mxu0 %v1497
        %v1686 = vpop.f32.mrb[0].mxu0
        %v1687 = vadd.f32 %v678, %v1686
        %v1688 = vpop.f32.mrb[0].mxu0
        %1689 = vmatprep.mubr.f32.mxu0 0.0
        %1690 = vmatmul.mubr.f32.gmra.mrb[0].mxu0 %v1500
        %v1691 = vpop.f32.mrb[0].mxu0
        %v1692 = vadd.f32 %v678, %v1691
        %v1693 = vpop.f32.mrb[0].mxu0
        %1694 = vmatprep.mubr.f32.mxu0 0.0
        %1695 = vmatmul.mubr.f32.gmra.mrb[0].mxu0 %v1503
        %v1696 = vpop.f32.mrb[0].mxu0
        %v1697 = vadd.f32 %v678, %v1696
        %v1698 = vpop.f32.mrb[0].mxu0
        %1699 = vmatprep.mubr.f32.mxu0 0.0
        %1700 = vmatmul.mubr.f32.gmra.mrb[0].mxu0 %v1506
        %v1701 = vpop.f32.mrb[0].mxu0
        %v1702 = vadd.f32 %v678, %v1701
        %v1703 = vpop.f32.mrb[0].mxu0
        %1704 = vmatprep.mubr.f32.mxu0 0.0
        %1705 = vmatmul.mubr.f32.gmra.mrb[0].mxu0 %v1509
        %v1706 = vpop.f32.mrb[0].mxu0
        %v1707 = vadd.f32 %v678, %v1706
        %v1708 = vpop.f32.mrb[0].mxu0
        %1709 = vmatprep.mubr.f32.mxu0 0.0
        %1710 = vmatmul.mubr.f32.gmra.mrb[0].mxu0 %v1512
        %v1711 = vpop.f32.mrb[0].mxu0
        %v1712 = vadd.f32 %v678, %v1711
        %v1713 = vpop.f32.mrb[0].mxu0
        %1714 = vmatprep.mubr.f32.mxu0 0.0
        %1715 = vmatmul.mubr.f32.gmra.mrb[0].mxu0 %v1515
        %v1716 = vpop.f32.mrb[0].mxu0
        %v1717 = vadd.f32 %v678, %v1716
        %v1718 = vpop.f32.mrb[0].mxu0
        %1719 = vmatprep.mubr.f32.mxu0 0.0
        %1720 = vmatmul.mubr.f32.gmra.mrb[0].mxu0 %v1518
        %v1721 = vpop.f32.mrb[0].mxu0
        %v1722 = vadd.f32 %v678, %v1721
        %v1723 = vpop.f32.mrb[0].mxu0
        %1724 = vmatprep.mubr.f32.mxu0 0.0
        %1725 = vmatmul.mubr.f32.gmra.mrb[0].mxu0 %v1521
        %v1726 = vpop.f32.mrb[0].mxu0
        %v1727 = vadd.f32 %v678, %v1726
        %v1728 = vpop.f32.mrb[0].mxu0
        %1729 = vmatprep.mubr.f32.mxu0 0.0
        %1730 = vmatmul.mubr.f32.gmra.mrb[0].mxu0 %v1524
        %v1731 = vpop.f32.mrb[0].mxu0
        %v1732 = vadd.f32 %v678, %v1731
        %v1733 = vpop.f32.mrb[0].mxu0
        %1734 = vmatprep.mubr.f32.mxu0 0.0
        %1735 = vmatmul.mubr.f32.gmra.mrb[0].mxu0 %v1527
        %v1736 = vpop.f32.mrb[0].mxu0
        %v1737 = vadd.f32 %v678, %v1736
        %v1738 = vpop.f32.mrb[0].mxu0
        %1739 = vmatprep.mubr.f32.mxu0 0.0
        %1740 = vmatmul.mubr.f32.gmra.mrb[0].mxu0 %v1530
        %v1741 = vpop.f32.mrb[0].mxu0
        %v1742 = vadd.f32 %v678, %v1741
        %v1743 = vpop.f32.mrb[0].mxu0
        %1744 = vmatprep.mubr.f32.mxu0 0.0
        %1745 = vmatmul.mubr.f32.gmra.mrb[0].mxu0 %v1533
        %v1746 = vpop.f32.mrb[0].mxu0
        %v1747 = vadd.f32 %v678, %v1746
        %v1748 = vpop.f32.mrb[0].mxu0
        %1749 = vmatprep.mubr.f32.mxu0 0.0
        %1750 = vmatmul.mubr.f32.gmra.mrb[0].mxu0 %v1536
        %v1751 = vpop.f32.mrb[0].mxu0
        %v1752 = vadd.f32 %v678, %v1751
        %v1753 = vpop.f32.mrb[0].mxu0
        %1754 = vmatprep.mubr.f32.mxu0 0.0
        %1755 = vmatmul.mubr.f32.gmra.mrb[0].mxu0 %v1539
        %v1756 = vpop.f32.mrb[0].mxu0
        %v1757 = vadd.f32 %v678, %v1756
        %v1758 = vpop.f32.mrb[0].mxu0
        %1759 = vmatprep.mubr.f32.mxu0 0.0
        %1760 = vmatmul.mubr.f32.gmra.mrb[0].mxu0 %v1542
        %v1761 = vpop.f32.mrb[0].mxu0
        %v1762 = vadd.f32 %v678, %v1761
        %v1763 = vpop.f32.mrb[0].mxu0
        %1764 = vmatprep.mubr.f32.mxu0 0.0
        %1765 = vmatmul.mubr.f32.gmra.mrb[0].mxu0 %v1545
        %v1766 = vpop.f32.mrb[0].mxu0
        %v1767 = vadd.f32 %v678, %v1766
        %v1768 = vpop.f32.mrb[0].mxu0
        %1769 = vmatprep.mubr.f32.mxu0 0.0
        %1770 = vmatmul.mubr.f32.gmra.mrb[0].mxu0 %v1548
        %v1771 = vpop.f32.mrb[0].mxu0
        %v1772 = vadd.f32 %v678, %v1771
        %v1773 = vpop.f32.mrb[0].mxu0
        %1774 = vdwg.mxu0
        %v1775 = vmax.f32 %v1617, 0.0
        %v1776 = vmax.f32 %v1622, 0.0
        %v1777 = vmax.f32 %v1627, 0.0
        %v1778 = vmax.f32 %v1632, 0.0
        %v1779 = vmax.f32 %v1637, 0.0
        %v1780 = vmax.f32 %v1642, 0.0
        %v1781 = vmax.f32 %v1647, 0.0
        %v1782 = vmax.f32 %v1652, 0.0
        %v1783 = vmax.f32 %v1657, 0.0
        %v1784 = vmax.f32 %v1662, 0.0
        %v1785 = vmax.f32 %v1667, 0.0
        %v1786 = vmax.f32 %v1672, 0.0
        %v1787 = vmax.f32 %v1677, 0.0
        %v1788 = vmax.f32 %v1682, 0.0
        %v1789 = vmax.f32 %v1687, 0.0
        %v1790 = vmax.f32 %v1692, 0.0
        %v1791 = vmax.f32 %v1697, 0.0
        %v1792 = vmax.f32 %v1702, 0.0
        %v1793 = vmax.f32 %v1707, 0.0
        %v1794 = vmax.f32 %v1712, 0.0
        %v1795 = vmax.f32 %v1717, 0.0
        %v1796 = vmax.f32 %v1722, 0.0
        %v1797 = vmax.f32 %v1727, 0.0
        %v1798 = vmax.f32 %v1732, 0.0
        %v1799 = vmax.f32 %v1737, 0.0
        %v1800 = vmax.f32 %v1742, 0.0
        %v1801 = vmax.f32 %v1747, 0.0
        %v1802 = vmax.f32 %v1752, 0.0
        %v1803 = vmax.f32 %v1757, 0.0
        %v1804 = vmax.f32 %v1762, 0.0
        %v1805 = vmax.f32 %v1767, 0.0
        %v1806 = vmax.f32 %v1772, 0.0
        %v1808 = vsel %vm679, %v1775, 0
        %v1811 = vsel %vm679, %v1776, 0
        %v1814 = vsel %vm679, %v1777, 0
        %v1817 = vsel %vm679, %v1778, 0
        %v1820 = vsel %vm679, %v1779, 0
        %v1823 = vsel %vm679, %v1780, 0
        %v1826 = vsel %vm679, %v1781, 0
        %v1829 = vsel %vm679, %v1782, 0
        %v1832 = vsel %vm679, %v1783, 0
        %v1835 = vsel %vm679, %v1784, 0
        %v1838 = vsel %vm679, %v1785, 0
        %v1841 = vsel %vm679, %v1786, 0
        %v1844 = vsel %vm679, %v1787, 0
        %v1847 = vsel %vm679, %v1788, 0
        %v1850 = vsel %vm679, %v1789, 0
        %v1853 = vsel %vm679, %v1790, 0
        %v1856 = vsel %vm679, %v1791, 0
        %v1859 = vsel %vm679, %v1792, 0
        %v1862 = vsel %vm679, %v1793, 0
        %v1865 = vsel %vm679, %v1794, 0
        %v1868 = vsel %vm679, %v1795, 0
        %v1871 = vsel %vm679, %v1796, 0
        %v1874 = vsel %vm679, %v1797, 0
        %v1877 = vsel %vm679, %v1798, 0
        %v1880 = vsel %vm679, %v1799, 0
        %v1883 = vsel %vm679, %v1800, 0
        %v1886 = vsel %vm679, %v1801, 0
        %v1889 = vsel %vm679, %v1802, 0
        %v1892 = vsel %vm679, %v1803, 0
        %v1895 = vsel %vm679, %v1804, 0
        %v1898 = vsel %vm679, %v1805, 0
        %v1901 = vsel %vm679, %v1806, 0
        %1903 = vmatprep.subr.mxu0 0.0
        %1904 = vmatpush1.msra.mxu0 %v259
        %1905 = vmatprep.subr.mxu0 0.0
        %1906 = vmatpush1.msra.mxu0 %v260
        %1907 = vmatprep.subr.mxu0 0.0
        %1908 = vmatpush1.msra.mxu0 %v261
        %1909 = vmatprep.subr.mxu0 0.0
        %1910 = vmatpush1.msra.mxu0 %v262
        %1911 = vmatprep.subr.mxu0 0.0
        %1912 = vmatpush1.msra.mxu0 0.0
        %1913 = vmatprep.subr.mxu0 0.0
        %1914 = vmatpush1.msra.mxu0 0.0
        %1915 = vmatprep.subr.mxu0 0.0
        %1916 = vmatpush1.msra.mxu0 0.0
        %1917 = vmatprep.subr.mxu0 0.0
        %1918 = vmatpush1.msra.mxu0 0.0
        %1919 = vmatprep.subr.mxu0 0.0
        %1920 = vmatpush1.msra.mxu0 0.0
        %1921 = vmatprep.subr.mxu0 0.0
        %1922 = vmatpush1.msra.mxu0 0.0
        %1923 = vmatprep.subr.mxu0 0.0
        %1924 = vmatpush1.msra.mxu0 0.0
        %1925 = vmatprep.subr.mxu0 0.0
        %1926 = vmatpush1.msra.mxu0 0.0
        %1927 = vmatprep.subr.mxu0 0.0
        %1928 = vmatpush1.msra.mxu0 0.0
        %1929 = vmatprep.subr.mxu0 0.0
        %1930 = vmatpush1.msra.mxu0 0.0
        %1931 = vmatprep.subr.mxu0 0.0
        %1932 = vmatpush1.msra.mxu0 0.0
        %1933 = vmatprep.subr.mxu0 0.0
        %1934 = vmatpush1.msra.mxu0 0.0
        %1935 = vmatprep.subr.mxu0 0.0
        %1936 = vmatpush1.msra.mxu0 0.0
        %1937 = vmatprep.subr.mxu0 0.0
        %1938 = vmatpush1.msra.mxu0 0.0
        %1939 = vmatprep.subr.mxu0 0.0
        %1940 = vmatpush1.msra.mxu0 0.0
        %1941 = vmatprep.subr.mxu0 0.0
        %1942 = vmatpush1.msra.mxu0 0.0
        %1943 = vmatprep.subr.mxu0 0.0
        %1944 = vmatpush1.msra.mxu0 0.0
        %1945 = vmatprep.subr.mxu0 0.0
        %1946 = vmatpush1.msra.mxu0 0.0
        %1947 = vmatprep.subr.mxu0 0.0
        %1948 = vmatpush1.msra.mxu0 0.0
        %1949 = vmatprep.subr.mxu0 0.0
        %1950 = vmatpush1.msra.mxu0 0.0
        %1951 = vmatprep.subr.mxu0 0.0
        %1952 = vmatpush1.msra.mxu0 0.0
        %1953 = vmatprep.subr.mxu0 0.0
        %1954 = vmatpush1.msra.mxu0 0.0
        %1955 = vmatprep.subr.mxu0 0.0
        %1956 = vmatpush1.msra.mxu0 0.0
        %1957 = vmatprep.subr.mxu0 0.0
        %1958 = vmatpush1.msra.mxu0 0.0
        %1959 = vmatprep.subr.mxu0 0.0
        %1960 = vmatpush1.msra.mxu0 0.0
        %1961 = vmatprep.subr.mxu0 0.0
        %1962 = vmatpush1.msra.mxu0 0.0
        %1963 = vmatprep.subr.mxu0 0.0
        %1964 = vmatpush1.msra.mxu0 0.0
        %1965 = vmatprep.subr.mxu0 0.0
        %1966 = vmatpush1.msra.mxu0 0.0
        %1967 = vmatprep.mubr.f32.mxu0 0.0
        %1968 = vmatmul.mubr.f32.gmra.mrb[0].mxu0 %v1808
        %v1969 = vpop.f32.mrb[0].mxu0
        %v1970 = vadd.f32 %v1036, %v1969
        %v1971 = vpop.f32.mrb[0].mxu0
        %1972 = vmatprep.mubr.f32.mxu0 0.0
        %1973 = vmatmul.mubr.f32.gmra.mrb[0].mxu0 %v1811
        %v1974 = vpop.f32.mrb[0].mxu0
        %v1975 = vadd.f32 %v1036, %v1974
        %v1976 = vpop.f32.mrb[0].mxu0
        %1977 = vmatprep.mubr.f32.mxu0 0.0
        %1978 = vmatmul.mubr.f32.gmra.mrb[0].mxu0 %v1814
        %v1979 = vpop.f32.mrb[0].mxu0
        %v1980 = vadd.f32 %v1036, %v1979
        %v1981 = vpop.f32.mrb[0].mxu0
        %1982 = vmatprep.mubr.f32.mxu0 0.0
        %1983 = vmatmul.mubr.f32.gmra.mrb[0].mxu0 %v1817
        %v1984 = vpop.f32.mrb[0].mxu0
        %v1985 = vadd.f32 %v1036, %v1984
        %v1986 = vpop.f32.mrb[0].mxu0
        %1987 = vmatprep.mubr.f32.mxu0 0.0
        %1988 = vmatmul.mubr.f32.gmra.mrb[0].mxu0 %v1820
        %v1989 = vpop.f32.mrb[0].mxu0
        %v1990 = vadd.f32 %v1036, %v1989
        %v1991 = vpop.f32.mrb[0].mxu0
        %1992 = vmatprep.mubr.f32.mxu0 0.0
        %1993 = vmatmul.mubr.f32.gmra.mrb[0].mxu0 %v1823
        %v1994 = vpop.f32.mrb[0].mxu0
        %v1995 = vadd.f32 %v1036, %v1994
        %v1996 = vpop.f32.mrb[0].mxu0
        %1997 = vmatprep.mubr.f32.mxu0 0.0
        %1998 = vmatmul.mubr.f32.gmra.mrb[0].mxu0 %v1826
        %v1999 = vpop.f32.mrb[0].mxu0
        %v2000 = vadd.f32 %v1036, %v1999
        %v2001 = vpop.f32.mrb[0].mxu0
        %2002 = vmatprep.mubr.f32.mxu0 0.0
        %2003 = vmatmul.mubr.f32.gmra.mrb[0].mxu0 %v1829
        %v2004 = vpop.f32.mrb[0].mxu0
        %v2005 = vadd.f32 %v1036, %v2004
        %v2006 = vpop.f32.mrb[0].mxu0
        %2007 = vmatprep.mubr.f32.mxu0 0.0
        %2008 = vmatmul.mubr.f32.gmra.mrb[0].mxu0 %v1832
        %v2009 = vpop.f32.mrb[0].mxu0
        %v2010 = vadd.f32 %v1036, %v2009
        %v2011 = vpop.f32.mrb[0].mxu0
        %2012 = vmatprep.mubr.f32.mxu0 0.0
        %2013 = vmatmul.mubr.f32.gmra.mrb[0].mxu0 %v1835
        %v2014 = vpop.f32.mrb[0].mxu0
        %v2015 = vadd.f32 %v1036, %v2014
        %v2016 = vpop.f32.mrb[0].mxu0
        %2017 = vmatprep.mubr.f32.mxu0 0.0
        %2018 = vmatmul.mubr.f32.gmra.mrb[0].mxu0 %v1838
        %v2019 = vpop.f32.mrb[0].mxu0
        %v2020 = vadd.f32 %v1036, %v2019
        %v2021 = vpop.f32.mrb[0].mxu0
        %2022 = vmatprep.mubr.f32.mxu0 0.0
        %2023 = vmatmul.mubr.f32.gmra.mrb[0].mxu0 %v1841
        %v2024 = vpop.f32.mrb[0].mxu0
        %v2025 = vadd.f32 %v1036, %v2024
        %v2026 = vpop.f32.mrb[0].mxu0
        %2027 = vmatprep.mubr.f32.mxu0 0.0
        %2028 = vmatmul.mubr.f32.gmra.mrb[0].mxu0 %v1844
        %v2029 = vpop.f32.mrb[0].mxu0
        %v2030 = vadd.f32 %v1036, %v2029
        %v2031 = vpop.f32.mrb[0].mxu0
        %2032 = vmatprep.mubr.f32.mxu0 0.0
        %2033 = vmatmul.mubr.f32.gmra.mrb[0].mxu0 %v1847
        %v2034 = vpop.f32.mrb[0].mxu0
        %v2035 = vadd.f32 %v1036, %v2034
        %v2036 = vpop.f32.mrb[0].mxu0
        %2037 = vmatprep.mubr.f32.mxu0 0.0
        %2038 = vmatmul.mubr.f32.gmra.mrb[0].mxu0 %v1850
        %v2039 = vpop.f32.mrb[0].mxu0
        %v2040 = vadd.f32 %v1036, %v2039
        %v2041 = vpop.f32.mrb[0].mxu0
        %2042 = vmatprep.mubr.f32.mxu0 0.0
        %2043 = vmatmul.mubr.f32.gmra.mrb[0].mxu0 %v1853
        %v2044 = vpop.f32.mrb[0].mxu0
        %v2045 = vadd.f32 %v1036, %v2044
        %v2046 = vpop.f32.mrb[0].mxu0
        %2047 = vmatprep.mubr.f32.mxu0 0.0
        %2048 = vmatmul.mubr.f32.gmra.mrb[0].mxu0 %v1856
        %v2049 = vpop.f32.mrb[0].mxu0
        %v2050 = vadd.f32 %v1036, %v2049
        %v2051 = vpop.f32.mrb[0].mxu0
        %2052 = vmatprep.mubr.f32.mxu0 0.0
        %2053 = vmatmul.mubr.f32.gmra.mrb[0].mxu0 %v1859
        %v2054 = vpop.f32.mrb[0].mxu0
        %v2055 = vadd.f32 %v1036, %v2054
        %v2056 = vpop.f32.mrb[0].mxu0
        %2057 = vmatprep.mubr.f32.mxu0 0.0
        %2058 = vmatmul.mubr.f32.gmra.mrb[0].mxu0 %v1862
        %v2059 = vpop.f32.mrb[0].mxu0
        %v2060 = vadd.f32 %v1036, %v2059
        %v2061 = vpop.f32.mrb[0].mxu0
        %2062 = vmatprep.mubr.f32.mxu0 0.0
        %2063 = vmatmul.mubr.f32.gmra.mrb[0].mxu0 %v1865
        %v2064 = vpop.f32.mrb[0].mxu0
        %v2065 = vadd.f32 %v1036, %v2064
        %v2066 = vpop.f32.mrb[0].mxu0
        %2067 = vmatprep.mubr.f32.mxu0 0.0
        %2068 = vmatmul.mubr.f32.gmra.mrb[0].mxu0 %v1868
        %v2069 = vpop.f32.mrb[0].mxu0
        %v2070 = vadd.f32 %v1036, %v2069
        %v2071 = vpop.f32.mrb[0].mxu0
        %2072 = vmatprep.mubr.f32.mxu0 0.0
        %2073 = vmatmul.mubr.f32.gmra.mrb[0].mxu0 %v1871
        %v2074 = vpop.f32.mrb[0].mxu0
        %v2075 = vadd.f32 %v1036, %v2074
        %v2076 = vpop.f32.mrb[0].mxu0
        %2077 = vmatprep.mubr.f32.mxu0 0.0
        %2078 = vmatmul.mubr.f32.gmra.mrb[0].mxu0 %v1874
        %v2079 = vpop.f32.mrb[0].mxu0
        %v2080 = vadd.f32 %v1036, %v2079
        %v2081 = vpop.f32.mrb[0].mxu0
        %2082 = vmatprep.mubr.f32.mxu0 0.0
        %2083 = vmatmul.mubr.f32.gmra.mrb[0].mxu0 %v1877
        %v2084 = vpop.f32.mrb[0].mxu0
        %v2085 = vadd.f32 %v1036, %v2084
        %v2086 = vpop.f32.mrb[0].mxu0
        %2087 = vmatprep.mubr.f32.mxu0 0.0
        %2088 = vmatmul.mubr.f32.gmra.mrb[0].mxu0 %v1880
        %v2089 = vpop.f32.mrb[0].mxu0
        %v2090 = vadd.f32 %v1036, %v2089
        %v2091 = vpop.f32.mrb[0].mxu0
        %2092 = vmatprep.mubr.f32.mxu0 0.0
        %2093 = vmatmul.mubr.f32.gmra.mrb[0].mxu0 %v1883
        %v2094 = vpop.f32.mrb[0].mxu0
        %v2095 = vadd.f32 %v1036, %v2094
        %v2096 = vpop.f32.mrb[0].mxu0
        %2097 = vmatprep.mubr.f32.mxu0 0.0
        %2098 = vmatmul.mubr.f32.gmra.mrb[0].mxu0 %v1886
        %v2099 = vpop.f32.mrb[0].mxu0
        %v2100 = vadd.f32 %v1036, %v2099
        %v2101 = vpop.f32.mrb[0].mxu0
        %2102 = vmatprep.mubr.f32.mxu0 0.0
        %2103 = vmatmul.mubr.f32.gmra.mrb[0].mxu0 %v1889
        %v2104 = vpop.f32.mrb[0].mxu0
        %v2105 = vadd.f32 %v1036, %v2104
        %v2106 = vpop.f32.mrb[0].mxu0
        %2107 = vmatprep.mubr.f32.mxu0 0.0
        %2108 = vmatmul.mubr.f32.gmra.mrb[0].mxu0 %v1892
        %v2109 = vpop.f32.mrb[0].mxu0
        %v2110 = vadd.f32 %v1036, %v2109
        %v2111 = vpop.f32.mrb[0].mxu0
        %2112 = vmatprep.mubr.f32.mxu0 0.0
        %2113 = vmatmul.mubr.f32.gmra.mrb[0].mxu0 %v1895
        %v2114 = vpop.f32.mrb[0].mxu0
        %v2115 = vadd.f32 %v1036, %v2114
        %v2116 = vpop.f32.mrb[0].mxu0
        %2117 = vmatprep.mubr.f32.mxu0 0.0
        %2118 = vmatmul.mubr.f32.gmra.mrb[0].mxu0 %v1898
        %v2119 = vpop.f32.mrb[0].mxu0
        %v2120 = vadd.f32 %v1036, %v2119
        %v2121 = vpop.f32.mrb[0].mxu0
        %2122 = vmatprep.mubr.f32.mxu0 0.0
        %2123 = vmatmul.mubr.f32.gmra.mrb[0].mxu0 %v1901
        %v2124 = vpop.f32.mrb[0].mxu0
        %v2125 = vadd.f32 %v1036, %v2124
        %v2126 = vpop.f32.mrb[0].mxu0
        %2127 = vdwg.mxu0
        %v2128 = vmax.f32 %v1970, 0.0
        %v2129 = vmax.f32 %v1975, 0.0
        %v2130 = vmax.f32 %v1980, 0.0
        %v2131 = vmax.f32 %v1985, 0.0
        %v2132 = vmax.f32 %v1990, 0.0
        %v2133 = vmax.f32 %v1995, 0.0
        %v2134 = vmax.f32 %v2000, 0.0
        %v2135 = vmax.f32 %v2005, 0.0
        %v2136 = vmax.f32 %v2010, 0.0
        %v2137 = vmax.f32 %v2015, 0.0
        %v2138 = vmax.f32 %v2020, 0.0
        %v2139 = vmax.f32 %v2025, 0.0
        %v2140 = vmax.f32 %v2030, 0.0
        %v2141 = vmax.f32 %v2035, 0.0
        %v2142 = vmax.f32 %v2040, 0.0
        %v2143 = vmax.f32 %v2045, 0.0
        %v2144 = vmax.f32 %v2050, 0.0
        %v2145 = vmax.f32 %v2055, 0.0
        %v2146 = vmax.f32 %v2060, 0.0
        %v2147 = vmax.f32 %v2065, 0.0
        %v2148 = vmax.f32 %v2070, 0.0
        %v2149 = vmax.f32 %v2075, 0.0
        %v2150 = vmax.f32 %v2080, 0.0
        %v2151 = vmax.f32 %v2085, 0.0
        %v2152 = vmax.f32 %v2090, 0.0
        %v2153 = vmax.f32 %v2095, 0.0
        %v2154 = vmax.f32 %v2100, 0.0
        %v2155 = vmax.f32 %v2105, 0.0
        %v2156 = vmax.f32 %v2110, 0.0
        %v2157 = vmax.f32 %v2115, 0.0
        %v2158 = vmax.f32 %v2120, 0.0
        %v2159 = vmax.f32 %v2125, 0.0
        %v2160 = vsub.f32 %v2128, %v1390
        %v2161 = vsub.f32 %v2129, %v1391
        %v2162 = vsub.f32 %v2130, %v1392
        %v2163 = vsub.f32 %v2131, %v1393
        %v2164 = vsub.f32 %v2132, %v1394
        %v2165 = vsub.f32 %v2133, %v1395
        %v2166 = vsub.f32 %v2134, %v1396
        %v2167 = vsub.f32 %v2135, %v1397
        %v2168 = vsub.f32 %v2136, %v1398
        %v2169 = vsub.f32 %v2137, %v1399
        %v2170 = vsub.f32 %v2138, %v1400
        %v2171 = vsub.f32 %v2139, %v1401
        %v2172 = vsub.f32 %v2140, %v1402
        %v2173 = vsub.f32 %v2141, %v1403
        %v2174 = vsub.f32 %v2142, %v1404
        %v2175 = vsub.f32 %v2143, %v1405
        %v2176 = vsub.f32 %v2144, %v1406
        %v2177 = vsub.f32 %v2145, %v1407
        %v2178 = vsub.f32 %v2146, %v1408
        %v2179 = vsub.f32 %v2147, %v1409
        %v2180 = vsub.f32 %v2148, %v1410
        %v2181 = vsub.f32 %v2149, %v1411
        %v2182 = vsub.f32 %v2150, %v1412
        %v2183 = vsub.f32 %v2151, %v1413
        %v2184 = vsub.f32 %v2152, %v1414
        %v2185 = vsub.f32 %v2153, %v1415
        %v2186 = vsub.f32 %v2154, %v1416
        %v2187 = vsub.f32 %v2155, %v1417
        %v2188 = vsub.f32 %v2156, %v1418
        %v2189 = vsub.f32 %v2157, %v1419
        %v2190 = vsub.f32 %v2158, %v1420
        %v2191 = vsub.f32 %v2159, %v1421
        %v2192 = vadd.f32 %v643, %v2160
        %v2193 = vadd.f32 %v644, %v2161
        %v2194 = vadd.f32 %v645, %v2162
        %v2195 = vadd.f32 %v646, %v2163
        %v2196 = vadd.f32 %v647, %v2164
        %v2197 = vadd.f32 %v648, %v2165
        %v2198 = vadd.f32 %v649, %v2166
        %v2199 = vadd.f32 %v650, %v2167
        %v2200 = vadd.f32 %v651, %v2168
        %v2201 = vadd.f32 %v652, %v2169
        %v2202 = vadd.f32 %v653, %v2170
        %v2203 = vadd.f32 %v654, %v2171
        %v2204 = vadd.f32 %v655, %v2172
        %v2205 = vadd.f32 %v656, %v2173
        %v2206 = vadd.f32 %v657, %v2174
        %v2207 = vadd.f32 %v658, %v2175
        %v2208 = vadd.f32 %v659, %v2176
        %v2209 = vadd.f32 %v660, %v2177
        %v2210 = vadd.f32 %v661, %v2178
        %v2211 = vadd.f32 %v662, %v2179
        %v2212 = vadd.f32 %v663, %v2180
        %v2213 = vadd.f32 %v664, %v2181
        %v2214 = vadd.f32 %v665, %v2182
        %v2215 = vadd.f32 %v666, %v2183
        %v2216 = vadd.f32 %v667, %v2184
        %v2217 = vadd.f32 %v668, %v2185
        %v2218 = vadd.f32 %v669, %v2186
        %v2219 = vadd.f32 %v670, %v2187
        %v2220 = vadd.f32 %v671, %v2188
        %v2221 = vadd.f32 %v672, %v2189
        %v2222 = vadd.f32 %v673, %v2190
        %v2223 = vadd.f32 %v674, %v2191
        %v2225 = vsel %vm679, %v2192, 0
        %v2228 = vsel %vm679, %v2193, 0
        %v2231 = vsel %vm679, %v2194, 0
        %v2234 = vsel %vm679, %v2195, 0
        %v2237 = vsel %vm679, %v2196, 0
        %v2240 = vsel %vm679, %v2197, 0
        %v2243 = vsel %vm679, %v2198, 0
        %v2246 = vsel %vm679, %v2199, 0
        %v2249 = vsel %vm679, %v2200, 0
        %v2252 = vsel %vm679, %v2201, 0
        %v2255 = vsel %vm679, %v2202, 0
        %v2258 = vsel %vm679, %v2203, 0
        %v2261 = vsel %vm679, %v2204, 0
        %v2264 = vsel %vm679, %v2205, 0
        %v2267 = vsel %vm679, %v2206, 0
        %v2270 = vsel %vm679, %v2207, 0
        %v2273 = vsel %vm679, %v2208, 0
        %v2276 = vsel %vm679, %v2209, 0
        %v2279 = vsel %vm679, %v2210, 0
        %v2282 = vsel %vm679, %v2211, 0
        %v2285 = vsel %vm679, %v2212, 0
        %v2288 = vsel %vm679, %v2213, 0
        %v2291 = vsel %vm679, %v2214, 0
        %v2294 = vsel %vm679, %v2215, 0
        %v2297 = vsel %vm679, %v2216, 0
        %v2300 = vsel %vm679, %v2217, 0
        %v2303 = vsel %vm679, %v2218, 0
        %v2306 = vsel %vm679, %v2219, 0
        %v2309 = vsel %vm679, %v2220, 0
        %v2312 = vsel %vm679, %v2221, 0
        %v2315 = vsel %vm679, %v2222, 0
        %v2318 = vsel %vm679, %v2223, 0
        %2320 = vmatprep.subr.mxu0 0.0
        %2321 = vmatpush1.msra.mxu0 %v254
        %2322 = vmatprep.subr.mxu0 0.0
        %2323 = vmatpush1.msra.mxu0 %v255
        %2324 = vmatprep.subr.mxu0 0.0
        %2325 = vmatpush1.msra.mxu0 %v256
        %2326 = vmatprep.subr.mxu0 0.0
        %2327 = vmatpush1.msra.mxu0 %v257
        %2328 = vmatprep.subr.mxu0 0.0
        %2329 = vmatpush1.msra.mxu0 0.0
        %2330 = vmatprep.subr.mxu0 0.0
        %2331 = vmatpush1.msra.mxu0 0.0
        %2332 = vmatprep.subr.mxu0 0.0
        %2333 = vmatpush1.msra.mxu0 0.0
        %2334 = vmatprep.subr.mxu0 0.0
        %2335 = vmatpush1.msra.mxu0 0.0
        %2336 = vmatprep.subr.mxu0 0.0
        %2337 = vmatpush1.msra.mxu0 0.0
        %2338 = vmatprep.subr.mxu0 0.0
        %2339 = vmatpush1.msra.mxu0 0.0
        %2340 = vmatprep.subr.mxu0 0.0
        %2341 = vmatpush1.msra.mxu0 0.0
        %2342 = vmatprep.subr.mxu0 0.0
        %2343 = vmatpush1.msra.mxu0 0.0
        %2344 = vmatprep.subr.mxu0 0.0
        %2345 = vmatpush1.msra.mxu0 0.0
        %2346 = vmatprep.subr.mxu0 0.0
        %2347 = vmatpush1.msra.mxu0 0.0
        %2348 = vmatprep.subr.mxu0 0.0
        %2349 = vmatpush1.msra.mxu0 0.0
        %2350 = vmatprep.subr.mxu0 0.0
        %2351 = vmatpush1.msra.mxu0 0.0
        %2352 = vmatprep.subr.mxu0 0.0
        %2353 = vmatpush1.msra.mxu0 0.0
        %2354 = vmatprep.subr.mxu0 0.0
        %2355 = vmatpush1.msra.mxu0 0.0
        %2356 = vmatprep.subr.mxu0 0.0
        %2357 = vmatpush1.msra.mxu0 0.0
        %2358 = vmatprep.subr.mxu0 0.0
        %2359 = vmatpush1.msra.mxu0 0.0
        %2360 = vmatprep.subr.mxu0 0.0
        %2361 = vmatpush1.msra.mxu0 0.0
        %2362 = vmatprep.subr.mxu0 0.0
        %2363 = vmatpush1.msra.mxu0 0.0
        %2364 = vmatprep.subr.mxu0 0.0
        %2365 = vmatpush1.msra.mxu0 0.0
        %2366 = vmatprep.subr.mxu0 0.0
        %2367 = vmatpush1.msra.mxu0 0.0
        %2368 = vmatprep.subr.mxu0 0.0
        %2369 = vmatpush1.msra.mxu0 0.0
        %2370 = vmatprep.subr.mxu0 0.0
        %2371 = vmatpush1.msra.mxu0 0.0
        %2372 = vmatprep.subr.mxu0 0.0
        %2373 = vmatpush1.msra.mxu0 0.0
        %2374 = vmatprep.subr.mxu0 0.0
        %2375 = vmatpush1.msra.mxu0 0.0
        %2376 = vmatprep.subr.mxu0 0.0
        %2377 = vmatpush1.msra.mxu0 0.0
        %2378 = vmatprep.subr.mxu0 0.0
        %2379 = vmatpush1.msra.mxu0 0.0
        %2380 = vmatprep.subr.mxu0 0.0
        %2381 = vmatpush1.msra.mxu0 0.0
        %2382 = vmatprep.subr.mxu0 0.0
        %2383 = vmatpush1.msra.mxu0 0.0
        %2384 = vmatprep.mubr.f32.mxu0 0.0
        %2385 = vmatmul.mubr.f32.gmra.mrb[0].mxu0 %v2225
        %v2386 = vpop.f32.mrb[0].mxu0
        %v2387 = vadd.f32 %v678, %v2386
        %v2388 = vpop.f32.mrb[0].mxu0
        %2389 = vmatprep.mubr.f32.mxu0 0.0
        %2390 = vmatmul.mubr.f32.gmra.mrb[0].mxu0 %v2228
        %v2391 = vpop.f32.mrb[0].mxu0
        %v2392 = vadd.f32 %v678, %v2391
        %v2393 = vpop.f32.mrb[0].mxu0
        %2394 = vmatprep.mubr.f32.mxu0 0.0
        %2395 = vmatmul.mubr.f32.gmra.mrb[0].mxu0 %v2231
        %v2396 = vpop.f32.mrb[0].mxu0
        %v2397 = vadd.f32 %v678, %v2396
        %v2398 = vpop.f32.mrb[0].mxu0
        %2399 = vmatprep.mubr.f32.mxu0 0.0
        %2400 = vmatmul.mubr.f32.gmra.mrb[0].mxu0 %v2234
        %v2401 = vpop.f32.mrb[0].mxu0
        %v2402 = vadd.f32 %v678, %v2401
        %v2403 = vpop.f32.mrb[0].mxu0
        %2404 = vmatprep.mubr.f32.mxu0 0.0
        %2405 = vmatmul.mubr.f32.gmra.mrb[0].mxu0 %v2237
        %v2406 = vpop.f32.mrb[0].mxu0
        %v2407 = vadd.f32 %v678, %v2406
        %v2408 = vpop.f32.mrb[0].mxu0
        %2409 = vmatprep.mubr.f32.mxu0 0.0
        %2410 = vmatmul.mubr.f32.gmra.mrb[0].mxu0 %v2240
        %v2411 = vpop.f32.mrb[0].mxu0
        %v2412 = vadd.f32 %v678, %v2411
        %v2413 = vpop.f32.mrb[0].mxu0
        %2414 = vmatprep.mubr.f32.mxu0 0.0
        %2415 = vmatmul.mubr.f32.gmra.mrb[0].mxu0 %v2243
        %v2416 = vpop.f32.mrb[0].mxu0
        %v2417 = vadd.f32 %v678, %v2416
        %v2418 = vpop.f32.mrb[0].mxu0
        %2419 = vmatprep.mubr.f32.mxu0 0.0
        %2420 = vmatmul.mubr.f32.gmra.mrb[0].mxu0 %v2246
        %v2421 = vpop.f32.mrb[0].mxu0
        %v2422 = vadd.f32 %v678, %v2421
        %v2423 = vpop.f32.mrb[0].mxu0
        %2424 = vmatprep.mubr.f32.mxu0 0.0
        %2425 = vmatmul.mubr.f32.gmra.mrb[0].mxu0 %v2249
        %v2426 = vpop.f32.mrb[0].mxu0
        %v2427 = vadd.f32 %v678, %v2426
        %v2428 = vpop.f32.mrb[0].mxu0
        %2429 = vmatprep.mubr.f32.mxu0 0.0
        %2430 = vmatmul.mubr.f32.gmra.mrb[0].mxu0 %v2252
        %v2431 = vpop.f32.mrb[0].mxu0
        %v2432 = vadd.f32 %v678, %v2431
        %v2433 = vpop.f32.mrb[0].mxu0
        %2434 = vmatprep.mubr.f32.mxu0 0.0
        %2435 = vmatmul.mubr.f32.gmra.mrb[0].mxu0 %v2255
        %v2436 = vpop.f32.mrb[0].mxu0
        %v2437 = vadd.f32 %v678, %v2436
        %v2438 = vpop.f32.mrb[0].mxu0
        %2439 = vmatprep.mubr.f32.mxu0 0.0
        %2440 = vmatmul.mubr.f32.gmra.mrb[0].mxu0 %v2258
        %v2441 = vpop.f32.mrb[0].mxu0
        %v2442 = vadd.f32 %v678, %v2441
        %v2443 = vpop.f32.mrb[0].mxu0
        %2444 = vmatprep.mubr.f32.mxu0 0.0
        %2445 = vmatmul.mubr.f32.gmra.mrb[0].mxu0 %v2261
        %v2446 = vpop.f32.mrb[0].mxu0
        %v2447 = vadd.f32 %v678, %v2446
        %v2448 = vpop.f32.mrb[0].mxu0
        %2449 = vmatprep.mubr.f32.mxu0 0.0
        %2450 = vmatmul.mubr.f32.gmra.mrb[0].mxu0 %v2264
        %v2451 = vpop.f32.mrb[0].mxu0
        %v2452 = vadd.f32 %v678, %v2451
        %v2453 = vpop.f32.mrb[0].mxu0
        %2454 = vmatprep.mubr.f32.mxu0 0.0
        %2455 = vmatmul.mubr.f32.gmra.mrb[0].mxu0 %v2267
        %v2456 = vpop.f32.mrb[0].mxu0
        %v2457 = vadd.f32 %v678, %v2456
        %v2458 = vpop.f32.mrb[0].mxu0
        %2459 = vmatprep.mubr.f32.mxu0 0.0
        %2460 = vmatmul.mubr.f32.gmra.mrb[0].mxu0 %v2270
        %v2461 = vpop.f32.mrb[0].mxu0
        %v2462 = vadd.f32 %v678, %v2461
        %v2463 = vpop.f32.mrb[0].mxu0
        %2464 = vmatprep.mubr.f32.mxu0 0.0
        %2465 = vmatmul.mubr.f32.gmra.mrb[0].mxu0 %v2273
        %v2466 = vpop.f32.mrb[0].mxu0
        %v2467 = vadd.f32 %v678, %v2466
        %v2468 = vpop.f32.mrb[0].mxu0
        %2469 = vmatprep.mubr.f32.mxu0 0.0
        %2470 = vmatmul.mubr.f32.gmra.mrb[0].mxu0 %v2276
        %v2471 = vpop.f32.mrb[0].mxu0
        %v2472 = vadd.f32 %v678, %v2471
        %v2473 = vpop.f32.mrb[0].mxu0
        %2474 = vmatprep.mubr.f32.mxu0 0.0
        %2475 = vmatmul.mubr.f32.gmra.mrb[0].mxu0 %v2279
        %v2476 = vpop.f32.mrb[0].mxu0
        %v2477 = vadd.f32 %v678, %v2476
        %v2478 = vpop.f32.mrb[0].mxu0
        %2479 = vmatprep.mubr.f32.mxu0 0.0
        %2480 = vmatmul.mubr.f32.gmra.mrb[0].mxu0 %v2282
        %v2481 = vpop.f32.mrb[0].mxu0
        %v2482 = vadd.f32 %v678, %v2481
        %v2483 = vpop.f32.mrb[0].mxu0
        %2484 = vmatprep.mubr.f32.mxu0 0.0
        %2485 = vmatmul.mubr.f32.gmra.mrb[0].mxu0 %v2285
        %v2486 = vpop.f32.mrb[0].mxu0
        %v2487 = vadd.f32 %v678, %v2486
        %v2488 = vpop.f32.mrb[0].mxu0
        %2489 = vmatprep.mubr.f32.mxu0 0.0
        %2490 = vmatmul.mubr.f32.gmra.mrb[0].mxu0 %v2288
        %v2491 = vpop.f32.mrb[0].mxu0
        %v2492 = vadd.f32 %v678, %v2491
        %v2493 = vpop.f32.mrb[0].mxu0
        %2494 = vmatprep.mubr.f32.mxu0 0.0
        %2495 = vmatmul.mubr.f32.gmra.mrb[0].mxu0 %v2291
        %v2496 = vpop.f32.mrb[0].mxu0
        %v2497 = vadd.f32 %v678, %v2496
        %v2498 = vpop.f32.mrb[0].mxu0
        %2499 = vmatprep.mubr.f32.mxu0 0.0
        %2500 = vmatmul.mubr.f32.gmra.mrb[0].mxu0 %v2294
        %v2501 = vpop.f32.mrb[0].mxu0
        %v2502 = vadd.f32 %v678, %v2501
        %v2503 = vpop.f32.mrb[0].mxu0
        %2504 = vmatprep.mubr.f32.mxu0 0.0
        %2505 = vmatmul.mubr.f32.gmra.mrb[0].mxu0 %v2297
        %v2506 = vpop.f32.mrb[0].mxu0
        %v2507 = vadd.f32 %v678, %v2506
        %v2508 = vpop.f32.mrb[0].mxu0
        %2509 = vmatprep.mubr.f32.mxu0 0.0
        %2510 = vmatmul.mubr.f32.gmra.mrb[0].mxu0 %v2300
        %v2511 = vpop.f32.mrb[0].mxu0
        %v2512 = vadd.f32 %v678, %v2511
        %v2513 = vpop.f32.mrb[0].mxu0
        %2514 = vmatprep.mubr.f32.mxu0 0.0
        %2515 = vmatmul.mubr.f32.gmra.mrb[0].mxu0 %v2303
        %v2516 = vpop.f32.mrb[0].mxu0
        %v2517 = vadd.f32 %v678, %v2516
        %v2518 = vpop.f32.mrb[0].mxu0
        %2519 = vmatprep.mubr.f32.mxu0 0.0
        %2520 = vmatmul.mubr.f32.gmra.mrb[0].mxu0 %v2306
        %v2521 = vpop.f32.mrb[0].mxu0
        %v2522 = vadd.f32 %v678, %v2521
        %v2523 = vpop.f32.mrb[0].mxu0
        %2524 = vmatprep.mubr.f32.mxu0 0.0
        %2525 = vmatmul.mubr.f32.gmra.mrb[0].mxu0 %v2309
        %v2526 = vpop.f32.mrb[0].mxu0
        %v2527 = vadd.f32 %v678, %v2526
        %v2528 = vpop.f32.mrb[0].mxu0
        %2529 = vmatprep.mubr.f32.mxu0 0.0
        %2530 = vmatmul.mubr.f32.gmra.mrb[0].mxu0 %v2312
        %v2531 = vpop.f32.mrb[0].mxu0
        %v2532 = vadd.f32 %v678, %v2531
        %v2533 = vpop.f32.mrb[0].mxu0
        %2534 = vmatprep.mubr.f32.mxu0 0.0
        %2535 = vmatmul.mubr.f32.gmra.mrb[0].mxu0 %v2315
        %v2536 = vpop.f32.mrb[0].mxu0
        %v2537 = vadd.f32 %v678, %v2536
        %v2538 = vpop.f32.mrb[0].mxu0
        %2539 = vmatprep.mubr.f32.mxu0 0.0
        %2540 = vmatmul.mubr.f32.gmra.mrb[0].mxu0 %v2318
        %v2541 = vpop.f32.mrb[0].mxu0
        %v2542 = vadd.f32 %v678, %v2541
        %v2543 = vpop.f32.mrb[0].mxu0
        %2544 = vdwg.mxu0
        %v2545 = vmax.f32 %v2387, 0.0
        %v2546 = vmax.f32 %v2392, 0.0
        %v2547 = vmax.f32 %v2397, 0.0
        %v2548 = vmax.f32 %v2402, 0.0
        %v2549 = vmax.f32 %v2407, 0.0
        %v2550 = vmax.f32 %v2412, 0.0
        %v2551 = vmax.f32 %v2417, 0.0
        %v2552 = vmax.f32 %v2422, 0.0
        %v2553 = vmax.f32 %v2427, 0.0
        %v2554 = vmax.f32 %v2432, 0.0
        %v2555 = vmax.f32 %v2437, 0.0
        %v2556 = vmax.f32 %v2442, 0.0
        %v2557 = vmax.f32 %v2447, 0.0
        %v2558 = vmax.f32 %v2452, 0.0
        %v2559 = vmax.f32 %v2457, 0.0
        %v2560 = vmax.f32 %v2462, 0.0
        %v2561 = vmax.f32 %v2467, 0.0
        %v2562 = vmax.f32 %v2472, 0.0
        %v2563 = vmax.f32 %v2477, 0.0
        %v2564 = vmax.f32 %v2482, 0.0
        %v2565 = vmax.f32 %v2487, 0.0
        %v2566 = vmax.f32 %v2492, 0.0
        %v2567 = vmax.f32 %v2497, 0.0
        %v2568 = vmax.f32 %v2502, 0.0
        %v2569 = vmax.f32 %v2507, 0.0
        %v2570 = vmax.f32 %v2512, 0.0
        %v2571 = vmax.f32 %v2517, 0.0
        %v2572 = vmax.f32 %v2522, 0.0
        %v2573 = vmax.f32 %v2527, 0.0
        %v2574 = vmax.f32 %v2532, 0.0
        %v2575 = vmax.f32 %v2537, 0.0
        %v2576 = vmax.f32 %v2542, 0.0
        %v2578 = vsel %vm679, %v2545, 0
        %v2581 = vsel %vm679, %v2546, 0
        %v2584 = vsel %vm679, %v2547, 0
        %v2587 = vsel %vm679, %v2548, 0
        %v2590 = vsel %vm679, %v2549, 0
        %v2593 = vsel %vm679, %v2550, 0
        %v2596 = vsel %vm679, %v2551, 0
        %v2599 = vsel %vm679, %v2552, 0
        %v2602 = vsel %vm679, %v2553, 0
        %v2605 = vsel %vm679, %v2554, 0
        %v2608 = vsel %vm679, %v2555, 0
        %v2611 = vsel %vm679, %v2556, 0
        %v2614 = vsel %vm679, %v2557, 0
        %v2617 = vsel %vm679, %v2558, 0
        %v2620 = vsel %vm679, %v2559, 0
        %v2623 = vsel %vm679, %v2560, 0
        %v2626 = vsel %vm679, %v2561, 0
        %v2629 = vsel %vm679, %v2562, 0
        %v2632 = vsel %vm679, %v2563, 0
        %v2635 = vsel %vm679, %v2564, 0
        %v2638 = vsel %vm679, %v2565, 0
        %v2641 = vsel %vm679, %v2566, 0
        %v2644 = vsel %vm679, %v2567, 0
        %v2647 = vsel %vm679, %v2568, 0
        %v2650 = vsel %vm679, %v2569, 0
        %v2653 = vsel %vm679, %v2570, 0
        %v2656 = vsel %vm679, %v2571, 0
        %v2659 = vsel %vm679, %v2572, 0
        %v2662 = vsel %vm679, %v2573, 0
        %v2665 = vsel %vm679, %v2574, 0
        %v2668 = vsel %vm679, %v2575, 0
        %v2671 = vsel %vm679, %v2576, 0
        %2673 = vmatprep.subr.mxu0 0.0
        %2674 = vmatpush1.msra.mxu0 %v259
        %2675 = vmatprep.subr.mxu0 0.0
        %2676 = vmatpush1.msra.mxu0 %v260
        %2677 = vmatprep.subr.mxu0 0.0
        %2678 = vmatpush1.msra.mxu0 %v261
        %2679 = vmatprep.subr.mxu0 0.0
        %2680 = vmatpush1.msra.mxu0 %v262
        %2681 = vmatprep.subr.mxu0 0.0
        %2682 = vmatpush1.msra.mxu0 0.0
        %2683 = vmatprep.subr.mxu0 0.0
        %2684 = vmatpush1.msra.mxu0 0.0
        %2685 = vmatprep.subr.mxu0 0.0
        %2686 = vmatpush1.msra.mxu0 0.0
        %2687 = vmatprep.subr.mxu0 0.0
        %2688 = vmatpush1.msra.mxu0 0.0
        %2689 = vmatprep.subr.mxu0 0.0
        %2690 = vmatpush1.msra.mxu0 0.0
        %2691 = vmatprep.subr.mxu0 0.0
        %2692 = vmatpush1.msra.mxu0 0.0
        %2693 = vmatprep.subr.mxu0 0.0
        %2694 = vmatpush1.msra.mxu0 0.0
        %2695 = vmatprep.subr.mxu0 0.0
        %2696 = vmatpush1.msra.mxu0 0.0
        %2697 = vmatprep.subr.mxu0 0.0
        %2698 = vmatpush1.msra.mxu0 0.0
        %2699 = vmatprep.subr.mxu0 0.0
        %2700 = vmatpush1.msra.mxu0 0.0
        %2701 = vmatprep.subr.mxu0 0.0
        %2702 = vmatpush1.msra.mxu0 0.0
        %2703 = vmatprep.subr.mxu0 0.0
        %2704 = vmatpush1.msra.mxu0 0.0
        %2705 = vmatprep.subr.mxu0 0.0
        %2706 = vmatpush1.msra.mxu0 0.0
        %2707 = vmatprep.subr.mxu0 0.0
        %2708 = vmatpush1.msra.mxu0 0.0
        %2709 = vmatprep.subr.mxu0 0.0
        %2710 = vmatpush1.msra.mxu0 0.0
        %2711 = vmatprep.subr.mxu0 0.0
        %2712 = vmatpush1.msra.mxu0 0.0
        %2713 = vmatprep.subr.mxu0 0.0
        %2714 = vmatpush1.msra.mxu0 0.0
        %2715 = vmatprep.subr.mxu0 0.0
        %2716 = vmatpush1.msra.mxu0 0.0
        %2717 = vmatprep.subr.mxu0 0.0
        %2718 = vmatpush1.msra.mxu0 0.0
        %2719 = vmatprep.subr.mxu0 0.0
        %2720 = vmatpush1.msra.mxu0 0.0
        %2721 = vmatprep.subr.mxu0 0.0
        %2722 = vmatpush1.msra.mxu0 0.0
        %2723 = vmatprep.subr.mxu0 0.0
        %2724 = vmatpush1.msra.mxu0 0.0
        %2725 = vmatprep.subr.mxu0 0.0
        %2726 = vmatpush1.msra.mxu0 0.0
        %2727 = vmatprep.subr.mxu0 0.0
        %2728 = vmatpush1.msra.mxu0 0.0
        %2729 = vmatprep.subr.mxu0 0.0
        %2730 = vmatpush1.msra.mxu0 0.0
        %2731 = vmatprep.subr.mxu0 0.0
        %2732 = vmatpush1.msra.mxu0 0.0
        %2733 = vmatprep.subr.mxu0 0.0
        %2734 = vmatpush1.msra.mxu0 0.0
        %2735 = vmatprep.subr.mxu0 0.0
        %2736 = vmatpush1.msra.mxu0 0.0
        %2737 = vmatprep.mubr.f32.mxu0 0.0
        %2738 = vmatmul.mubr.f32.gmra.mrb[0].mxu0 %v2578
        %v2739 = vpop.f32.mrb[0].mxu0
        %v2740 = vadd.f32 %v1036, %v2739
        %v2741 = vpop.f32.mrb[0].mxu0
        %2742 = vmatprep.mubr.f32.mxu0 0.0
        %2743 = vmatmul.mubr.f32.gmra.mrb[0].mxu0 %v2581
        %v2744 = vpop.f32.mrb[0].mxu0
        %v2745 = vadd.f32 %v1036, %v2744
        %v2746 = vpop.f32.mrb[0].mxu0
        %2747 = vmatprep.mubr.f32.mxu0 0.0
        %2748 = vmatmul.mubr.f32.gmra.mrb[0].mxu0 %v2584
        %v2749 = vpop.f32.mrb[0].mxu0
        %v2750 = vadd.f32 %v1036, %v2749
        %v2751 = vpop.f32.mrb[0].mxu0
        %2752 = vmatprep.mubr.f32.mxu0 0.0
        %2753 = vmatmul.mubr.f32.gmra.mrb[0].mxu0 %v2587
        %v2754 = vpop.f32.mrb[0].mxu0
        %v2755 = vadd.f32 %v1036, %v2754
        %v2756 = vpop.f32.mrb[0].mxu0
        %2757 = vmatprep.mubr.f32.mxu0 0.0
        %2758 = vmatmul.mubr.f32.gmra.mrb[0].mxu0 %v2590
        %v2759 = vpop.f32.mrb[0].mxu0
        %v2760 = vadd.f32 %v1036, %v2759
        %v2761 = vpop.f32.mrb[0].mxu0
        %2762 = vmatprep.mubr.f32.mxu0 0.0
        %2763 = vmatmul.mubr.f32.gmra.mrb[0].mxu0 %v2593
        %v2764 = vpop.f32.mrb[0].mxu0
        %v2765 = vadd.f32 %v1036, %v2764
        %v2766 = vpop.f32.mrb[0].mxu0
        %2767 = vmatprep.mubr.f32.mxu0 0.0
        %2768 = vmatmul.mubr.f32.gmra.mrb[0].mxu0 %v2596
        %v2769 = vpop.f32.mrb[0].mxu0
        %v2770 = vadd.f32 %v1036, %v2769
        %v2771 = vpop.f32.mrb[0].mxu0
        %2772 = vmatprep.mubr.f32.mxu0 0.0
        %2773 = vmatmul.mubr.f32.gmra.mrb[0].mxu0 %v2599
        %v2774 = vpop.f32.mrb[0].mxu0
        %v2775 = vadd.f32 %v1036, %v2774
        %v2776 = vpop.f32.mrb[0].mxu0
        %2777 = vmatprep.mubr.f32.mxu0 0.0
        %2778 = vmatmul.mubr.f32.gmra.mrb[0].mxu0 %v2602
        %v2779 = vpop.f32.mrb[0].mxu0
        %v2780 = vadd.f32 %v1036, %v2779
        %v2781 = vpop.f32.mrb[0].mxu0
        %2782 = vmatprep.mubr.f32.mxu0 0.0
        %2783 = vmatmul.mubr.f32.gmra.mrb[0].mxu0 %v2605
        %v2784 = vpop.f32.mrb[0].mxu0
        %v2785 = vadd.f32 %v1036, %v2784
        %v2786 = vpop.f32.mrb[0].mxu0
        %2787 = vmatprep.mubr.f32.mxu0 0.0
        %2788 = vmatmul.mubr.f32.gmra.mrb[0].mxu0 %v2608
        %v2789 = vpop.f32.mrb[0].mxu0
        %v2790 = vadd.f32 %v1036, %v2789
        %v2791 = vpop.f32.mrb[0].mxu0
        %2792 = vmatprep.mubr.f32.mxu0 0.0
        %2793 = vmatmul.mubr.f32.gmra.mrb[0].mxu0 %v2611
        %v2794 = vpop.f32.mrb[0].mxu0
        %v2795 = vadd.f32 %v1036, %v2794
        %v2796 = vpop.f32.mrb[0].mxu0
        %2797 = vmatprep.mubr.f32.mxu0 0.0
        %2798 = vmatmul.mubr.f32.gmra.mrb[0].mxu0 %v2614
        %v2799 = vpop.f32.mrb[0].mxu0
        %v2800 = vadd.f32 %v1036, %v2799
        %v2801 = vpop.f32.mrb[0].mxu0
        %2802 = vmatprep.mubr.f32.mxu0 0.0
        %2803 = vmatmul.mubr.f32.gmra.mrb[0].mxu0 %v2617
        %v2804 = vpop.f32.mrb[0].mxu0
        %v2805 = vadd.f32 %v1036, %v2804
        %v2806 = vpop.f32.mrb[0].mxu0
        %2807 = vmatprep.mubr.f32.mxu0 0.0
        %2808 = vmatmul.mubr.f32.gmra.mrb[0].mxu0 %v2620
        %v2809 = vpop.f32.mrb[0].mxu0
        %v2810 = vadd.f32 %v1036, %v2809
        %v2811 = vpop.f32.mrb[0].mxu0
        %2812 = vmatprep.mubr.f32.mxu0 0.0
        %2813 = vmatmul.mubr.f32.gmra.mrb[0].mxu0 %v2623
        %v2814 = vpop.f32.mrb[0].mxu0
        %v2815 = vadd.f32 %v1036, %v2814
        %v2816 = vpop.f32.mrb[0].mxu0
        %2817 = vmatprep.mubr.f32.mxu0 0.0
        %2818 = vmatmul.mubr.f32.gmra.mrb[0].mxu0 %v2626
        %v2819 = vpop.f32.mrb[0].mxu0
        %v2820 = vadd.f32 %v1036, %v2819
        %v2821 = vpop.f32.mrb[0].mxu0
        %2822 = vmatprep.mubr.f32.mxu0 0.0
        %2823 = vmatmul.mubr.f32.gmra.mrb[0].mxu0 %v2629
        %v2824 = vpop.f32.mrb[0].mxu0
        %v2825 = vadd.f32 %v1036, %v2824
        %v2826 = vpop.f32.mrb[0].mxu0
        %2827 = vmatprep.mubr.f32.mxu0 0.0
        %2828 = vmatmul.mubr.f32.gmra.mrb[0].mxu0 %v2632
        %v2829 = vpop.f32.mrb[0].mxu0
        %v2830 = vadd.f32 %v1036, %v2829
        %v2831 = vpop.f32.mrb[0].mxu0
        %2832 = vmatprep.mubr.f32.mxu0 0.0
        %2833 = vmatmul.mubr.f32.gmra.mrb[0].mxu0 %v2635
        %v2834 = vpop.f32.mrb[0].mxu0
        %v2835 = vadd.f32 %v1036, %v2834
        %v2836 = vpop.f32.mrb[0].mxu0
        %2837 = vmatprep.mubr.f32.mxu0 0.0
        %2838 = vmatmul.mubr.f32.gmra.mrb[0].mxu0 %v2638
        %v2839 = vpop.f32.mrb[0].mxu0
        %v2840 = vadd.f32 %v1036, %v2839
        %v2841 = vpop.f32.mrb[0].mxu0
        %2842 = vmatprep.mubr.f32.mxu0 0.0
        %2843 = vmatmul.mubr.f32.gmra.mrb[0].mxu0 %v2641
        %v2844 = vpop.f32.mrb[0].mxu0
        %v2845 = vadd.f32 %v1036, %v2844
        %v2846 = vpop.f32.mrb[0].mxu0
        %2847 = vmatprep.mubr.f32.mxu0 0.0
        %2848 = vmatmul.mubr.f32.gmra.mrb[0].mxu0 %v2644
        %v2849 = vpop.f32.mrb[0].mxu0
        %v2850 = vadd.f32 %v1036, %v2849
        %v2851 = vpop.f32.mrb[0].mxu0
        %2852 = vmatprep.mubr.f32.mxu0 0.0
        %2853 = vmatmul.mubr.f32.gmra.mrb[0].mxu0 %v2647
        %v2854 = vpop.f32.mrb[0].mxu0
        %v2855 = vadd.f32 %v1036, %v2854
        %v2856 = vpop.f32.mrb[0].mxu0
        %2857 = vmatprep.mubr.f32.mxu0 0.0
        %2858 = vmatmul.mubr.f32.gmra.mrb[0].mxu0 %v2650
        %v2859 = vpop.f32.mrb[0].mxu0
        %v2860 = vadd.f32 %v1036, %v2859
        %v2861 = vpop.f32.mrb[0].mxu0
        %2862 = vmatprep.mubr.f32.mxu0 0.0
        %2863 = vmatmul.mubr.f32.gmra.mrb[0].mxu0 %v2653
        %v2864 = vpop.f32.mrb[0].mxu0
        %v2865 = vadd.f32 %v1036, %v2864
        %v2866 = vpop.f32.mrb[0].mxu0
        %2867 = vmatprep.mubr.f32.mxu0 0.0
        %2868 = vmatmul.mubr.f32.gmra.mrb[0].mxu0 %v2656
        %v2869 = vpop.f32.mrb[0].mxu0
        %v2870 = vadd.f32 %v1036, %v2869
        %v2871 = vpop.f32.mrb[0].mxu0
        %2872 = vmatprep.mubr.f32.mxu0 0.0
        %2873 = vmatmul.mubr.f32.gmra.mrb[0].mxu0 %v2659
        %v2874 = vpop.f32.mrb[0].mxu0
        %v2875 = vadd.f32 %v1036, %v2874
        %v2876 = vpop.f32.mrb[0].mxu0
        %2877 = vmatprep.mubr.f32.mxu0 0.0
        %2878 = vmatmul.mubr.f32.gmra.mrb[0].mxu0 %v2662
        %v2879 = vpop.f32.mrb[0].mxu0
        %v2880 = vadd.f32 %v1036, %v2879
        %v2881 = vpop.f32.mrb[0].mxu0
        %2882 = vmatprep.mubr.f32.mxu0 0.0
        %2883 = vmatmul.mubr.f32.gmra.mrb[0].mxu0 %v2665
        %v2884 = vpop.f32.mrb[0].mxu0
        %v2885 = vadd.f32 %v1036, %v2884
        %v2886 = vpop.f32.mrb[0].mxu0
        %2887 = vmatprep.mubr.f32.mxu0 0.0
        %2888 = vmatmul.mubr.f32.gmra.mrb[0].mxu0 %v2668
        %v2889 = vpop.f32.mrb[0].mxu0
        %v2890 = vadd.f32 %v1036, %v2889
        %v2891 = vpop.f32.mrb[0].mxu0
        %2892 = vmatprep.mubr.f32.mxu0 0.0
        %2893 = vmatmul.mubr.f32.gmra.mrb[0].mxu0 %v2671
        %v2894 = vpop.f32.mrb[0].mxu0
        %v2895 = vadd.f32 %v1036, %v2894
        %v2896 = vpop.f32.mrb[0].mxu0
        %2897 = vdwg.mxu0
        %v2898 = vmax.f32 %v2740, 0.0
        %v2899 = vmax.f32 %v2745, 0.0
        %v2900 = vmax.f32 %v2750, 0.0
        %v2901 = vmax.f32 %v2755, 0.0
        %v2902 = vmax.f32 %v2760, 0.0
        %v2903 = vmax.f32 %v2765, 0.0
        %v2904 = vmax.f32 %v2770, 0.0
        %v2905 = vmax.f32 %v2775, 0.0
        %v2906 = vmax.f32 %v2780, 0.0
        %v2907 = vmax.f32 %v2785, 0.0
        %v2908 = vmax.f32 %v2790, 0.0
        %v2909 = vmax.f32 %v2795, 0.0
        %v2910 = vmax.f32 %v2800, 0.0
        %v2911 = vmax.f32 %v2805, 0.0
        %v2912 = vmax.f32 %v2810, 0.0
        %v2913 = vmax.f32 %v2815, 0.0
        %v2914 = vmax.f32 %v2820, 0.0
        %v2915 = vmax.f32 %v2825, 0.0
        %v2916 = vmax.f32 %v2830, 0.0
        %v2917 = vmax.f32 %v2835, 0.0
        %v2918 = vmax.f32 %v2840, 0.0
        %v2919 = vmax.f32 %v2845, 0.0
        %v2920 = vmax.f32 %v2850, 0.0
        %v2921 = vmax.f32 %v2855, 0.0
        %v2922 = vmax.f32 %v2860, 0.0
        %v2923 = vmax.f32 %v2865, 0.0
        %v2924 = vmax.f32 %v2870, 0.0
        %v2925 = vmax.f32 %v2875, 0.0
        %v2926 = vmax.f32 %v2880, 0.0
        %v2927 = vmax.f32 %v2885, 0.0
        %v2928 = vmax.f32 %v2890, 0.0
        %v2929 = vmax.f32 %v2895, 0.0
        %v2930 = vsub.f32 %v1358, %v2128
        %v2931 = vsub.f32 %v1359, %v2129
        %v2932 = vsub.f32 %v1360, %v2130
        %v2933 = vsub.f32 %v1361, %v2131
        %v2934 = vsub.f32 %v1362, %v2132
        %v2935 = vsub.f32 %v1363, %v2133
        %v2936 = vsub.f32 %v1364, %v2134
        %v2937 = vsub.f32 %v1365, %v2135
        %v2938 = vsub.f32 %v1366, %v2136
        %v2939 = vsub.f32 %v1367, %v2137
        %v2940 = vsub.f32 %v1368, %v2138
        %v2941 = vsub.f32 %v1369, %v2139
        %v2942 = vsub.f32 %v1370, %v2140
        %v2943 = vsub.f32 %v1371, %v2141
        %v2944 = vsub.f32 %v1372, %v2142
        %v2945 = vsub.f32 %v1373, %v2143
        %v2946 = vsub.f32 %v1374, %v2144
        %v2947 = vsub.f32 %v1375, %v2145
        %v2948 = vsub.f32 %v1376, %v2146
        %v2949 = vsub.f32 %v1377, %v2147
        %v2950 = vsub.f32 %v1378, %v2148
        %v2951 = vsub.f32 %v1379, %v2149
        %v2952 = vsub.f32 %v1380, %v2150
        %v2953 = vsub.f32 %v1381, %v2151
        %v2954 = vsub.f32 %v1382, %v2152
        %v2955 = vsub.f32 %v1383, %v2153
        %v2956 = vsub.f32 %v1384, %v2154
        %v2957 = vsub.f32 %v1385, %v2155
        %v2958 = vsub.f32 %v1386, %v2156
        %v2959 = vsub.f32 %v1387, %v2157
        %v2960 = vsub.f32 %v1388, %v2158
        %v2961 = vsub.f32 %v1389, %v2159
        %v2962 = vadd.f32 %v2930, %v2898
        %v2963 = vadd.f32 %v2931, %v2899
        %v2964 = vadd.f32 %v2932, %v2900
        %v2965 = vadd.f32 %v2933, %v2901
        %v2966 = vadd.f32 %v2934, %v2902
        %v2967 = vadd.f32 %v2935, %v2903
        %v2968 = vadd.f32 %v2936, %v2904
        %v2969 = vadd.f32 %v2937, %v2905
        %v2970 = vadd.f32 %v2938, %v2906
        %v2971 = vadd.f32 %v2939, %v2907
        %v2972 = vadd.f32 %v2940, %v2908
        %v2973 = vadd.f32 %v2941, %v2909
        %v2974 = vadd.f32 %v2942, %v2910
        %v2975 = vadd.f32 %v2943, %v2911
        %v2976 = vadd.f32 %v2944, %v2912
        %v2977 = vadd.f32 %v2945, %v2913
        %v2978 = vadd.f32 %v2946, %v2914
        %v2979 = vadd.f32 %v2947, %v2915
        %v2980 = vadd.f32 %v2948, %v2916
        %v2981 = vadd.f32 %v2949, %v2917
        %v2982 = vadd.f32 %v2950, %v2918
        %v2983 = vadd.f32 %v2951, %v2919
        %v2984 = vadd.f32 %v2952, %v2920
        %v2985 = vadd.f32 %v2953, %v2921
        %v2986 = vadd.f32 %v2954, %v2922
        %v2987 = vadd.f32 %v2955, %v2923
        %v2988 = vadd.f32 %v2956, %v2924
        %v2989 = vadd.f32 %v2957, %v2925
        %v2990 = vadd.f32 %v2958, %v2926
        %v2991 = vadd.f32 %v2959, %v2927
        %v2992 = vadd.f32 %v2960, %v2928
        %v2993 = vadd.f32 %v2961, %v2929
        %v2994 = vadd.f32 %v643, %v2962
        %v2995 = vadd.f32 %v644, %v2963
        %v2996 = vadd.f32 %v645, %v2964
        %v2997 = vadd.f32 %v646, %v2965
        %v2998 = vadd.f32 %v647, %v2966
        %v2999 = vadd.f32 %v648, %v2967
        %v3000 = vadd.f32 %v649, %v2968
        %v3001 = vadd.f32 %v650, %v2969
        %v3002 = vadd.f32 %v651, %v2970
        %v3003 = vadd.f32 %v652, %v2971
        %v3004 = vadd.f32 %v653, %v2972
        %v3005 = vadd.f32 %v654, %v2973
        %v3006 = vadd.f32 %v655, %v2974
        %v3007 = vadd.f32 %v656, %v2975
        %v3008 = vadd.f32 %v657, %v2976
        %v3009 = vadd.f32 %v658, %v2977
        %v3010 = vadd.f32 %v659, %v2978
        %v3011 = vadd.f32 %v660, %v2979
        %v3012 = vadd.f32 %v661, %v2980
        %v3013 = vadd.f32 %v662, %v2981
        %v3014 = vadd.f32 %v663, %v2982
        %v3015 = vadd.f32 %v664, %v2983
        %v3016 = vadd.f32 %v665, %v2984
        %v3017 = vadd.f32 %v666, %v2985
        %v3018 = vadd.f32 %v667, %v2986
        %v3019 = vadd.f32 %v668, %v2987
        %v3020 = vadd.f32 %v669, %v2988
        %v3021 = vadd.f32 %v670, %v2989
        %v3022 = vadd.f32 %v671, %v2990
        %v3023 = vadd.f32 %v672, %v2991
        %v3024 = vadd.f32 %v673, %v2992
        %v3025 = vadd.f32 %v674, %v2993
        %v3027 = vsel %vm679, %v2994, 0
        %v3030 = vsel %vm679, %v2995, 0
        %v3033 = vsel %vm679, %v2996, 0
        %v3036 = vsel %vm679, %v2997, 0
        %v3039 = vsel %vm679, %v2998, 0
        %v3042 = vsel %vm679, %v2999, 0
        %v3045 = vsel %vm679, %v3000, 0
        %v3048 = vsel %vm679, %v3001, 0
        %v3051 = vsel %vm679, %v3002, 0
        %v3054 = vsel %vm679, %v3003, 0
        %v3057 = vsel %vm679, %v3004, 0
        %v3060 = vsel %vm679, %v3005, 0
        %v3063 = vsel %vm679, %v3006, 0
        %v3066 = vsel %vm679, %v3007, 0
        %v3069 = vsel %vm679, %v3008, 0
        %v3072 = vsel %vm679, %v3009, 0
        %v3075 = vsel %vm679, %v3010, 0
        %v3078 = vsel %vm679, %v3011, 0
        %v3081 = vsel %vm679, %v3012, 0
        %v3084 = vsel %vm679, %v3013, 0
        %v3087 = vsel %vm679, %v3014, 0
        %v3090 = vsel %vm679, %v3015, 0
        %v3093 = vsel %vm679, %v3016, 0
        %v3096 = vsel %vm679, %v3017, 0
        %v3099 = vsel %vm679, %v3018, 0
        %v3102 = vsel %vm679, %v3019, 0
        %v3105 = vsel %vm679, %v3020, 0
        %v3108 = vsel %vm679, %v3021, 0
        %v3111 = vsel %vm679, %v3022, 0
        %v3114 = vsel %vm679, %v3023, 0
        %v3117 = vsel %vm679, %v3024, 0
        %v3120 = vsel %vm679, %v3025, 0
        %3122 = vmatprep.subr.mxu0 0.0
        %3123 = vmatpush1.msra.mxu0 %v254
        %3124 = vmatprep.subr.mxu0 0.0
        %3125 = vmatpush1.msra.mxu0 %v255
        %3126 = vmatprep.subr.mxu0 0.0
        %3127 = vmatpush1.msra.mxu0 %v256
        %3128 = vmatprep.subr.mxu0 0.0
        %3129 = vmatpush1.msra.mxu0 %v257
        %3130 = vmatprep.subr.mxu0 0.0
        %3131 = vmatpush1.msra.mxu0 0.0
        %3132 = vmatprep.subr.mxu0 0.0
        %3133 = vmatpush1.msra.mxu0 0.0
        %3134 = vmatprep.subr.mxu0 0.0
        %3135 = vmatpush1.msra.mxu0 0.0
        %3136 = vmatprep.subr.mxu0 0.0
        %3137 = vmatpush1.msra.mxu0 0.0
        %3138 = vmatprep.subr.mxu0 0.0
        %3139 = vmatpush1.msra.mxu0 0.0
        %3140 = vmatprep.subr.mxu0 0.0
        %3141 = vmatpush1.msra.mxu0 0.0
        %3142 = vmatprep.subr.mxu0 0.0
        %3143 = vmatpush1.msra.mxu0 0.0
        %3144 = vmatprep.subr.mxu0 0.0
        %3145 = vmatpush1.msra.mxu0 0.0
        %3146 = vmatprep.subr.mxu0 0.0
        %3147 = vmatpush1.msra.mxu0 0.0
        %3148 = vmatprep.subr.mxu0 0.0
        %3149 = vmatpush1.msra.mxu0 0.0
        %3150 = vmatprep.subr.mxu0 0.0
        %3151 = vmatpush1.msra.mxu0 0.0
        %3152 = vmatprep.subr.mxu0 0.0
        %3153 = vmatpush1.msra.mxu0 0.0
        %3154 = vmatprep.subr.mxu0 0.0
        %3155 = vmatpush1.msra.mxu0 0.0
        %3156 = vmatprep.subr.mxu0 0.0
        %3157 = vmatpush1.msra.mxu0 0.0
        %3158 = vmatprep.subr.mxu0 0.0
        %3159 = vmatpush1.msra.mxu0 0.0
        %3160 = vmatprep.subr.mxu0 0.0
        %3161 = vmatpush1.msra.mxu0 0.0
        %3162 = vmatprep.subr.mxu0 0.0
        %3163 = vmatpush1.msra.mxu0 0.0
        %3164 = vmatprep.subr.mxu0 0.0
        %3165 = vmatpush1.msra.mxu0 0.0
        %3166 = vmatprep.subr.mxu0 0.0
        %3167 = vmatpush1.msra.mxu0 0.0
        %3168 = vmatprep.subr.mxu0 0.0
        %3169 = vmatpush1.msra.mxu0 0.0
        %3170 = vmatprep.subr.mxu0 0.0
        %3171 = vmatpush1.msra.mxu0 0.0
        %3172 = vmatprep.subr.mxu0 0.0
        %3173 = vmatpush1.msra.mxu0 0.0
        %3174 = vmatprep.subr.mxu0 0.0
        %3175 = vmatpush1.msra.mxu0 0.0
        %3176 = vmatprep.subr.mxu0 0.0
        %3177 = vmatpush1.msra.mxu0 0.0
        %3178 = vmatprep.subr.mxu0 0.0
        %3179 = vmatpush1.msra.mxu0 0.0
        %3180 = vmatprep.subr.mxu0 0.0
        %3181 = vmatpush1.msra.mxu0 0.0
        %3182 = vmatprep.subr.mxu0 0.0
        %3183 = vmatpush1.msra.mxu0 0.0
        %3184 = vmatprep.subr.mxu0 0.0
        %3185 = vmatpush1.msra.mxu0 0.0
        %3186 = vmatprep.mubr.f32.mxu0 0.0
        %3187 = vmatmul.mubr.f32.gmra.mrb[0].mxu0 %v3027
        %v3188 = vpop.f32.mrb[0].mxu0
        %v3189 = vadd.f32 %v678, %v3188
        %v3190 = vpop.f32.mrb[0].mxu0
        %3191 = vmatprep.mubr.f32.mxu0 0.0
        %3192 = vmatmul.mubr.f32.gmra.mrb[0].mxu0 %v3030
        %v3193 = vpop.f32.mrb[0].mxu0
        %v3194 = vadd.f32 %v678, %v3193
        %v3195 = vpop.f32.mrb[0].mxu0
        %3196 = vmatprep.mubr.f32.mxu0 0.0
        %3197 = vmatmul.mubr.f32.gmra.mrb[0].mxu0 %v3033
        %v3198 = vpop.f32.mrb[0].mxu0
        %v3199 = vadd.f32 %v678, %v3198
        %v3200 = vpop.f32.mrb[0].mxu0
        %3201 = vmatprep.mubr.f32.mxu0 0.0
        %3202 = vmatmul.mubr.f32.gmra.mrb[0].mxu0 %v3036
        %v3203 = vpop.f32.mrb[0].mxu0
        %v3204 = vadd.f32 %v678, %v3203
        %v3205 = vpop.f32.mrb[0].mxu0
        %3206 = vmatprep.mubr.f32.mxu0 0.0
        %3207 = vmatmul.mubr.f32.gmra.mrb[0].mxu0 %v3039
        %v3208 = vpop.f32.mrb[0].mxu0
        %v3209 = vadd.f32 %v678, %v3208
        %v3210 = vpop.f32.mrb[0].mxu0
        %3211 = vmatprep.mubr.f32.mxu0 0.0
        %3212 = vmatmul.mubr.f32.gmra.mrb[0].mxu0 %v3042
        %v3213 = vpop.f32.mrb[0].mxu0
        %v3214 = vadd.f32 %v678, %v3213
        %v3215 = vpop.f32.mrb[0].mxu0
        %3216 = vmatprep.mubr.f32.mxu0 0.0
        %3217 = vmatmul.mubr.f32.gmra.mrb[0].mxu0 %v3045
        %v3218 = vpop.f32.mrb[0].mxu0
        %v3219 = vadd.f32 %v678, %v3218
        %v3220 = vpop.f32.mrb[0].mxu0
        %3221 = vmatprep.mubr.f32.mxu0 0.0
        %3222 = vmatmul.mubr.f32.gmra.mrb[0].mxu0 %v3048
        %v3223 = vpop.f32.mrb[0].mxu0
        %v3224 = vadd.f32 %v678, %v3223
        %v3225 = vpop.f32.mrb[0].mxu0
        %3226 = vmatprep.mubr.f32.mxu0 0.0
        %3227 = vmatmul.mubr.f32.gmra.mrb[0].mxu0 %v3051
        %v3228 = vpop.f32.mrb[0].mxu0
        %v3229 = vadd.f32 %v678, %v3228
        %v3230 = vpop.f32.mrb[0].mxu0
        %3231 = vmatprep.mubr.f32.mxu0 0.0
        %3232 = vmatmul.mubr.f32.gmra.mrb[0].mxu0 %v3054
        %v3233 = vpop.f32.mrb[0].mxu0
        %v3234 = vadd.f32 %v678, %v3233
        %v3235 = vpop.f32.mrb[0].mxu0
        %3236 = vmatprep.mubr.f32.mxu0 0.0
        %3237 = vmatmul.mubr.f32.gmra.mrb[0].mxu0 %v3057
        %v3238 = vpop.f32.mrb[0].mxu0
        %v3239 = vadd.f32 %v678, %v3238
        %v3240 = vpop.f32.mrb[0].mxu0
        %3241 = vmatprep.mubr.f32.mxu0 0.0
        %3242 = vmatmul.mubr.f32.gmra.mrb[0].mxu0 %v3060
        %v3243 = vpop.f32.mrb[0].mxu0
        %v3244 = vadd.f32 %v678, %v3243
        %v3245 = vpop.f32.mrb[0].mxu0
        %3246 = vmatprep.mubr.f32.mxu0 0.0
        %3247 = vmatmul.mubr.f32.gmra.mrb[0].mxu0 %v3063
        %v3248 = vpop.f32.mrb[0].mxu0
        %v3249 = vadd.f32 %v678, %v3248
        %v3250 = vpop.f32.mrb[0].mxu0
        %3251 = vmatprep.mubr.f32.mxu0 0.0
        %3252 = vmatmul.mubr.f32.gmra.mrb[0].mxu0 %v3066
        %v3253 = vpop.f32.mrb[0].mxu0
        %v3254 = vadd.f32 %v678, %v3253
        %v3255 = vpop.f32.mrb[0].mxu0
        %3256 = vmatprep.mubr.f32.mxu0 0.0
        %3257 = vmatmul.mubr.f32.gmra.mrb[0].mxu0 %v3069
        %v3258 = vpop.f32.mrb[0].mxu0
        %v3259 = vadd.f32 %v678, %v3258
        %v3260 = vpop.f32.mrb[0].mxu0
        %3261 = vmatprep.mubr.f32.mxu0 0.0
        %3262 = vmatmul.mubr.f32.gmra.mrb[0].mxu0 %v3072
        %v3263 = vpop.f32.mrb[0].mxu0
        %v3264 = vadd.f32 %v678, %v3263
        %v3265 = vpop.f32.mrb[0].mxu0
        %3266 = vmatprep.mubr.f32.mxu0 0.0
        %3267 = vmatmul.mubr.f32.gmra.mrb[0].mxu0 %v3075
        %v3268 = vpop.f32.mrb[0].mxu0
        %v3269 = vadd.f32 %v678, %v3268
        %v3270 = vpop.f32.mrb[0].mxu0
        %3271 = vmatprep.mubr.f32.mxu0 0.0
        %3272 = vmatmul.mubr.f32.gmra.mrb[0].mxu0 %v3078
        %v3273 = vpop.f32.mrb[0].mxu0
        %v3274 = vadd.f32 %v678, %v3273
        %v3275 = vpop.f32.mrb[0].mxu0
        %3276 = vmatprep.mubr.f32.mxu0 0.0
        %3277 = vmatmul.mubr.f32.gmra.mrb[0].mxu0 %v3081
        %v3278 = vpop.f32.mrb[0].mxu0
        %v3279 = vadd.f32 %v678, %v3278
        %v3280 = vpop.f32.mrb[0].mxu0
        %3281 = vmatprep.mubr.f32.mxu0 0.0
        %3282 = vmatmul.mubr.f32.gmra.mrb[0].mxu0 %v3084
        %v3283 = vpop.f32.mrb[0].mxu0
        %v3284 = vadd.f32 %v678, %v3283
        %v3285 = vpop.f32.mrb[0].mxu0
        %3286 = vmatprep.mubr.f32.mxu0 0.0
        %3287 = vmatmul.mubr.f32.gmra.mrb[0].mxu0 %v3087
        %v3288 = vpop.f32.mrb[0].mxu0
        %v3289 = vadd.f32 %v678, %v3288
        %v3290 = vpop.f32.mrb[0].mxu0
        %3291 = vmatprep.mubr.f32.mxu0 0.0
        %3292 = vmatmul.mubr.f32.gmra.mrb[0].mxu0 %v3090
        %v3293 = vpop.f32.mrb[0].mxu0
        %v3294 = vadd.f32 %v678, %v3293
        %v3295 = vpop.f32.mrb[0].mxu0
        %3296 = vmatprep.mubr.f32.mxu0 0.0
        %3297 = vmatmul.mubr.f32.gmra.mrb[0].mxu0 %v3093
        %v3298 = vpop.f32.mrb[0].mxu0
        %v3299 = vadd.f32 %v678, %v3298
        %v3300 = vpop.f32.mrb[0].mxu0
        %3301 = vmatprep.mubr.f32.mxu0 0.0
        %3302 = vmatmul.mubr.f32.gmra.mrb[0].mxu0 %v3096
        %v3303 = vpop.f32.mrb[0].mxu0
        %v3304 = vadd.f32 %v678, %v3303
        %v3305 = vpop.f32.mrb[0].mxu0
        %3306 = vmatprep.mubr.f32.mxu0 0.0
        %3307 = vmatmul.mubr.f32.gmra.mrb[0].mxu0 %v3099
        %v3308 = vpop.f32.mrb[0].mxu0
        %v3309 = vadd.f32 %v678, %v3308
        %v3310 = vpop.f32.mrb[0].mxu0
        %3311 = vmatprep.mubr.f32.mxu0 0.0
        %3312 = vmatmul.mubr.f32.gmra.mrb[0].mxu0 %v3102
        %v3313 = vpop.f32.mrb[0].mxu0
        %v3314 = vadd.f32 %v678, %v3313
        %v3315 = vpop.f32.mrb[0].mxu0
        %3316 = vmatprep.mubr.f32.mxu0 0.0
        %3317 = vmatmul.mubr.f32.gmra.mrb[0].mxu0 %v3105
        %v3318 = vpop.f32.mrb[0].mxu0
        %v3319 = vadd.f32 %v678, %v3318
        %v3320 = vpop.f32.mrb[0].mxu0
        %3321 = vmatprep.mubr.f32.mxu0 0.0
        %3322 = vmatmul.mubr.f32.gmra.mrb[0].mxu0 %v3108
        %v3323 = vpop.f32.mrb[0].mxu0
        %v3324 = vadd.f32 %v678, %v3323
        %v3325 = vpop.f32.mrb[0].mxu0
        %3326 = vmatprep.mubr.f32.mxu0 0.0
        %3327 = vmatmul.mubr.f32.gmra.mrb[0].mxu0 %v3111
        %v3328 = vpop.f32.mrb[0].mxu0
        %v3329 = vadd.f32 %v678, %v3328
        %v3330 = vpop.f32.mrb[0].mxu0
        %3331 = vmatprep.mubr.f32.mxu0 0.0
        %3332 = vmatmul.mubr.f32.gmra.mrb[0].mxu0 %v3114
        %v3333 = vpop.f32.mrb[0].mxu0
        %v3334 = vadd.f32 %v678, %v3333
        %v3335 = vpop.f32.mrb[0].mxu0
        %3336 = vmatprep.mubr.f32.mxu0 0.0
        %3337 = vmatmul.mubr.f32.gmra.mrb[0].mxu0 %v3117
        %v3338 = vpop.f32.mrb[0].mxu0
        %v3339 = vadd.f32 %v678, %v3338
        %v3340 = vpop.f32.mrb[0].mxu0
        %3341 = vmatprep.mubr.f32.mxu0 0.0
        %3342 = vmatmul.mubr.f32.gmra.mrb[0].mxu0 %v3120
        %v3343 = vpop.f32.mrb[0].mxu0
        %v3344 = vadd.f32 %v678, %v3343
        %v3345 = vpop.f32.mrb[0].mxu0
        %3346 = vdwg.mxu0
        %v3347 = vmax.f32 %v3189, 0.0
        %v3348 = vmax.f32 %v3194, 0.0
        %v3349 = vmax.f32 %v3199, 0.0
        %v3350 = vmax.f32 %v3204, 0.0
        %v3351 = vmax.f32 %v3209, 0.0
        %v3352 = vmax.f32 %v3214, 0.0
        %v3353 = vmax.f32 %v3219, 0.0
        %v3354 = vmax.f32 %v3224, 0.0
        %v3355 = vmax.f32 %v3229, 0.0
        %v3356 = vmax.f32 %v3234, 0.0
        %v3357 = vmax.f32 %v3239, 0.0
        %v3358 = vmax.f32 %v3244, 0.0
        %v3359 = vmax.f32 %v3249, 0.0
        %v3360 = vmax.f32 %v3254, 0.0
        %v3361 = vmax.f32 %v3259, 0.0
        %v3362 = vmax.f32 %v3264, 0.0
        %v3363 = vmax.f32 %v3269, 0.0
        %v3364 = vmax.f32 %v3274, 0.0
        %v3365 = vmax.f32 %v3279, 0.0
        %v3366 = vmax.f32 %v3284, 0.0
        %v3367 = vmax.f32 %v3289, 0.0
        %v3368 = vmax.f32 %v3294, 0.0
        %v3369 = vmax.f32 %v3299, 0.0
        %v3370 = vmax.f32 %v3304, 0.0
        %v3371 = vmax.f32 %v3309, 0.0
        %v3372 = vmax.f32 %v3314, 0.0
        %v3373 = vmax.f32 %v3319, 0.0
        %v3374 = vmax.f32 %v3324, 0.0
        %v3375 = vmax.f32 %v3329, 0.0
        %v3376 = vmax.f32 %v3334, 0.0
        %v3377 = vmax.f32 %v3339, 0.0
        %v3378 = vmax.f32 %v3344, 0.0
        %v3380 = vsel %vm679, %v3347, 0
        %v3383 = vsel %vm679, %v3348, 0
        %v3386 = vsel %vm679, %v3349, 0
        %v3389 = vsel %vm679, %v3350, 0
        %v3392 = vsel %vm679, %v3351, 0
        %v3395 = vsel %vm679, %v3352, 0
        %v3398 = vsel %vm679, %v3353, 0
        %v3401 = vsel %vm679, %v3354, 0
        %v3404 = vsel %vm679, %v3355, 0
        %v3407 = vsel %vm679, %v3356, 0
        %v3410 = vsel %vm679, %v3357, 0
        %v3413 = vsel %vm679, %v3358, 0
        %v3416 = vsel %vm679, %v3359, 0
        %v3419 = vsel %vm679, %v3360, 0
        %v3422 = vsel %vm679, %v3361, 0
        %v3425 = vsel %vm679, %v3362, 0
        %v3428 = vsel %vm679, %v3363, 0
        %v3431 = vsel %vm679, %v3364, 0
        %v3434 = vsel %vm679, %v3365, 0
        %v3437 = vsel %vm679, %v3366, 0
        %v3440 = vsel %vm679, %v3367, 0
        %v3443 = vsel %vm679, %v3368, 0
        %v3446 = vsel %vm679, %v3369, 0
        %v3449 = vsel %vm679, %v3370, 0
        %v3452 = vsel %vm679, %v3371, 0
        %v3455 = vsel %vm679, %v3372, 0
        %v3458 = vsel %vm679, %v3373, 0
        %v3461 = vsel %vm679, %v3374, 0
        %v3464 = vsel %vm679, %v3375, 0
        %v3467 = vsel %vm679, %v3376, 0
        %v3470 = vsel %vm679, %v3377, 0
        %v3473 = vsel %vm679, %v3378, 0
        %3475 = vmatprep.subr.mxu0 0.0
        %3476 = vmatpush1.msra.mxu0 %v259
        %3477 = vmatprep.subr.mxu0 0.0
        %3478 = vmatpush1.msra.mxu0 %v260
        %3479 = vmatprep.subr.mxu0 0.0
        %3480 = vmatpush1.msra.mxu0 %v261
        %3481 = vmatprep.subr.mxu0 0.0
        %3482 = vmatpush1.msra.mxu0 %v262
        %3483 = vmatprep.subr.mxu0 0.0
        %3484 = vmatpush1.msra.mxu0 0.0
        %3485 = vmatprep.subr.mxu0 0.0
        %3486 = vmatpush1.msra.mxu0 0.0
        %3487 = vmatprep.subr.mxu0 0.0
        %3488 = vmatpush1.msra.mxu0 0.0
        %3489 = vmatprep.subr.mxu0 0.0
        %3490 = vmatpush1.msra.mxu0 0.0
        %3491 = vmatprep.subr.mxu0 0.0
        %3492 = vmatpush1.msra.mxu0 0.0
        %3493 = vmatprep.subr.mxu0 0.0
        %3494 = vmatpush1.msra.mxu0 0.0
        %3495 = vmatprep.subr.mxu0 0.0
        %3496 = vmatpush1.msra.mxu0 0.0
        %3497 = vmatprep.subr.mxu0 0.0
        %3498 = vmatpush1.msra.mxu0 0.0
        %3499 = vmatprep.subr.mxu0 0.0
        %3500 = vmatpush1.msra.mxu0 0.0
        %3501 = vmatprep.subr.mxu0 0.0
        %3502 = vmatpush1.msra.mxu0 0.0
        %3503 = vmatprep.subr.mxu0 0.0
        %3504 = vmatpush1.msra.mxu0 0.0
        %3505 = vmatprep.subr.mxu0 0.0
        %3506 = vmatpush1.msra.mxu0 0.0
        %3507 = vmatprep.subr.mxu0 0.0
        %3508 = vmatpush1.msra.mxu0 0.0
        %3509 = vmatprep.subr.mxu0 0.0
        %3510 = vmatpush1.msra.mxu0 0.0
        %3511 = vmatprep.subr.mxu0 0.0
        %3512 = vmatpush1.msra.mxu0 0.0
        %3513 = vmatprep.subr.mxu0 0.0
        %3514 = vmatpush1.msra.mxu0 0.0
        %3515 = vmatprep.subr.mxu0 0.0
        %3516 = vmatpush1.msra.mxu0 0.0
        %3517 = vmatprep.subr.mxu0 0.0
        %3518 = vmatpush1.msra.mxu0 0.0
        %3519 = vmatprep.subr.mxu0 0.0
        %3520 = vmatpush1.msra.mxu0 0.0
        %3521 = vmatprep.subr.mxu0 0.0
        %3522 = vmatpush1.msra.mxu0 0.0
        %3523 = vmatprep.subr.mxu0 0.0
        %3524 = vmatpush1.msra.mxu0 0.0
        %3525 = vmatprep.subr.mxu0 0.0
        %3526 = vmatpush1.msra.mxu0 0.0
        %3527 = vmatprep.subr.mxu0 0.0
        %3528 = vmatpush1.msra.mxu0 0.0
        %3529 = vmatprep.subr.mxu0 0.0
        %3530 = vmatpush1.msra.mxu0 0.0
        %3531 = vmatprep.subr.mxu0 0.0
        %3532 = vmatpush1.msra.mxu0 0.0
        %3533 = vmatprep.subr.mxu0 0.0
        %3534 = vmatpush1.msra.mxu0 0.0
        %3535 = vmatprep.subr.mxu0 0.0
        %3536 = vmatpush1.msra.mxu0 0.0
        %3537 = vmatprep.subr.mxu0 0.0
        %3538 = vmatpush1.msra.mxu0 0.0
        %3539 = vmatprep.mubr.f32.mxu0 0.0
        %3540 = vmatmul.mubr.f32.gmra.mrb[0].mxu0 %v3380
        %v3541 = vpop.f32.mrb[0].mxu0
        %v3542 = vadd.f32 %v1036, %v3541
        %v3543 = vpop.f32.mrb[0].mxu0
        %3544 = vmatprep.mubr.f32.mxu0 0.0
        %3545 = vmatmul.mubr.f32.gmra.mrb[0].mxu0 %v3383
        %v3546 = vpop.f32.mrb[0].mxu0
        %v3547 = vadd.f32 %v1036, %v3546
        %v3548 = vpop.f32.mrb[0].mxu0
        %3549 = vmatprep.mubr.f32.mxu0 0.0
        %3550 = vmatmul.mubr.f32.gmra.mrb[0].mxu0 %v3386
        %v3551 = vpop.f32.mrb[0].mxu0
        %v3552 = vadd.f32 %v1036, %v3551
        %v3553 = vpop.f32.mrb[0].mxu0
        %3554 = vmatprep.mubr.f32.mxu0 0.0
        %3555 = vmatmul.mubr.f32.gmra.mrb[0].mxu0 %v3389
        %v3556 = vpop.f32.mrb[0].mxu0
        %v3557 = vadd.f32 %v1036, %v3556
        %v3558 = vpop.f32.mrb[0].mxu0
        %3559 = vmatprep.mubr.f32.mxu0 0.0
        %3560 = vmatmul.mubr.f32.gmra.mrb[0].mxu0 %v3392
        %v3561 = vpop.f32.mrb[0].mxu0
        %v3562 = vadd.f32 %v1036, %v3561
        %v3563 = vpop.f32.mrb[0].mxu0
        %3564 = vmatprep.mubr.f32.mxu0 0.0
        %3565 = vmatmul.mubr.f32.gmra.mrb[0].mxu0 %v3395
        %v3566 = vpop.f32.mrb[0].mxu0
        %v3567 = vadd.f32 %v1036, %v3566
        %v3568 = vpop.f32.mrb[0].mxu0
        %3569 = vmatprep.mubr.f32.mxu0 0.0
        %3570 = vmatmul.mubr.f32.gmra.mrb[0].mxu0 %v3398
        %v3571 = vpop.f32.mrb[0].mxu0
        %v3572 = vadd.f32 %v1036, %v3571
        %v3573 = vpop.f32.mrb[0].mxu0
        %3574 = vmatprep.mubr.f32.mxu0 0.0
        %3575 = vmatmul.mubr.f32.gmra.mrb[0].mxu0 %v3401
        %v3576 = vpop.f32.mrb[0].mxu0
        %v3577 = vadd.f32 %v1036, %v3576
        %v3578 = vpop.f32.mrb[0].mxu0
        %3579 = vmatprep.mubr.f32.mxu0 0.0
        %3580 = vmatmul.mubr.f32.gmra.mrb[0].mxu0 %v3404
        %v3581 = vpop.f32.mrb[0].mxu0
        %v3582 = vadd.f32 %v1036, %v3581
        %v3583 = vpop.f32.mrb[0].mxu0
        %3584 = vmatprep.mubr.f32.mxu0 0.0
        %3585 = vmatmul.mubr.f32.gmra.mrb[0].mxu0 %v3407
        %v3586 = vpop.f32.mrb[0].mxu0
        %v3587 = vadd.f32 %v1036, %v3586
        %v3588 = vpop.f32.mrb[0].mxu0
        %3589 = vmatprep.mubr.f32.mxu0 0.0
        %3590 = vmatmul.mubr.f32.gmra.mrb[0].mxu0 %v3410
        %v3591 = vpop.f32.mrb[0].mxu0
        %v3592 = vadd.f32 %v1036, %v3591
        %v3593 = vpop.f32.mrb[0].mxu0
        %3594 = vmatprep.mubr.f32.mxu0 0.0
        %3595 = vmatmul.mubr.f32.gmra.mrb[0].mxu0 %v3413
        %v3596 = vpop.f32.mrb[0].mxu0
        %v3597 = vadd.f32 %v1036, %v3596
        %v3598 = vpop.f32.mrb[0].mxu0
        %3599 = vmatprep.mubr.f32.mxu0 0.0
        %3600 = vmatmul.mubr.f32.gmra.mrb[0].mxu0 %v3416
        %v3601 = vpop.f32.mrb[0].mxu0
        %v3602 = vadd.f32 %v1036, %v3601
        %v3603 = vpop.f32.mrb[0].mxu0
        %3604 = vmatprep.mubr.f32.mxu0 0.0
        %3605 = vmatmul.mubr.f32.gmra.mrb[0].mxu0 %v3419
        %v3606 = vpop.f32.mrb[0].mxu0
        %v3607 = vadd.f32 %v1036, %v3606
        %v3608 = vpop.f32.mrb[0].mxu0
        %3609 = vmatprep.mubr.f32.mxu0 0.0
        %3610 = vmatmul.mubr.f32.gmra.mrb[0].mxu0 %v3422
        %v3611 = vpop.f32.mrb[0].mxu0
        %v3612 = vadd.f32 %v1036, %v3611
        %v3613 = vpop.f32.mrb[0].mxu0
        %3614 = vmatprep.mubr.f32.mxu0 0.0
        %3615 = vmatmul.mubr.f32.gmra.mrb[0].mxu0 %v3425
        %v3616 = vpop.f32.mrb[0].mxu0
        %v3617 = vadd.f32 %v1036, %v3616
        %v3618 = vpop.f32.mrb[0].mxu0
        %3619 = vmatprep.mubr.f32.mxu0 0.0
        %3620 = vmatmul.mubr.f32.gmra.mrb[0].mxu0 %v3428
        %v3621 = vpop.f32.mrb[0].mxu0
        %v3622 = vadd.f32 %v1036, %v3621
        %v3623 = vpop.f32.mrb[0].mxu0
        %3624 = vmatprep.mubr.f32.mxu0 0.0
        %3625 = vmatmul.mubr.f32.gmra.mrb[0].mxu0 %v3431
        %v3626 = vpop.f32.mrb[0].mxu0
        %v3627 = vadd.f32 %v1036, %v3626
        %v3628 = vpop.f32.mrb[0].mxu0
        %3629 = vmatprep.mubr.f32.mxu0 0.0
        %3630 = vmatmul.mubr.f32.gmra.mrb[0].mxu0 %v3434
        %v3631 = vpop.f32.mrb[0].mxu0
        %v3632 = vadd.f32 %v1036, %v3631
        %v3633 = vpop.f32.mrb[0].mxu0
        %3634 = vmatprep.mubr.f32.mxu0 0.0
        %3635 = vmatmul.mubr.f32.gmra.mrb[0].mxu0 %v3437
        %v3636 = vpop.f32.mrb[0].mxu0
        %v3637 = vadd.f32 %v1036, %v3636
        %v3638 = vpop.f32.mrb[0].mxu0
        %3639 = vmatprep.mubr.f32.mxu0 0.0
        %3640 = vmatmul.mubr.f32.gmra.mrb[0].mxu0 %v3440
        %v3641 = vpop.f32.mrb[0].mxu0
        %v3642 = vadd.f32 %v1036, %v3641
        %v3643 = vpop.f32.mrb[0].mxu0
        %3644 = vmatprep.mubr.f32.mxu0 0.0
        %3645 = vmatmul.mubr.f32.gmra.mrb[0].mxu0 %v3443
        %v3646 = vpop.f32.mrb[0].mxu0
        %v3647 = vadd.f32 %v1036, %v3646
        %v3648 = vpop.f32.mrb[0].mxu0
        %3649 = vmatprep.mubr.f32.mxu0 0.0
        %3650 = vmatmul.mubr.f32.gmra.mrb[0].mxu0 %v3446
        %v3651 = vpop.f32.mrb[0].mxu0
        %v3652 = vadd.f32 %v1036, %v3651
        %v3653 = vpop.f32.mrb[0].mxu0
        %3654 = vmatprep.mubr.f32.mxu0 0.0
        %3655 = vmatmul.mubr.f32.gmra.mrb[0].mxu0 %v3449
        %v3656 = vpop.f32.mrb[0].mxu0
        %v3657 = vadd.f32 %v1036, %v3656
        %v3658 = vpop.f32.mrb[0].mxu0
        %3659 = vmatprep.mubr.f32.mxu0 0.0
        %3660 = vmatmul.mubr.f32.gmra.mrb[0].mxu0 %v3452
        %v3661 = vpop.f32.mrb[0].mxu0
        %v3662 = vadd.f32 %v1036, %v3661
        %v3663 = vpop.f32.mrb[0].mxu0
        %3664 = vmatprep.mubr.f32.mxu0 0.0
        %3665 = vmatmul.mubr.f32.gmra.mrb[0].mxu0 %v3455
        %v3666 = vpop.f32.mrb[0].mxu0
        %v3667 = vadd.f32 %v1036, %v3666
        %v3668 = vpop.f32.mrb[0].mxu0
        %3669 = vmatprep.mubr.f32.mxu0 0.0
        %3670 = vmatmul.mubr.f32.gmra.mrb[0].mxu0 %v3458
        %v3671 = vpop.f32.mrb[0].mxu0
        %v3672 = vadd.f32 %v1036, %v3671
        %v3673 = vpop.f32.mrb[0].mxu0
        %3674 = vmatprep.mubr.f32.mxu0 0.0
        %3675 = vmatmul.mubr.f32.gmra.mrb[0].mxu0 %v3461
        %v3676 = vpop.f32.mrb[0].mxu0
        %v3677 = vadd.f32 %v1036, %v3676
        %v3678 = vpop.f32.mrb[0].mxu0
        %3679 = vmatprep.mubr.f32.mxu0 0.0
        %3680 = vmatmul.mubr.f32.gmra.mrb[0].mxu0 %v3464
        %v3681 = vpop.f32.mrb[0].mxu0
        %v3682 = vadd.f32 %v1036, %v3681
        %v3683 = vpop.f32.mrb[0].mxu0
        %3684 = vmatprep.mubr.f32.mxu0 0.0
        %3685 = vmatmul.mubr.f32.gmra.mrb[0].mxu0 %v3467
        %v3686 = vpop.f32.mrb[0].mxu0
        %v3687 = vadd.f32 %v1036, %v3686
        %v3688 = vpop.f32.mrb[0].mxu0
        %3689 = vmatprep.mubr.f32.mxu0 0.0
        %3690 = vmatmul.mubr.f32.gmra.mrb[0].mxu0 %v3470
        %v3691 = vpop.f32.mrb[0].mxu0
        %v3692 = vadd.f32 %v1036, %v3691
        %v3693 = vpop.f32.mrb[0].mxu0
        %3694 = vmatprep.mubr.f32.mxu0 0.0
        %3695 = vmatmul.mubr.f32.gmra.mrb[0].mxu0 %v3473
        %v3696 = vpop.f32.mrb[0].mxu0
        %v3697 = vadd.f32 %v1036, %v3696
        %v3698 = vpop.f32.mrb[0].mxu0
        %3699 = vdwg.mxu0
        %v3700 = vmax.f32 %v3542, 0.0
        %v3701 = vmax.f32 %v3547, 0.0
        %v3702 = vmax.f32 %v3552, 0.0
        %v3703 = vmax.f32 %v3557, 0.0
        %v3704 = vmax.f32 %v3562, 0.0
        %v3705 = vmax.f32 %v3567, 0.0
        %v3706 = vmax.f32 %v3572, 0.0
        %v3707 = vmax.f32 %v3577, 0.0
        %v3708 = vmax.f32 %v3582, 0.0
        %v3709 = vmax.f32 %v3587, 0.0
        %v3710 = vmax.f32 %v3592, 0.0
        %v3711 = vmax.f32 %v3597, 0.0
        %v3712 = vmax.f32 %v3602, 0.0
        %v3713 = vmax.f32 %v3607, 0.0
        %v3714 = vmax.f32 %v3612, 0.0
        %v3715 = vmax.f32 %v3617, 0.0
        %v3716 = vmax.f32 %v3622, 0.0
        %v3717 = vmax.f32 %v3627, 0.0
        %v3718 = vmax.f32 %v3632, 0.0
        %v3719 = vmax.f32 %v3637, 0.0
        %v3720 = vmax.f32 %v3642, 0.0
        %v3721 = vmax.f32 %v3647, 0.0
        %v3722 = vmax.f32 %v3652, 0.0
        %v3723 = vmax.f32 %v3657, 0.0
        %v3724 = vmax.f32 %v3662, 0.0
        %v3725 = vmax.f32 %v3667, 0.0
        %v3726 = vmax.f32 %v3672, 0.0
        %v3727 = vmax.f32 %v3677, 0.0
        %v3728 = vmax.f32 %v3682, 0.0
        %v3729 = vmax.f32 %v3687, 0.0
        %v3730 = vmax.f32 %v3692, 0.0
        %v3731 = vmax.f32 %v3697, 0.0
        %v3732 = vadd.f32 %v2128, %v2898
        %v3733 = vadd.f32 %v2129, %v2899
        %v3734 = vadd.f32 %v2130, %v2900
        %v3735 = vadd.f32 %v2131, %v2901
        %v3736 = vadd.f32 %v2132, %v2902
        %v3737 = vadd.f32 %v2133, %v2903
        %v3738 = vadd.f32 %v2134, %v2904
        %v3739 = vadd.f32 %v2135, %v2905
        %v3740 = vadd.f32 %v2136, %v2906
        %v3741 = vadd.f32 %v2137, %v2907
        %v3742 = vadd.f32 %v2138, %v2908
        %v3743 = vadd.f32 %v2139, %v2909
        %v3744 = vadd.f32 %v2140, %v2910
        %v3745 = vadd.f32 %v2141, %v2911
        %v3746 = vadd.f32 %v2142, %v2912
        %v3747 = vadd.f32 %v2143, %v2913
        %v3748 = vadd.f32 %v2144, %v2914
        %v3749 = vadd.f32 %v2145, %v2915
        %v3750 = vadd.f32 %v2146, %v2916
        %v3751 = vadd.f32 %v2147, %v2917
        %v3752 = vadd.f32 %v2148, %v2918
        %v3753 = vadd.f32 %v2149, %v2919
        %v3754 = vadd.f32 %v2150, %v2920
        %v3755 = vadd.f32 %v2151, %v2921
        %v3756 = vadd.f32 %v2152, %v2922
        %v3757 = vadd.f32 %v2153, %v2923
        %v3758 = vadd.f32 %v2154, %v2924
        %v3759 = vadd.f32 %v2155, %v2925
        %v3760 = vadd.f32 %v2156, %v2926
        %v3761 = vadd.f32 %v2157, %v2927
        %v3762 = vadd.f32 %v2158, %v2928
        %v3763 = vadd.f32 %v2159, %v2929
        %v3764 = vmul.f32 %v3732, 3.0
        %v3765 = vmul.f32 %v3733, 3.0
        %v3766 = vmul.f32 %v3734, 3.0
        %v3767 = vmul.f32 %v3735, 3.0
        %v3768 = vmul.f32 %v3736, 3.0
        %v3769 = vmul.f32 %v3737, 3.0
        %v3770 = vmul.f32 %v3738, 3.0
        %v3771 = vmul.f32 %v3739, 3.0
        %v3772 = vmul.f32 %v3740, 3.0
        %v3773 = vmul.f32 %v3741, 3.0
        %v3774 = vmul.f32 %v3742, 3.0
        %v3775 = vmul.f32 %v3743, 3.0
        %v3776 = vmul.f32 %v3744, 3.0
        %v3777 = vmul.f32 %v3745, 3.0
        %v3778 = vmul.f32 %v3746, 3.0
        %v3779 = vmul.f32 %v3747, 3.0
        %v3780 = vmul.f32 %v3748, 3.0
        %v3781 = vmul.f32 %v3749, 3.0
        %v3782 = vmul.f32 %v3750, 3.0
        %v3783 = vmul.f32 %v3751, 3.0
        %v3784 = vmul.f32 %v3752, 3.0
        %v3785 = vmul.f32 %v3753, 3.0
        %v3786 = vmul.f32 %v3754, 3.0
        %v3787 = vmul.f32 %v3755, 3.0
        %v3788 = vmul.f32 %v3756, 3.0
        %v3789 = vmul.f32 %v3757, 3.0
        %v3790 = vmul.f32 %v3758, 3.0
        %v3791 = vmul.f32 %v3759, 3.0
        %v3792 = vmul.f32 %v3760, 3.0
        %v3793 = vmul.f32 %v3761, 3.0
        %v3794 = vmul.f32 %v3762, 3.0
        %v3795 = vmul.f32 %v3763, 3.0
        %v3796 = vadd.f32 %v1358, %v3764
        %v3797 = vadd.f32 %v1359, %v3765
        %v3798 = vadd.f32 %v1360, %v3766
        %v3799 = vadd.f32 %v1361, %v3767
        %v3800 = vadd.f32 %v1362, %v3768
        %v3801 = vadd.f32 %v1363, %v3769
        %v3802 = vadd.f32 %v1364, %v3770
        %v3803 = vadd.f32 %v1365, %v3771
        %v3804 = vadd.f32 %v1366, %v3772
        %v3805 = vadd.f32 %v1367, %v3773
        %v3806 = vadd.f32 %v1368, %v3774
        %v3807 = vadd.f32 %v1369, %v3775
        %v3808 = vadd.f32 %v1370, %v3776
        %v3809 = vadd.f32 %v1371, %v3777
        %v3810 = vadd.f32 %v1372, %v3778
        %v3811 = vadd.f32 %v1373, %v3779
        %v3812 = vadd.f32 %v1374, %v3780
        %v3813 = vadd.f32 %v1375, %v3781
        %v3814 = vadd.f32 %v1376, %v3782
        %v3815 = vadd.f32 %v1377, %v3783
        %v3816 = vadd.f32 %v1378, %v3784
        %v3817 = vadd.f32 %v1379, %v3785
        %v3818 = vadd.f32 %v1380, %v3786
        %v3819 = vadd.f32 %v1381, %v3787
        %v3820 = vadd.f32 %v1382, %v3788
        %v3821 = vadd.f32 %v1383, %v3789
        %v3822 = vadd.f32 %v1384, %v3790
        %v3823 = vadd.f32 %v1385, %v3791
        %v3824 = vadd.f32 %v1386, %v3792
        %v3825 = vadd.f32 %v1387, %v3793
        %v3826 = vadd.f32 %v1388, %v3794
        %v3827 = vadd.f32 %v1389, %v3795
        %v3828 = vadd.f32 %v3796, %v3700
        %v3829 = vadd.f32 %v3797, %v3701
        %v3830 = vadd.f32 %v3798, %v3702
        %v3831 = vadd.f32 %v3799, %v3703
        %v3832 = vadd.f32 %v3800, %v3704
        %v3833 = vadd.f32 %v3801, %v3705
        %v3834 = vadd.f32 %v3802, %v3706
        %v3835 = vadd.f32 %v3803, %v3707
        %v3836 = vadd.f32 %v3804, %v3708
        %v3837 = vadd.f32 %v3805, %v3709
        %v3838 = vadd.f32 %v3806, %v3710
        %v3839 = vadd.f32 %v3807, %v3711
        %v3840 = vadd.f32 %v3808, %v3712
        %v3841 = vadd.f32 %v3809, %v3713
        %v3842 = vadd.f32 %v3810, %v3714
        %v3843 = vadd.f32 %v3811, %v3715
        %v3844 = vadd.f32 %v3812, %v3716
        %v3845 = vadd.f32 %v3813, %v3717
        %v3846 = vadd.f32 %v3814, %v3718
        %v3847 = vadd.f32 %v3815, %v3719
        %v3848 = vadd.f32 %v3816, %v3720
        %v3849 = vadd.f32 %v3817, %v3721
        %v3850 = vadd.f32 %v3818, %v3722
        %v3851 = vadd.f32 %v3819, %v3723
        %v3852 = vadd.f32 %v3820, %v3724
        %v3853 = vadd.f32 %v3821, %v3725
        %v3854 = vadd.f32 %v3822, %v3726
        %v3855 = vadd.f32 %v3823, %v3727
        %v3856 = vadd.f32 %v3824, %v3728
        %v3857 = vadd.f32 %v3825, %v3729
        %v3858 = vadd.f32 %v3826, %v3730
        %v3859 = vadd.f32 %v3827, %v3731
        %v3860 = vmul.f32 %v3828, 0.125
        %v3861 = vmul.f32 %v3829, 0.125
        %v3862 = vmul.f32 %v3830, 0.125
        %v3863 = vmul.f32 %v3831, 0.125
        %v3864 = vmul.f32 %v3832, 0.125
        %v3865 = vmul.f32 %v3833, 0.125
        %v3866 = vmul.f32 %v3834, 0.125
        %v3867 = vmul.f32 %v3835, 0.125
        %v3868 = vmul.f32 %v3836, 0.125
        %v3869 = vmul.f32 %v3837, 0.125
        %v3870 = vmul.f32 %v3838, 0.125
        %v3871 = vmul.f32 %v3839, 0.125
        %v3872 = vmul.f32 %v3840, 0.125
        %v3873 = vmul.f32 %v3841, 0.125
        %v3874 = vmul.f32 %v3842, 0.125
        %v3875 = vmul.f32 %v3843, 0.125
        %v3876 = vmul.f32 %v3844, 0.125
        %v3877 = vmul.f32 %v3845, 0.125
        %v3878 = vmul.f32 %v3846, 0.125
        %v3879 = vmul.f32 %v3847, 0.125
        %v3880 = vmul.f32 %v3848, 0.125
        %v3881 = vmul.f32 %v3849, 0.125
        %v3882 = vmul.f32 %v3850, 0.125
        %v3883 = vmul.f32 %v3851, 0.125
        %v3884 = vmul.f32 %v3852, 0.125
        %v3885 = vmul.f32 %v3853, 0.125
        %v3886 = vmul.f32 %v3854, 0.125
        %v3887 = vmul.f32 %v3855, 0.125
        %v3888 = vmul.f32 %v3856, 0.125
        %v3889 = vmul.f32 %v3857, 0.125
        %v3890 = vmul.f32 %v3858, 0.125
        %v3891 = vmul.f32 %v3859, 0.125
        %v3892 = vadd.f32 %v643, %v3860
        %v3893 = vadd.f32 %v644, %v3861
        %v3894 = vadd.f32 %v645, %v3862
        %v3895 = vadd.f32 %v646, %v3863
        %v3896 = vadd.f32 %v647, %v3864
        %v3897 = vadd.f32 %v648, %v3865
        %v3898 = vadd.f32 %v649, %v3866
        %v3899 = vadd.f32 %v650, %v3867
        %v3900 = vadd.f32 %v651, %v3868
        %v3901 = vadd.f32 %v652, %v3869
        %v3902 = vadd.f32 %v653, %v3870
        %v3903 = vadd.f32 %v654, %v3871
        %v3904 = vadd.f32 %v655, %v3872
        %v3905 = vadd.f32 %v656, %v3873
        %v3906 = vadd.f32 %v657, %v3874
        %v3907 = vadd.f32 %v658, %v3875
        %v3908 = vadd.f32 %v659, %v3876
        %v3909 = vadd.f32 %v660, %v3877
        %v3910 = vadd.f32 %v661, %v3878
        %v3911 = vadd.f32 %v662, %v3879
        %v3912 = vadd.f32 %v663, %v3880
        %v3913 = vadd.f32 %v664, %v3881
        %v3914 = vadd.f32 %v665, %v3882
        %v3915 = vadd.f32 %v666, %v3883
        %v3916 = vadd.f32 %v667, %v3884
        %v3917 = vadd.f32 %v668, %v3885
        %v3918 = vadd.f32 %v669, %v3886
        %v3919 = vadd.f32 %v670, %v3887
        %v3920 = vadd.f32 %v671, %v3888
        %v3921 = vadd.f32 %v672, %v3889
        %v3922 = vadd.f32 %v673, %v3890
        %v3923 = vadd.f32 %v674, %v3891
        %v3924 = vlaneseq
        %v3925 = vshrl.u32 %v3924, 7
        %v3926 = vsub.s32 3, %v3925
        %v3927 = vrot.slane %v253, %v3926
        %v3929 = vsel %vm679, %v3892, 0
        %v3932 = vsel %vm679, %v3893, 0
        %v3935 = vsel %vm679, %v3894, 0
        %v3938 = vsel %vm679, %v3895, 0
        %v3941 = vsel %vm679, %v3896, 0
        %v3944 = vsel %vm679, %v3897, 0
        %v3947 = vsel %vm679, %v3898, 0
        %v3950 = vsel %vm679, %v3899, 0
        %v3953 = vsel %vm679, %v3900, 0
        %v3956 = vsel %vm679, %v3901, 0
        %v3959 = vsel %vm679, %v3902, 0
        %v3962 = vsel %vm679, %v3903, 0
        %v3965 = vsel %vm679, %v3904, 0
        %v3968 = vsel %vm679, %v3905, 0
        %v3971 = vsel %vm679, %v3906, 0
        %v3974 = vsel %vm679, %v3907, 0
        %v3977 = vsel %vm679, %v3908, 0
        %v3980 = vsel %vm679, %v3909, 0
        %v3983 = vsel %vm679, %v3910, 0
        %v3986 = vsel %vm679, %v3911, 0
        %v3989 = vsel %vm679, %v3912, 0
        %v3992 = vsel %vm679, %v3913, 0
        %v3995 = vsel %vm679, %v3914, 0
        %v3998 = vsel %vm679, %v3915, 0
        %v4001 = vsel %vm679, %v3916, 0
        %v4004 = vsel %vm679, %v3917, 0
        %v4007 = vsel %vm679, %v3918, 0
        %v4010 = vsel %vm679, %v3919, 0
        %v4013 = vsel %vm679, %v3920, 0
        %v4016 = vsel %vm679, %v3921, 0
        %v4019 = vsel %vm679, %v3922, 0
        %v4022 = vsel %vm679, %v3923, 0
        %4024 = vmatprep.subr.mxu0 0.0
        %4025 = vmatpush1.msra.mxu0 %v264
        %4026 = vmatprep.subr.mxu0 0.0
        %4027 = vmatpush1.msra.mxu0 %v265
        %4028 = vmatprep.subr.mxu0 0.0
        %4029 = vmatpush1.msra.mxu0 %v266
        %4030 = vmatprep.subr.mxu0 0.0
        %4031 = vmatpush1.msra.mxu0 %v267
        %4032 = vmatprep.subr.mxu0 0.0
        %4033 = vmatpush1.msra.mxu0 0.0
        %4034 = vmatprep.subr.mxu0 0.0
        %4035 = vmatpush1.msra.mxu0 0.0
        %4036 = vmatprep.subr.mxu0 0.0
        %4037 = vmatpush1.msra.mxu0 0.0
        %4038 = vmatprep.subr.mxu0 0.0
        %4039 = vmatpush1.msra.mxu0 0.0
        %4040 = vmatprep.subr.mxu0 0.0
        %4041 = vmatpush1.msra.mxu0 0.0
        %4042 = vmatprep.subr.mxu0 0.0
        %4043 = vmatpush1.msra.mxu0 0.0
        %4044 = vmatprep.subr.mxu0 0.0
        %4045 = vmatpush1.msra.mxu0 0.0
        %4046 = vmatprep.subr.mxu0 0.0
        %4047 = vmatpush1.msra.mxu0 0.0
        %4048 = vmatprep.subr.mxu0 0.0
        %4049 = vmatpush1.msra.mxu0 0.0
        %4050 = vmatprep.subr.mxu0 0.0
        %4051 = vmatpush1.msra.mxu0 0.0
        %4052 = vmatprep.subr.mxu0 0.0
        %4053 = vmatpush1.msra.mxu0 0.0
        %4054 = vmatprep.subr.mxu0 0.0
        %4055 = vmatpush1.msra.mxu0 0.0
        %4056 = vmatprep.subr.mxu0 0.0
        %4057 = vmatpush1.msra.mxu0 0.0
        %4058 = vmatprep.subr.mxu0 0.0
        %4059 = vmatpush1.msra.mxu0 0.0
        %4060 = vmatprep.subr.mxu0 0.0
        %4061 = vmatpush1.msra.mxu0 0.0
        %4062 = vmatprep.subr.mxu0 0.0
        %4063 = vmatpush1.msra.mxu0 0.0
        %4064 = vmatprep.subr.mxu0 0.0
        %4065 = vmatpush1.msra.mxu0 0.0
        %4066 = vmatprep.subr.mxu0 0.0
        %4067 = vmatpush1.msra.mxu0 0.0
        %4068 = vmatprep.subr.mxu0 0.0
        %4069 = vmatpush1.msra.mxu0 0.0
        %4070 = vmatprep.subr.mxu0 0.0
        %4071 = vmatpush1.msra.mxu0 0.0
        %4072 = vmatprep.subr.mxu0 0.0
        %4073 = vmatpush1.msra.mxu0 0.0
        %4074 = vmatprep.subr.mxu0 0.0
        %4075 = vmatpush1.msra.mxu0 0.0
        %4076 = vmatprep.subr.mxu0 0.0
        %4077 = vmatpush1.msra.mxu0 0.0
        %4078 = vmatprep.subr.mxu0 0.0
        %4079 = vmatpush1.msra.mxu0 0.0
        %4080 = vmatprep.subr.mxu0 0.0
        %4081 = vmatpush1.msra.mxu0 0.0
        %4082 = vmatprep.subr.mxu0 0.0
        %4083 = vmatpush1.msra.mxu0 0.0
        %4084 = vmatprep.subr.mxu0 0.0
        %4085 = vmatpush1.msra.mxu0 0.0
        %4086 = vmatprep.subr.mxu0 0.0
        %4087 = vmatpush1.msra.mxu0 0.0
        %4088 = vmatprep.mubr.f32.mxu0 0.0
        %4089 = vmatmul.mubr.f32.gmra.mrb[0].mxu0 %v3929
        %v4090 = vpop.f32.mrb[0].mxu0
        %v4091 = vadd.f32 %v3927, %v4090
        %v4092 = vpop.f32.mrb[0].mxu0
        %4093 = vmatprep.mubr.f32.mxu0 0.0
        %4094 = vmatmul.mubr.f32.gmra.mrb[0].mxu0 %v3932
        %v4095 = vpop.f32.mrb[0].mxu0
        %v4096 = vadd.f32 %v3927, %v4095
        %v4097 = vpop.f32.mrb[0].mxu0
        %4098 = vmatprep.mubr.f32.mxu0 0.0
        %4099 = vmatmul.mubr.f32.gmra.mrb[0].mxu0 %v3935
        %v4100 = vpop.f32.mrb[0].mxu0
        %v4101 = vadd.f32 %v3927, %v4100
        %v4102 = vpop.f32.mrb[0].mxu0
        %4103 = vmatprep.mubr.f32.mxu0 0.0
        %4104 = vmatmul.mubr.f32.gmra.mrb[0].mxu0 %v3938
        %v4105 = vpop.f32.mrb[0].mxu0
        %v4106 = vadd.f32 %v3927, %v4105
        %v4107 = vpop.f32.mrb[0].mxu0
        %4108 = vmatprep.mubr.f32.mxu0 0.0
        %4109 = vmatmul.mubr.f32.gmra.mrb[0].mxu0 %v3941
        %v4110 = vpop.f32.mrb[0].mxu0
        %v4111 = vadd.f32 %v3927, %v4110
        %v4112 = vpop.f32.mrb[0].mxu0
        %4113 = vmatprep.mubr.f32.mxu0 0.0
        %4114 = vmatmul.mubr.f32.gmra.mrb[0].mxu0 %v3944
        %v4115 = vpop.f32.mrb[0].mxu0
        %v4116 = vadd.f32 %v3927, %v4115
        %v4117 = vpop.f32.mrb[0].mxu0
        %4118 = vmatprep.mubr.f32.mxu0 0.0
        %4119 = vmatmul.mubr.f32.gmra.mrb[0].mxu0 %v3947
        %v4120 = vpop.f32.mrb[0].mxu0
        %v4121 = vadd.f32 %v3927, %v4120
        %v4122 = vpop.f32.mrb[0].mxu0
        %4123 = vmatprep.mubr.f32.mxu0 0.0
        %4124 = vmatmul.mubr.f32.gmra.mrb[0].mxu0 %v3950
        %v4125 = vpop.f32.mrb[0].mxu0
        %v4126 = vadd.f32 %v3927, %v4125
        %v4127 = vpop.f32.mrb[0].mxu0
        %4128 = vmatprep.mubr.f32.mxu0 0.0
        %4129 = vmatmul.mubr.f32.gmra.mrb[0].mxu0 %v3953
        %v4130 = vpop.f32.mrb[0].mxu0
        %v4131 = vadd.f32 %v3927, %v4130
        %v4132 = vpop.f32.mrb[0].mxu0
        %4133 = vmatprep.mubr.f32.mxu0 0.0
        %4134 = vmatmul.mubr.f32.gmra.mrb[0].mxu0 %v3956
        %v4135 = vpop.f32.mrb[0].mxu0
        %v4136 = vadd.f32 %v3927, %v4135
        %v4137 = vpop.f32.mrb[0].mxu0
        %4138 = vmatprep.mubr.f32.mxu0 0.0
        %4139 = vmatmul.mubr.f32.gmra.mrb[0].mxu0 %v3959
        %v4140 = vpop.f32.mrb[0].mxu0
        %v4141 = vadd.f32 %v3927, %v4140
        %v4142 = vpop.f32.mrb[0].mxu0
        %4143 = vmatprep.mubr.f32.mxu0 0.0
        %4144 = vmatmul.mubr.f32.gmra.mrb[0].mxu0 %v3962
        %v4145 = vpop.f32.mrb[0].mxu0
        %v4146 = vadd.f32 %v3927, %v4145
        %v4147 = vpop.f32.mrb[0].mxu0
        %4148 = vmatprep.mubr.f32.mxu0 0.0
        %4149 = vmatmul.mubr.f32.gmra.mrb[0].mxu0 %v3965
        %v4150 = vpop.f32.mrb[0].mxu0
        %v4151 = vadd.f32 %v3927, %v4150
        %v4152 = vpop.f32.mrb[0].mxu0
        %4153 = vmatprep.mubr.f32.mxu0 0.0
        %4154 = vmatmul.mubr.f32.gmra.mrb[0].mxu0 %v3968
        %v4155 = vpop.f32.mrb[0].mxu0
        %v4156 = vadd.f32 %v3927, %v4155
        %v4157 = vpop.f32.mrb[0].mxu0
        %4158 = vmatprep.mubr.f32.mxu0 0.0
        %4159 = vmatmul.mubr.f32.gmra.mrb[0].mxu0 %v3971
        %v4160 = vpop.f32.mrb[0].mxu0
        %v4161 = vadd.f32 %v3927, %v4160
        %v4162 = vpop.f32.mrb[0].mxu0
        %4163 = vmatprep.mubr.f32.mxu0 0.0
        %4164 = vmatmul.mubr.f32.gmra.mrb[0].mxu0 %v3974
        %v4165 = vpop.f32.mrb[0].mxu0
        %v4166 = vadd.f32 %v3927, %v4165
        %v4167 = vpop.f32.mrb[0].mxu0
        %4168 = vmatprep.mubr.f32.mxu0 0.0
        %4169 = vmatmul.mubr.f32.gmra.mrb[0].mxu0 %v3977
        %v4170 = vpop.f32.mrb[0].mxu0
        %v4171 = vadd.f32 %v3927, %v4170
        %v4172 = vpop.f32.mrb[0].mxu0
        %4173 = vmatprep.mubr.f32.mxu0 0.0
        %4174 = vmatmul.mubr.f32.gmra.mrb[0].mxu0 %v3980
        %v4175 = vpop.f32.mrb[0].mxu0
        %v4176 = vadd.f32 %v3927, %v4175
        %v4177 = vpop.f32.mrb[0].mxu0
        %4178 = vmatprep.mubr.f32.mxu0 0.0
        %4179 = vmatmul.mubr.f32.gmra.mrb[0].mxu0 %v3983
        %v4180 = vpop.f32.mrb[0].mxu0
        %v4181 = vadd.f32 %v3927, %v4180
        %v4182 = vpop.f32.mrb[0].mxu0
        %4183 = vmatprep.mubr.f32.mxu0 0.0
        %4184 = vmatmul.mubr.f32.gmra.mrb[0].mxu0 %v3986
        %v4185 = vpop.f32.mrb[0].mxu0
        %v4186 = vadd.f32 %v3927, %v4185
        %v4187 = vpop.f32.mrb[0].mxu0
        %4188 = vmatprep.mubr.f32.mxu0 0.0
        %4189 = vmatmul.mubr.f32.gmra.mrb[0].mxu0 %v3989
        %v4190 = vpop.f32.mrb[0].mxu0
        %v4191 = vadd.f32 %v3927, %v4190
        %v4192 = vpop.f32.mrb[0].mxu0
        %4193 = vmatprep.mubr.f32.mxu0 0.0
        %4194 = vmatmul.mubr.f32.gmra.mrb[0].mxu0 %v3992
        %v4195 = vpop.f32.mrb[0].mxu0
        %v4196 = vadd.f32 %v3927, %v4195
        %v4197 = vpop.f32.mrb[0].mxu0
        %4198 = vmatprep.mubr.f32.mxu0 0.0
        %4199 = vmatmul.mubr.f32.gmra.mrb[0].mxu0 %v3995
        %v4200 = vpop.f32.mrb[0].mxu0
        %v4201 = vadd.f32 %v3927, %v4200
        %v4202 = vpop.f32.mrb[0].mxu0
        %4203 = vmatprep.mubr.f32.mxu0 0.0
        %4204 = vmatmul.mubr.f32.gmra.mrb[0].mxu0 %v3998
        %v4205 = vpop.f32.mrb[0].mxu0
        %v4206 = vadd.f32 %v3927, %v4205
        %v4207 = vpop.f32.mrb[0].mxu0
        %4208 = vmatprep.mubr.f32.mxu0 0.0
        %4209 = vmatmul.mubr.f32.gmra.mrb[0].mxu0 %v4001
        %v4210 = vpop.f32.mrb[0].mxu0
        %v4211 = vadd.f32 %v3927, %v4210
        %v4212 = vpop.f32.mrb[0].mxu0
        %4213 = vmatprep.mubr.f32.mxu0 0.0
        %4214 = vmatmul.mubr.f32.gmra.mrb[0].mxu0 %v4004
        %v4215 = vpop.f32.mrb[0].mxu0
        %v4216 = vadd.f32 %v3927, %v4215
        %v4217 = vpop.f32.mrb[0].mxu0
        %4218 = vmatprep.mubr.f32.mxu0 0.0
        %4219 = vmatmul.mubr.f32.gmra.mrb[0].mxu0 %v4007
        %v4220 = vpop.f32.mrb[0].mxu0
        %v4221 = vadd.f32 %v3927, %v4220
        %v4222 = vpop.f32.mrb[0].mxu0
        %4223 = vmatprep.mubr.f32.mxu0 0.0
        %4224 = vmatmul.mubr.f32.gmra.mrb[0].mxu0 %v4010
        %v4225 = vpop.f32.mrb[0].mxu0
        %v4226 = vadd.f32 %v3927, %v4225
        %v4227 = vpop.f32.mrb[0].mxu0
        %4228 = vmatprep.mubr.f32.mxu0 0.0
        %4229 = vmatmul.mubr.f32.gmra.mrb[0].mxu0 %v4013
        %v4230 = vpop.f32.mrb[0].mxu0
        %v4231 = vadd.f32 %v3927, %v4230
        %v4232 = vpop.f32.mrb[0].mxu0
        %4233 = vmatprep.mubr.f32.mxu0 0.0
        %4234 = vmatmul.mubr.f32.gmra.mrb[0].mxu0 %v4016
        %v4235 = vpop.f32.mrb[0].mxu0
        %v4236 = vadd.f32 %v3927, %v4235
        %v4237 = vpop.f32.mrb[0].mxu0
        %4238 = vmatprep.mubr.f32.mxu0 0.0
        %4239 = vmatmul.mubr.f32.gmra.mrb[0].mxu0 %v4019
        %v4240 = vpop.f32.mrb[0].mxu0
        %v4241 = vadd.f32 %v3927, %v4240
        %v4242 = vpop.f32.mrb[0].mxu0
        %4243 = vmatprep.mubr.f32.mxu0 0.0
        %4244 = vmatmul.mubr.f32.gmra.mrb[0].mxu0 %v4022
        %v4245 = vpop.f32.mrb[0].mxu0
        %v4246 = vadd.f32 %v3927, %v4245
        %v4247 = vpop.f32.mrb[0].mxu0
        %4248 = vdwg.mxu0
        %v4249 = vmax.f32 %v4091, 0.0
        %v4250 = vmax.f32 %v4096, 0.0
        %v4251 = vmax.f32 %v4101, 0.0
        %v4252 = vmax.f32 %v4106, 0.0
        %v4253 = vmax.f32 %v4111, 0.0
        %v4254 = vmax.f32 %v4116, 0.0
        %v4255 = vmax.f32 %v4121, 0.0
        %v4256 = vmax.f32 %v4126, 0.0
        %v4257 = vmax.f32 %v4131, 0.0
        %v4258 = vmax.f32 %v4136, 0.0
        %v4259 = vmax.f32 %v4141, 0.0
        %v4260 = vmax.f32 %v4146, 0.0
        %v4261 = vmax.f32 %v4151, 0.0
        %v4262 = vmax.f32 %v4156, 0.0
        %v4263 = vmax.f32 %v4161, 0.0
        %v4264 = vmax.f32 %v4166, 0.0
        %v4265 = vmax.f32 %v4171, 0.0
        %v4266 = vmax.f32 %v4176, 0.0
        %v4267 = vmax.f32 %v4181, 0.0
        %v4268 = vmax.f32 %v4186, 0.0
        %v4269 = vmax.f32 %v4191, 0.0
        %v4270 = vmax.f32 %v4196, 0.0
        %v4271 = vmax.f32 %v4201, 0.0
        %v4272 = vmax.f32 %v4206, 0.0
        %v4273 = vmax.f32 %v4211, 0.0
        %v4274 = vmax.f32 %v4216, 0.0
        %v4275 = vmax.f32 %v4221, 0.0
        %v4276 = vmax.f32 %v4226, 0.0
        %v4277 = vmax.f32 %v4231, 0.0
        %v4278 = vmax.f32 %v4236, 0.0
        %v4279 = vmax.f32 %v4241, 0.0
        %v4280 = vmax.f32 %v4246, 0.0
        %v4281 = vlaneseq
        %v4282 = vshrl.u32 %v4281, 7
        %v4283 = vsub.s32 4, %v4282
        %v4284 = vrot.slane %v253, %v4283
        %v4286 = vsel %vm679, %v4249, 0
        %v4289 = vsel %vm679, %v4250, 0
        %v4292 = vsel %vm679, %v4251, 0
        %v4295 = vsel %vm679, %v4252, 0
        %v4298 = vsel %vm679, %v4253, 0
        %v4301 = vsel %vm679, %v4254, 0
        %v4304 = vsel %vm679, %v4255, 0
        %v4307 = vsel %vm679, %v4256, 0
        %v4310 = vsel %vm679, %v4257, 0
        %v4313 = vsel %vm679, %v4258, 0
        %v4316 = vsel %vm679, %v4259, 0
        %v4319 = vsel %vm679, %v4260, 0
        %v4322 = vsel %vm679, %v4261, 0
        %v4325 = vsel %vm679, %v4262, 0
        %v4328 = vsel %vm679, %v4263, 0
        %v4331 = vsel %vm679, %v4264, 0
        %v4334 = vsel %vm679, %v4265, 0
        %v4337 = vsel %vm679, %v4266, 0
        %v4340 = vsel %vm679, %v4267, 0
        %v4343 = vsel %vm679, %v4268, 0
        %v4346 = vsel %vm679, %v4269, 0
        %v4349 = vsel %vm679, %v4270, 0
        %v4352 = vsel %vm679, %v4271, 0
        %v4355 = vsel %vm679, %v4272, 0
        %v4358 = vsel %vm679, %v4273, 0
        %v4361 = vsel %vm679, %v4274, 0
        %v4364 = vsel %vm679, %v4275, 0
        %v4367 = vsel %vm679, %v4276, 0
        %v4370 = vsel %vm679, %v4277, 0
        %v4373 = vsel %vm679, %v4278, 0
        %v4376 = vsel %vm679, %v4279, 0
        %v4379 = vsel %vm679, %v4280, 0
        %4381 = vmatprep.subr.mxu0 0.0
        %4382 = vmatpush1.msra.mxu0 %v269
        %4383 = vmatprep.subr.mxu0 0.0
        %4384 = vmatpush1.msra.mxu0 %v270
        %4385 = vmatprep.subr.mxu0 0.0
        %4386 = vmatpush1.msra.mxu0 %v271
        %4387 = vmatprep.subr.mxu0 0.0
        %4388 = vmatpush1.msra.mxu0 %v272
        %4389 = vmatprep.subr.mxu0 0.0
        %4390 = vmatpush1.msra.mxu0 0.0
        %4391 = vmatprep.subr.mxu0 0.0
        %4392 = vmatpush1.msra.mxu0 0.0
        %4393 = vmatprep.subr.mxu0 0.0
        %4394 = vmatpush1.msra.mxu0 0.0
        %4395 = vmatprep.subr.mxu0 0.0
        %4396 = vmatpush1.msra.mxu0 0.0
        %4397 = vmatprep.subr.mxu0 0.0
        %4398 = vmatpush1.msra.mxu0 0.0
        %4399 = vmatprep.subr.mxu0 0.0
        %4400 = vmatpush1.msra.mxu0 0.0
        %4401 = vmatprep.subr.mxu0 0.0
        %4402 = vmatpush1.msra.mxu0 0.0
        %4403 = vmatprep.subr.mxu0 0.0
        %4404 = vmatpush1.msra.mxu0 0.0
        %4405 = vmatprep.subr.mxu0 0.0
        %4406 = vmatpush1.msra.mxu0 0.0
        %4407 = vmatprep.subr.mxu0 0.0
        %4408 = vmatpush1.msra.mxu0 0.0
        %4409 = vmatprep.subr.mxu0 0.0
        %4410 = vmatpush1.msra.mxu0 0.0
        %4411 = vmatprep.subr.mxu0 0.0
        %4412 = vmatpush1.msra.mxu0 0.0
        %4413 = vmatprep.subr.mxu0 0.0
        %4414 = vmatpush1.msra.mxu0 0.0
        %4415 = vmatprep.subr.mxu0 0.0
        %4416 = vmatpush1.msra.mxu0 0.0
        %4417 = vmatprep.subr.mxu0 0.0
        %4418 = vmatpush1.msra.mxu0 0.0
        %4419 = vmatprep.subr.mxu0 0.0
        %4420 = vmatpush1.msra.mxu0 0.0
        %4421 = vmatprep.subr.mxu0 0.0
        %4422 = vmatpush1.msra.mxu0 0.0
        %4423 = vmatprep.subr.mxu0 0.0
        %4424 = vmatpush1.msra.mxu0 0.0
        %4425 = vmatprep.subr.mxu0 0.0
        %4426 = vmatpush1.msra.mxu0 0.0
        %4427 = vmatprep.subr.mxu0 0.0
        %4428 = vmatpush1.msra.mxu0 0.0
        %4429 = vmatprep.subr.mxu0 0.0
        %4430 = vmatpush1.msra.mxu0 0.0
        %4431 = vmatprep.subr.mxu0 0.0
        %4432 = vmatpush1.msra.mxu0 0.0
        %4433 = vmatprep.subr.mxu0 0.0
        %4434 = vmatpush1.msra.mxu0 0.0
        %4435 = vmatprep.subr.mxu0 0.0
        %4436 = vmatpush1.msra.mxu0 0.0
        %4437 = vmatprep.subr.mxu0 0.0
        %4438 = vmatpush1.msra.mxu0 0.0
        %4439 = vmatprep.subr.mxu0 0.0
        %4440 = vmatpush1.msra.mxu0 0.0
        %4441 = vmatprep.subr.mxu0 0.0
        %4442 = vmatpush1.msra.mxu0 0.0
        %4443 = vmatprep.subr.mxu0 0.0
        %4444 = vmatpush1.msra.mxu0 0.0
        %4445 = vmatprep.mubr.f32.mxu0 0.0
        %4446 = vmatmul.mubr.f32.gmra.mrb[0].mxu0 %v4286
        %v4447 = vpop.f32.mrb[0].mxu0
        %v4448 = vadd.f32 %v4284, %v4447
        %v4449 = vpop.f32.mrb[0].mxu0
        %4450 = vmatprep.mubr.f32.mxu0 0.0
        %4451 = vmatmul.mubr.f32.gmra.mrb[0].mxu0 %v4289
        %v4452 = vpop.f32.mrb[0].mxu0
        %v4453 = vadd.f32 %v4284, %v4452
        %v4454 = vpop.f32.mrb[0].mxu0
        %4455 = vmatprep.mubr.f32.mxu0 0.0
        %4456 = vmatmul.mubr.f32.gmra.mrb[0].mxu0 %v4292
        %v4457 = vpop.f32.mrb[0].mxu0
        %v4458 = vadd.f32 %v4284, %v4457
        %v4459 = vpop.f32.mrb[0].mxu0
        %4460 = vmatprep.mubr.f32.mxu0 0.0
        %4461 = vmatmul.mubr.f32.gmra.mrb[0].mxu0 %v4295
        %v4462 = vpop.f32.mrb[0].mxu0
        %v4463 = vadd.f32 %v4284, %v4462
        %v4464 = vpop.f32.mrb[0].mxu0
        %4465 = vmatprep.mubr.f32.mxu0 0.0
        %4466 = vmatmul.mubr.f32.gmra.mrb[0].mxu0 %v4298
        %v4467 = vpop.f32.mrb[0].mxu0
        %v4468 = vadd.f32 %v4284, %v4467
        %v4469 = vpop.f32.mrb[0].mxu0
        %4470 = vmatprep.mubr.f32.mxu0 0.0
        %4471 = vmatmul.mubr.f32.gmra.mrb[0].mxu0 %v4301
        %v4472 = vpop.f32.mrb[0].mxu0
        %v4473 = vadd.f32 %v4284, %v4472
        %v4474 = vpop.f32.mrb[0].mxu0
        %4475 = vmatprep.mubr.f32.mxu0 0.0
        %4476 = vmatmul.mubr.f32.gmra.mrb[0].mxu0 %v4304
        %v4477 = vpop.f32.mrb[0].mxu0
        %v4478 = vadd.f32 %v4284, %v4477
        %v4479 = vpop.f32.mrb[0].mxu0
        %4480 = vmatprep.mubr.f32.mxu0 0.0
        %4481 = vmatmul.mubr.f32.gmra.mrb[0].mxu0 %v4307
        %v4482 = vpop.f32.mrb[0].mxu0
        %v4483 = vadd.f32 %v4284, %v4482
        %v4484 = vpop.f32.mrb[0].mxu0
        %4485 = vmatprep.mubr.f32.mxu0 0.0
        %4486 = vmatmul.mubr.f32.gmra.mrb[0].mxu0 %v4310
        %v4487 = vpop.f32.mrb[0].mxu0
        %v4488 = vadd.f32 %v4284, %v4487
        %v4489 = vpop.f32.mrb[0].mxu0
        %4490 = vmatprep.mubr.f32.mxu0 0.0
        %4491 = vmatmul.mubr.f32.gmra.mrb[0].mxu0 %v4313
        %v4492 = vpop.f32.mrb[0].mxu0
        %v4493 = vadd.f32 %v4284, %v4492
        %v4494 = vpop.f32.mrb[0].mxu0
        %4495 = vmatprep.mubr.f32.mxu0 0.0
        %4496 = vmatmul.mubr.f32.gmra.mrb[0].mxu0 %v4316
        %v4497 = vpop.f32.mrb[0].mxu0
        %v4498 = vadd.f32 %v4284, %v4497
        %v4499 = vpop.f32.mrb[0].mxu0
        %4500 = vmatprep.mubr.f32.mxu0 0.0
        %4501 = vmatmul.mubr.f32.gmra.mrb[0].mxu0 %v4319
        %v4502 = vpop.f32.mrb[0].mxu0
        %v4503 = vadd.f32 %v4284, %v4502
        %v4504 = vpop.f32.mrb[0].mxu0
        %4505 = vmatprep.mubr.f32.mxu0 0.0
        %4506 = vmatmul.mubr.f32.gmra.mrb[0].mxu0 %v4322
        %v4507 = vpop.f32.mrb[0].mxu0
        %v4508 = vadd.f32 %v4284, %v4507
        %v4509 = vpop.f32.mrb[0].mxu0
        %4510 = vmatprep.mubr.f32.mxu0 0.0
        %4511 = vmatmul.mubr.f32.gmra.mrb[0].mxu0 %v4325
        %v4512 = vpop.f32.mrb[0].mxu0
        %v4513 = vadd.f32 %v4284, %v4512
        %v4514 = vpop.f32.mrb[0].mxu0
        %4515 = vmatprep.mubr.f32.mxu0 0.0
        %4516 = vmatmul.mubr.f32.gmra.mrb[0].mxu0 %v4328
        %v4517 = vpop.f32.mrb[0].mxu0
        %v4518 = vadd.f32 %v4284, %v4517
        %v4519 = vpop.f32.mrb[0].mxu0
        %4520 = vmatprep.mubr.f32.mxu0 0.0
        %4521 = vmatmul.mubr.f32.gmra.mrb[0].mxu0 %v4331
        %v4522 = vpop.f32.mrb[0].mxu0
        %v4523 = vadd.f32 %v4284, %v4522
        %v4524 = vpop.f32.mrb[0].mxu0
        %4525 = vmatprep.mubr.f32.mxu0 0.0
        %4526 = vmatmul.mubr.f32.gmra.mrb[0].mxu0 %v4334
        %v4527 = vpop.f32.mrb[0].mxu0
        %v4528 = vadd.f32 %v4284, %v4527
        %v4529 = vpop.f32.mrb[0].mxu0
        %4530 = vmatprep.mubr.f32.mxu0 0.0
        %4531 = vmatmul.mubr.f32.gmra.mrb[0].mxu0 %v4337
        %v4532 = vpop.f32.mrb[0].mxu0
        %v4533 = vadd.f32 %v4284, %v4532
        %v4534 = vpop.f32.mrb[0].mxu0
        %4535 = vmatprep.mubr.f32.mxu0 0.0
        %4536 = vmatmul.mubr.f32.gmra.mrb[0].mxu0 %v4340
        %v4537 = vpop.f32.mrb[0].mxu0
        %v4538 = vadd.f32 %v4284, %v4537
        %v4539 = vpop.f32.mrb[0].mxu0
        %4540 = vmatprep.mubr.f32.mxu0 0.0
        %4541 = vmatmul.mubr.f32.gmra.mrb[0].mxu0 %v4343
        %v4542 = vpop.f32.mrb[0].mxu0
        %v4543 = vadd.f32 %v4284, %v4542
        %v4544 = vpop.f32.mrb[0].mxu0
        %4545 = vmatprep.mubr.f32.mxu0 0.0
        %4546 = vmatmul.mubr.f32.gmra.mrb[0].mxu0 %v4346
        %v4547 = vpop.f32.mrb[0].mxu0
        %v4548 = vadd.f32 %v4284, %v4547
        %v4549 = vpop.f32.mrb[0].mxu0
        %4550 = vmatprep.mubr.f32.mxu0 0.0
        %4551 = vmatmul.mubr.f32.gmra.mrb[0].mxu0 %v4349
        %v4552 = vpop.f32.mrb[0].mxu0
        %v4553 = vadd.f32 %v4284, %v4552
        %v4554 = vpop.f32.mrb[0].mxu0
        %4555 = vmatprep.mubr.f32.mxu0 0.0
        %4556 = vmatmul.mubr.f32.gmra.mrb[0].mxu0 %v4352
        %v4557 = vpop.f32.mrb[0].mxu0
        %v4558 = vadd.f32 %v4284, %v4557
        %v4559 = vpop.f32.mrb[0].mxu0
        %4560 = vmatprep.mubr.f32.mxu0 0.0
        %4561 = vmatmul.mubr.f32.gmra.mrb[0].mxu0 %v4355
        %v4562 = vpop.f32.mrb[0].mxu0
        %v4563 = vadd.f32 %v4284, %v4562
        %v4564 = vpop.f32.mrb[0].mxu0
        %4565 = vmatprep.mubr.f32.mxu0 0.0
        %4566 = vmatmul.mubr.f32.gmra.mrb[0].mxu0 %v4358
        %v4567 = vpop.f32.mrb[0].mxu0
        %v4568 = vadd.f32 %v4284, %v4567
        %v4569 = vpop.f32.mrb[0].mxu0
        %4570 = vmatprep.mubr.f32.mxu0 0.0
        %4571 = vmatmul.mubr.f32.gmra.mrb[0].mxu0 %v4361
        %v4572 = vpop.f32.mrb[0].mxu0
        %v4573 = vadd.f32 %v4284, %v4572
        %v4574 = vpop.f32.mrb[0].mxu0
        %4575 = vmatprep.mubr.f32.mxu0 0.0
        %4576 = vmatmul.mubr.f32.gmra.mrb[0].mxu0 %v4364
        %v4577 = vpop.f32.mrb[0].mxu0
        %v4578 = vadd.f32 %v4284, %v4577
        %v4579 = vpop.f32.mrb[0].mxu0
        %4580 = vmatprep.mubr.f32.mxu0 0.0
        %4581 = vmatmul.mubr.f32.gmra.mrb[0].mxu0 %v4367
        %v4582 = vpop.f32.mrb[0].mxu0
        %v4583 = vadd.f32 %v4284, %v4582
        %v4584 = vpop.f32.mrb[0].mxu0
        %4585 = vmatprep.mubr.f32.mxu0 0.0
        %4586 = vmatmul.mubr.f32.gmra.mrb[0].mxu0 %v4370
        %v4587 = vpop.f32.mrb[0].mxu0
        %v4588 = vadd.f32 %v4284, %v4587
        %v4589 = vpop.f32.mrb[0].mxu0
        %4590 = vmatprep.mubr.f32.mxu0 0.0
        %4591 = vmatmul.mubr.f32.gmra.mrb[0].mxu0 %v4373
        %v4592 = vpop.f32.mrb[0].mxu0
        %v4593 = vadd.f32 %v4284, %v4592
        %v4594 = vpop.f32.mrb[0].mxu0
        %4595 = vmatprep.mubr.f32.mxu0 0.0
        %4596 = vmatmul.mubr.f32.gmra.mrb[0].mxu0 %v4376
        %v4597 = vpop.f32.mrb[0].mxu0
        %v4598 = vadd.f32 %v4284, %v4597
        %v4599 = vpop.f32.mrb[0].mxu0
        %4600 = vmatprep.mubr.f32.mxu0 0.0
        %4601 = vmatmul.mubr.f32.gmra.mrb[0].mxu0 %v4379
        %v4602 = vpop.f32.mrb[0].mxu0
        %v4603 = vadd.f32 %v4284, %v4602
        %v4604 = vpop.f32.mrb[0].mxu0
        %4605 = vdwg.mxu0
        %v4606 = vmax.f32 %v4448, 0.0
        %v4607 = vmax.f32 %v4453, 0.0
        %v4608 = vmax.f32 %v4458, 0.0
        %v4609 = vmax.f32 %v4463, 0.0
        %v4610 = vmax.f32 %v4468, 0.0
        %v4611 = vmax.f32 %v4473, 0.0
        %v4612 = vmax.f32 %v4478, 0.0
        %v4613 = vmax.f32 %v4483, 0.0
        %v4614 = vmax.f32 %v4488, 0.0
        %v4615 = vmax.f32 %v4493, 0.0
        %v4616 = vmax.f32 %v4498, 0.0
        %v4617 = vmax.f32 %v4503, 0.0
        %v4618 = vmax.f32 %v4508, 0.0
        %v4619 = vmax.f32 %v4513, 0.0
        %v4620 = vmax.f32 %v4518, 0.0
        %v4621 = vmax.f32 %v4523, 0.0
        %v4622 = vmax.f32 %v4528, 0.0
        %v4623 = vmax.f32 %v4533, 0.0
        %v4624 = vmax.f32 %v4538, 0.0
        %v4625 = vmax.f32 %v4543, 0.0
        %v4626 = vmax.f32 %v4548, 0.0
        %v4627 = vmax.f32 %v4553, 0.0
        %v4628 = vmax.f32 %v4558, 0.0
        %v4629 = vmax.f32 %v4563, 0.0
        %v4630 = vmax.f32 %v4568, 0.0
        %v4631 = vmax.f32 %v4573, 0.0
        %v4632 = vmax.f32 %v4578, 0.0
        %v4633 = vmax.f32 %v4583, 0.0
        %v4634 = vmax.f32 %v4588, 0.0
        %v4635 = vmax.f32 %v4593, 0.0
        %v4636 = vmax.f32 %v4598, 0.0
        %v4637 = vmax.f32 %v4603, 0.0
        %v4638 = vlaneseq
        %v4639 = vshrl.u32 %v4638, 7
        %v4640 = vsub.s32 5, %v4639
        %v4641 = vrot.slane %v253, %v4640
        %v4643 = vsel %vm679, %v4606, 0
        %v4646 = vsel %vm679, %v4607, 0
        %v4649 = vsel %vm679, %v4608, 0
        %v4652 = vsel %vm679, %v4609, 0
        %v4655 = vsel %vm679, %v4610, 0
        %v4658 = vsel %vm679, %v4611, 0
        %v4661 = vsel %vm679, %v4612, 0
        %v4664 = vsel %vm679, %v4613, 0
        %v4667 = vsel %vm679, %v4614, 0
        %v4670 = vsel %vm679, %v4615, 0
        %v4673 = vsel %vm679, %v4616, 0
        %v4676 = vsel %vm679, %v4617, 0
        %v4679 = vsel %vm679, %v4618, 0
        %v4682 = vsel %vm679, %v4619, 0
        %v4685 = vsel %vm679, %v4620, 0
        %v4688 = vsel %vm679, %v4621, 0
        %v4691 = vsel %vm679, %v4622, 0
        %v4694 = vsel %vm679, %v4623, 0
        %v4697 = vsel %vm679, %v4624, 0
        %v4700 = vsel %vm679, %v4625, 0
        %v4703 = vsel %vm679, %v4626, 0
        %v4706 = vsel %vm679, %v4627, 0
        %v4709 = vsel %vm679, %v4628, 0
        %v4712 = vsel %vm679, %v4629, 0
        %v4715 = vsel %vm679, %v4630, 0
        %v4718 = vsel %vm679, %v4631, 0
        %v4721 = vsel %vm679, %v4632, 0
        %v4724 = vsel %vm679, %v4633, 0
        %v4727 = vsel %vm679, %v4634, 0
        %v4730 = vsel %vm679, %v4635, 0
        %v4733 = vsel %vm679, %v4636, 0
        %v4736 = vsel %vm679, %v4637, 0
        %4738 = vmatprep.subr.mxu0 0.0
        %4739 = vmatpush1.msra.mxu0 %v274
        %4740 = vmatprep.subr.mxu0 0.0
        %4741 = vmatpush1.msra.mxu0 %v275
        %4742 = vmatprep.subr.mxu0 0.0
        %4743 = vmatpush1.msra.mxu0 %v276
        %4744 = vmatprep.subr.mxu0 0.0
        %4745 = vmatpush1.msra.mxu0 %v277
        %4746 = vmatprep.subr.mxu0 0.0
        %4747 = vmatpush1.msra.mxu0 0.0
        %4748 = vmatprep.subr.mxu0 0.0
        %4749 = vmatpush1.msra.mxu0 0.0
        %4750 = vmatprep.subr.mxu0 0.0
        %4751 = vmatpush1.msra.mxu0 0.0
        %4752 = vmatprep.subr.mxu0 0.0
        %4753 = vmatpush1.msra.mxu0 0.0
        %4754 = vmatprep.subr.mxu0 0.0
        %4755 = vmatpush1.msra.mxu0 0.0
        %4756 = vmatprep.subr.mxu0 0.0
        %4757 = vmatpush1.msra.mxu0 0.0
        %4758 = vmatprep.subr.mxu0 0.0
        %4759 = vmatpush1.msra.mxu0 0.0
        %4760 = vmatprep.subr.mxu0 0.0
        %4761 = vmatpush1.msra.mxu0 0.0
        %4762 = vmatprep.subr.mxu0 0.0
        %4763 = vmatpush1.msra.mxu0 0.0
        %4764 = vmatprep.subr.mxu0 0.0
        %4765 = vmatpush1.msra.mxu0 0.0
        %4766 = vmatprep.subr.mxu0 0.0
        %4767 = vmatpush1.msra.mxu0 0.0
        %4768 = vmatprep.subr.mxu0 0.0
        %4769 = vmatpush1.msra.mxu0 0.0
        %4770 = vmatprep.subr.mxu0 0.0
        %4771 = vmatpush1.msra.mxu0 0.0
        %4772 = vmatprep.subr.mxu0 0.0
        %4773 = vmatpush1.msra.mxu0 0.0
        %4774 = vmatprep.subr.mxu0 0.0
        %4775 = vmatpush1.msra.mxu0 0.0
        %4776 = vmatprep.subr.mxu0 0.0
        %4777 = vmatpush1.msra.mxu0 0.0
        %4778 = vmatprep.subr.mxu0 0.0
        %4779 = vmatpush1.msra.mxu0 0.0
        %4780 = vmatprep.subr.mxu0 0.0
        %4781 = vmatpush1.msra.mxu0 0.0
        %4782 = vmatprep.subr.mxu0 0.0
        %4783 = vmatpush1.msra.mxu0 0.0
        %4784 = vmatprep.subr.mxu0 0.0
        %4785 = vmatpush1.msra.mxu0 0.0
        %4786 = vmatprep.subr.mxu0 0.0
        %4787 = vmatpush1.msra.mxu0 0.0
        %4788 = vmatprep.subr.mxu0 0.0
        %4789 = vmatpush1.msra.mxu0 0.0
        %4790 = vmatprep.subr.mxu0 0.0
        %4791 = vmatpush1.msra.mxu0 0.0
        %4792 = vmatprep.subr.mxu0 0.0
        %4793 = vmatpush1.msra.mxu0 0.0
        %4794 = vmatprep.subr.mxu0 0.0
        %4795 = vmatpush1.msra.mxu0 0.0
        %4796 = vmatprep.subr.mxu0 0.0
        %4797 = vmatpush1.msra.mxu0 0.0
        %4798 = vmatprep.subr.mxu0 0.0
        %4799 = vmatpush1.msra.mxu0 0.0
        %4800 = vmatprep.subr.mxu0 0.0
        %4801 = vmatpush1.msra.mxu0 0.0
        %4802 = vmatprep.mubr.f32.mxu0 0.0
        %4803 = vmatmul.mubr.f32.gmra.mrb[0].mxu0 %v4643
        %v4804 = vpop.f32.mrb[0].mxu0
        %v4805 = vadd.f32 %v4641, %v4804
        %v4806 = vpop.f32.mrb[0].mxu0
        %4807 = vmatprep.mubr.f32.mxu0 0.0
        %4808 = vmatmul.mubr.f32.gmra.mrb[0].mxu0 %v4646
        %v4809 = vpop.f32.mrb[0].mxu0
        %v4810 = vadd.f32 %v4641, %v4809
        %v4811 = vpop.f32.mrb[0].mxu0
        %4812 = vmatprep.mubr.f32.mxu0 0.0
        %4813 = vmatmul.mubr.f32.gmra.mrb[0].mxu0 %v4649
        %v4814 = vpop.f32.mrb[0].mxu0
        %v4815 = vadd.f32 %v4641, %v4814
        %v4816 = vpop.f32.mrb[0].mxu0
        %4817 = vmatprep.mubr.f32.mxu0 0.0
        %4818 = vmatmul.mubr.f32.gmra.mrb[0].mxu0 %v4652
        %v4819 = vpop.f32.mrb[0].mxu0
        %v4820 = vadd.f32 %v4641, %v4819
        %v4821 = vpop.f32.mrb[0].mxu0
        %4822 = vmatprep.mubr.f32.mxu0 0.0
        %4823 = vmatmul.mubr.f32.gmra.mrb[0].mxu0 %v4655
        %v4824 = vpop.f32.mrb[0].mxu0
        %v4825 = vadd.f32 %v4641, %v4824
        %v4826 = vpop.f32.mrb[0].mxu0
        %4827 = vmatprep.mubr.f32.mxu0 0.0
        %4828 = vmatmul.mubr.f32.gmra.mrb[0].mxu0 %v4658
        %v4829 = vpop.f32.mrb[0].mxu0
        %v4830 = vadd.f32 %v4641, %v4829
        %v4831 = vpop.f32.mrb[0].mxu0
        %4832 = vmatprep.mubr.f32.mxu0 0.0
        %4833 = vmatmul.mubr.f32.gmra.mrb[0].mxu0 %v4661
        %v4834 = vpop.f32.mrb[0].mxu0
        %v4835 = vadd.f32 %v4641, %v4834
        %v4836 = vpop.f32.mrb[0].mxu0
        %4837 = vmatprep.mubr.f32.mxu0 0.0
        %4838 = vmatmul.mubr.f32.gmra.mrb[0].mxu0 %v4664
        %v4839 = vpop.f32.mrb[0].mxu0
        %v4840 = vadd.f32 %v4641, %v4839
        %v4841 = vpop.f32.mrb[0].mxu0
        %4842 = vmatprep.mubr.f32.mxu0 0.0
        %4843 = vmatmul.mubr.f32.gmra.mrb[0].mxu0 %v4667
        %v4844 = vpop.f32.mrb[0].mxu0
        %v4845 = vadd.f32 %v4641, %v4844
        %v4846 = vpop.f32.mrb[0].mxu0
        %4847 = vmatprep.mubr.f32.mxu0 0.0
        %4848 = vmatmul.mubr.f32.gmra.mrb[0].mxu0 %v4670
        %v4849 = vpop.f32.mrb[0].mxu0
        %v4850 = vadd.f32 %v4641, %v4849
        %v4851 = vpop.f32.mrb[0].mxu0
        %4852 = vmatprep.mubr.f32.mxu0 0.0
        %4853 = vmatmul.mubr.f32.gmra.mrb[0].mxu0 %v4673
        %v4854 = vpop.f32.mrb[0].mxu0
        %v4855 = vadd.f32 %v4641, %v4854
        %v4856 = vpop.f32.mrb[0].mxu0
        %4857 = vmatprep.mubr.f32.mxu0 0.0
        %4858 = vmatmul.mubr.f32.gmra.mrb[0].mxu0 %v4676
        %v4859 = vpop.f32.mrb[0].mxu0
        %v4860 = vadd.f32 %v4641, %v4859
        %v4861 = vpop.f32.mrb[0].mxu0
        %4862 = vmatprep.mubr.f32.mxu0 0.0
        %4863 = vmatmul.mubr.f32.gmra.mrb[0].mxu0 %v4679
        %v4864 = vpop.f32.mrb[0].mxu0
        %v4865 = vadd.f32 %v4641, %v4864
        %v4866 = vpop.f32.mrb[0].mxu0
        %4867 = vmatprep.mubr.f32.mxu0 0.0
        %4868 = vmatmul.mubr.f32.gmra.mrb[0].mxu0 %v4682
        %v4869 = vpop.f32.mrb[0].mxu0
        %v4870 = vadd.f32 %v4641, %v4869
        %v4871 = vpop.f32.mrb[0].mxu0
        %4872 = vmatprep.mubr.f32.mxu0 0.0
        %4873 = vmatmul.mubr.f32.gmra.mrb[0].mxu0 %v4685
        %v4874 = vpop.f32.mrb[0].mxu0
        %v4875 = vadd.f32 %v4641, %v4874
        %v4876 = vpop.f32.mrb[0].mxu0
        %4877 = vmatprep.mubr.f32.mxu0 0.0
        %4878 = vmatmul.mubr.f32.gmra.mrb[0].mxu0 %v4688
        %v4879 = vpop.f32.mrb[0].mxu0
        %v4880 = vadd.f32 %v4641, %v4879
        %v4881 = vpop.f32.mrb[0].mxu0
        %4882 = vmatprep.mubr.f32.mxu0 0.0
        %4883 = vmatmul.mubr.f32.gmra.mrb[0].mxu0 %v4691
        %v4884 = vpop.f32.mrb[0].mxu0
        %v4885 = vadd.f32 %v4641, %v4884
        %v4886 = vpop.f32.mrb[0].mxu0
        %4887 = vmatprep.mubr.f32.mxu0 0.0
        %4888 = vmatmul.mubr.f32.gmra.mrb[0].mxu0 %v4694
        %v4889 = vpop.f32.mrb[0].mxu0
        %v4890 = vadd.f32 %v4641, %v4889
        %v4891 = vpop.f32.mrb[0].mxu0
        %4892 = vmatprep.mubr.f32.mxu0 0.0
        %4893 = vmatmul.mubr.f32.gmra.mrb[0].mxu0 %v4697
        %v4894 = vpop.f32.mrb[0].mxu0
        %v4895 = vadd.f32 %v4641, %v4894
        %v4896 = vpop.f32.mrb[0].mxu0
        %4897 = vmatprep.mubr.f32.mxu0 0.0
        %4898 = vmatmul.mubr.f32.gmra.mrb[0].mxu0 %v4700
        %v4899 = vpop.f32.mrb[0].mxu0
        %v4900 = vadd.f32 %v4641, %v4899
        %v4901 = vpop.f32.mrb[0].mxu0
        %4902 = vmatprep.mubr.f32.mxu0 0.0
        %4903 = vmatmul.mubr.f32.gmra.mrb[0].mxu0 %v4703
        %v4904 = vpop.f32.mrb[0].mxu0
        %v4905 = vadd.f32 %v4641, %v4904
        %v4906 = vpop.f32.mrb[0].mxu0
        %4907 = vmatprep.mubr.f32.mxu0 0.0
        %4908 = vmatmul.mubr.f32.gmra.mrb[0].mxu0 %v4706
        %v4909 = vpop.f32.mrb[0].mxu0
        %v4910 = vadd.f32 %v4641, %v4909
        %v4911 = vpop.f32.mrb[0].mxu0
        %4912 = vmatprep.mubr.f32.mxu0 0.0
        %4913 = vmatmul.mubr.f32.gmra.mrb[0].mxu0 %v4709
        %v4914 = vpop.f32.mrb[0].mxu0
        %v4915 = vadd.f32 %v4641, %v4914
        %v4916 = vpop.f32.mrb[0].mxu0
        %4917 = vmatprep.mubr.f32.mxu0 0.0
        %4918 = vmatmul.mubr.f32.gmra.mrb[0].mxu0 %v4712
        %v4919 = vpop.f32.mrb[0].mxu0
        %v4920 = vadd.f32 %v4641, %v4919
        %v4921 = vpop.f32.mrb[0].mxu0
        %4922 = vmatprep.mubr.f32.mxu0 0.0
        %4923 = vmatmul.mubr.f32.gmra.mrb[0].mxu0 %v4715
        %v4924 = vpop.f32.mrb[0].mxu0
        %v4925 = vadd.f32 %v4641, %v4924
        %v4926 = vpop.f32.mrb[0].mxu0
        %4927 = vmatprep.mubr.f32.mxu0 0.0
        %4928 = vmatmul.mubr.f32.gmra.mrb[0].mxu0 %v4718
        %v4929 = vpop.f32.mrb[0].mxu0
        %v4930 = vadd.f32 %v4641, %v4929
        %v4931 = vpop.f32.mrb[0].mxu0
        %4932 = vmatprep.mubr.f32.mxu0 0.0
        %4933 = vmatmul.mubr.f32.gmra.mrb[0].mxu0 %v4721
        %v4934 = vpop.f32.mrb[0].mxu0
        %v4935 = vadd.f32 %v4641, %v4934
        %v4936 = vpop.f32.mrb[0].mxu0
        %4937 = vmatprep.mubr.f32.mxu0 0.0
        %4938 = vmatmul.mubr.f32.gmra.mrb[0].mxu0 %v4724
        %v4939 = vpop.f32.mrb[0].mxu0
        %v4940 = vadd.f32 %v4641, %v4939
        %v4941 = vpop.f32.mrb[0].mxu0
        %4942 = vmatprep.mubr.f32.mxu0 0.0
        %4943 = vmatmul.mubr.f32.gmra.mrb[0].mxu0 %v4727
        %v4944 = vpop.f32.mrb[0].mxu0
        %v4945 = vadd.f32 %v4641, %v4944
        %v4946 = vpop.f32.mrb[0].mxu0
        %4947 = vmatprep.mubr.f32.mxu0 0.0
        %4948 = vmatmul.mubr.f32.gmra.mrb[0].mxu0 %v4730
        %v4949 = vpop.f32.mrb[0].mxu0
        %v4950 = vadd.f32 %v4641, %v4949
        %v4951 = vpop.f32.mrb[0].mxu0
        %4952 = vmatprep.mubr.f32.mxu0 0.0
        %4953 = vmatmul.mubr.f32.gmra.mrb[0].mxu0 %v4733
        %v4954 = vpop.f32.mrb[0].mxu0
        %v4955 = vadd.f32 %v4641, %v4954
        %v4956 = vpop.f32.mrb[0].mxu0
        %4957 = vmatprep.mubr.f32.mxu0 0.0
        %4958 = vmatmul.mubr.f32.gmra.mrb[0].mxu0 %v4736
        %v4959 = vpop.f32.mrb[0].mxu0
        %v4960 = vadd.f32 %v4641, %v4959
        %v4961 = vpop.f32.mrb[0].mxu0
        %4962 = vdwg.mxu0
        %v4963 = vmax.f32 %v4805, 0.0
        %v4964 = vmax.f32 %v4810, 0.0
        %v4965 = vmax.f32 %v4815, 0.0
        %v4966 = vmax.f32 %v4820, 0.0
        %v4967 = vmax.f32 %v4825, 0.0
        %v4968 = vmax.f32 %v4830, 0.0
        %v4969 = vmax.f32 %v4835, 0.0
        %v4970 = vmax.f32 %v4840, 0.0
        %v4971 = vmax.f32 %v4845, 0.0
        %v4972 = vmax.f32 %v4850, 0.0
        %v4973 = vmax.f32 %v4855, 0.0
        %v4974 = vmax.f32 %v4860, 0.0
        %v4975 = vmax.f32 %v4865, 0.0
        %v4976 = vmax.f32 %v4870, 0.0
        %v4977 = vmax.f32 %v4875, 0.0
        %v4978 = vmax.f32 %v4880, 0.0
        %v4979 = vmax.f32 %v4885, 0.0
        %v4980 = vmax.f32 %v4890, 0.0
        %v4981 = vmax.f32 %v4895, 0.0
        %v4982 = vmax.f32 %v4900, 0.0
        %v4983 = vmax.f32 %v4905, 0.0
        %v4984 = vmax.f32 %v4910, 0.0
        %v4985 = vmax.f32 %v4915, 0.0
        %v4986 = vmax.f32 %v4920, 0.0
        %v4987 = vmax.f32 %v4925, 0.0
        %v4988 = vmax.f32 %v4930, 0.0
        %v4989 = vmax.f32 %v4935, 0.0
        %v4990 = vmax.f32 %v4940, 0.0
        %v4991 = vmax.f32 %v4945, 0.0
        %v4992 = vmax.f32 %v4950, 0.0
        %v4993 = vmax.f32 %v4955, 0.0
        %v4994 = vmax.f32 %v4960, 0.0
        %v4995 = vmul.f32 %v4963, 0.33333334
        %v4996 = vmul.f32 %v4964, 0.33333334
        %v4997 = vmul.f32 %v4965, 0.33333334
        %v4998 = vmul.f32 %v4966, 0.33333334
        %v4999 = vmul.f32 %v4967, 0.33333334
        %v5000 = vmul.f32 %v4968, 0.33333334
        %v5001 = vmul.f32 %v4969, 0.33333334
        %v5002 = vmul.f32 %v4970, 0.33333334
        %v5003 = vmul.f32 %v4971, 0.33333334
        %v5004 = vmul.f32 %v4972, 0.33333334
        %v5005 = vmul.f32 %v4973, 0.33333334
        %v5006 = vmul.f32 %v4974, 0.33333334
        %v5007 = vmul.f32 %v4975, 0.33333334
        %v5008 = vmul.f32 %v4976, 0.33333334
        %v5009 = vmul.f32 %v4977, 0.33333334
        %v5010 = vmul.f32 %v4978, 0.33333334
        %v5011 = vmul.f32 %v4979, 0.33333334
        %v5012 = vmul.f32 %v4980, 0.33333334
        %v5013 = vmul.f32 %v4981, 0.33333334
        %v5014 = vmul.f32 %v4982, 0.33333334
        %v5015 = vmul.f32 %v4983, 0.33333334
        %v5016 = vmul.f32 %v4984, 0.33333334
        %v5017 = vmul.f32 %v4985, 0.33333334
        %v5018 = vmul.f32 %v4986, 0.33333334
        %v5019 = vmul.f32 %v4987, 0.33333334
        %v5020 = vmul.f32 %v4988, 0.33333334
        %v5021 = vmul.f32 %v4989, 0.33333334
        %v5022 = vmul.f32 %v4990, 0.33333334
        %v5023 = vmul.f32 %v4991, 0.33333334
        %v5024 = vmul.f32 %v4992, 0.33333334
        %v5025 = vmul.f32 %v4993, 0.33333334
        %v5026 = vmul.f32 %v4994, 0.33333334
        %v5027 = vadd.f32 %v4249, %v4995
        %v5028 = vadd.f32 %v4250, %v4996
        %v5029 = vadd.f32 %v4251, %v4997
        %v5030 = vadd.f32 %v4252, %v4998
        %v5031 = vadd.f32 %v4253, %v4999
        %v5032 = vadd.f32 %v4254, %v5000
        %v5033 = vadd.f32 %v4255, %v5001
        %v5034 = vadd.f32 %v4256, %v5002
        %v5035 = vadd.f32 %v4257, %v5003
        %v5036 = vadd.f32 %v4258, %v5004
        %v5037 = vadd.f32 %v4259, %v5005
        %v5038 = vadd.f32 %v4260, %v5006
        %v5039 = vadd.f32 %v4261, %v5007
        %v5040 = vadd.f32 %v4262, %v5008
        %v5041 = vadd.f32 %v4263, %v5009
        %v5042 = vadd.f32 %v4264, %v5010
        %v5043 = vadd.f32 %v4265, %v5011
        %v5044 = vadd.f32 %v4266, %v5012
        %v5045 = vadd.f32 %v4267, %v5013
        %v5046 = vadd.f32 %v4268, %v5014
        %v5047 = vadd.f32 %v4269, %v5015
        %v5048 = vadd.f32 %v4270, %v5016
        %v5049 = vadd.f32 %v4271, %v5017
        %v5050 = vadd.f32 %v4272, %v5018
        %v5051 = vadd.f32 %v4273, %v5019
        %v5052 = vadd.f32 %v4274, %v5020
        %v5053 = vadd.f32 %v4275, %v5021
        %v5054 = vadd.f32 %v4276, %v5022
        %v5055 = vadd.f32 %v4277, %v5023
        %v5056 = vadd.f32 %v4278, %v5024
        %v5057 = vadd.f32 %v4279, %v5025
        %v5058 = vadd.f32 %v4280, %v5026
        %v5060 = vsel %vm679, %v5027, 0
        %v5063 = vsel %vm679, %v5028, 0
        %v5066 = vsel %vm679, %v5029, 0
        %v5069 = vsel %vm679, %v5030, 0
        %v5072 = vsel %vm679, %v5031, 0
        %v5075 = vsel %vm679, %v5032, 0
        %v5078 = vsel %vm679, %v5033, 0
        %v5081 = vsel %vm679, %v5034, 0
        %v5084 = vsel %vm679, %v5035, 0
        %v5087 = vsel %vm679, %v5036, 0
        %v5090 = vsel %vm679, %v5037, 0
        %v5093 = vsel %vm679, %v5038, 0
        %v5096 = vsel %vm679, %v5039, 0
        %v5099 = vsel %vm679, %v5040, 0
        %v5102 = vsel %vm679, %v5041, 0
        %v5105 = vsel %vm679, %v5042, 0
        %v5108 = vsel %vm679, %v5043, 0
        %v5111 = vsel %vm679, %v5044, 0
        %v5114 = vsel %vm679, %v5045, 0
        %v5117 = vsel %vm679, %v5046, 0
        %v5120 = vsel %vm679, %v5047, 0
        %v5123 = vsel %vm679, %v5048, 0
        %v5126 = vsel %vm679, %v5049, 0
        %v5129 = vsel %vm679, %v5050, 0
        %v5132 = vsel %vm679, %v5051, 0
        %v5135 = vsel %vm679, %v5052, 0
        %v5138 = vsel %vm679, %v5053, 0
        %v5141 = vsel %vm679, %v5054, 0
        %v5144 = vsel %vm679, %v5055, 0
        %v5147 = vsel %vm679, %v5056, 0
        %v5150 = vsel %vm679, %v5057, 0
        %v5153 = vsel %vm679, %v5058, 0
        %5155 = vmatprep.subr.mxu0 0.0
        %5156 = vmatpush1.msra.mxu0 %v269
        %5157 = vmatprep.subr.mxu0 0.0
        %5158 = vmatpush1.msra.mxu0 %v270
        %5159 = vmatprep.subr.mxu0 0.0
        %5160 = vmatpush1.msra.mxu0 %v271
        %5161 = vmatprep.subr.mxu0 0.0
        %5162 = vmatpush1.msra.mxu0 %v272
        %5163 = vmatprep.subr.mxu0 0.0
        %5164 = vmatpush1.msra.mxu0 0.0
        %5165 = vmatprep.subr.mxu0 0.0
        %5166 = vmatpush1.msra.mxu0 0.0
        %5167 = vmatprep.subr.mxu0 0.0
        %5168 = vmatpush1.msra.mxu0 0.0
        %5169 = vmatprep.subr.mxu0 0.0
        %5170 = vmatpush1.msra.mxu0 0.0
        %5171 = vmatprep.subr.mxu0 0.0
        %5172 = vmatpush1.msra.mxu0 0.0
        %5173 = vmatprep.subr.mxu0 0.0
        %5174 = vmatpush1.msra.mxu0 0.0
        %5175 = vmatprep.subr.mxu0 0.0
        %5176 = vmatpush1.msra.mxu0 0.0
        %5177 = vmatprep.subr.mxu0 0.0
        %5178 = vmatpush1.msra.mxu0 0.0
        %5179 = vmatprep.subr.mxu0 0.0
        %5180 = vmatpush1.msra.mxu0 0.0
        %5181 = vmatprep.subr.mxu0 0.0
        %5182 = vmatpush1.msra.mxu0 0.0
        %5183 = vmatprep.subr.mxu0 0.0
        %5184 = vmatpush1.msra.mxu0 0.0
        %5185 = vmatprep.subr.mxu0 0.0
        %5186 = vmatpush1.msra.mxu0 0.0
        %5187 = vmatprep.subr.mxu0 0.0
        %5188 = vmatpush1.msra.mxu0 0.0
        %5189 = vmatprep.subr.mxu0 0.0
        %5190 = vmatpush1.msra.mxu0 0.0
        %5191 = vmatprep.subr.mxu0 0.0
        %5192 = vmatpush1.msra.mxu0 0.0
        %5193 = vmatprep.subr.mxu0 0.0
        %5194 = vmatpush1.msra.mxu0 0.0
        %5195 = vmatprep.subr.mxu0 0.0
        %5196 = vmatpush1.msra.mxu0 0.0
        %5197 = vmatprep.subr.mxu0 0.0
        %5198 = vmatpush1.msra.mxu0 0.0
        %5199 = vmatprep.subr.mxu0 0.0
        %5200 = vmatpush1.msra.mxu0 0.0
        %5201 = vmatprep.subr.mxu0 0.0
        %5202 = vmatpush1.msra.mxu0 0.0
        %5203 = vmatprep.subr.mxu0 0.0
        %5204 = vmatpush1.msra.mxu0 0.0
        %5205 = vmatprep.subr.mxu0 0.0
        %5206 = vmatpush1.msra.mxu0 0.0
        %5207 = vmatprep.subr.mxu0 0.0
        %5208 = vmatpush1.msra.mxu0 0.0
        %5209 = vmatprep.subr.mxu0 0.0
        %5210 = vmatpush1.msra.mxu0 0.0
        %5211 = vmatprep.subr.mxu0 0.0
        %5212 = vmatpush1.msra.mxu0 0.0
        %5213 = vmatprep.subr.mxu0 0.0
        %5214 = vmatpush1.msra.mxu0 0.0
        %5215 = vmatprep.subr.mxu0 0.0
        %5216 = vmatpush1.msra.mxu0 0.0
        %5217 = vmatprep.subr.mxu0 0.0
        %5218 = vmatpush1.msra.mxu0 0.0
        %5219 = vmatprep.mubr.f32.mxu0 0.0
        %5220 = vmatmul.mubr.f32.gmra.mrb[0].mxu0 %v5060
        %v5221 = vpop.f32.mrb[0].mxu0
        %v5222 = vadd.f32 %v4284, %v5221
        %v5223 = vpop.f32.mrb[0].mxu0
        %5224 = vmatprep.mubr.f32.mxu0 0.0
        %5225 = vmatmul.mubr.f32.gmra.mrb[0].mxu0 %v5063
        %v5226 = vpop.f32.mrb[0].mxu0
        %v5227 = vadd.f32 %v4284, %v5226
        %v5228 = vpop.f32.mrb[0].mxu0
        %5229 = vmatprep.mubr.f32.mxu0 0.0
        %5230 = vmatmul.mubr.f32.gmra.mrb[0].mxu0 %v5066
        %v5231 = vpop.f32.mrb[0].mxu0
        %v5232 = vadd.f32 %v4284, %v5231
        %v5233 = vpop.f32.mrb[0].mxu0
        %5234 = vmatprep.mubr.f32.mxu0 0.0
        %5235 = vmatmul.mubr.f32.gmra.mrb[0].mxu0 %v5069
        %v5236 = vpop.f32.mrb[0].mxu0
        %v5237 = vadd.f32 %v4284, %v5236
        %v5238 = vpop.f32.mrb[0].mxu0
        %5239 = vmatprep.mubr.f32.mxu0 0.0
        %5240 = vmatmul.mubr.f32.gmra.mrb[0].mxu0 %v5072
        %v5241 = vpop.f32.mrb[0].mxu0
        %v5242 = vadd.f32 %v4284, %v5241
        %v5243 = vpop.f32.mrb[0].mxu0
        %5244 = vmatprep.mubr.f32.mxu0 0.0
        %5245 = vmatmul.mubr.f32.gmra.mrb[0].mxu0 %v5075
        %v5246 = vpop.f32.mrb[0].mxu0
        %v5247 = vadd.f32 %v4284, %v5246
        %v5248 = vpop.f32.mrb[0].mxu0
        %5249 = vmatprep.mubr.f32.mxu0 0.0
        %5250 = vmatmul.mubr.f32.gmra.mrb[0].mxu0 %v5078
        %v5251 = vpop.f32.mrb[0].mxu0
        %v5252 = vadd.f32 %v4284, %v5251
        %v5253 = vpop.f32.mrb[0].mxu0
        %5254 = vmatprep.mubr.f32.mxu0 0.0
        %5255 = vmatmul.mubr.f32.gmra.mrb[0].mxu0 %v5081
        %v5256 = vpop.f32.mrb[0].mxu0
        %v5257 = vadd.f32 %v4284, %v5256
        %v5258 = vpop.f32.mrb[0].mxu0
        %5259 = vmatprep.mubr.f32.mxu0 0.0
        %5260 = vmatmul.mubr.f32.gmra.mrb[0].mxu0 %v5084
        %v5261 = vpop.f32.mrb[0].mxu0
        %v5262 = vadd.f32 %v4284, %v5261
        %v5263 = vpop.f32.mrb[0].mxu0
        %5264 = vmatprep.mubr.f32.mxu0 0.0
        %5265 = vmatmul.mubr.f32.gmra.mrb[0].mxu0 %v5087
        %v5266 = vpop.f32.mrb[0].mxu0
        %v5267 = vadd.f32 %v4284, %v5266
        %v5268 = vpop.f32.mrb[0].mxu0
        %5269 = vmatprep.mubr.f32.mxu0 0.0
        %5270 = vmatmul.mubr.f32.gmra.mrb[0].mxu0 %v5090
        %v5271 = vpop.f32.mrb[0].mxu0
        %v5272 = vadd.f32 %v4284, %v5271
        %v5273 = vpop.f32.mrb[0].mxu0
        %5274 = vmatprep.mubr.f32.mxu0 0.0
        %5275 = vmatmul.mubr.f32.gmra.mrb[0].mxu0 %v5093
        %v5276 = vpop.f32.mrb[0].mxu0
        %v5277 = vadd.f32 %v4284, %v5276
        %v5278 = vpop.f32.mrb[0].mxu0
        %5279 = vmatprep.mubr.f32.mxu0 0.0
        %5280 = vmatmul.mubr.f32.gmra.mrb[0].mxu0 %v5096
        %v5281 = vpop.f32.mrb[0].mxu0
        %v5282 = vadd.f32 %v4284, %v5281
        %v5283 = vpop.f32.mrb[0].mxu0
        %5284 = vmatprep.mubr.f32.mxu0 0.0
        %5285 = vmatmul.mubr.f32.gmra.mrb[0].mxu0 %v5099
        %v5286 = vpop.f32.mrb[0].mxu0
        %v5287 = vadd.f32 %v4284, %v5286
        %v5288 = vpop.f32.mrb[0].mxu0
        %5289 = vmatprep.mubr.f32.mxu0 0.0
        %5290 = vmatmul.mubr.f32.gmra.mrb[0].mxu0 %v5102
        %v5291 = vpop.f32.mrb[0].mxu0
        %v5292 = vadd.f32 %v4284, %v5291
        %v5293 = vpop.f32.mrb[0].mxu0
        %5294 = vmatprep.mubr.f32.mxu0 0.0
        %5295 = vmatmul.mubr.f32.gmra.mrb[0].mxu0 %v5105
        %v5296 = vpop.f32.mrb[0].mxu0
        %v5297 = vadd.f32 %v4284, %v5296
        %v5298 = vpop.f32.mrb[0].mxu0
        %5299 = vmatprep.mubr.f32.mxu0 0.0
        %5300 = vmatmul.mubr.f32.gmra.mrb[0].mxu0 %v5108
        %v5301 = vpop.f32.mrb[0].mxu0
        %v5302 = vadd.f32 %v4284, %v5301
        %v5303 = vpop.f32.mrb[0].mxu0
        %5304 = vmatprep.mubr.f32.mxu0 0.0
        %5305 = vmatmul.mubr.f32.gmra.mrb[0].mxu0 %v5111
        %v5306 = vpop.f32.mrb[0].mxu0
        %v5307 = vadd.f32 %v4284, %v5306
        %v5308 = vpop.f32.mrb[0].mxu0
        %5309 = vmatprep.mubr.f32.mxu0 0.0
        %5310 = vmatmul.mubr.f32.gmra.mrb[0].mxu0 %v5114
        %v5311 = vpop.f32.mrb[0].mxu0
        %v5312 = vadd.f32 %v4284, %v5311
        %v5313 = vpop.f32.mrb[0].mxu0
        %5314 = vmatprep.mubr.f32.mxu0 0.0
        %5315 = vmatmul.mubr.f32.gmra.mrb[0].mxu0 %v5117
        %v5316 = vpop.f32.mrb[0].mxu0
        %v5317 = vadd.f32 %v4284, %v5316
        %v5318 = vpop.f32.mrb[0].mxu0
        %5319 = vmatprep.mubr.f32.mxu0 0.0
        %5320 = vmatmul.mubr.f32.gmra.mrb[0].mxu0 %v5120
        %v5321 = vpop.f32.mrb[0].mxu0
        %v5322 = vadd.f32 %v4284, %v5321
        %v5323 = vpop.f32.mrb[0].mxu0
        %5324 = vmatprep.mubr.f32.mxu0 0.0
        %5325 = vmatmul.mubr.f32.gmra.mrb[0].mxu0 %v5123
        %v5326 = vpop.f32.mrb[0].mxu0
        %v5327 = vadd.f32 %v4284, %v5326
        %v5328 = vpop.f32.mrb[0].mxu0
        %5329 = vmatprep.mubr.f32.mxu0 0.0
        %5330 = vmatmul.mubr.f32.gmra.mrb[0].mxu0 %v5126
        %v5331 = vpop.f32.mrb[0].mxu0
        %v5332 = vadd.f32 %v4284, %v5331
        %v5333 = vpop.f32.mrb[0].mxu0
        %5334 = vmatprep.mubr.f32.mxu0 0.0
        %5335 = vmatmul.mubr.f32.gmra.mrb[0].mxu0 %v5129
        %v5336 = vpop.f32.mrb[0].mxu0
        %v5337 = vadd.f32 %v4284, %v5336
        %v5338 = vpop.f32.mrb[0].mxu0
        %5339 = vmatprep.mubr.f32.mxu0 0.0
        %5340 = vmatmul.mubr.f32.gmra.mrb[0].mxu0 %v5132
        %v5341 = vpop.f32.mrb[0].mxu0
        %v5342 = vadd.f32 %v4284, %v5341
        %v5343 = vpop.f32.mrb[0].mxu0
        %5344 = vmatprep.mubr.f32.mxu0 0.0
        %5345 = vmatmul.mubr.f32.gmra.mrb[0].mxu0 %v5135
        %v5346 = vpop.f32.mrb[0].mxu0
        %v5347 = vadd.f32 %v4284, %v5346
        %v5348 = vpop.f32.mrb[0].mxu0
        %5349 = vmatprep.mubr.f32.mxu0 0.0
        %5350 = vmatmul.mubr.f32.gmra.mrb[0].mxu0 %v5138
        %v5351 = vpop.f32.mrb[0].mxu0
        %v5352 = vadd.f32 %v4284, %v5351
        %v5353 = vpop.f32.mrb[0].mxu0
        %5354 = vmatprep.mubr.f32.mxu0 0.0
        %5355 = vmatmul.mubr.f32.gmra.mrb[0].mxu0 %v5141
        %v5356 = vpop.f32.mrb[0].mxu0
        %v5357 = vadd.f32 %v4284, %v5356
        %v5358 = vpop.f32.mrb[0].mxu0
        %5359 = vmatprep.mubr.f32.mxu0 0.0
        %5360 = vmatmul.mubr.f32.gmra.mrb[0].mxu0 %v5144
        %v5361 = vpop.f32.mrb[0].mxu0
        %v5362 = vadd.f32 %v4284, %v5361
        %v5363 = vpop.f32.mrb[0].mxu0
        %5364 = vmatprep.mubr.f32.mxu0 0.0
        %5365 = vmatmul.mubr.f32.gmra.mrb[0].mxu0 %v5147
        %v5366 = vpop.f32.mrb[0].mxu0
        %v5367 = vadd.f32 %v4284, %v5366
        %v5368 = vpop.f32.mrb[0].mxu0
        %5369 = vmatprep.mubr.f32.mxu0 0.0
        %5370 = vmatmul.mubr.f32.gmra.mrb[0].mxu0 %v5150
        %v5371 = vpop.f32.mrb[0].mxu0
        %v5372 = vadd.f32 %v4284, %v5371
        %v5373 = vpop.f32.mrb[0].mxu0
        %5374 = vmatprep.mubr.f32.mxu0 0.0
        %5375 = vmatmul.mubr.f32.gmra.mrb[0].mxu0 %v5153
        %v5376 = vpop.f32.mrb[0].mxu0
        %v5377 = vadd.f32 %v4284, %v5376
        %v5378 = vpop.f32.mrb[0].mxu0
        %5379 = vdwg.mxu0
        %v5380 = vmax.f32 %v5222, 0.0
        %v5381 = vmax.f32 %v5227, 0.0
        %v5382 = vmax.f32 %v5232, 0.0
        %v5383 = vmax.f32 %v5237, 0.0
        %v5384 = vmax.f32 %v5242, 0.0
        %v5385 = vmax.f32 %v5247, 0.0
        %v5386 = vmax.f32 %v5252, 0.0
        %v5387 = vmax.f32 %v5257, 0.0
        %v5388 = vmax.f32 %v5262, 0.0
        %v5389 = vmax.f32 %v5267, 0.0
        %v5390 = vmax.f32 %v5272, 0.0
        %v5391 = vmax.f32 %v5277, 0.0
        %v5392 = vmax.f32 %v5282, 0.0
        %v5393 = vmax.f32 %v5287, 0.0
        %v5394 = vmax.f32 %v5292, 0.0
        %v5395 = vmax.f32 %v5297, 0.0
        %v5396 = vmax.f32 %v5302, 0.0
        %v5397 = vmax.f32 %v5307, 0.0
        %v5398 = vmax.f32 %v5312, 0.0
        %v5399 = vmax.f32 %v5317, 0.0
        %v5400 = vmax.f32 %v5322, 0.0
        %v5401 = vmax.f32 %v5327, 0.0
        %v5402 = vmax.f32 %v5332, 0.0
        %v5403 = vmax.f32 %v5337, 0.0
        %v5404 = vmax.f32 %v5342, 0.0
        %v5405 = vmax.f32 %v5347, 0.0
        %v5406 = vmax.f32 %v5352, 0.0
        %v5407 = vmax.f32 %v5357, 0.0
        %v5408 = vmax.f32 %v5362, 0.0
        %v5409 = vmax.f32 %v5367, 0.0
        %v5410 = vmax.f32 %v5372, 0.0
        %v5411 = vmax.f32 %v5377, 0.0
        %v5413 = vsel %vm679, %v5380, 0
        %v5416 = vsel %vm679, %v5381, 0
        %v5419 = vsel %vm679, %v5382, 0
        %v5422 = vsel %vm679, %v5383, 0
        %v5425 = vsel %vm679, %v5384, 0
        %v5428 = vsel %vm679, %v5385, 0
        %v5431 = vsel %vm679, %v5386, 0
        %v5434 = vsel %vm679, %v5387, 0
        %v5437 = vsel %vm679, %v5388, 0
        %v5440 = vsel %vm679, %v5389, 0
        %v5443 = vsel %vm679, %v5390, 0
        %v5446 = vsel %vm679, %v5391, 0
        %v5449 = vsel %vm679, %v5392, 0
        %v5452 = vsel %vm679, %v5393, 0
        %v5455 = vsel %vm679, %v5394, 0
        %v5458 = vsel %vm679, %v5395, 0
        %v5461 = vsel %vm679, %v5396, 0
        %v5464 = vsel %vm679, %v5397, 0
        %v5467 = vsel %vm679, %v5398, 0
        %v5470 = vsel %vm679, %v5399, 0
        %v5473 = vsel %vm679, %v5400, 0
        %v5476 = vsel %vm679, %v5401, 0
        %v5479 = vsel %vm679, %v5402, 0
        %v5482 = vsel %vm679, %v5403, 0
        %v5485 = vsel %vm679, %v5404, 0
        %v5488 = vsel %vm679, %v5405, 0
        %v5491 = vsel %vm679, %v5406, 0
        %v5494 = vsel %vm679, %v5407, 0
        %v5497 = vsel %vm679, %v5408, 0
        %v5500 = vsel %vm679, %v5409, 0
        %v5503 = vsel %vm679, %v5410, 0
        %v5506 = vsel %vm679, %v5411, 0
        %5508 = vmatprep.subr.mxu0 0.0
        %5509 = vmatpush1.msra.mxu0 %v274
        %5510 = vmatprep.subr.mxu0 0.0
        %5511 = vmatpush1.msra.mxu0 %v275
        %5512 = vmatprep.subr.mxu0 0.0
        %5513 = vmatpush1.msra.mxu0 %v276
        %5514 = vmatprep.subr.mxu0 0.0
        %5515 = vmatpush1.msra.mxu0 %v277
        %5516 = vmatprep.subr.mxu0 0.0
        %5517 = vmatpush1.msra.mxu0 0.0
        %5518 = vmatprep.subr.mxu0 0.0
        %5519 = vmatpush1.msra.mxu0 0.0
        %5520 = vmatprep.subr.mxu0 0.0
        %5521 = vmatpush1.msra.mxu0 0.0
        %5522 = vmatprep.subr.mxu0 0.0
        %5523 = vmatpush1.msra.mxu0 0.0
        %5524 = vmatprep.subr.mxu0 0.0
        %5525 = vmatpush1.msra.mxu0 0.0
        %5526 = vmatprep.subr.mxu0 0.0
        %5527 = vmatpush1.msra.mxu0 0.0
        %5528 = vmatprep.subr.mxu0 0.0
        %5529 = vmatpush1.msra.mxu0 0.0
        %5530 = vmatprep.subr.mxu0 0.0
        %5531 = vmatpush1.msra.mxu0 0.0
        %5532 = vmatprep.subr.mxu0 0.0
        %5533 = vmatpush1.msra.mxu0 0.0
        %5534 = vmatprep.subr.mxu0 0.0
        %5535 = vmatpush1.msra.mxu0 0.0
        %5536 = vmatprep.subr.mxu0 0.0
        %5537 = vmatpush1.msra.mxu0 0.0
        %5538 = vmatprep.subr.mxu0 0.0
        %5539 = vmatpush1.msra.mxu0 0.0
        %5540 = vmatprep.subr.mxu0 0.0
        %5541 = vmatpush1.msra.mxu0 0.0
        %5542 = vmatprep.subr.mxu0 0.0
        %5543 = vmatpush1.msra.mxu0 0.0
        %5544 = vmatprep.subr.mxu0 0.0
        %5545 = vmatpush1.msra.mxu0 0.0
        %5546 = vmatprep.subr.mxu0 0.0
        %5547 = vmatpush1.msra.mxu0 0.0
        %5548 = vmatprep.subr.mxu0 0.0
        %5549 = vmatpush1.msra.mxu0 0.0
        %5550 = vmatprep.subr.mxu0 0.0
        %5551 = vmatpush1.msra.mxu0 0.0
        %5552 = vmatprep.subr.mxu0 0.0
        %5553 = vmatpush1.msra.mxu0 0.0
        %5554 = vmatprep.subr.mxu0 0.0
        %5555 = vmatpush1.msra.mxu0 0.0
        %5556 = vmatprep.subr.mxu0 0.0
        %5557 = vmatpush1.msra.mxu0 0.0
        %5558 = vmatprep.subr.mxu0 0.0
        %5559 = vmatpush1.msra.mxu0 0.0
        %5560 = vmatprep.subr.mxu0 0.0
        %5561 = vmatpush1.msra.mxu0 0.0
        %5562 = vmatprep.subr.mxu0 0.0
        %5563 = vmatpush1.msra.mxu0 0.0
        %5564 = vmatprep.subr.mxu0 0.0
        %5565 = vmatpush1.msra.mxu0 0.0
        %5566 = vmatprep.subr.mxu0 0.0
        %5567 = vmatpush1.msra.mxu0 0.0
        %5568 = vmatprep.subr.mxu0 0.0
        %5569 = vmatpush1.msra.mxu0 0.0
        %5570 = vmatprep.subr.mxu0 0.0
        %5571 = vmatpush1.msra.mxu0 0.0
        %5572 = vmatprep.mubr.f32.mxu0 0.0
        %5573 = vmatmul.mubr.f32.gmra.mrb[0].mxu0 %v5413
        %v5574 = vpop.f32.mrb[0].mxu0
        %v5575 = vadd.f32 %v4641, %v5574
        %v5576 = vpop.f32.mrb[0].mxu0
        %5577 = vmatprep.mubr.f32.mxu0 0.0
        %5578 = vmatmul.mubr.f32.gmra.mrb[0].mxu0 %v5416
        %v5579 = vpop.f32.mrb[0].mxu0
        %v5580 = vadd.f32 %v4641, %v5579
        %v5581 = vpop.f32.mrb[0].mxu0
        %5582 = vmatprep.mubr.f32.mxu0 0.0
        %5583 = vmatmul.mubr.f32.gmra.mrb[0].mxu0 %v5419
        %v5584 = vpop.f32.mrb[0].mxu0
        %v5585 = vadd.f32 %v4641, %v5584
        %v5586 = vpop.f32.mrb[0].mxu0
        %5587 = vmatprep.mubr.f32.mxu0 0.0
        %5588 = vmatmul.mubr.f32.gmra.mrb[0].mxu0 %v5422
        %v5589 = vpop.f32.mrb[0].mxu0
        %v5590 = vadd.f32 %v4641, %v5589
        %v5591 = vpop.f32.mrb[0].mxu0
        %5592 = vmatprep.mubr.f32.mxu0 0.0
        %5593 = vmatmul.mubr.f32.gmra.mrb[0].mxu0 %v5425
        %v5594 = vpop.f32.mrb[0].mxu0
        %v5595 = vadd.f32 %v4641, %v5594
        %v5596 = vpop.f32.mrb[0].mxu0
        %5597 = vmatprep.mubr.f32.mxu0 0.0
        %5598 = vmatmul.mubr.f32.gmra.mrb[0].mxu0 %v5428
        %v5599 = vpop.f32.mrb[0].mxu0
        %v5600 = vadd.f32 %v4641, %v5599
        %v5601 = vpop.f32.mrb[0].mxu0
        %5602 = vmatprep.mubr.f32.mxu0 0.0
        %5603 = vmatmul.mubr.f32.gmra.mrb[0].mxu0 %v5431
        %v5604 = vpop.f32.mrb[0].mxu0
        %v5605 = vadd.f32 %v4641, %v5604
        %v5606 = vpop.f32.mrb[0].mxu0
        %5607 = vmatprep.mubr.f32.mxu0 0.0
        %5608 = vmatmul.mubr.f32.gmra.mrb[0].mxu0 %v5434
        %v5609 = vpop.f32.mrb[0].mxu0
        %v5610 = vadd.f32 %v4641, %v5609
        %v5611 = vpop.f32.mrb[0].mxu0
        %5612 = vmatprep.mubr.f32.mxu0 0.0
        %5613 = vmatmul.mubr.f32.gmra.mrb[0].mxu0 %v5437
        %v5614 = vpop.f32.mrb[0].mxu0
        %v5615 = vadd.f32 %v4641, %v5614
        %v5616 = vpop.f32.mrb[0].mxu0
        %5617 = vmatprep.mubr.f32.mxu0 0.0
        %5618 = vmatmul.mubr.f32.gmra.mrb[0].mxu0 %v5440
        %v5619 = vpop.f32.mrb[0].mxu0
        %v5620 = vadd.f32 %v4641, %v5619
        %v5621 = vpop.f32.mrb[0].mxu0
        %5622 = vmatprep.mubr.f32.mxu0 0.0
        %5623 = vmatmul.mubr.f32.gmra.mrb[0].mxu0 %v5443
        %v5624 = vpop.f32.mrb[0].mxu0
        %v5625 = vadd.f32 %v4641, %v5624
        %v5626 = vpop.f32.mrb[0].mxu0
        %5627 = vmatprep.mubr.f32.mxu0 0.0
        %5628 = vmatmul.mubr.f32.gmra.mrb[0].mxu0 %v5446
        %v5629 = vpop.f32.mrb[0].mxu0
        %v5630 = vadd.f32 %v4641, %v5629
        %v5631 = vpop.f32.mrb[0].mxu0
        %5632 = vmatprep.mubr.f32.mxu0 0.0
        %5633 = vmatmul.mubr.f32.gmra.mrb[0].mxu0 %v5449
        %v5634 = vpop.f32.mrb[0].mxu0
        %v5635 = vadd.f32 %v4641, %v5634
        %v5636 = vpop.f32.mrb[0].mxu0
        %5637 = vmatprep.mubr.f32.mxu0 0.0
        %5638 = vmatmul.mubr.f32.gmra.mrb[0].mxu0 %v5452
        %v5639 = vpop.f32.mrb[0].mxu0
        %v5640 = vadd.f32 %v4641, %v5639
        %v5641 = vpop.f32.mrb[0].mxu0
        %5642 = vmatprep.mubr.f32.mxu0 0.0
        %5643 = vmatmul.mubr.f32.gmra.mrb[0].mxu0 %v5455
        %v5644 = vpop.f32.mrb[0].mxu0
        %v5645 = vadd.f32 %v4641, %v5644
        %v5646 = vpop.f32.mrb[0].mxu0
        %5647 = vmatprep.mubr.f32.mxu0 0.0
        %5648 = vmatmul.mubr.f32.gmra.mrb[0].mxu0 %v5458
        %v5649 = vpop.f32.mrb[0].mxu0
        %v5650 = vadd.f32 %v4641, %v5649
        %v5651 = vpop.f32.mrb[0].mxu0
        %5652 = vmatprep.mubr.f32.mxu0 0.0
        %5653 = vmatmul.mubr.f32.gmra.mrb[0].mxu0 %v5461
        %v5654 = vpop.f32.mrb[0].mxu0
        %v5655 = vadd.f32 %v4641, %v5654
        %v5656 = vpop.f32.mrb[0].mxu0
        %5657 = vmatprep.mubr.f32.mxu0 0.0
        %5658 = vmatmul.mubr.f32.gmra.mrb[0].mxu0 %v5464
        %v5659 = vpop.f32.mrb[0].mxu0
        %v5660 = vadd.f32 %v4641, %v5659
        %v5661 = vpop.f32.mrb[0].mxu0
        %5662 = vmatprep.mubr.f32.mxu0 0.0
        %5663 = vmatmul.mubr.f32.gmra.mrb[0].mxu0 %v5467
        %v5664 = vpop.f32.mrb[0].mxu0
        %v5665 = vadd.f32 %v4641, %v5664
        %v5666 = vpop.f32.mrb[0].mxu0
        %5667 = vmatprep.mubr.f32.mxu0 0.0
        %5668 = vmatmul.mubr.f32.gmra.mrb[0].mxu0 %v5470
        %v5669 = vpop.f32.mrb[0].mxu0
        %v5670 = vadd.f32 %v4641, %v5669
        %v5671 = vpop.f32.mrb[0].mxu0
        %5672 = vmatprep.mubr.f32.mxu0 0.0
        %5673 = vmatmul.mubr.f32.gmra.mrb[0].mxu0 %v5473
        %v5674 = vpop.f32.mrb[0].mxu0
        %v5675 = vadd.f32 %v4641, %v5674
        %v5676 = vpop.f32.mrb[0].mxu0
        %5677 = vmatprep.mubr.f32.mxu0 0.0
        %5678 = vmatmul.mubr.f32.gmra.mrb[0].mxu0 %v5476
        %v5679 = vpop.f32.mrb[0].mxu0
        %v5680 = vadd.f32 %v4641, %v5679
        %v5681 = vpop.f32.mrb[0].mxu0
        %5682 = vmatprep.mubr.f32.mxu0 0.0
        %5683 = vmatmul.mubr.f32.gmra.mrb[0].mxu0 %v5479
        %v5684 = vpop.f32.mrb[0].mxu0
        %v5685 = vadd.f32 %v4641, %v5684
        %v5686 = vpop.f32.mrb[0].mxu0
        %5687 = vmatprep.mubr.f32.mxu0 0.0
        %5688 = vmatmul.mubr.f32.gmra.mrb[0].mxu0 %v5482
        %v5689 = vpop.f32.mrb[0].mxu0
        %v5690 = vadd.f32 %v4641, %v5689
        %v5691 = vpop.f32.mrb[0].mxu0
        %5692 = vmatprep.mubr.f32.mxu0 0.0
        %5693 = vmatmul.mubr.f32.gmra.mrb[0].mxu0 %v5485
        %v5694 = vpop.f32.mrb[0].mxu0
        %v5695 = vadd.f32 %v4641, %v5694
        %v5696 = vpop.f32.mrb[0].mxu0
        %5697 = vmatprep.mubr.f32.mxu0 0.0
        %5698 = vmatmul.mubr.f32.gmra.mrb[0].mxu0 %v5488
        %v5699 = vpop.f32.mrb[0].mxu0
        %v5700 = vadd.f32 %v4641, %v5699
        %v5701 = vpop.f32.mrb[0].mxu0
        %5702 = vmatprep.mubr.f32.mxu0 0.0
        %5703 = vmatmul.mubr.f32.gmra.mrb[0].mxu0 %v5491
        %v5704 = vpop.f32.mrb[0].mxu0
        %v5705 = vadd.f32 %v4641, %v5704
        %v5706 = vpop.f32.mrb[0].mxu0
        %5707 = vmatprep.mubr.f32.mxu0 0.0
        %5708 = vmatmul.mubr.f32.gmra.mrb[0].mxu0 %v5494
        %v5709 = vpop.f32.mrb[0].mxu0
        %v5710 = vadd.f32 %v4641, %v5709
        %v5711 = vpop.f32.mrb[0].mxu0
        %5712 = vmatprep.mubr.f32.mxu0 0.0
        %5713 = vmatmul.mubr.f32.gmra.mrb[0].mxu0 %v5497
        %v5714 = vpop.f32.mrb[0].mxu0
        %v5715 = vadd.f32 %v4641, %v5714
        %v5716 = vpop.f32.mrb[0].mxu0
        %5717 = vmatprep.mubr.f32.mxu0 0.0
        %5718 = vmatmul.mubr.f32.gmra.mrb[0].mxu0 %v5500
        %v5719 = vpop.f32.mrb[0].mxu0
        %v5720 = vadd.f32 %v4641, %v5719
        %v5721 = vpop.f32.mrb[0].mxu0
        %5722 = vmatprep.mubr.f32.mxu0 0.0
        %5723 = vmatmul.mubr.f32.gmra.mrb[0].mxu0 %v5503
        %v5724 = vpop.f32.mrb[0].mxu0
        %v5725 = vadd.f32 %v4641, %v5724
        %v5726 = vpop.f32.mrb[0].mxu0
        %5727 = vmatprep.mubr.f32.mxu0 0.0
        %5728 = vmatmul.mubr.f32.gmra.mrb[0].mxu0 %v5506
        %v5729 = vpop.f32.mrb[0].mxu0
        %v5730 = vadd.f32 %v4641, %v5729
        %v5731 = vpop.f32.mrb[0].mxu0
        %5732 = vdwg.mxu0
        %v5733 = vmax.f32 %v5575, 0.0
        %v5734 = vmax.f32 %v5580, 0.0
        %v5735 = vmax.f32 %v5585, 0.0
        %v5736 = vmax.f32 %v5590, 0.0
        %v5737 = vmax.f32 %v5595, 0.0
        %v5738 = vmax.f32 %v5600, 0.0
        %v5739 = vmax.f32 %v5605, 0.0
        %v5740 = vmax.f32 %v5610, 0.0
        %v5741 = vmax.f32 %v5615, 0.0
        %v5742 = vmax.f32 %v5620, 0.0
        %v5743 = vmax.f32 %v5625, 0.0
        %v5744 = vmax.f32 %v5630, 0.0
        %v5745 = vmax.f32 %v5635, 0.0
        %v5746 = vmax.f32 %v5640, 0.0
        %v5747 = vmax.f32 %v5645, 0.0
        %v5748 = vmax.f32 %v5650, 0.0
        %v5749 = vmax.f32 %v5655, 0.0
        %v5750 = vmax.f32 %v5660, 0.0
        %v5751 = vmax.f32 %v5665, 0.0
        %v5752 = vmax.f32 %v5670, 0.0
        %v5753 = vmax.f32 %v5675, 0.0
        %v5754 = vmax.f32 %v5680, 0.0
        %v5755 = vmax.f32 %v5685, 0.0
        %v5756 = vmax.f32 %v5690, 0.0
        %v5757 = vmax.f32 %v5695, 0.0
        %v5758 = vmax.f32 %v5700, 0.0
        %v5759 = vmax.f32 %v5705, 0.0
        %v5760 = vmax.f32 %v5710, 0.0
        %v5761 = vmax.f32 %v5715, 0.0
        %v5762 = vmax.f32 %v5720, 0.0
        %v5763 = vmax.f32 %v5725, 0.0
        %v5764 = vmax.f32 %v5730, 0.0
        %v5765 = vsub.f32 %v5733, %v4995
        %v5766 = vsub.f32 %v5734, %v4996
        %v5767 = vsub.f32 %v5735, %v4997
        %v5768 = vsub.f32 %v5736, %v4998
        %v5769 = vsub.f32 %v5737, %v4999
        %v5770 = vsub.f32 %v5738, %v5000
        %v5771 = vsub.f32 %v5739, %v5001
        %v5772 = vsub.f32 %v5740, %v5002
        %v5773 = vsub.f32 %v5741, %v5003
        %v5774 = vsub.f32 %v5742, %v5004
        %v5775 = vsub.f32 %v5743, %v5005
        %v5776 = vsub.f32 %v5744, %v5006
        %v5777 = vsub.f32 %v5745, %v5007
        %v5778 = vsub.f32 %v5746, %v5008
        %v5779 = vsub.f32 %v5747, %v5009
        %v5780 = vsub.f32 %v5748, %v5010
        %v5781 = vsub.f32 %v5749, %v5011
        %v5782 = vsub.f32 %v5750, %v5012
        %v5783 = vsub.f32 %v5751, %v5013
        %v5784 = vsub.f32 %v5752, %v5014
        %v5785 = vsub.f32 %v5753, %v5015
        %v5786 = vsub.f32 %v5754, %v5016
        %v5787 = vsub.f32 %v5755, %v5017
        %v5788 = vsub.f32 %v5756, %v5018
        %v5789 = vsub.f32 %v5757, %v5019
        %v5790 = vsub.f32 %v5758, %v5020
        %v5791 = vsub.f32 %v5759, %v5021
        %v5792 = vsub.f32 %v5760, %v5022
        %v5793 = vsub.f32 %v5761, %v5023
        %v5794 = vsub.f32 %v5762, %v5024
        %v5795 = vsub.f32 %v5763, %v5025
        %v5796 = vsub.f32 %v5764, %v5026
        %v5797 = vadd.f32 %v4249, %v5765
        %v5798 = vadd.f32 %v4250, %v5766
        %v5799 = vadd.f32 %v4251, %v5767
        %v5800 = vadd.f32 %v4252, %v5768
        %v5801 = vadd.f32 %v4253, %v5769
        %v5802 = vadd.f32 %v4254, %v5770
        %v5803 = vadd.f32 %v4255, %v5771
        %v5804 = vadd.f32 %v4256, %v5772
        %v5805 = vadd.f32 %v4257, %v5773
        %v5806 = vadd.f32 %v4258, %v5774
        %v5807 = vadd.f32 %v4259, %v5775
        %v5808 = vadd.f32 %v4260, %v5776
        %v5809 = vadd.f32 %v4261, %v5777
        %v5810 = vadd.f32 %v4262, %v5778
        %v5811 = vadd.f32 %v4263, %v5779
        %v5812 = vadd.f32 %v4264, %v5780
        %v5813 = vadd.f32 %v4265, %v5781
        %v5814 = vadd.f32 %v4266, %v5782
        %v5815 = vadd.f32 %v4267, %v5783
        %v5816 = vadd.f32 %v4268, %v5784
        %v5817 = vadd.f32 %v4269, %v5785
        %v5818 = vadd.f32 %v4270, %v5786
        %v5819 = vadd.f32 %v4271, %v5787
        %v5820 = vadd.f32 %v4272, %v5788
        %v5821 = vadd.f32 %v4273, %v5789
        %v5822 = vadd.f32 %v4274, %v5790
        %v5823 = vadd.f32 %v4275, %v5791
        %v5824 = vadd.f32 %v4276, %v5792
        %v5825 = vadd.f32 %v4277, %v5793
        %v5826 = vadd.f32 %v4278, %v5794
        %v5827 = vadd.f32 %v4279, %v5795
        %v5828 = vadd.f32 %v4280, %v5796
        %v5830 = vsel %vm679, %v5797, 0
        %v5833 = vsel %vm679, %v5798, 0
        %v5836 = vsel %vm679, %v5799, 0
        %v5839 = vsel %vm679, %v5800, 0
        %v5842 = vsel %vm679, %v5801, 0
        %v5845 = vsel %vm679, %v5802, 0
        %v5848 = vsel %vm679, %v5803, 0
        %v5851 = vsel %vm679, %v5804, 0
        %v5854 = vsel %vm679, %v5805, 0
        %v5857 = vsel %vm679, %v5806, 0
        %v5860 = vsel %vm679, %v5807, 0
        %v5863 = vsel %vm679, %v5808, 0
        %v5866 = vsel %vm679, %v5809, 0
        %v5869 = vsel %vm679, %v5810, 0
        %v5872 = vsel %vm679, %v5811, 0
        %v5875 = vsel %vm679, %v5812, 0
        %v5878 = vsel %vm679, %v5813, 0
        %v5881 = vsel %vm679, %v5814, 0
        %v5884 = vsel %vm679, %v5815, 0
        %v5887 = vsel %vm679, %v5816, 0
        %v5890 = vsel %vm679, %v5817, 0
        %v5893 = vsel %vm679, %v5818, 0
        %v5896 = vsel %vm679, %v5819, 0
        %v5899 = vsel %vm679, %v5820, 0
        %v5902 = vsel %vm679, %v5821, 0
        %v5905 = vsel %vm679, %v5822, 0
        %v5908 = vsel %vm679, %v5823, 0
        %v5911 = vsel %vm679, %v5824, 0
        %v5914 = vsel %vm679, %v5825, 0
        %v5917 = vsel %vm679, %v5826, 0
        %v5920 = vsel %vm679, %v5827, 0
        %v5923 = vsel %vm679, %v5828, 0
        %5925 = vmatprep.subr.mxu0 0.0
        %5926 = vmatpush1.msra.mxu0 %v269
        %5927 = vmatprep.subr.mxu0 0.0
        %5928 = vmatpush1.msra.mxu0 %v270
        %5929 = vmatprep.subr.mxu0 0.0
        %5930 = vmatpush1.msra.mxu0 %v271
        %5931 = vmatprep.subr.mxu0 0.0
        %5932 = vmatpush1.msra.mxu0 %v272
        %5933 = vmatprep.subr.mxu0 0.0
        %5934 = vmatpush1.msra.mxu0 0.0
        %5935 = vmatprep.subr.mxu0 0.0
        %5936 = vmatpush1.msra.mxu0 0.0
        %5937 = vmatprep.subr.mxu0 0.0
        %5938 = vmatpush1.msra.mxu0 0.0
        %5939 = vmatprep.subr.mxu0 0.0
        %5940 = vmatpush1.msra.mxu0 0.0
        %5941 = vmatprep.subr.mxu0 0.0
        %5942 = vmatpush1.msra.mxu0 0.0
        %5943 = vmatprep.subr.mxu0 0.0
        %5944 = vmatpush1.msra.mxu0 0.0
        %5945 = vmatprep.subr.mxu0 0.0
        %5946 = vmatpush1.msra.mxu0 0.0
        %5947 = vmatprep.subr.mxu0 0.0
        %5948 = vmatpush1.msra.mxu0 0.0
        %5949 = vmatprep.subr.mxu0 0.0
        %5950 = vmatpush1.msra.mxu0 0.0
        %5951 = vmatprep.subr.mxu0 0.0
        %5952 = vmatpush1.msra.mxu0 0.0
        %5953 = vmatprep.subr.mxu0 0.0
        %5954 = vmatpush1.msra.mxu0 0.0
        %5955 = vmatprep.subr.mxu0 0.0
        %5956 = vmatpush1.msra.mxu0 0.0
        %5957 = vmatprep.subr.mxu0 0.0
        %5958 = vmatpush1.msra.mxu0 0.0
        %5959 = vmatprep.subr.mxu0 0.0
        %5960 = vmatpush1.msra.mxu0 0.0
        %5961 = vmatprep.subr.mxu0 0.0
        %5962 = vmatpush1.msra.mxu0 0.0
        %5963 = vmatprep.subr.mxu0 0.0
        %5964 = vmatpush1.msra.mxu0 0.0
        %5965 = vmatprep.subr.mxu0 0.0
        %5966 = vmatpush1.msra.mxu0 0.0
        %5967 = vmatprep.subr.mxu0 0.0
        %5968 = vmatpush1.msra.mxu0 0.0
        %5969 = vmatprep.subr.mxu0 0.0
        %5970 = vmatpush1.msra.mxu0 0.0
        %5971 = vmatprep.subr.mxu0 0.0
        %5972 = vmatpush1.msra.mxu0 0.0
        %5973 = vmatprep.subr.mxu0 0.0
        %5974 = vmatpush1.msra.mxu0 0.0
        %5975 = vmatprep.subr.mxu0 0.0
        %5976 = vmatpush1.msra.mxu0 0.0
        %5977 = vmatprep.subr.mxu0 0.0
        %5978 = vmatpush1.msra.mxu0 0.0
        %5979 = vmatprep.subr.mxu0 0.0
        %5980 = vmatpush1.msra.mxu0 0.0
        %5981 = vmatprep.subr.mxu0 0.0
        %5982 = vmatpush1.msra.mxu0 0.0
        %5983 = vmatprep.subr.mxu0 0.0
        %5984 = vmatpush1.msra.mxu0 0.0
        %5985 = vmatprep.subr.mxu0 0.0
        %5986 = vmatpush1.msra.mxu0 0.0
        %5987 = vmatprep.subr.mxu0 0.0
        %5988 = vmatpush1.msra.mxu0 0.0
        %5989 = vmatprep.mubr.f32.mxu0 0.0
        %5990 = vmatmul.mubr.f32.gmra.mrb[0].mxu0 %v5830
        %v5991 = vpop.f32.mrb[0].mxu0
        %v5992 = vadd.f32 %v4284, %v5991
        %v5993 = vpop.f32.mrb[0].mxu0
        %5994 = vmatprep.mubr.f32.mxu0 0.0
        %5995 = vmatmul.mubr.f32.gmra.mrb[0].mxu0 %v5833
        %v5996 = vpop.f32.mrb[0].mxu0
        %v5997 = vadd.f32 %v4284, %v5996
        %v5998 = vpop.f32.mrb[0].mxu0
        %5999 = vmatprep.mubr.f32.mxu0 0.0
        %6000 = vmatmul.mubr.f32.gmra.mrb[0].mxu0 %v5836
        %v6001 = vpop.f32.mrb[0].mxu0
        %v6002 = vadd.f32 %v4284, %v6001
        %v6003 = vpop.f32.mrb[0].mxu0
        %6004 = vmatprep.mubr.f32.mxu0 0.0
        %6005 = vmatmul.mubr.f32.gmra.mrb[0].mxu0 %v5839
        %v6006 = vpop.f32.mrb[0].mxu0
        %v6007 = vadd.f32 %v4284, %v6006
        %v6008 = vpop.f32.mrb[0].mxu0
        %6009 = vmatprep.mubr.f32.mxu0 0.0
        %6010 = vmatmul.mubr.f32.gmra.mrb[0].mxu0 %v5842
        %v6011 = vpop.f32.mrb[0].mxu0
        %v6012 = vadd.f32 %v4284, %v6011
        %v6013 = vpop.f32.mrb[0].mxu0
        %6014 = vmatprep.mubr.f32.mxu0 0.0
        %6015 = vmatmul.mubr.f32.gmra.mrb[0].mxu0 %v5845
        %v6016 = vpop.f32.mrb[0].mxu0
        %v6017 = vadd.f32 %v4284, %v6016
        %v6018 = vpop.f32.mrb[0].mxu0
        %6019 = vmatprep.mubr.f32.mxu0 0.0
        %6020 = vmatmul.mubr.f32.gmra.mrb[0].mxu0 %v5848
        %v6021 = vpop.f32.mrb[0].mxu0
        %v6022 = vadd.f32 %v4284, %v6021
        %v6023 = vpop.f32.mrb[0].mxu0
        %6024 = vmatprep.mubr.f32.mxu0 0.0
        %6025 = vmatmul.mubr.f32.gmra.mrb[0].mxu0 %v5851
        %v6026 = vpop.f32.mrb[0].mxu0
        %v6027 = vadd.f32 %v4284, %v6026
        %v6028 = vpop.f32.mrb[0].mxu0
        %6029 = vmatprep.mubr.f32.mxu0 0.0
        %6030 = vmatmul.mubr.f32.gmra.mrb[0].mxu0 %v5854
        %v6031 = vpop.f32.mrb[0].mxu0
        %v6032 = vadd.f32 %v4284, %v6031
        %v6033 = vpop.f32.mrb[0].mxu0
        %6034 = vmatprep.mubr.f32.mxu0 0.0
        %6035 = vmatmul.mubr.f32.gmra.mrb[0].mxu0 %v5857
        %v6036 = vpop.f32.mrb[0].mxu0
        %v6037 = vadd.f32 %v4284, %v6036
        %v6038 = vpop.f32.mrb[0].mxu0
        %6039 = vmatprep.mubr.f32.mxu0 0.0
        %6040 = vmatmul.mubr.f32.gmra.mrb[0].mxu0 %v5860
        %v6041 = vpop.f32.mrb[0].mxu0
        %v6042 = vadd.f32 %v4284, %v6041
        %v6043 = vpop.f32.mrb[0].mxu0
        %6044 = vmatprep.mubr.f32.mxu0 0.0
        %6045 = vmatmul.mubr.f32.gmra.mrb[0].mxu0 %v5863
        %v6046 = vpop.f32.mrb[0].mxu0
        %v6047 = vadd.f32 %v4284, %v6046
        %v6048 = vpop.f32.mrb[0].mxu0
        %6049 = vmatprep.mubr.f32.mxu0 0.0
        %6050 = vmatmul.mubr.f32.gmra.mrb[0].mxu0 %v5866
        %v6051 = vpop.f32.mrb[0].mxu0
        %v6052 = vadd.f32 %v4284, %v6051
        %v6053 = vpop.f32.mrb[0].mxu0
        %6054 = vmatprep.mubr.f32.mxu0 0.0
        %6055 = vmatmul.mubr.f32.gmra.mrb[0].mxu0 %v5869
        %v6056 = vpop.f32.mrb[0].mxu0
        %v6057 = vadd.f32 %v4284, %v6056
        %v6058 = vpop.f32.mrb[0].mxu0
        %6059 = vmatprep.mubr.f32.mxu0 0.0
        %6060 = vmatmul.mubr.f32.gmra.mrb[0].mxu0 %v5872
        %v6061 = vpop.f32.mrb[0].mxu0
        %v6062 = vadd.f32 %v4284, %v6061
        %v6063 = vpop.f32.mrb[0].mxu0
        %6064 = vmatprep.mubr.f32.mxu0 0.0
        %6065 = vmatmul.mubr.f32.gmra.mrb[0].mxu0 %v5875
        %v6066 = vpop.f32.mrb[0].mxu0
        %v6067 = vadd.f32 %v4284, %v6066
        %v6068 = vpop.f32.mrb[0].mxu0
        %6069 = vmatprep.mubr.f32.mxu0 0.0
        %6070 = vmatmul.mubr.f32.gmra.mrb[0].mxu0 %v5878
        %v6071 = vpop.f32.mrb[0].mxu0
        %v6072 = vadd.f32 %v4284, %v6071
        %v6073 = vpop.f32.mrb[0].mxu0
        %6074 = vmatprep.mubr.f32.mxu0 0.0
        %6075 = vmatmul.mubr.f32.gmra.mrb[0].mxu0 %v5881
        %v6076 = vpop.f32.mrb[0].mxu0
        %v6077 = vadd.f32 %v4284, %v6076
        %v6078 = vpop.f32.mrb[0].mxu0
        %6079 = vmatprep.mubr.f32.mxu0 0.0
        %6080 = vmatmul.mubr.f32.gmra.mrb[0].mxu0 %v5884
        %v6081 = vpop.f32.mrb[0].mxu0
        %v6082 = vadd.f32 %v4284, %v6081
        %v6083 = vpop.f32.mrb[0].mxu0
        %6084 = vmatprep.mubr.f32.mxu0 0.0
        %6085 = vmatmul.mubr.f32.gmra.mrb[0].mxu0 %v5887
        %v6086 = vpop.f32.mrb[0].mxu0
        %v6087 = vadd.f32 %v4284, %v6086
        %v6088 = vpop.f32.mrb[0].mxu0
        %6089 = vmatprep.mubr.f32.mxu0 0.0
        %6090 = vmatmul.mubr.f32.gmra.mrb[0].mxu0 %v5890
        %v6091 = vpop.f32.mrb[0].mxu0
        %v6092 = vadd.f32 %v4284, %v6091
        %v6093 = vpop.f32.mrb[0].mxu0
        %6094 = vmatprep.mubr.f32.mxu0 0.0
        %6095 = vmatmul.mubr.f32.gmra.mrb[0].mxu0 %v5893
        %v6096 = vpop.f32.mrb[0].mxu0
        %v6097 = vadd.f32 %v4284, %v6096
        %v6098 = vpop.f32.mrb[0].mxu0
        %6099 = vmatprep.mubr.f32.mxu0 0.0
        %6100 = vmatmul.mubr.f32.gmra.mrb[0].mxu0 %v5896
        %v6101 = vpop.f32.mrb[0].mxu0
        %v6102 = vadd.f32 %v4284, %v6101
        %v6103 = vpop.f32.mrb[0].mxu0
        %6104 = vmatprep.mubr.f32.mxu0 0.0
        %6105 = vmatmul.mubr.f32.gmra.mrb[0].mxu0 %v5899
        %v6106 = vpop.f32.mrb[0].mxu0
        %v6107 = vadd.f32 %v4284, %v6106
        %v6108 = vpop.f32.mrb[0].mxu0
        %6109 = vmatprep.mubr.f32.mxu0 0.0
        %6110 = vmatmul.mubr.f32.gmra.mrb[0].mxu0 %v5902
        %v6111 = vpop.f32.mrb[0].mxu0
        %v6112 = vadd.f32 %v4284, %v6111
        %v6113 = vpop.f32.mrb[0].mxu0
        %6114 = vmatprep.mubr.f32.mxu0 0.0
        %6115 = vmatmul.mubr.f32.gmra.mrb[0].mxu0 %v5905
        %v6116 = vpop.f32.mrb[0].mxu0
        %v6117 = vadd.f32 %v4284, %v6116
        %v6118 = vpop.f32.mrb[0].mxu0
        %6119 = vmatprep.mubr.f32.mxu0 0.0
        %6120 = vmatmul.mubr.f32.gmra.mrb[0].mxu0 %v5908
        %v6121 = vpop.f32.mrb[0].mxu0
        %v6122 = vadd.f32 %v4284, %v6121
        %v6123 = vpop.f32.mrb[0].mxu0
        %6124 = vmatprep.mubr.f32.mxu0 0.0
        %6125 = vmatmul.mubr.f32.gmra.mrb[0].mxu0 %v5911
        %v6126 = vpop.f32.mrb[0].mxu0
        %v6127 = vadd.f32 %v4284, %v6126
        %v6128 = vpop.f32.mrb[0].mxu0
        %6129 = vmatprep.mubr.f32.mxu0 0.0
        %6130 = vmatmul.mubr.f32.gmra.mrb[0].mxu0 %v5914
        %v6131 = vpop.f32.mrb[0].mxu0
        %v6132 = vadd.f32 %v4284, %v6131
        %v6133 = vpop.f32.mrb[0].mxu0
        %6134 = vmatprep.mubr.f32.mxu0 0.0
        %6135 = vmatmul.mubr.f32.gmra.mrb[0].mxu0 %v5917
        %v6136 = vpop.f32.mrb[0].mxu0
        %v6137 = vadd.f32 %v4284, %v6136
        %v6138 = vpop.f32.mrb[0].mxu0
        %6139 = vmatprep.mubr.f32.mxu0 0.0
        %6140 = vmatmul.mubr.f32.gmra.mrb[0].mxu0 %v5920
        %v6141 = vpop.f32.mrb[0].mxu0
        %v6142 = vadd.f32 %v4284, %v6141
        %v6143 = vpop.f32.mrb[0].mxu0
        %6144 = vmatprep.mubr.f32.mxu0 0.0
        %6145 = vmatmul.mubr.f32.gmra.mrb[0].mxu0 %v5923
        %v6146 = vpop.f32.mrb[0].mxu0
        %v6147 = vadd.f32 %v4284, %v6146
        %v6148 = vpop.f32.mrb[0].mxu0
        %6149 = vdwg.mxu0
        %v6150 = vmax.f32 %v5992, 0.0
        %v6151 = vmax.f32 %v5997, 0.0
        %v6152 = vmax.f32 %v6002, 0.0
        %v6153 = vmax.f32 %v6007, 0.0
        %v6154 = vmax.f32 %v6012, 0.0
        %v6155 = vmax.f32 %v6017, 0.0
        %v6156 = vmax.f32 %v6022, 0.0
        %v6157 = vmax.f32 %v6027, 0.0
        %v6158 = vmax.f32 %v6032, 0.0
        %v6159 = vmax.f32 %v6037, 0.0
        %v6160 = vmax.f32 %v6042, 0.0
        %v6161 = vmax.f32 %v6047, 0.0
        %v6162 = vmax.f32 %v6052, 0.0
        %v6163 = vmax.f32 %v6057, 0.0
        %v6164 = vmax.f32 %v6062, 0.0
        %v6165 = vmax.f32 %v6067, 0.0
        %v6166 = vmax.f32 %v6072, 0.0
        %v6167 = vmax.f32 %v6077, 0.0
        %v6168 = vmax.f32 %v6082, 0.0
        %v6169 = vmax.f32 %v6087, 0.0
        %v6170 = vmax.f32 %v6092, 0.0
        %v6171 = vmax.f32 %v6097, 0.0
        %v6172 = vmax.f32 %v6102, 0.0
        %v6173 = vmax.f32 %v6107, 0.0
        %v6174 = vmax.f32 %v6112, 0.0
        %v6175 = vmax.f32 %v6117, 0.0
        %v6176 = vmax.f32 %v6122, 0.0
        %v6177 = vmax.f32 %v6127, 0.0
        %v6178 = vmax.f32 %v6132, 0.0
        %v6179 = vmax.f32 %v6137, 0.0
        %v6180 = vmax.f32 %v6142, 0.0
        %v6181 = vmax.f32 %v6147, 0.0
        %v6183 = vsel %vm679, %v6150, 0
        %v6186 = vsel %vm679, %v6151, 0
        %v6189 = vsel %vm679, %v6152, 0
        %v6192 = vsel %vm679, %v6153, 0
        %v6195 = vsel %vm679, %v6154, 0
        %v6198 = vsel %vm679, %v6155, 0
        %v6201 = vsel %vm679, %v6156, 0
        %v6204 = vsel %vm679, %v6157, 0
        %v6207 = vsel %vm679, %v6158, 0
        %v6210 = vsel %vm679, %v6159, 0
        %v6213 = vsel %vm679, %v6160, 0
        %v6216 = vsel %vm679, %v6161, 0
        %v6219 = vsel %vm679, %v6162, 0
        %v6222 = vsel %vm679, %v6163, 0
        %v6225 = vsel %vm679, %v6164, 0
        %v6228 = vsel %vm679, %v6165, 0
        %v6231 = vsel %vm679, %v6166, 0
        %v6234 = vsel %vm679, %v6167, 0
        %v6237 = vsel %vm679, %v6168, 0
        %v6240 = vsel %vm679, %v6169, 0
        %v6243 = vsel %vm679, %v6170, 0
        %v6246 = vsel %vm679, %v6171, 0
        %v6249 = vsel %vm679, %v6172, 0
        %v6252 = vsel %vm679, %v6173, 0
        %v6255 = vsel %vm679, %v6174, 0
        %v6258 = vsel %vm679, %v6175, 0
        %v6261 = vsel %vm679, %v6176, 0
        %v6264 = vsel %vm679, %v6177, 0
        %v6267 = vsel %vm679, %v6178, 0
        %v6270 = vsel %vm679, %v6179, 0
        %v6273 = vsel %vm679, %v6180, 0
        %v6276 = vsel %vm679, %v6181, 0
        %6278 = vmatprep.subr.mxu0 0.0
        %6279 = vmatpush1.msra.mxu0 %v274
        %6280 = vmatprep.subr.mxu0 0.0
        %6281 = vmatpush1.msra.mxu0 %v275
        %6282 = vmatprep.subr.mxu0 0.0
        %6283 = vmatpush1.msra.mxu0 %v276
        %6284 = vmatprep.subr.mxu0 0.0
        %6285 = vmatpush1.msra.mxu0 %v277
        %6286 = vmatprep.subr.mxu0 0.0
        %6287 = vmatpush1.msra.mxu0 0.0
        %6288 = vmatprep.subr.mxu0 0.0
        %6289 = vmatpush1.msra.mxu0 0.0
        %6290 = vmatprep.subr.mxu0 0.0
        %6291 = vmatpush1.msra.mxu0 0.0
        %6292 = vmatprep.subr.mxu0 0.0
        %6293 = vmatpush1.msra.mxu0 0.0
        %6294 = vmatprep.subr.mxu0 0.0
        %6295 = vmatpush1.msra.mxu0 0.0
        %6296 = vmatprep.subr.mxu0 0.0
        %6297 = vmatpush1.msra.mxu0 0.0
        %6298 = vmatprep.subr.mxu0 0.0
        %6299 = vmatpush1.msra.mxu0 0.0
        %6300 = vmatprep.subr.mxu0 0.0
        %6301 = vmatpush1.msra.mxu0 0.0
        %6302 = vmatprep.subr.mxu0 0.0
        %6303 = vmatpush1.msra.mxu0 0.0
        %6304 = vmatprep.subr.mxu0 0.0
        %6305 = vmatpush1.msra.mxu0 0.0
        %6306 = vmatprep.subr.mxu0 0.0
        %6307 = vmatpush1.msra.mxu0 0.0
        %6308 = vmatprep.subr.mxu0 0.0
        %6309 = vmatpush1.msra.mxu0 0.0
        %6310 = vmatprep.subr.mxu0 0.0
        %6311 = vmatpush1.msra.mxu0 0.0
        %6312 = vmatprep.subr.mxu0 0.0
        %6313 = vmatpush1.msra.mxu0 0.0
        %6314 = vmatprep.subr.mxu0 0.0
        %6315 = vmatpush1.msra.mxu0 0.0
        %6316 = vmatprep.subr.mxu0 0.0
        %6317 = vmatpush1.msra.mxu0 0.0
        %6318 = vmatprep.subr.mxu0 0.0
        %6319 = vmatpush1.msra.mxu0 0.0
        %6320 = vmatprep.subr.mxu0 0.0
        %6321 = vmatpush1.msra.mxu0 0.0
        %6322 = vmatprep.subr.mxu0 0.0
        %6323 = vmatpush1.msra.mxu0 0.0
        %6324 = vmatprep.subr.mxu0 0.0
        %6325 = vmatpush1.msra.mxu0 0.0
        %6326 = vmatprep.subr.mxu0 0.0
        %6327 = vmatpush1.msra.mxu0 0.0
        %6328 = vmatprep.subr.mxu0 0.0
        %6329 = vmatpush1.msra.mxu0 0.0
        %6330 = vmatprep.subr.mxu0 0.0
        %6331 = vmatpush1.msra.mxu0 0.0
        %6332 = vmatprep.subr.mxu0 0.0
        %6333 = vmatpush1.msra.mxu0 0.0
        %6334 = vmatprep.subr.mxu0 0.0
        %6335 = vmatpush1.msra.mxu0 0.0
        %6336 = vmatprep.subr.mxu0 0.0
        %6337 = vmatpush1.msra.mxu0 0.0
        %6338 = vmatprep.subr.mxu0 0.0
        %6339 = vmatpush1.msra.mxu0 0.0
        %6340 = vmatprep.subr.mxu0 0.0
        %6341 = vmatpush1.msra.mxu0 0.0
        %6342 = vmatprep.mubr.f32.mxu0 0.0
        %6343 = vmatmul.mubr.f32.gmra.mrb[0].mxu0 %v6183
        %v6344 = vpop.f32.mrb[0].mxu0
        %v6345 = vadd.f32 %v4641, %v6344
        %v6346 = vpop.f32.mrb[0].mxu0
        %6347 = vmatprep.mubr.f32.mxu0 0.0
        %6348 = vmatmul.mubr.f32.gmra.mrb[0].mxu0 %v6186
        %v6349 = vpop.f32.mrb[0].mxu0
        %v6350 = vadd.f32 %v4641, %v6349
        %v6351 = vpop.f32.mrb[0].mxu0
        %6352 = vmatprep.mubr.f32.mxu0 0.0
        %6353 = vmatmul.mubr.f32.gmra.mrb[0].mxu0 %v6189
        %v6354 = vpop.f32.mrb[0].mxu0
        %v6355 = vadd.f32 %v4641, %v6354
        %v6356 = vpop.f32.mrb[0].mxu0
        %6357 = vmatprep.mubr.f32.mxu0 0.0
        %6358 = vmatmul.mubr.f32.gmra.mrb[0].mxu0 %v6192
        %v6359 = vpop.f32.mrb[0].mxu0
        %v6360 = vadd.f32 %v4641, %v6359
        %v6361 = vpop.f32.mrb[0].mxu0
        %6362 = vmatprep.mubr.f32.mxu0 0.0
        %6363 = vmatmul.mubr.f32.gmra.mrb[0].mxu0 %v6195
        %v6364 = vpop.f32.mrb[0].mxu0
        %v6365 = vadd.f32 %v4641, %v6364
        %v6366 = vpop.f32.mrb[0].mxu0
        %6367 = vmatprep.mubr.f32.mxu0 0.0
        %6368 = vmatmul.mubr.f32.gmra.mrb[0].mxu0 %v6198
        %v6369 = vpop.f32.mrb[0].mxu0
        %v6370 = vadd.f32 %v4641, %v6369
        %v6371 = vpop.f32.mrb[0].mxu0
        %6372 = vmatprep.mubr.f32.mxu0 0.0
        %6373 = vmatmul.mubr.f32.gmra.mrb[0].mxu0 %v6201
        %v6374 = vpop.f32.mrb[0].mxu0
        %v6375 = vadd.f32 %v4641, %v6374
        %v6376 = vpop.f32.mrb[0].mxu0
        %6377 = vmatprep.mubr.f32.mxu0 0.0
        %6378 = vmatmul.mubr.f32.gmra.mrb[0].mxu0 %v6204
        %v6379 = vpop.f32.mrb[0].mxu0
        %v6380 = vadd.f32 %v4641, %v6379
        %v6381 = vpop.f32.mrb[0].mxu0
        %6382 = vmatprep.mubr.f32.mxu0 0.0
        %6383 = vmatmul.mubr.f32.gmra.mrb[0].mxu0 %v6207
        %v6384 = vpop.f32.mrb[0].mxu0
        %v6385 = vadd.f32 %v4641, %v6384
        %v6386 = vpop.f32.mrb[0].mxu0
        %6387 = vmatprep.mubr.f32.mxu0 0.0
        %6388 = vmatmul.mubr.f32.gmra.mrb[0].mxu0 %v6210
        %v6389 = vpop.f32.mrb[0].mxu0
        %v6390 = vadd.f32 %v4641, %v6389
        %v6391 = vpop.f32.mrb[0].mxu0
        %6392 = vmatprep.mubr.f32.mxu0 0.0
        %6393 = vmatmul.mubr.f32.gmra.mrb[0].mxu0 %v6213
        %v6394 = vpop.f32.mrb[0].mxu0
        %v6395 = vadd.f32 %v4641, %v6394
        %v6396 = vpop.f32.mrb[0].mxu0
        %6397 = vmatprep.mubr.f32.mxu0 0.0
        %6398 = vmatmul.mubr.f32.gmra.mrb[0].mxu0 %v6216
        %v6399 = vpop.f32.mrb[0].mxu0
        %v6400 = vadd.f32 %v4641, %v6399
        %v6401 = vpop.f32.mrb[0].mxu0
        %6402 = vmatprep.mubr.f32.mxu0 0.0
        %6403 = vmatmul.mubr.f32.gmra.mrb[0].mxu0 %v6219
        %v6404 = vpop.f32.mrb[0].mxu0
        %v6405 = vadd.f32 %v4641, %v6404
        %v6406 = vpop.f32.mrb[0].mxu0
        %6407 = vmatprep.mubr.f32.mxu0 0.0
        %6408 = vmatmul.mubr.f32.gmra.mrb[0].mxu0 %v6222
        %v6409 = vpop.f32.mrb[0].mxu0
        %v6410 = vadd.f32 %v4641, %v6409
        %v6411 = vpop.f32.mrb[0].mxu0
        %6412 = vmatprep.mubr.f32.mxu0 0.0
        %6413 = vmatmul.mubr.f32.gmra.mrb[0].mxu0 %v6225
        %v6414 = vpop.f32.mrb[0].mxu0
        %v6415 = vadd.f32 %v4641, %v6414
        %v6416 = vpop.f32.mrb[0].mxu0
        %6417 = vmatprep.mubr.f32.mxu0 0.0
        %6418 = vmatmul.mubr.f32.gmra.mrb[0].mxu0 %v6228
        %v6419 = vpop.f32.mrb[0].mxu0
        %v6420 = vadd.f32 %v4641, %v6419
        %v6421 = vpop.f32.mrb[0].mxu0
        %6422 = vmatprep.mubr.f32.mxu0 0.0
        %6423 = vmatmul.mubr.f32.gmra.mrb[0].mxu0 %v6231
        %v6424 = vpop.f32.mrb[0].mxu0
        %v6425 = vadd.f32 %v4641, %v6424
        %v6426 = vpop.f32.mrb[0].mxu0
        %6427 = vmatprep.mubr.f32.mxu0 0.0
        %6428 = vmatmul.mubr.f32.gmra.mrb[0].mxu0 %v6234
        %v6429 = vpop.f32.mrb[0].mxu0
        %v6430 = vadd.f32 %v4641, %v6429
        %v6431 = vpop.f32.mrb[0].mxu0
        %6432 = vmatprep.mubr.f32.mxu0 0.0
        %6433 = vmatmul.mubr.f32.gmra.mrb[0].mxu0 %v6237
        %v6434 = vpop.f32.mrb[0].mxu0
        %v6435 = vadd.f32 %v4641, %v6434
        %v6436 = vpop.f32.mrb[0].mxu0
        %6437 = vmatprep.mubr.f32.mxu0 0.0
        %6438 = vmatmul.mubr.f32.gmra.mrb[0].mxu0 %v6240
        %v6439 = vpop.f32.mrb[0].mxu0
        %v6440 = vadd.f32 %v4641, %v6439
        %v6441 = vpop.f32.mrb[0].mxu0
        %6442 = vmatprep.mubr.f32.mxu0 0.0
        %6443 = vmatmul.mubr.f32.gmra.mrb[0].mxu0 %v6243
        %v6444 = vpop.f32.mrb[0].mxu0
        %v6445 = vadd.f32 %v4641, %v6444
        %v6446 = vpop.f32.mrb[0].mxu0
        %6447 = vmatprep.mubr.f32.mxu0 0.0
        %6448 = vmatmul.mubr.f32.gmra.mrb[0].mxu0 %v6246
        %v6449 = vpop.f32.mrb[0].mxu0
        %v6450 = vadd.f32 %v4641, %v6449
        %v6451 = vpop.f32.mrb[0].mxu0
        %6452 = vmatprep.mubr.f32.mxu0 0.0
        %6453 = vmatmul.mubr.f32.gmra.mrb[0].mxu0 %v6249
        %v6454 = vpop.f32.mrb[0].mxu0
        %v6455 = vadd.f32 %v4641, %v6454
        %v6456 = vpop.f32.mrb[0].mxu0
        %6457 = vmatprep.mubr.f32.mxu0 0.0
        %6458 = vmatmul.mubr.f32.gmra.mrb[0].mxu0 %v6252
        %v6459 = vpop.f32.mrb[0].mxu0
        %v6460 = vadd.f32 %v4641, %v6459
        %v6461 = vpop.f32.mrb[0].mxu0
        %6462 = vmatprep.mubr.f32.mxu0 0.0
        %6463 = vmatmul.mubr.f32.gmra.mrb[0].mxu0 %v6255
        %v6464 = vpop.f32.mrb[0].mxu0
        %v6465 = vadd.f32 %v4641, %v6464
        %v6466 = vpop.f32.mrb[0].mxu0
        %6467 = vmatprep.mubr.f32.mxu0 0.0
        %6468 = vmatmul.mubr.f32.gmra.mrb[0].mxu0 %v6258
        %v6469 = vpop.f32.mrb[0].mxu0
        %v6470 = vadd.f32 %v4641, %v6469
        %v6471 = vpop.f32.mrb[0].mxu0
        %6472 = vmatprep.mubr.f32.mxu0 0.0
        %6473 = vmatmul.mubr.f32.gmra.mrb[0].mxu0 %v6261
        %v6474 = vpop.f32.mrb[0].mxu0
        %v6475 = vadd.f32 %v4641, %v6474
        %v6476 = vpop.f32.mrb[0].mxu0
        %6477 = vmatprep.mubr.f32.mxu0 0.0
        %6478 = vmatmul.mubr.f32.gmra.mrb[0].mxu0 %v6264
        %v6479 = vpop.f32.mrb[0].mxu0
        %v6480 = vadd.f32 %v4641, %v6479
        %v6481 = vpop.f32.mrb[0].mxu0
        %6482 = vmatprep.mubr.f32.mxu0 0.0
        %6483 = vmatmul.mubr.f32.gmra.mrb[0].mxu0 %v6267
        %v6484 = vpop.f32.mrb[0].mxu0
        %v6485 = vadd.f32 %v4641, %v6484
        %v6486 = vpop.f32.mrb[0].mxu0
        %6487 = vmatprep.mubr.f32.mxu0 0.0
        %6488 = vmatmul.mubr.f32.gmra.mrb[0].mxu0 %v6270
        %v6489 = vpop.f32.mrb[0].mxu0
        %v6490 = vadd.f32 %v4641, %v6489
        %v6491 = vpop.f32.mrb[0].mxu0
        %6492 = vmatprep.mubr.f32.mxu0 0.0
        %6493 = vmatmul.mubr.f32.gmra.mrb[0].mxu0 %v6273
        %v6494 = vpop.f32.mrb[0].mxu0
        %v6495 = vadd.f32 %v4641, %v6494
        %v6496 = vpop.f32.mrb[0].mxu0
        %6497 = vmatprep.mubr.f32.mxu0 0.0
        %6498 = vmatmul.mubr.f32.gmra.mrb[0].mxu0 %v6276
        %v6499 = vpop.f32.mrb[0].mxu0
        %v6500 = vadd.f32 %v4641, %v6499
        %v6501 = vpop.f32.mrb[0].mxu0
        %6502 = vdwg.mxu0
        %v6503 = vmax.f32 %v6345, 0.0
        %v6504 = vmax.f32 %v6350, 0.0
        %v6505 = vmax.f32 %v6355, 0.0
        %v6506 = vmax.f32 %v6360, 0.0
        %v6507 = vmax.f32 %v6365, 0.0
        %v6508 = vmax.f32 %v6370, 0.0
        %v6509 = vmax.f32 %v6375, 0.0
        %v6510 = vmax.f32 %v6380, 0.0
        %v6511 = vmax.f32 %v6385, 0.0
        %v6512 = vmax.f32 %v6390, 0.0
        %v6513 = vmax.f32 %v6395, 0.0
        %v6514 = vmax.f32 %v6400, 0.0
        %v6515 = vmax.f32 %v6405, 0.0
        %v6516 = vmax.f32 %v6410, 0.0
        %v6517 = vmax.f32 %v6415, 0.0
        %v6518 = vmax.f32 %v6420, 0.0
        %v6519 = vmax.f32 %v6425, 0.0
        %v6520 = vmax.f32 %v6430, 0.0
        %v6521 = vmax.f32 %v6435, 0.0
        %v6522 = vmax.f32 %v6440, 0.0
        %v6523 = vmax.f32 %v6445, 0.0
        %v6524 = vmax.f32 %v6450, 0.0
        %v6525 = vmax.f32 %v6455, 0.0
        %v6526 = vmax.f32 %v6460, 0.0
        %v6527 = vmax.f32 %v6465, 0.0
        %v6528 = vmax.f32 %v6470, 0.0
        %v6529 = vmax.f32 %v6475, 0.0
        %v6530 = vmax.f32 %v6480, 0.0
        %v6531 = vmax.f32 %v6485, 0.0
        %v6532 = vmax.f32 %v6490, 0.0
        %v6533 = vmax.f32 %v6495, 0.0
        %v6534 = vmax.f32 %v6500, 0.0
        %v6535 = vsub.f32 %v4963, %v5733
        %v6536 = vsub.f32 %v4964, %v5734
        %v6537 = vsub.f32 %v4965, %v5735
        %v6538 = vsub.f32 %v4966, %v5736
        %v6539 = vsub.f32 %v4967, %v5737
        %v6540 = vsub.f32 %v4968, %v5738
        %v6541 = vsub.f32 %v4969, %v5739
        %v6542 = vsub.f32 %v4970, %v5740
        %v6543 = vsub.f32 %v4971, %v5741
        %v6544 = vsub.f32 %v4972, %v5742
        %v6545 = vsub.f32 %v4973, %v5743
        %v6546 = vsub.f32 %v4974, %v5744
        %v6547 = vsub.f32 %v4975, %v5745
        %v6548 = vsub.f32 %v4976, %v5746
        %v6549 = vsub.f32 %v4977, %v5747
        %v6550 = vsub.f32 %v4978, %v5748
        %v6551 = vsub.f32 %v4979, %v5749
        %v6552 = vsub.f32 %v4980, %v5750
        %v6553 = vsub.f32 %v4981, %v5751
        %v6554 = vsub.f32 %v4982, %v5752
        %v6555 = vsub.f32 %v4983, %v5753
        %v6556 = vsub.f32 %v4984, %v5754
        %v6557 = vsub.f32 %v4985, %v5755
        %v6558 = vsub.f32 %v4986, %v5756
        %v6559 = vsub.f32 %v4987, %v5757
        %v6560 = vsub.f32 %v4988, %v5758
        %v6561 = vsub.f32 %v4989, %v5759
        %v6562 = vsub.f32 %v4990, %v5760
        %v6563 = vsub.f32 %v4991, %v5761
        %v6564 = vsub.f32 %v4992, %v5762
        %v6565 = vsub.f32 %v4993, %v5763
        %v6566 = vsub.f32 %v4994, %v5764
        %v6567 = vadd.f32 %v6535, %v6503
        %v6568 = vadd.f32 %v6536, %v6504
        %v6569 = vadd.f32 %v6537, %v6505
        %v6570 = vadd.f32 %v6538, %v6506
        %v6571 = vadd.f32 %v6539, %v6507
        %v6572 = vadd.f32 %v6540, %v6508
        %v6573 = vadd.f32 %v6541, %v6509
        %v6574 = vadd.f32 %v6542, %v6510
        %v6575 = vadd.f32 %v6543, %v6511
        %v6576 = vadd.f32 %v6544, %v6512
        %v6577 = vadd.f32 %v6545, %v6513
        %v6578 = vadd.f32 %v6546, %v6514
        %v6579 = vadd.f32 %v6547, %v6515
        %v6580 = vadd.f32 %v6548, %v6516
        %v6581 = vadd.f32 %v6549, %v6517
        %v6582 = vadd.f32 %v6550, %v6518
        %v6583 = vadd.f32 %v6551, %v6519
        %v6584 = vadd.f32 %v6552, %v6520
        %v6585 = vadd.f32 %v6553, %v6521
        %v6586 = vadd.f32 %v6554, %v6522
        %v6587 = vadd.f32 %v6555, %v6523
        %v6588 = vadd.f32 %v6556, %v6524
        %v6589 = vadd.f32 %v6557, %v6525
        %v6590 = vadd.f32 %v6558, %v6526
        %v6591 = vadd.f32 %v6559, %v6527
        %v6592 = vadd.f32 %v6560, %v6528
        %v6593 = vadd.f32 %v6561, %v6529
        %v6594 = vadd.f32 %v6562, %v6530
        %v6595 = vadd.f32 %v6563, %v6531
        %v6596 = vadd.f32 %v6564, %v6532
        %v6597 = vadd.f32 %v6565, %v6533
        %v6598 = vadd.f32 %v6566, %v6534
        %v6599 = vadd.f32 %v4249, %v6567
        %v6600 = vadd.f32 %v4250, %v6568
        %v6601 = vadd.f32 %v4251, %v6569
        %v6602 = vadd.f32 %v4252, %v6570
        %v6603 = vadd.f32 %v4253, %v6571
        %v6604 = vadd.f32 %v4254, %v6572
        %v6605 = vadd.f32 %v4255, %v6573
        %v6606 = vadd.f32 %v4256, %v6574
        %v6607 = vadd.f32 %v4257, %v6575
        %v6608 = vadd.f32 %v4258, %v6576
        %v6609 = vadd.f32 %v4259, %v6577
        %v6610 = vadd.f32 %v4260, %v6578
        %v6611 = vadd.f32 %v4261, %v6579
        %v6612 = vadd.f32 %v4262, %v6580
        %v6613 = vadd.f32 %v4263, %v6581
        %v6614 = vadd.f32 %v4264, %v6582
        %v6615 = vadd.f32 %v4265, %v6583
        %v6616 = vadd.f32 %v4266, %v6584
        %v6617 = vadd.f32 %v4267, %v6585
        %v6618 = vadd.f32 %v4268, %v6586
        %v6619 = vadd.f32 %v4269, %v6587
        %v6620 = vadd.f32 %v4270, %v6588
        %v6621 = vadd.f32 %v4271, %v6589
        %v6622 = vadd.f32 %v4272, %v6590
        %v6623 = vadd.f32 %v4273, %v6591
        %v6624 = vadd.f32 %v4274, %v6592
        %v6625 = vadd.f32 %v4275, %v6593
        %v6626 = vadd.f32 %v4276, %v6594
        %v6627 = vadd.f32 %v4277, %v6595
        %v6628 = vadd.f32 %v4278, %v6596
        %v6629 = vadd.f32 %v4279, %v6597
        %v6630 = vadd.f32 %v4280, %v6598
        %v6632 = vsel %vm679, %v6599, 0
        %v6635 = vsel %vm679, %v6600, 0
        %v6638 = vsel %vm679, %v6601, 0
        %v6641 = vsel %vm679, %v6602, 0
        %v6644 = vsel %vm679, %v6603, 0
        %v6647 = vsel %vm679, %v6604, 0
        %v6650 = vsel %vm679, %v6605, 0
        %v6653 = vsel %vm679, %v6606, 0
        %v6656 = vsel %vm679, %v6607, 0
        %v6659 = vsel %vm679, %v6608, 0
        %v6662 = vsel %vm679, %v6609, 0
        %v6665 = vsel %vm679, %v6610, 0
        %v6668 = vsel %vm679, %v6611, 0
        %v6671 = vsel %vm679, %v6612, 0
        %v6674 = vsel %vm679, %v6613, 0
        %v6677 = vsel %vm679, %v6614, 0
        %v6680 = vsel %vm679, %v6615, 0
        %v6683 = vsel %vm679, %v6616, 0
        %v6686 = vsel %vm679, %v6617, 0
        %v6689 = vsel %vm679, %v6618, 0
        %v6692 = vsel %vm679, %v6619, 0
        %v6695 = vsel %vm679, %v6620, 0
        %v6698 = vsel %vm679, %v6621, 0
        %v6701 = vsel %vm679, %v6622, 0
        %v6704 = vsel %vm679, %v6623, 0
        %v6707 = vsel %vm679, %v6624, 0
        %v6710 = vsel %vm679, %v6625, 0
        %v6713 = vsel %vm679, %v6626, 0
        %v6716 = vsel %vm679, %v6627, 0
        %v6719 = vsel %vm679, %v6628, 0
        %v6722 = vsel %vm679, %v6629, 0
        %v6725 = vsel %vm679, %v6630, 0
        %6727 = vmatprep.subr.mxu0 0.0
        %6728 = vmatpush1.msra.mxu0 %v269
        %6729 = vmatprep.subr.mxu0 0.0
        %6730 = vmatpush1.msra.mxu0 %v270
        %6731 = vmatprep.subr.mxu0 0.0
        %6732 = vmatpush1.msra.mxu0 %v271
        %6733 = vmatprep.subr.mxu0 0.0
        %6734 = vmatpush1.msra.mxu0 %v272
        %6735 = vmatprep.subr.mxu0 0.0
        %6736 = vmatpush1.msra.mxu0 0.0
        %6737 = vmatprep.subr.mxu0 0.0
        %6738 = vmatpush1.msra.mxu0 0.0
        %6739 = vmatprep.subr.mxu0 0.0
        %6740 = vmatpush1.msra.mxu0 0.0
        %6741 = vmatprep.subr.mxu0 0.0
        %6742 = vmatpush1.msra.mxu0 0.0
        %6743 = vmatprep.subr.mxu0 0.0
        %6744 = vmatpush1.msra.mxu0 0.0
        %6745 = vmatprep.subr.mxu0 0.0
        %6746 = vmatpush1.msra.mxu0 0.0
        %6747 = vmatprep.subr.mxu0 0.0
        %6748 = vmatpush1.msra.mxu0 0.0
        %6749 = vmatprep.subr.mxu0 0.0
        %6750 = vmatpush1.msra.mxu0 0.0
        %6751 = vmatprep.subr.mxu0 0.0
        %6752 = vmatpush1.msra.mxu0 0.0
        %6753 = vmatprep.subr.mxu0 0.0
        %6754 = vmatpush1.msra.mxu0 0.0
        %6755 = vmatprep.subr.mxu0 0.0
        %6756 = vmatpush1.msra.mxu0 0.0
        %6757 = vmatprep.subr.mxu0 0.0
        %6758 = vmatpush1.msra.mxu0 0.0
        %6759 = vmatprep.subr.mxu0 0.0
        %6760 = vmatpush1.msra.mxu0 0.0
        %6761 = vmatprep.subr.mxu0 0.0
        %6762 = vmatpush1.msra.mxu0 0.0
        %6763 = vmatprep.subr.mxu0 0.0
        %6764 = vmatpush1.msra.mxu0 0.0
        %6765 = vmatprep.subr.mxu0 0.0
        %6766 = vmatpush1.msra.mxu0 0.0
        %6767 = vmatprep.subr.mxu0 0.0
        %6768 = vmatpush1.msra.mxu0 0.0
        %6769 = vmatprep.subr.mxu0 0.0
        %6770 = vmatpush1.msra.mxu0 0.0
        %6771 = vmatprep.subr.mxu0 0.0
        %6772 = vmatpush1.msra.mxu0 0.0
        %6773 = vmatprep.subr.mxu0 0.0
        %6774 = vmatpush1.msra.mxu0 0.0
        %6775 = vmatprep.subr.mxu0 0.0
        %6776 = vmatpush1.msra.mxu0 0.0
        %6777 = vmatprep.subr.mxu0 0.0
        %6778 = vmatpush1.msra.mxu0 0.0
        %6779 = vmatprep.subr.mxu0 0.0
        %6780 = vmatpush1.msra.mxu0 0.0
        %6781 = vmatprep.subr.mxu0 0.0
        %6782 = vmatpush1.msra.mxu0 0.0
        %6783 = vmatprep.subr.mxu0 0.0
        %6784 = vmatpush1.msra.mxu0 0.0
        %6785 = vmatprep.subr.mxu0 0.0
        %6786 = vmatpush1.msra.mxu0 0.0
        %6787 = vmatprep.subr.mxu0 0.0
        %6788 = vmatpush1.msra.mxu0 0.0
        %6789 = vmatprep.subr.mxu0 0.0
        %6790 = vmatpush1.msra.mxu0 0.0
        %6791 = vmatprep.mubr.f32.mxu0 0.0
        %6792 = vmatmul.mubr.f32.gmra.mrb[0].mxu0 %v6632
        %v6793 = vpop.f32.mrb[0].mxu0
        %v6794 = vadd.f32 %v4284, %v6793
        %v6795 = vpop.f32.mrb[0].mxu0
        %6796 = vmatprep.mubr.f32.mxu0 0.0
        %6797 = vmatmul.mubr.f32.gmra.mrb[0].mxu0 %v6635
        %v6798 = vpop.f32.mrb[0].mxu0
        %v6799 = vadd.f32 %v4284, %v6798
        %v6800 = vpop.f32.mrb[0].mxu0
        %6801 = vmatprep.mubr.f32.mxu0 0.0
        %6802 = vmatmul.mubr.f32.gmra.mrb[0].mxu0 %v6638
        %v6803 = vpop.f32.mrb[0].mxu0
        %v6804 = vadd.f32 %v4284, %v6803
        %v6805 = vpop.f32.mrb[0].mxu0
        %6806 = vmatprep.mubr.f32.mxu0 0.0
        %6807 = vmatmul.mubr.f32.gmra.mrb[0].mxu0 %v6641
        %v6808 = vpop.f32.mrb[0].mxu0
        %v6809 = vadd.f32 %v4284, %v6808
        %v6810 = vpop.f32.mrb[0].mxu0
        %6811 = vmatprep.mubr.f32.mxu0 0.0
        %6812 = vmatmul.mubr.f32.gmra.mrb[0].mxu0 %v6644
        %v6813 = vpop.f32.mrb[0].mxu0
        %v6814 = vadd.f32 %v4284, %v6813
        %v6815 = vpop.f32.mrb[0].mxu0
        %6816 = vmatprep.mubr.f32.mxu0 0.0
        %6817 = vmatmul.mubr.f32.gmra.mrb[0].mxu0 %v6647
        %v6818 = vpop.f32.mrb[0].mxu0
        %v6819 = vadd.f32 %v4284, %v6818
        %v6820 = vpop.f32.mrb[0].mxu0
        %6821 = vmatprep.mubr.f32.mxu0 0.0
        %6822 = vmatmul.mubr.f32.gmra.mrb[0].mxu0 %v6650
        %v6823 = vpop.f32.mrb[0].mxu0
        %v6824 = vadd.f32 %v4284, %v6823
        %v6825 = vpop.f32.mrb[0].mxu0
        %6826 = vmatprep.mubr.f32.mxu0 0.0
        %6827 = vmatmul.mubr.f32.gmra.mrb[0].mxu0 %v6653
        %v6828 = vpop.f32.mrb[0].mxu0
        %v6829 = vadd.f32 %v4284, %v6828
        %v6830 = vpop.f32.mrb[0].mxu0
        %6831 = vmatprep.mubr.f32.mxu0 0.0
        %6832 = vmatmul.mubr.f32.gmra.mrb[0].mxu0 %v6656
        %v6833 = vpop.f32.mrb[0].mxu0
        %v6834 = vadd.f32 %v4284, %v6833
        %v6835 = vpop.f32.mrb[0].mxu0
        %6836 = vmatprep.mubr.f32.mxu0 0.0
        %6837 = vmatmul.mubr.f32.gmra.mrb[0].mxu0 %v6659
        %v6838 = vpop.f32.mrb[0].mxu0
        %v6839 = vadd.f32 %v4284, %v6838
        %v6840 = vpop.f32.mrb[0].mxu0
        %6841 = vmatprep.mubr.f32.mxu0 0.0
        %6842 = vmatmul.mubr.f32.gmra.mrb[0].mxu0 %v6662
        %v6843 = vpop.f32.mrb[0].mxu0
        %v6844 = vadd.f32 %v4284, %v6843
        %v6845 = vpop.f32.mrb[0].mxu0
        %6846 = vmatprep.mubr.f32.mxu0 0.0
        %6847 = vmatmul.mubr.f32.gmra.mrb[0].mxu0 %v6665
        %v6848 = vpop.f32.mrb[0].mxu0
        %v6849 = vadd.f32 %v4284, %v6848
        %v6850 = vpop.f32.mrb[0].mxu0
        %6851 = vmatprep.mubr.f32.mxu0 0.0
        %6852 = vmatmul.mubr.f32.gmra.mrb[0].mxu0 %v6668
        %v6853 = vpop.f32.mrb[0].mxu0
        %v6854 = vadd.f32 %v4284, %v6853
        %v6855 = vpop.f32.mrb[0].mxu0
        %6856 = vmatprep.mubr.f32.mxu0 0.0
        %6857 = vmatmul.mubr.f32.gmra.mrb[0].mxu0 %v6671
        %v6858 = vpop.f32.mrb[0].mxu0
        %v6859 = vadd.f32 %v4284, %v6858
        %v6860 = vpop.f32.mrb[0].mxu0
        %6861 = vmatprep.mubr.f32.mxu0 0.0
        %6862 = vmatmul.mubr.f32.gmra.mrb[0].mxu0 %v6674
        %v6863 = vpop.f32.mrb[0].mxu0
        %v6864 = vadd.f32 %v4284, %v6863
        %v6865 = vpop.f32.mrb[0].mxu0
        %6866 = vmatprep.mubr.f32.mxu0 0.0
        %6867 = vmatmul.mubr.f32.gmra.mrb[0].mxu0 %v6677
        %v6868 = vpop.f32.mrb[0].mxu0
        %v6869 = vadd.f32 %v4284, %v6868
        %v6870 = vpop.f32.mrb[0].mxu0
        %6871 = vmatprep.mubr.f32.mxu0 0.0
        %6872 = vmatmul.mubr.f32.gmra.mrb[0].mxu0 %v6680
        %v6873 = vpop.f32.mrb[0].mxu0
        %v6874 = vadd.f32 %v4284, %v6873
        %v6875 = vpop.f32.mrb[0].mxu0
        %6876 = vmatprep.mubr.f32.mxu0 0.0
        %6877 = vmatmul.mubr.f32.gmra.mrb[0].mxu0 %v6683
        %v6878 = vpop.f32.mrb[0].mxu0
        %v6879 = vadd.f32 %v4284, %v6878
        %v6880 = vpop.f32.mrb[0].mxu0
        %6881 = vmatprep.mubr.f32.mxu0 0.0
        %6882 = vmatmul.mubr.f32.gmra.mrb[0].mxu0 %v6686
        %v6883 = vpop.f32.mrb[0].mxu0
        %v6884 = vadd.f32 %v4284, %v6883
        %v6885 = vpop.f32.mrb[0].mxu0
        %6886 = vmatprep.mubr.f32.mxu0 0.0
        %6887 = vmatmul.mubr.f32.gmra.mrb[0].mxu0 %v6689
        %v6888 = vpop.f32.mrb[0].mxu0
        %v6889 = vadd.f32 %v4284, %v6888
        %v6890 = vpop.f32.mrb[0].mxu0
        %6891 = vmatprep.mubr.f32.mxu0 0.0
        %6892 = vmatmul.mubr.f32.gmra.mrb[0].mxu0 %v6692
        %v6893 = vpop.f32.mrb[0].mxu0
        %v6894 = vadd.f32 %v4284, %v6893
        %v6895 = vpop.f32.mrb[0].mxu0
        %6896 = vmatprep.mubr.f32.mxu0 0.0
        %6897 = vmatmul.mubr.f32.gmra.mrb[0].mxu0 %v6695
        %v6898 = vpop.f32.mrb[0].mxu0
        %v6899 = vadd.f32 %v4284, %v6898
        %v6900 = vpop.f32.mrb[0].mxu0
        %6901 = vmatprep.mubr.f32.mxu0 0.0
        %6902 = vmatmul.mubr.f32.gmra.mrb[0].mxu0 %v6698
        %v6903 = vpop.f32.mrb[0].mxu0
        %v6904 = vadd.f32 %v4284, %v6903
        %v6905 = vpop.f32.mrb[0].mxu0
        %6906 = vmatprep.mubr.f32.mxu0 0.0
        %6907 = vmatmul.mubr.f32.gmra.mrb[0].mxu0 %v6701
        %v6908 = vpop.f32.mrb[0].mxu0
        %v6909 = vadd.f32 %v4284, %v6908
        %v6910 = vpop.f32.mrb[0].mxu0
        %6911 = vmatprep.mubr.f32.mxu0 0.0
        %6912 = vmatmul.mubr.f32.gmra.mrb[0].mxu0 %v6704
        %v6913 = vpop.f32.mrb[0].mxu0
        %v6914 = vadd.f32 %v4284, %v6913
        %v6915 = vpop.f32.mrb[0].mxu0
        %6916 = vmatprep.mubr.f32.mxu0 0.0
        %6917 = vmatmul.mubr.f32.gmra.mrb[0].mxu0 %v6707
        %v6918 = vpop.f32.mrb[0].mxu0
        %v6919 = vadd.f32 %v4284, %v6918
        %v6920 = vpop.f32.mrb[0].mxu0
        %6921 = vmatprep.mubr.f32.mxu0 0.0
        %6922 = vmatmul.mubr.f32.gmra.mrb[0].mxu0 %v6710
        %v6923 = vpop.f32.mrb[0].mxu0
        %v6924 = vadd.f32 %v4284, %v6923
        %v6925 = vpop.f32.mrb[0].mxu0
        %6926 = vmatprep.mubr.f32.mxu0 0.0
        %6927 = vmatmul.mubr.f32.gmra.mrb[0].mxu0 %v6713
        %v6928 = vpop.f32.mrb[0].mxu0
        %v6929 = vadd.f32 %v4284, %v6928
        %v6930 = vpop.f32.mrb[0].mxu0
        %6931 = vmatprep.mubr.f32.mxu0 0.0
        %6932 = vmatmul.mubr.f32.gmra.mrb[0].mxu0 %v6716
        %v6933 = vpop.f32.mrb[0].mxu0
        %v6934 = vadd.f32 %v4284, %v6933
        %v6935 = vpop.f32.mrb[0].mxu0
        %6936 = vmatprep.mubr.f32.mxu0 0.0
        %6937 = vmatmul.mubr.f32.gmra.mrb[0].mxu0 %v6719
        %v6938 = vpop.f32.mrb[0].mxu0
        %v6939 = vadd.f32 %v4284, %v6938
        %v6940 = vpop.f32.mrb[0].mxu0
        %6941 = vmatprep.mubr.f32.mxu0 0.0
        %6942 = vmatmul.mubr.f32.gmra.mrb[0].mxu0 %v6722
        %v6943 = vpop.f32.mrb[0].mxu0
        %v6944 = vadd.f32 %v4284, %v6943
        %v6945 = vpop.f32.mrb[0].mxu0
        %6946 = vmatprep.mubr.f32.mxu0 0.0
        %6947 = vmatmul.mubr.f32.gmra.mrb[0].mxu0 %v6725
        %v6948 = vpop.f32.mrb[0].mxu0
        %v6949 = vadd.f32 %v4284, %v6948
        %v6950 = vpop.f32.mrb[0].mxu0
        %6951 = vdwg.mxu0
        %v6952 = vmax.f32 %v6794, 0.0
        %v6953 = vmax.f32 %v6799, 0.0
        %v6954 = vmax.f32 %v6804, 0.0
        %v6955 = vmax.f32 %v6809, 0.0
        %v6956 = vmax.f32 %v6814, 0.0
        %v6957 = vmax.f32 %v6819, 0.0
        %v6958 = vmax.f32 %v6824, 0.0
        %v6959 = vmax.f32 %v6829, 0.0
        %v6960 = vmax.f32 %v6834, 0.0
        %v6961 = vmax.f32 %v6839, 0.0
        %v6962 = vmax.f32 %v6844, 0.0
        %v6963 = vmax.f32 %v6849, 0.0
        %v6964 = vmax.f32 %v6854, 0.0
        %v6965 = vmax.f32 %v6859, 0.0
        %v6966 = vmax.f32 %v6864, 0.0
        %v6967 = vmax.f32 %v6869, 0.0
        %v6968 = vmax.f32 %v6874, 0.0
        %v6969 = vmax.f32 %v6879, 0.0
        %v6970 = vmax.f32 %v6884, 0.0
        %v6971 = vmax.f32 %v6889, 0.0
        %v6972 = vmax.f32 %v6894, 0.0
        %v6973 = vmax.f32 %v6899, 0.0
        %v6974 = vmax.f32 %v6904, 0.0
        %v6975 = vmax.f32 %v6909, 0.0
        %v6976 = vmax.f32 %v6914, 0.0
        %v6977 = vmax.f32 %v6919, 0.0
        %v6978 = vmax.f32 %v6924, 0.0
        %v6979 = vmax.f32 %v6929, 0.0
        %v6980 = vmax.f32 %v6934, 0.0
        %v6981 = vmax.f32 %v6939, 0.0
        %v6982 = vmax.f32 %v6944, 0.0
        %v6983 = vmax.f32 %v6949, 0.0
        %v6985 = vsel %vm679, %v6952, 0
        %v6988 = vsel %vm679, %v6953, 0
        %v6991 = vsel %vm679, %v6954, 0
        %v6994 = vsel %vm679, %v6955, 0
        %v6997 = vsel %vm679, %v6956, 0
        %v7000 = vsel %vm679, %v6957, 0
        %v7003 = vsel %vm679, %v6958, 0
        %v7006 = vsel %vm679, %v6959, 0
        %v7009 = vsel %vm679, %v6960, 0
        %v7012 = vsel %vm679, %v6961, 0
        %v7015 = vsel %vm679, %v6962, 0
        %v7018 = vsel %vm679, %v6963, 0
        %v7021 = vsel %vm679, %v6964, 0
        %v7024 = vsel %vm679, %v6965, 0
        %v7027 = vsel %vm679, %v6966, 0
        %v7030 = vsel %vm679, %v6967, 0
        %v7033 = vsel %vm679, %v6968, 0
        %v7036 = vsel %vm679, %v6969, 0
        %v7039 = vsel %vm679, %v6970, 0
        %v7042 = vsel %vm679, %v6971, 0
        %v7045 = vsel %vm679, %v6972, 0
        %v7048 = vsel %vm679, %v6973, 0
        %v7051 = vsel %vm679, %v6974, 0
        %v7054 = vsel %vm679, %v6975, 0
        %v7057 = vsel %vm679, %v6976, 0
        %v7060 = vsel %vm679, %v6977, 0
        %v7063 = vsel %vm679, %v6978, 0
        %v7066 = vsel %vm679, %v6979, 0
        %v7069 = vsel %vm679, %v6980, 0
        %v7072 = vsel %vm679, %v6981, 0
        %v7075 = vsel %vm679, %v6982, 0
        %v7078 = vsel %vm679, %v6983, 0
        %7080 = vmatprep.subr.mxu0 0.0
        %7081 = vmatpush1.msra.mxu0 %v274
        %7082 = vmatprep.subr.mxu0 0.0
        %7083 = vmatpush1.msra.mxu0 %v275
        %7084 = vmatprep.subr.mxu0 0.0
        %7085 = vmatpush1.msra.mxu0 %v276
        %7086 = vmatprep.subr.mxu0 0.0
        %7087 = vmatpush1.msra.mxu0 %v277
        %7088 = vmatprep.subr.mxu0 0.0
        %7089 = vmatpush1.msra.mxu0 0.0
        %7090 = vmatprep.subr.mxu0 0.0
        %7091 = vmatpush1.msra.mxu0 0.0
        %7092 = vmatprep.subr.mxu0 0.0
        %7093 = vmatpush1.msra.mxu0 0.0
        %7094 = vmatprep.subr.mxu0 0.0
        %7095 = vmatpush1.msra.mxu0 0.0
        %7096 = vmatprep.subr.mxu0 0.0
        %7097 = vmatpush1.msra.mxu0 0.0
        %7098 = vmatprep.subr.mxu0 0.0
        %7099 = vmatpush1.msra.mxu0 0.0
        %7100 = vmatprep.subr.mxu0 0.0
        %7101 = vmatpush1.msra.mxu0 0.0
        %7102 = vmatprep.subr.mxu0 0.0
        %7103 = vmatpush1.msra.mxu0 0.0
        %7104 = vmatprep.subr.mxu0 0.0
        %7105 = vmatpush1.msra.mxu0 0.0
        %7106 = vmatprep.subr.mxu0 0.0
        %7107 = vmatpush1.msra.mxu0 0.0
        %7108 = vmatprep.subr.mxu0 0.0
        %7109 = vmatpush1.msra.mxu0 0.0
        %7110 = vmatprep.subr.mxu0 0.0
        %7111 = vmatpush1.msra.mxu0 0.0
        %7112 = vmatprep.subr.mxu0 0.0
        %7113 = vmatpush1.msra.mxu0 0.0
        %7114 = vmatprep.subr.mxu0 0.0
        %7115 = vmatpush1.msra.mxu0 0.0
        %7116 = vmatprep.subr.mxu0 0.0
        %7117 = vmatpush1.msra.mxu0 0.0
        %7118 = vmatprep.subr.mxu0 0.0
        %7119 = vmatpush1.msra.mxu0 0.0
        %7120 = vmatprep.subr.mxu0 0.0
        %7121 = vmatpush1.msra.mxu0 0.0
        %7122 = vmatprep.subr.mxu0 0.0
        %7123 = vmatpush1.msra.mxu0 0.0
        %7124 = vmatprep.subr.mxu0 0.0
        %7125 = vmatpush1.msra.mxu0 0.0
        %7126 = vmatprep.subr.mxu0 0.0
        %7127 = vmatpush1.msra.mxu0 0.0
        %7128 = vmatprep.subr.mxu0 0.0
        %7129 = vmatpush1.msra.mxu0 0.0
        %7130 = vmatprep.subr.mxu0 0.0
        %7131 = vmatpush1.msra.mxu0 0.0
        %7132 = vmatprep.subr.mxu0 0.0
        %7133 = vmatpush1.msra.mxu0 0.0
        %7134 = vmatprep.subr.mxu0 0.0
        %7135 = vmatpush1.msra.mxu0 0.0
        %7136 = vmatprep.subr.mxu0 0.0
        %7137 = vmatpush1.msra.mxu0 0.0
        %7138 = vmatprep.subr.mxu0 0.0
        %7139 = vmatpush1.msra.mxu0 0.0
        %7140 = vmatprep.subr.mxu0 0.0
        %7141 = vmatpush1.msra.mxu0 0.0
        %7142 = vmatprep.subr.mxu0 0.0
        %7143 = vmatpush1.msra.mxu0 0.0
        %7144 = vmatprep.mubr.f32.mxu0 0.0
        %7145 = vmatmul.mubr.f32.gmra.mrb[0].mxu0 %v6985
        %v7146 = vpop.f32.mrb[0].mxu0
        %v7147 = vadd.f32 %v4641, %v7146
        %v7148 = vpop.f32.mrb[0].mxu0
        %7149 = vmatprep.mubr.f32.mxu0 0.0
        %7150 = vmatmul.mubr.f32.gmra.mrb[0].mxu0 %v6988
        %v7151 = vpop.f32.mrb[0].mxu0
        %v7152 = vadd.f32 %v4641, %v7151
        %v7153 = vpop.f32.mrb[0].mxu0
        %7154 = vmatprep.mubr.f32.mxu0 0.0
        %7155 = vmatmul.mubr.f32.gmra.mrb[0].mxu0 %v6991
        %v7156 = vpop.f32.mrb[0].mxu0
        %v7157 = vadd.f32 %v4641, %v7156
        %v7158 = vpop.f32.mrb[0].mxu0
        %7159 = vmatprep.mubr.f32.mxu0 0.0
        %7160 = vmatmul.mubr.f32.gmra.mrb[0].mxu0 %v6994
        %v7161 = vpop.f32.mrb[0].mxu0
        %v7162 = vadd.f32 %v4641, %v7161
        %v7163 = vpop.f32.mrb[0].mxu0
        %7164 = vmatprep.mubr.f32.mxu0 0.0
        %7165 = vmatmul.mubr.f32.gmra.mrb[0].mxu0 %v6997
        %v7166 = vpop.f32.mrb[0].mxu0
        %v7167 = vadd.f32 %v4641, %v7166
        %v7168 = vpop.f32.mrb[0].mxu0
        %7169 = vmatprep.mubr.f32.mxu0 0.0
        %7170 = vmatmul.mubr.f32.gmra.mrb[0].mxu0 %v7000
        %v7171 = vpop.f32.mrb[0].mxu0
        %v7172 = vadd.f32 %v4641, %v7171
        %v7173 = vpop.f32.mrb[0].mxu0
        %7174 = vmatprep.mubr.f32.mxu0 0.0
        %7175 = vmatmul.mubr.f32.gmra.mrb[0].mxu0 %v7003
        %v7176 = vpop.f32.mrb[0].mxu0
        %v7177 = vadd.f32 %v4641, %v7176
        %v7178 = vpop.f32.mrb[0].mxu0
        %7179 = vmatprep.mubr.f32.mxu0 0.0
        %7180 = vmatmul.mubr.f32.gmra.mrb[0].mxu0 %v7006
        %v7181 = vpop.f32.mrb[0].mxu0
        %v7182 = vadd.f32 %v4641, %v7181
        %v7183 = vpop.f32.mrb[0].mxu0
        %7184 = vmatprep.mubr.f32.mxu0 0.0
        %7185 = vmatmul.mubr.f32.gmra.mrb[0].mxu0 %v7009
        %v7186 = vpop.f32.mrb[0].mxu0
        %v7187 = vadd.f32 %v4641, %v7186
        %v7188 = vpop.f32.mrb[0].mxu0
        %7189 = vmatprep.mubr.f32.mxu0 0.0
        %7190 = vmatmul.mubr.f32.gmra.mrb[0].mxu0 %v7012
        %v7191 = vpop.f32.mrb[0].mxu0
        %v7192 = vadd.f32 %v4641, %v7191
        %v7193 = vpop.f32.mrb[0].mxu0
        %7194 = vmatprep.mubr.f32.mxu0 0.0
        %7195 = vmatmul.mubr.f32.gmra.mrb[0].mxu0 %v7015
        %v7196 = vpop.f32.mrb[0].mxu0
        %v7197 = vadd.f32 %v4641, %v7196
        %v7198 = vpop.f32.mrb[0].mxu0
        %7199 = vmatprep.mubr.f32.mxu0 0.0
        %7200 = vmatmul.mubr.f32.gmra.mrb[0].mxu0 %v7018
        %v7201 = vpop.f32.mrb[0].mxu0
        %v7202 = vadd.f32 %v4641, %v7201
        %v7203 = vpop.f32.mrb[0].mxu0
        %7204 = vmatprep.mubr.f32.mxu0 0.0
        %7205 = vmatmul.mubr.f32.gmra.mrb[0].mxu0 %v7021
        %v7206 = vpop.f32.mrb[0].mxu0
        %v7207 = vadd.f32 %v4641, %v7206
        %v7208 = vpop.f32.mrb[0].mxu0
        %7209 = vmatprep.mubr.f32.mxu0 0.0
        %7210 = vmatmul.mubr.f32.gmra.mrb[0].mxu0 %v7024
        %v7211 = vpop.f32.mrb[0].mxu0
        %v7212 = vadd.f32 %v4641, %v7211
        %v7213 = vpop.f32.mrb[0].mxu0
        %7214 = vmatprep.mubr.f32.mxu0 0.0
        %7215 = vmatmul.mubr.f32.gmra.mrb[0].mxu0 %v7027
        %v7216 = vpop.f32.mrb[0].mxu0
        %v7217 = vadd.f32 %v4641, %v7216
        %v7218 = vpop.f32.mrb[0].mxu0
        %7219 = vmatprep.mubr.f32.mxu0 0.0
        %7220 = vmatmul.mubr.f32.gmra.mrb[0].mxu0 %v7030
        %v7221 = vpop.f32.mrb[0].mxu0
        %v7222 = vadd.f32 %v4641, %v7221
        %v7223 = vpop.f32.mrb[0].mxu0
        %7224 = vmatprep.mubr.f32.mxu0 0.0
        %7225 = vmatmul.mubr.f32.gmra.mrb[0].mxu0 %v7033
        %v7226 = vpop.f32.mrb[0].mxu0
        %v7227 = vadd.f32 %v4641, %v7226
        %v7228 = vpop.f32.mrb[0].mxu0
        %7229 = vmatprep.mubr.f32.mxu0 0.0
        %7230 = vmatmul.mubr.f32.gmra.mrb[0].mxu0 %v7036
        %v7231 = vpop.f32.mrb[0].mxu0
        %v7232 = vadd.f32 %v4641, %v7231
        %v7233 = vpop.f32.mrb[0].mxu0
        %7234 = vmatprep.mubr.f32.mxu0 0.0
        %7235 = vmatmul.mubr.f32.gmra.mrb[0].mxu0 %v7039
        %v7236 = vpop.f32.mrb[0].mxu0
        %v7237 = vadd.f32 %v4641, %v7236
        %v7238 = vpop.f32.mrb[0].mxu0
        %7239 = vmatprep.mubr.f32.mxu0 0.0
        %7240 = vmatmul.mubr.f32.gmra.mrb[0].mxu0 %v7042
        %v7241 = vpop.f32.mrb[0].mxu0
        %v7242 = vadd.f32 %v4641, %v7241
        %v7243 = vpop.f32.mrb[0].mxu0
        %7244 = vmatprep.mubr.f32.mxu0 0.0
        %7245 = vmatmul.mubr.f32.gmra.mrb[0].mxu0 %v7045
        %v7246 = vpop.f32.mrb[0].mxu0
        %v7247 = vadd.f32 %v4641, %v7246
        %v7248 = vpop.f32.mrb[0].mxu0
        %7249 = vmatprep.mubr.f32.mxu0 0.0
        %7250 = vmatmul.mubr.f32.gmra.mrb[0].mxu0 %v7048
        %v7251 = vpop.f32.mrb[0].mxu0
        %v7252 = vadd.f32 %v4641, %v7251
        %v7253 = vpop.f32.mrb[0].mxu0
        %7254 = vmatprep.mubr.f32.mxu0 0.0
        %7255 = vmatmul.mubr.f32.gmra.mrb[0].mxu0 %v7051
        %v7256 = vpop.f32.mrb[0].mxu0
        %v7257 = vadd.f32 %v4641, %v7256
        %v7258 = vpop.f32.mrb[0].mxu0
        %7259 = vmatprep.mubr.f32.mxu0 0.0
        %7260 = vmatmul.mubr.f32.gmra.mrb[0].mxu0 %v7054
        %v7261 = vpop.f32.mrb[0].mxu0
        %v7262 = vadd.f32 %v4641, %v7261
        %v7263 = vpop.f32.mrb[0].mxu0
        %7264 = vmatprep.mubr.f32.mxu0 0.0
        %7265 = vmatmul.mubr.f32.gmra.mrb[0].mxu0 %v7057
        %v7266 = vpop.f32.mrb[0].mxu0
        %v7267 = vadd.f32 %v4641, %v7266
        %v7268 = vpop.f32.mrb[0].mxu0
        %7269 = vmatprep.mubr.f32.mxu0 0.0
        %7270 = vmatmul.mubr.f32.gmra.mrb[0].mxu0 %v7060
        %v7271 = vpop.f32.mrb[0].mxu0
        %v7272 = vadd.f32 %v4641, %v7271
        %v7273 = vpop.f32.mrb[0].mxu0
        %7274 = vmatprep.mubr.f32.mxu0 0.0
        %7275 = vmatmul.mubr.f32.gmra.mrb[0].mxu0 %v7063
        %v7276 = vpop.f32.mrb[0].mxu0
        %v7277 = vadd.f32 %v4641, %v7276
        %v7278 = vpop.f32.mrb[0].mxu0
        %7279 = vmatprep.mubr.f32.mxu0 0.0
        %7280 = vmatmul.mubr.f32.gmra.mrb[0].mxu0 %v7066
        %v7281 = vpop.f32.mrb[0].mxu0
        %v7282 = vadd.f32 %v4641, %v7281
        %v7283 = vpop.f32.mrb[0].mxu0
        %7284 = vmatprep.mubr.f32.mxu0 0.0
        %7285 = vmatmul.mubr.f32.gmra.mrb[0].mxu0 %v7069
        %v7286 = vpop.f32.mrb[0].mxu0
        %v7287 = vadd.f32 %v4641, %v7286
        %v7288 = vpop.f32.mrb[0].mxu0
        %7289 = vmatprep.mubr.f32.mxu0 0.0
        %7290 = vmatmul.mubr.f32.gmra.mrb[0].mxu0 %v7072
        %v7291 = vpop.f32.mrb[0].mxu0
        %v7292 = vadd.f32 %v4641, %v7291
        %v7293 = vpop.f32.mrb[0].mxu0
        %7294 = vmatprep.mubr.f32.mxu0 0.0
        %7295 = vmatmul.mubr.f32.gmra.mrb[0].mxu0 %v7075
        %v7296 = vpop.f32.mrb[0].mxu0
        %v7297 = vadd.f32 %v4641, %v7296
        %v7298 = vpop.f32.mrb[0].mxu0
        %7299 = vmatprep.mubr.f32.mxu0 0.0
        %7300 = vmatmul.mubr.f32.gmra.mrb[0].mxu0 %v7078
        %v7301 = vpop.f32.mrb[0].mxu0
        %v7302 = vadd.f32 %v4641, %v7301
        %v7303 = vpop.f32.mrb[0].mxu0
        %7304 = vdwg.mxu0
        %v7305 = vmax.f32 %v7147, 0.0
        %v7306 = vmax.f32 %v7152, 0.0
        %v7307 = vmax.f32 %v7157, 0.0
        %v7308 = vmax.f32 %v7162, 0.0
        %v7309 = vmax.f32 %v7167, 0.0
        %v7310 = vmax.f32 %v7172, 0.0
        %v7311 = vmax.f32 %v7177, 0.0
        %v7312 = vmax.f32 %v7182, 0.0
        %v7313 = vmax.f32 %v7187, 0.0
        %v7314 = vmax.f32 %v7192, 0.0
        %v7315 = vmax.f32 %v7197, 0.0
        %v7316 = vmax.f32 %v7202, 0.0
        %v7317 = vmax.f32 %v7207, 0.0
        %v7318 = vmax.f32 %v7212, 0.0
        %v7319 = vmax.f32 %v7217, 0.0
        %v7320 = vmax.f32 %v7222, 0.0
        %v7321 = vmax.f32 %v7227, 0.0
        %v7322 = vmax.f32 %v7232, 0.0
        %v7323 = vmax.f32 %v7237, 0.0
        %v7324 = vmax.f32 %v7242, 0.0
        %v7325 = vmax.f32 %v7247, 0.0
        %v7326 = vmax.f32 %v7252, 0.0
        %v7327 = vmax.f32 %v7257, 0.0
        %v7328 = vmax.f32 %v7262, 0.0
        %v7329 = vmax.f32 %v7267, 0.0
        %v7330 = vmax.f32 %v7272, 0.0
        %v7331 = vmax.f32 %v7277, 0.0
        %v7332 = vmax.f32 %v7282, 0.0
        %v7333 = vmax.f32 %v7287, 0.0
        %v7334 = vmax.f32 %v7292, 0.0
        %v7335 = vmax.f32 %v7297, 0.0
        %v7336 = vmax.f32 %v7302, 0.0
        %v7337 = vadd.f32 %v5733, %v6503
        %v7338 = vadd.f32 %v5734, %v6504
        %v7339 = vadd.f32 %v5735, %v6505
        %v7340 = vadd.f32 %v5736, %v6506
        %v7341 = vadd.f32 %v5737, %v6507
        %v7342 = vadd.f32 %v5738, %v6508
        %v7343 = vadd.f32 %v5739, %v6509
        %v7344 = vadd.f32 %v5740, %v6510
        %v7345 = vadd.f32 %v5741, %v6511
        %v7346 = vadd.f32 %v5742, %v6512
        %v7347 = vadd.f32 %v5743, %v6513
        %v7348 = vadd.f32 %v5744, %v6514
        %v7349 = vadd.f32 %v5745, %v6515
        %v7350 = vadd.f32 %v5746, %v6516
        %v7351 = vadd.f32 %v5747, %v6517
        %v7352 = vadd.f32 %v5748, %v6518
        %v7353 = vadd.f32 %v5749, %v6519
        %v7354 = vadd.f32 %v5750, %v6520
        %v7355 = vadd.f32 %v5751, %v6521
        %v7356 = vadd.f32 %v5752, %v6522
        %v7357 = vadd.f32 %v5753, %v6523
        %v7358 = vadd.f32 %v5754, %v6524
        %v7359 = vadd.f32 %v5755, %v6525
        %v7360 = vadd.f32 %v5756, %v6526
        %v7361 = vadd.f32 %v5757, %v6527
        %v7362 = vadd.f32 %v5758, %v6528
        %v7363 = vadd.f32 %v5759, %v6529
        %v7364 = vadd.f32 %v5760, %v6530
        %v7365 = vadd.f32 %v5761, %v6531
        %v7366 = vadd.f32 %v5762, %v6532
        %v7367 = vadd.f32 %v5763, %v6533
        %v7368 = vadd.f32 %v5764, %v6534
        %v7369 = vmul.f32 %v7337, 3.0
        %v7370 = vmul.f32 %v7338, 3.0
        %v7371 = vmul.f32 %v7339, 3.0
        %v7372 = vmul.f32 %v7340, 3.0
        %v7373 = vmul.f32 %v7341, 3.0
        %v7374 = vmul.f32 %v7342, 3.0
        %v7375 = vmul.f32 %v7343, 3.0
        %v7376 = vmul.f32 %v7344, 3.0
        %v7377 = vmul.f32 %v7345, 3.0
        %v7378 = vmul.f32 %v7346, 3.0
        %v7379 = vmul.f32 %v7347, 3.0
        %v7380 = vmul.f32 %v7348, 3.0
        %v7381 = vmul.f32 %v7349, 3.0
        %v7382 = vmul.f32 %v7350, 3.0
        %v7383 = vmul.f32 %v7351, 3.0
        %v7384 = vmul.f32 %v7352, 3.0
        %v7385 = vmul.f32 %v7353, 3.0
        %v7386 = vmul.f32 %v7354, 3.0
        %v7387 = vmul.f32 %v7355, 3.0
        %v7388 = vmul.f32 %v7356, 3.0
        %v7389 = vmul.f32 %v7357, 3.0
        %v7390 = vmul.f32 %v7358, 3.0
        %v7391 = vmul.f32 %v7359, 3.0
        %v7392 = vmul.f32 %v7360, 3.0
        %v7393 = vmul.f32 %v7361, 3.0
        %v7394 = vmul.f32 %v7362, 3.0
        %v7395 = vmul.f32 %v7363, 3.0
        %v7396 = vmul.f32 %v7364, 3.0
        %v7397 = vmul.f32 %v7365, 3.0
        %v7398 = vmul.f32 %v7366, 3.0
        %v7399 = vmul.f32 %v7367, 3.0
        %v7400 = vmul.f32 %v7368, 3.0
        %v7401 = vadd.f32 %v4963, %v7369
        %v7402 = vadd.f32 %v4964, %v7370
        %v7403 = vadd.f32 %v4965, %v7371
        %v7404 = vadd.f32 %v4966, %v7372
        %v7405 = vadd.f32 %v4967, %v7373
        %v7406 = vadd.f32 %v4968, %v7374
        %v7407 = vadd.f32 %v4969, %v7375
        %v7408 = vadd.f32 %v4970, %v7376
        %v7409 = vadd.f32 %v4971, %v7377
        %v7410 = vadd.f32 %v4972, %v7378
        %v7411 = vadd.f32 %v4973, %v7379
        %v7412 = vadd.f32 %v4974, %v7380
        %v7413 = vadd.f32 %v4975, %v7381
        %v7414 = vadd.f32 %v4976, %v7382
        %v7415 = vadd.f32 %v4977, %v7383
        %v7416 = vadd.f32 %v4978, %v7384
        %v7417 = vadd.f32 %v4979, %v7385
        %v7418 = vadd.f32 %v4980, %v7386
        %v7419 = vadd.f32 %v4981, %v7387
        %v7420 = vadd.f32 %v4982, %v7388
        %v7421 = vadd.f32 %v4983, %v7389
        %v7422 = vadd.f32 %v4984, %v7390
        %v7423 = vadd.f32 %v4985, %v7391
        %v7424 = vadd.f32 %v4986, %v7392
        %v7425 = vadd.f32 %v4987, %v7393
        %v7426 = vadd.f32 %v4988, %v7394
        %v7427 = vadd.f32 %v4989, %v7395
        %v7428 = vadd.f32 %v4990, %v7396
        %v7429 = vadd.f32 %v4991, %v7397
        %v7430 = vadd.f32 %v4992, %v7398
        %v7431 = vadd.f32 %v4993, %v7399
        %v7432 = vadd.f32 %v4994, %v7400
        %v7433 = vadd.f32 %v7401, %v7305
        %v7434 = vadd.f32 %v7402, %v7306
        %v7435 = vadd.f32 %v7403, %v7307
        %v7436 = vadd.f32 %v7404, %v7308
        %v7437 = vadd.f32 %v7405, %v7309
        %v7438 = vadd.f32 %v7406, %v7310
        %v7439 = vadd.f32 %v7407, %v7311
        %v7440 = vadd.f32 %v7408, %v7312
        %v7441 = vadd.f32 %v7409, %v7313
        %v7442 = vadd.f32 %v7410, %v7314
        %v7443 = vadd.f32 %v7411, %v7315
        %v7444 = vadd.f32 %v7412, %v7316
        %v7445 = vadd.f32 %v7413, %v7317
        %v7446 = vadd.f32 %v7414, %v7318
        %v7447 = vadd.f32 %v7415, %v7319
        %v7448 = vadd.f32 %v7416, %v7320
        %v7449 = vadd.f32 %v7417, %v7321
        %v7450 = vadd.f32 %v7418, %v7322
        %v7451 = vadd.f32 %v7419, %v7323
        %v7452 = vadd.f32 %v7420, %v7324
        %v7453 = vadd.f32 %v7421, %v7325
        %v7454 = vadd.f32 %v7422, %v7326
        %v7455 = vadd.f32 %v7423, %v7327
        %v7456 = vadd.f32 %v7424, %v7328
        %v7457 = vadd.f32 %v7425, %v7329
        %v7458 = vadd.f32 %v7426, %v7330
        %v7459 = vadd.f32 %v7427, %v7331
        %v7460 = vadd.f32 %v7428, %v7332
        %v7461 = vadd.f32 %v7429, %v7333
        %v7462 = vadd.f32 %v7430, %v7334
        %v7463 = vadd.f32 %v7431, %v7335
        %v7464 = vadd.f32 %v7432, %v7336
        %v7465 = vmul.f32 %v7433, 0.125
        %v7466 = vmul.f32 %v7434, 0.125
        %v7467 = vmul.f32 %v7435, 0.125
        %v7468 = vmul.f32 %v7436, 0.125
        %v7469 = vmul.f32 %v7437, 0.125
        %v7470 = vmul.f32 %v7438, 0.125
        %v7471 = vmul.f32 %v7439, 0.125
        %v7472 = vmul.f32 %v7440, 0.125
        %v7473 = vmul.f32 %v7441, 0.125
        %v7474 = vmul.f32 %v7442, 0.125
        %v7475 = vmul.f32 %v7443, 0.125
        %v7476 = vmul.f32 %v7444, 0.125
        %v7477 = vmul.f32 %v7445, 0.125
        %v7478 = vmul.f32 %v7446, 0.125
        %v7479 = vmul.f32 %v7447, 0.125
        %v7480 = vmul.f32 %v7448, 0.125
        %v7481 = vmul.f32 %v7449, 0.125
        %v7482 = vmul.f32 %v7450, 0.125
        %v7483 = vmul.f32 %v7451, 0.125
        %v7484 = vmul.f32 %v7452, 0.125
        %v7485 = vmul.f32 %v7453, 0.125
        %v7486 = vmul.f32 %v7454, 0.125
        %v7487 = vmul.f32 %v7455, 0.125
        %v7488 = vmul.f32 %v7456, 0.125
        %v7489 = vmul.f32 %v7457, 0.125
        %v7490 = vmul.f32 %v7458, 0.125
        %v7491 = vmul.f32 %v7459, 0.125
        %v7492 = vmul.f32 %v7460, 0.125
        %v7493 = vmul.f32 %v7461, 0.125
        %v7494 = vmul.f32 %v7462, 0.125
        %v7495 = vmul.f32 %v7463, 0.125
        %v7496 = vmul.f32 %v7464, 0.125
        %v7497 = vadd.f32 %v4249, %v7465
        %v7498 = vadd.f32 %v4250, %v7466
        %v7499 = vadd.f32 %v4251, %v7467
        %v7500 = vadd.f32 %v4252, %v7468
        %v7501 = vadd.f32 %v4253, %v7469
        %v7502 = vadd.f32 %v4254, %v7470
        %v7503 = vadd.f32 %v4255, %v7471
        %v7504 = vadd.f32 %v4256, %v7472
        %v7505 = vadd.f32 %v4257, %v7473
        %v7506 = vadd.f32 %v4258, %v7474
        %v7507 = vadd.f32 %v4259, %v7475
        %v7508 = vadd.f32 %v4260, %v7476
        %v7509 = vadd.f32 %v4261, %v7477
        %v7510 = vadd.f32 %v4262, %v7478
        %v7511 = vadd.f32 %v4263, %v7479
        %v7512 = vadd.f32 %v4264, %v7480
        %v7513 = vadd.f32 %v4265, %v7481
        %v7514 = vadd.f32 %v4266, %v7482
        %v7515 = vadd.f32 %v4267, %v7483
        %v7516 = vadd.f32 %v4268, %v7484
        %v7517 = vadd.f32 %v4269, %v7485
        %v7518 = vadd.f32 %v4270, %v7486
        %v7519 = vadd.f32 %v4271, %v7487
        %v7520 = vadd.f32 %v4272, %v7488
        %v7521 = vadd.f32 %v4273, %v7489
        %v7522 = vadd.f32 %v4274, %v7490
        %v7523 = vadd.f32 %v4275, %v7491
        %v7524 = vadd.f32 %v4276, %v7492
        %v7525 = vadd.f32 %v4277, %v7493
        %v7526 = vadd.f32 %v4278, %v7494
        %v7527 = vadd.f32 %v4279, %v7495
        %v7528 = vadd.f32 %v4280, %v7496
        %v7529 = vlaneseq
        %v7530 = vshrl.u32 %v7529, 7
        %v7531 = vsub.s32 6, %v7530
        %v7532 = vrot.slane %v253, %v7531
        %v7534 = vsel %vm679, %v7497, 0
        %v7537 = vsel %vm679, %v7498, 0
        %v7540 = vsel %vm679, %v7499, 0
        %v7543 = vsel %vm679, %v7500, 0
        %v7546 = vsel %vm679, %v7501, 0
        %v7549 = vsel %vm679, %v7502, 0
        %v7552 = vsel %vm679, %v7503, 0
        %v7555 = vsel %vm679, %v7504, 0
        %v7558 = vsel %vm679, %v7505, 0
        %v7561 = vsel %vm679, %v7506, 0
        %v7564 = vsel %vm679, %v7507, 0
        %v7567 = vsel %vm679, %v7508, 0
        %v7570 = vsel %vm679, %v7509, 0
        %v7573 = vsel %vm679, %v7510, 0
        %v7576 = vsel %vm679, %v7511, 0
        %v7579 = vsel %vm679, %v7512, 0
        %v7582 = vsel %vm679, %v7513, 0
        %v7585 = vsel %vm679, %v7514, 0
        %v7588 = vsel %vm679, %v7515, 0
        %v7591 = vsel %vm679, %v7516, 0
        %v7594 = vsel %vm679, %v7517, 0
        %v7597 = vsel %vm679, %v7518, 0
        %v7600 = vsel %vm679, %v7519, 0
        %v7603 = vsel %vm679, %v7520, 0
        %v7606 = vsel %vm679, %v7521, 0
        %v7609 = vsel %vm679, %v7522, 0
        %v7612 = vsel %vm679, %v7523, 0
        %v7615 = vsel %vm679, %v7524, 0
        %v7618 = vsel %vm679, %v7525, 0
        %v7621 = vsel %vm679, %v7526, 0
        %v7624 = vsel %vm679, %v7527, 0
        %v7627 = vsel %vm679, %v7528, 0
        %7629 = vmatprep.subr.mxu0 0.0
        %7630 = vmatpush1.msra.mxu0 %v279
        %7631 = vmatprep.subr.mxu0 0.0
        %7632 = vmatpush1.msra.mxu0 %v280
        %7633 = vmatprep.subr.mxu0 0.0
        %7634 = vmatpush1.msra.mxu0 %v281
        %7635 = vmatprep.subr.mxu0 0.0
        %7636 = vmatpush1.msra.mxu0 %v282
        %7637 = vmatprep.subr.mxu0 0.0
        %7638 = vmatpush1.msra.mxu0 0.0
        %7639 = vmatprep.subr.mxu0 0.0
        %7640 = vmatpush1.msra.mxu0 0.0
        %7641 = vmatprep.subr.mxu0 0.0
        %7642 = vmatpush1.msra.mxu0 0.0
        %7643 = vmatprep.subr.mxu0 0.0
        %7644 = vmatpush1.msra.mxu0 0.0
        %7645 = vmatprep.subr.mxu0 0.0
        %7646 = vmatpush1.msra.mxu0 0.0
        %7647 = vmatprep.subr.mxu0 0.0
        %7648 = vmatpush1.msra.mxu0 0.0
        %7649 = vmatprep.subr.mxu0 0.0
        %7650 = vmatpush1.msra.mxu0 0.0
        %7651 = vmatprep.subr.mxu0 0.0
        %7652 = vmatpush1.msra.mxu0 0.0
        %7653 = vmatprep.subr.mxu0 0.0
        %7654 = vmatpush1.msra.mxu0 0.0
        %7655 = vmatprep.subr.mxu0 0.0
        %7656 = vmatpush1.msra.mxu0 0.0
        %7657 = vmatprep.subr.mxu0 0.0
        %7658 = vmatpush1.msra.mxu0 0.0
        %7659 = vmatprep.subr.mxu0 0.0
        %7660 = vmatpush1.msra.mxu0 0.0
        %7661 = vmatprep.subr.mxu0 0.0
        %7662 = vmatpush1.msra.mxu0 0.0
        %7663 = vmatprep.subr.mxu0 0.0
        %7664 = vmatpush1.msra.mxu0 0.0
        %7665 = vmatprep.subr.mxu0 0.0
        %7666 = vmatpush1.msra.mxu0 0.0
        %7667 = vmatprep.subr.mxu0 0.0
        %7668 = vmatpush1.msra.mxu0 0.0
        %7669 = vmatprep.subr.mxu0 0.0
        %7670 = vmatpush1.msra.mxu0 0.0
        %7671 = vmatprep.subr.mxu0 0.0
        %7672 = vmatpush1.msra.mxu0 0.0
        %7673 = vmatprep.subr.mxu0 0.0
        %7674 = vmatpush1.msra.mxu0 0.0
        %7675 = vmatprep.subr.mxu0 0.0
        %7676 = vmatpush1.msra.mxu0 0.0
        %7677 = vmatprep.subr.mxu0 0.0
        %7678 = vmatpush1.msra.mxu0 0.0
        %7679 = vmatprep.subr.mxu0 0.0
        %7680 = vmatpush1.msra.mxu0 0.0
        %7681 = vmatprep.subr.mxu0 0.0
        %7682 = vmatpush1.msra.mxu0 0.0
        %7683 = vmatprep.subr.mxu0 0.0
        %7684 = vmatpush1.msra.mxu0 0.0
        %7685 = vmatprep.subr.mxu0 0.0
        %7686 = vmatpush1.msra.mxu0 0.0
        %7687 = vmatprep.subr.mxu0 0.0
        %7688 = vmatpush1.msra.mxu0 0.0
        %7689 = vmatprep.subr.mxu0 0.0
        %7690 = vmatpush1.msra.mxu0 0.0
        %7691 = vmatprep.subr.mxu0 0.0
        %7692 = vmatpush1.msra.mxu0 0.0
        %7693 = vmatprep.mubr.f32.mxu0 0.0
        %7694 = vmatmul.mubr.f32.gmra.mrb[0].mxu0 %v7534
        %v7695 = vpop.f32.mrb[0].mxu0
        %v7696 = vadd.f32 %v7532, %v7695
        %v7697 = vpop.f32.mrb[0].mxu0
        %7698 = vmatprep.mubr.f32.mxu0 0.0
        %7699 = vmatmul.mubr.f32.gmra.mrb[0].mxu0 %v7537
        %v7700 = vpop.f32.mrb[0].mxu0
        %v7701 = vadd.f32 %v7532, %v7700
        %v7702 = vpop.f32.mrb[0].mxu0
        %7703 = vmatprep.mubr.f32.mxu0 0.0
        %7704 = vmatmul.mubr.f32.gmra.mrb[0].mxu0 %v7540
        %v7705 = vpop.f32.mrb[0].mxu0
        %v7706 = vadd.f32 %v7532, %v7705
        %v7707 = vpop.f32.mrb[0].mxu0
        %7708 = vmatprep.mubr.f32.mxu0 0.0
        %7709 = vmatmul.mubr.f32.gmra.mrb[0].mxu0 %v7543
        %v7710 = vpop.f32.mrb[0].mxu0
        %v7711 = vadd.f32 %v7532, %v7710
        %v7712 = vpop.f32.mrb[0].mxu0
        %7713 = vmatprep.mubr.f32.mxu0 0.0
        %7714 = vmatmul.mubr.f32.gmra.mrb[0].mxu0 %v7546
        %v7715 = vpop.f32.mrb[0].mxu0
        %v7716 = vadd.f32 %v7532, %v7715
        %v7717 = vpop.f32.mrb[0].mxu0
        %7718 = vmatprep.mubr.f32.mxu0 0.0
        %7719 = vmatmul.mubr.f32.gmra.mrb[0].mxu0 %v7549
        %v7720 = vpop.f32.mrb[0].mxu0
        %v7721 = vadd.f32 %v7532, %v7720
        %v7722 = vpop.f32.mrb[0].mxu0
        %7723 = vmatprep.mubr.f32.mxu0 0.0
        %7724 = vmatmul.mubr.f32.gmra.mrb[0].mxu0 %v7552
        %v7725 = vpop.f32.mrb[0].mxu0
        %v7726 = vadd.f32 %v7532, %v7725
        %v7727 = vpop.f32.mrb[0].mxu0
        %7728 = vmatprep.mubr.f32.mxu0 0.0
        %7729 = vmatmul.mubr.f32.gmra.mrb[0].mxu0 %v7555
        %v7730 = vpop.f32.mrb[0].mxu0
        %v7731 = vadd.f32 %v7532, %v7730
        %v7732 = vpop.f32.mrb[0].mxu0
        %7733 = vmatprep.mubr.f32.mxu0 0.0
        %7734 = vmatmul.mubr.f32.gmra.mrb[0].mxu0 %v7558
        %v7735 = vpop.f32.mrb[0].mxu0
        %v7736 = vadd.f32 %v7532, %v7735
        %v7737 = vpop.f32.mrb[0].mxu0
        %7738 = vmatprep.mubr.f32.mxu0 0.0
        %7739 = vmatmul.mubr.f32.gmra.mrb[0].mxu0 %v7561
        %v7740 = vpop.f32.mrb[0].mxu0
        %v7741 = vadd.f32 %v7532, %v7740
        %v7742 = vpop.f32.mrb[0].mxu0
        %7743 = vmatprep.mubr.f32.mxu0 0.0
        %7744 = vmatmul.mubr.f32.gmra.mrb[0].mxu0 %v7564
        %v7745 = vpop.f32.mrb[0].mxu0
        %v7746 = vadd.f32 %v7532, %v7745
        %v7747 = vpop.f32.mrb[0].mxu0
        %7748 = vmatprep.mubr.f32.mxu0 0.0
        %7749 = vmatmul.mubr.f32.gmra.mrb[0].mxu0 %v7567
        %v7750 = vpop.f32.mrb[0].mxu0
        %v7751 = vadd.f32 %v7532, %v7750
        %v7752 = vpop.f32.mrb[0].mxu0
        %7753 = vmatprep.mubr.f32.mxu0 0.0
        %7754 = vmatmul.mubr.f32.gmra.mrb[0].mxu0 %v7570
        %v7755 = vpop.f32.mrb[0].mxu0
        %v7756 = vadd.f32 %v7532, %v7755
        %v7757 = vpop.f32.mrb[0].mxu0
        %7758 = vmatprep.mubr.f32.mxu0 0.0
        %7759 = vmatmul.mubr.f32.gmra.mrb[0].mxu0 %v7573
        %v7760 = vpop.f32.mrb[0].mxu0
        %v7761 = vadd.f32 %v7532, %v7760
        %v7762 = vpop.f32.mrb[0].mxu0
        %7763 = vmatprep.mubr.f32.mxu0 0.0
        %7764 = vmatmul.mubr.f32.gmra.mrb[0].mxu0 %v7576
        %v7765 = vpop.f32.mrb[0].mxu0
        %v7766 = vadd.f32 %v7532, %v7765
        %v7767 = vpop.f32.mrb[0].mxu0
        %7768 = vmatprep.mubr.f32.mxu0 0.0
        %7769 = vmatmul.mubr.f32.gmra.mrb[0].mxu0 %v7579
        %v7770 = vpop.f32.mrb[0].mxu0
        %v7771 = vadd.f32 %v7532, %v7770
        %v7772 = vpop.f32.mrb[0].mxu0
        %7773 = vmatprep.mubr.f32.mxu0 0.0
        %7774 = vmatmul.mubr.f32.gmra.mrb[0].mxu0 %v7582
        %v7775 = vpop.f32.mrb[0].mxu0
        %v7776 = vadd.f32 %v7532, %v7775
        %v7777 = vpop.f32.mrb[0].mxu0
        %7778 = vmatprep.mubr.f32.mxu0 0.0
        %7779 = vmatmul.mubr.f32.gmra.mrb[0].mxu0 %v7585
        %v7780 = vpop.f32.mrb[0].mxu0
        %v7781 = vadd.f32 %v7532, %v7780
        %v7782 = vpop.f32.mrb[0].mxu0
        %7783 = vmatprep.mubr.f32.mxu0 0.0
        %7784 = vmatmul.mubr.f32.gmra.mrb[0].mxu0 %v7588
        %v7785 = vpop.f32.mrb[0].mxu0
        %v7786 = vadd.f32 %v7532, %v7785
        %v7787 = vpop.f32.mrb[0].mxu0
        %7788 = vmatprep.mubr.f32.mxu0 0.0
        %7789 = vmatmul.mubr.f32.gmra.mrb[0].mxu0 %v7591
        %v7790 = vpop.f32.mrb[0].mxu0
        %v7791 = vadd.f32 %v7532, %v7790
        %v7792 = vpop.f32.mrb[0].mxu0
        %7793 = vmatprep.mubr.f32.mxu0 0.0
        %7794 = vmatmul.mubr.f32.gmra.mrb[0].mxu0 %v7594
        %v7795 = vpop.f32.mrb[0].mxu0
        %v7796 = vadd.f32 %v7532, %v7795
        %v7797 = vpop.f32.mrb[0].mxu0
        %7798 = vmatprep.mubr.f32.mxu0 0.0
        %7799 = vmatmul.mubr.f32.gmra.mrb[0].mxu0 %v7597
        %v7800 = vpop.f32.mrb[0].mxu0
        %v7801 = vadd.f32 %v7532, %v7800
        %v7802 = vpop.f32.mrb[0].mxu0
        %7803 = vmatprep.mubr.f32.mxu0 0.0
        %7804 = vmatmul.mubr.f32.gmra.mrb[0].mxu0 %v7600
        %v7805 = vpop.f32.mrb[0].mxu0
        %v7806 = vadd.f32 %v7532, %v7805
        %v7807 = vpop.f32.mrb[0].mxu0
        %7808 = vmatprep.mubr.f32.mxu0 0.0
        %7809 = vmatmul.mubr.f32.gmra.mrb[0].mxu0 %v7603
        %v7810 = vpop.f32.mrb[0].mxu0
        %v7811 = vadd.f32 %v7532, %v7810
        %v7812 = vpop.f32.mrb[0].mxu0
        %7813 = vmatprep.mubr.f32.mxu0 0.0
        %7814 = vmatmul.mubr.f32.gmra.mrb[0].mxu0 %v7606
        %v7815 = vpop.f32.mrb[0].mxu0
        %v7816 = vadd.f32 %v7532, %v7815
        %v7817 = vpop.f32.mrb[0].mxu0
        %7818 = vmatprep.mubr.f32.mxu0 0.0
        %7819 = vmatmul.mubr.f32.gmra.mrb[0].mxu0 %v7609
        %v7820 = vpop.f32.mrb[0].mxu0
        %v7821 = vadd.f32 %v7532, %v7820
        %v7822 = vpop.f32.mrb[0].mxu0
        %7823 = vmatprep.mubr.f32.mxu0 0.0
        %7824 = vmatmul.mubr.f32.gmra.mrb[0].mxu0 %v7612
        %v7825 = vpop.f32.mrb[0].mxu0
        %v7826 = vadd.f32 %v7532, %v7825
        %v7827 = vpop.f32.mrb[0].mxu0
        %7828 = vmatprep.mubr.f32.mxu0 0.0
        %7829 = vmatmul.mubr.f32.gmra.mrb[0].mxu0 %v7615
        %v7830 = vpop.f32.mrb[0].mxu0
        %v7831 = vadd.f32 %v7532, %v7830
        %v7832 = vpop.f32.mrb[0].mxu0
        %7833 = vmatprep.mubr.f32.mxu0 0.0
        %7834 = vmatmul.mubr.f32.gmra.mrb[0].mxu0 %v7618
        %v7835 = vpop.f32.mrb[0].mxu0
        %v7836 = vadd.f32 %v7532, %v7835
        %v7837 = vpop.f32.mrb[0].mxu0
        %7838 = vmatprep.mubr.f32.mxu0 0.0
        %7839 = vmatmul.mubr.f32.gmra.mrb[0].mxu0 %v7621
        %v7840 = vpop.f32.mrb[0].mxu0
        %v7841 = vadd.f32 %v7532, %v7840
        %v7842 = vpop.f32.mrb[0].mxu0
        %7843 = vmatprep.mubr.f32.mxu0 0.0
        %7844 = vmatmul.mubr.f32.gmra.mrb[0].mxu0 %v7624
        %v7845 = vpop.f32.mrb[0].mxu0
        %v7846 = vadd.f32 %v7532, %v7845
        %v7847 = vpop.f32.mrb[0].mxu0
        %7848 = vmatprep.mubr.f32.mxu0 0.0
        %7849 = vmatmul.mubr.f32.gmra.mrb[0].mxu0 %v7627
        %v7850 = vpop.f32.mrb[0].mxu0
        %v7851 = vadd.f32 %v7532, %v7850
        %v7852 = vpop.f32.mrb[0].mxu0
        %7853 = vdwg.mxu0
        %v7854 = vmax.f32 %v7696, 0.0
        %v7855 = vmax.f32 %v7701, 0.0
        %v7856 = vmax.f32 %v7706, 0.0
        %v7857 = vmax.f32 %v7711, 0.0
        %v7858 = vmax.f32 %v7716, 0.0
        %v7859 = vmax.f32 %v7721, 0.0
        %v7860 = vmax.f32 %v7726, 0.0
        %v7861 = vmax.f32 %v7731, 0.0
        %v7862 = vmax.f32 %v7736, 0.0
        %v7863 = vmax.f32 %v7741, 0.0
        %v7864 = vmax.f32 %v7746, 0.0
        %v7865 = vmax.f32 %v7751, 0.0
        %v7866 = vmax.f32 %v7756, 0.0
        %v7867 = vmax.f32 %v7761, 0.0
        %v7868 = vmax.f32 %v7766, 0.0
        %v7869 = vmax.f32 %v7771, 0.0
        %v7870 = vmax.f32 %v7776, 0.0
        %v7871 = vmax.f32 %v7781, 0.0
        %v7872 = vmax.f32 %v7786, 0.0
        %v7873 = vmax.f32 %v7791, 0.0
        %v7874 = vmax.f32 %v7796, 0.0
        %v7875 = vmax.f32 %v7801, 0.0
        %v7876 = vmax.f32 %v7806, 0.0
        %v7877 = vmax.f32 %v7811, 0.0
        %v7878 = vmax.f32 %v7816, 0.0
        %v7879 = vmax.f32 %v7821, 0.0
        %v7880 = vmax.f32 %v7826, 0.0
        %v7881 = vmax.f32 %v7831, 0.0
        %v7882 = vmax.f32 %v7836, 0.0
        %v7883 = vmax.f32 %v7841, 0.0
        %v7884 = vmax.f32 %v7846, 0.0
        %v7885 = vmax.f32 %v7851, 0.0
        %v7886 = vld [vmem:[%s4] sm:$0xff]
        %v7887 = vld [vmem:[%s4 + $0x8] sm:$0xff]
        %v7888 = vld [vmem:[%s4 + $0x10] sm:$0xff]
        %v7889 = vld [vmem:[%s4 + $0x18] sm:$0xff]
        %v7890 = vld [vmem:[%s5] sm:$0x1]
        %v7892 = vlaneseq
        %v7893 = vshrl.u32 %v7892, 7
        %v7894 = vsub.s32 0, %v7893
        %v7895 = vrot.slane %v7890, %v7894
        %v7898 = vsel %vm679, %v7854, 0
        %v7901 = vsel %vm679, %v7855, 0
        %v7904 = vsel %vm679, %v7856, 0
        %v7907 = vsel %vm679, %v7857, 0
        %v7910 = vsel %vm679, %v7858, 0
        %v7913 = vsel %vm679, %v7859, 0
        %v7916 = vsel %vm679, %v7860, 0
        %v7919 = vsel %vm679, %v7861, 0
        %v7922 = vsel %vm679, %v7862, 0
        %v7925 = vsel %vm679, %v7863, 0
        %v7928 = vsel %vm679, %v7864, 0
        %v7931 = vsel %vm679, %v7865, 0
        %v7934 = vsel %vm679, %v7866, 0
        %v7937 = vsel %vm679, %v7867, 0
        %v7940 = vsel %vm679, %v7868, 0
        %v7943 = vsel %vm679, %v7869, 0
        %v7946 = vsel %vm679, %v7870, 0
        %v7949 = vsel %vm679, %v7871, 0
        %v7952 = vsel %vm679, %v7872, 0
        %v7955 = vsel %vm679, %v7873, 0
        %v7958 = vsel %vm679, %v7874, 0
        %v7961 = vsel %vm679, %v7875, 0
        %v7964 = vsel %vm679, %v7876, 0
        %v7967 = vsel %vm679, %v7877, 0
        %v7970 = vsel %vm679, %v7878, 0
        %v7973 = vsel %vm679, %v7879, 0
        %v7976 = vsel %vm679, %v7880, 0
        %v7979 = vsel %vm679, %v7881, 0
        %v7982 = vsel %vm679, %v7882, 0
        %v7985 = vsel %vm679, %v7883, 0
        %v7988 = vsel %vm679, %v7884, 0
        %v7991 = vsel %vm679, %v7885, 0
        %7993 = vmatprep.subr.mxu0 0.0
        %7994 = vmatpush1.msra.mxu0 %v7886
        %7995 = vmatprep.subr.mxu0 0.0
        %7996 = vmatpush1.msra.mxu0 %v7887
        %7997 = vmatprep.subr.mxu0 0.0
        %7998 = vmatpush1.msra.mxu0 %v7888
        %7999 = vmatprep.subr.mxu0 0.0
        %8000 = vmatpush1.msra.mxu0 %v7889
        %8001 = vmatprep.subr.mxu0 0.0
        %8002 = vmatpush1.msra.mxu0 0.0
        %8003 = vmatprep.subr.mxu0 0.0
        %8004 = vmatpush1.msra.mxu0 0.0
        %8005 = vmatprep.subr.mxu0 0.0
        %8006 = vmatpush1.msra.mxu0 0.0
        %8007 = vmatprep.subr.mxu0 0.0
        %8008 = vmatpush1.msra.mxu0 0.0
        %8009 = vmatprep.subr.mxu0 0.0
        %8010 = vmatpush1.msra.mxu0 0.0
        %8011 = vmatprep.subr.mxu0 0.0
        %8012 = vmatpush1.msra.mxu0 0.0
        %8013 = vmatprep.subr.mxu0 0.0
        %8014 = vmatpush1.msra.mxu0 0.0
        %8015 = vmatprep.subr.mxu0 0.0
        %8016 = vmatpush1.msra.mxu0 0.0
        %8017 = vmatprep.subr.mxu0 0.0
        %8018 = vmatpush1.msra.mxu0 0.0
        %8019 = vmatprep.subr.mxu0 0.0
        %8020 = vmatpush1.msra.mxu0 0.0
        %8021 = vmatprep.subr.mxu0 0.0
        %8022 = vmatpush1.msra.mxu0 0.0
        %8023 = vmatprep.subr.mxu0 0.0
        %8024 = vmatpush1.msra.mxu0 0.0
        %8025 = vmatprep.subr.mxu0 0.0
        %8026 = vmatpush1.msra.mxu0 0.0
        %8027 = vmatprep.subr.mxu0 0.0
        %8028 = vmatpush1.msra.mxu0 0.0
        %8029 = vmatprep.subr.mxu0 0.0
        %8030 = vmatpush1.msra.mxu0 0.0
        %8031 = vmatprep.subr.mxu0 0.0
        %8032 = vmatpush1.msra.mxu0 0.0
        %8033 = vmatprep.subr.mxu0 0.0
        %8034 = vmatpush1.msra.mxu0 0.0
        %8035 = vmatprep.subr.mxu0 0.0
        %8036 = vmatpush1.msra.mxu0 0.0
        %8037 = vmatprep.subr.mxu0 0.0
        %8038 = vmatpush1.msra.mxu0 0.0
        %8039 = vmatprep.subr.mxu0 0.0
        %8040 = vmatpush1.msra.mxu0 0.0
        %8041 = vmatprep.subr.mxu0 0.0
        %8042 = vmatpush1.msra.mxu0 0.0
        %8043 = vmatprep.subr.mxu0 0.0
        %8044 = vmatpush1.msra.mxu0 0.0
        %8045 = vmatprep.subr.mxu0 0.0
        %8046 = vmatpush1.msra.mxu0 0.0
        %8047 = vmatprep.subr.mxu0 0.0
        %8048 = vmatpush1.msra.mxu0 0.0
        %8049 = vmatprep.subr.mxu0 0.0
        %8050 = vmatpush1.msra.mxu0 0.0
        %8051 = vmatprep.subr.mxu0 0.0
        %8052 = vmatpush1.msra.mxu0 0.0
        %8053 = vmatprep.subr.mxu0 0.0
        %8054 = vmatpush1.msra.mxu0 0.0
        %8055 = vmatprep.subr.mxu0 0.0
        %8056 = vmatpush1.msra.mxu0 0.0
        %8057 = vmatprep.mubr.f32.mxu0 0.0
        %8058 = vmatmul.mubr.f32.gmra.mrb[0].mxu0 %v7898
        %v8059 = vpop.f32.mrb[0].mxu0
        %v8060 = vadd.f32 %v7895, %v8059
        %v8061 = vpop.f32.mrb[0].mxu0
        %8062 = vmatprep.mubr.f32.mxu0 0.0
        %8063 = vmatmul.mubr.f32.gmra.mrb[0].mxu0 %v7901
        %v8064 = vpop.f32.mrb[0].mxu0
        %v8065 = vadd.f32 %v7895, %v8064
        %v8066 = vpop.f32.mrb[0].mxu0
        %8067 = vmatprep.mubr.f32.mxu0 0.0
        %8068 = vmatmul.mubr.f32.gmra.mrb[0].mxu0 %v7904
        %v8069 = vpop.f32.mrb[0].mxu0
        %v8070 = vadd.f32 %v7895, %v8069
        %v8071 = vpop.f32.mrb[0].mxu0
        %8072 = vmatprep.mubr.f32.mxu0 0.0
        %8073 = vmatmul.mubr.f32.gmra.mrb[0].mxu0 %v7907
        %v8074 = vpop.f32.mrb[0].mxu0
        %v8075 = vadd.f32 %v7895, %v8074
        %v8076 = vpop.f32.mrb[0].mxu0
        %8077 = vmatprep.mubr.f32.mxu0 0.0
        %8078 = vmatmul.mubr.f32.gmra.mrb[0].mxu0 %v7910
        %v8079 = vpop.f32.mrb[0].mxu0
        %v8080 = vadd.f32 %v7895, %v8079
        %v8081 = vpop.f32.mrb[0].mxu0
        %8082 = vmatprep.mubr.f32.mxu0 0.0
        %8083 = vmatmul.mubr.f32.gmra.mrb[0].mxu0 %v7913
        %v8084 = vpop.f32.mrb[0].mxu0
        %v8085 = vadd.f32 %v7895, %v8084
        %v8086 = vpop.f32.mrb[0].mxu0
        %8087 = vmatprep.mubr.f32.mxu0 0.0
        %8088 = vmatmul.mubr.f32.gmra.mrb[0].mxu0 %v7916
        %v8089 = vpop.f32.mrb[0].mxu0
        %v8090 = vadd.f32 %v7895, %v8089
        %v8091 = vpop.f32.mrb[0].mxu0
        %8092 = vmatprep.mubr.f32.mxu0 0.0
        %8093 = vmatmul.mubr.f32.gmra.mrb[0].mxu0 %v7919
        %v8094 = vpop.f32.mrb[0].mxu0
        %v8095 = vadd.f32 %v7895, %v8094
        %v8096 = vpop.f32.mrb[0].mxu0
        %8097 = vmatprep.mubr.f32.mxu0 0.0
        %8098 = vmatmul.mubr.f32.gmra.mrb[0].mxu0 %v7922
        %v8099 = vpop.f32.mrb[0].mxu0
        %v8100 = vadd.f32 %v7895, %v8099
        %v8101 = vpop.f32.mrb[0].mxu0
        %8102 = vmatprep.mubr.f32.mxu0 0.0
        %8103 = vmatmul.mubr.f32.gmra.mrb[0].mxu0 %v7925
        %v8104 = vpop.f32.mrb[0].mxu0
        %v8105 = vadd.f32 %v7895, %v8104
        %v8106 = vpop.f32.mrb[0].mxu0
        %8107 = vmatprep.mubr.f32.mxu0 0.0
        %8108 = vmatmul.mubr.f32.gmra.mrb[0].mxu0 %v7928
        %v8109 = vpop.f32.mrb[0].mxu0
        %v8110 = vadd.f32 %v7895, %v8109
        %v8111 = vpop.f32.mrb[0].mxu0
        %8112 = vmatprep.mubr.f32.mxu0 0.0
        %8113 = vmatmul.mubr.f32.gmra.mrb[0].mxu0 %v7931
        %v8114 = vpop.f32.mrb[0].mxu0
        %v8115 = vadd.f32 %v7895, %v8114
        %v8116 = vpop.f32.mrb[0].mxu0
        %8117 = vmatprep.mubr.f32.mxu0 0.0
        %8118 = vmatmul.mubr.f32.gmra.mrb[0].mxu0 %v7934
        %v8119 = vpop.f32.mrb[0].mxu0
        %v8120 = vadd.f32 %v7895, %v8119
        %v8121 = vpop.f32.mrb[0].mxu0
        %8122 = vmatprep.mubr.f32.mxu0 0.0
        %8123 = vmatmul.mubr.f32.gmra.mrb[0].mxu0 %v7937
        %v8124 = vpop.f32.mrb[0].mxu0
        %v8125 = vadd.f32 %v7895, %v8124
        %v8126 = vpop.f32.mrb[0].mxu0
        %8127 = vmatprep.mubr.f32.mxu0 0.0
        %8128 = vmatmul.mubr.f32.gmra.mrb[0].mxu0 %v7940
        %v8129 = vpop.f32.mrb[0].mxu0
        %v8130 = vadd.f32 %v7895, %v8129
        %v8131 = vpop.f32.mrb[0].mxu0
        %8132 = vmatprep.mubr.f32.mxu0 0.0
        %8133 = vmatmul.mubr.f32.gmra.mrb[0].mxu0 %v7943
        %v8134 = vpop.f32.mrb[0].mxu0
        %v8135 = vadd.f32 %v7895, %v8134
        %v8136 = vpop.f32.mrb[0].mxu0
        %8137 = vmatprep.mubr.f32.mxu0 0.0
        %8138 = vmatmul.mubr.f32.gmra.mrb[0].mxu0 %v7946
        %v8139 = vpop.f32.mrb[0].mxu0
        %v8140 = vadd.f32 %v7895, %v8139
        %v8141 = vpop.f32.mrb[0].mxu0
        %8142 = vmatprep.mubr.f32.mxu0 0.0
        %8143 = vmatmul.mubr.f32.gmra.mrb[0].mxu0 %v7949
        %v8144 = vpop.f32.mrb[0].mxu0
        %v8145 = vadd.f32 %v7895, %v8144
        %v8146 = vpop.f32.mrb[0].mxu0
        %8147 = vmatprep.mubr.f32.mxu0 0.0
        %8148 = vmatmul.mubr.f32.gmra.mrb[0].mxu0 %v7952
        %v8149 = vpop.f32.mrb[0].mxu0
        %v8150 = vadd.f32 %v7895, %v8149
        %v8151 = vpop.f32.mrb[0].mxu0
        %8152 = vmatprep.mubr.f32.mxu0 0.0
        %8153 = vmatmul.mubr.f32.gmra.mrb[0].mxu0 %v7955
        %v8154 = vpop.f32.mrb[0].mxu0
        %v8155 = vadd.f32 %v7895, %v8154
        %v8156 = vpop.f32.mrb[0].mxu0
        %8157 = vmatprep.mubr.f32.mxu0 0.0
        %8158 = vmatmul.mubr.f32.gmra.mrb[0].mxu0 %v7958
        %v8159 = vpop.f32.mrb[0].mxu0
        %v8160 = vadd.f32 %v7895, %v8159
        %v8161 = vpop.f32.mrb[0].mxu0
        %8162 = vmatprep.mubr.f32.mxu0 0.0
        %8163 = vmatmul.mubr.f32.gmra.mrb[0].mxu0 %v7961
        %v8164 = vpop.f32.mrb[0].mxu0
        %v8165 = vadd.f32 %v7895, %v8164
        %v8166 = vpop.f32.mrb[0].mxu0
        %8167 = vmatprep.mubr.f32.mxu0 0.0
        %8168 = vmatmul.mubr.f32.gmra.mrb[0].mxu0 %v7964
        %v8169 = vpop.f32.mrb[0].mxu0
        %v8170 = vadd.f32 %v7895, %v8169
        %v8171 = vpop.f32.mrb[0].mxu0
        %8172 = vmatprep.mubr.f32.mxu0 0.0
        %8173 = vmatmul.mubr.f32.gmra.mrb[0].mxu0 %v7967
        %v8174 = vpop.f32.mrb[0].mxu0
        %v8175 = vadd.f32 %v7895, %v8174
        %v8176 = vpop.f32.mrb[0].mxu0
        %8177 = vmatprep.mubr.f32.mxu0 0.0
        %8178 = vmatmul.mubr.f32.gmra.mrb[0].mxu0 %v7970
        %v8179 = vpop.f32.mrb[0].mxu0
        %v8180 = vadd.f32 %v7895, %v8179
        %v8181 = vpop.f32.mrb[0].mxu0
        %8182 = vmatprep.mubr.f32.mxu0 0.0
        %8183 = vmatmul.mubr.f32.gmra.mrb[0].mxu0 %v7973
        %v8184 = vpop.f32.mrb[0].mxu0
        %v8185 = vadd.f32 %v7895, %v8184
        %v8186 = vpop.f32.mrb[0].mxu0
        %8187 = vmatprep.mubr.f32.mxu0 0.0
        %8188 = vmatmul.mubr.f32.gmra.mrb[0].mxu0 %v7976
        %v8189 = vpop.f32.mrb[0].mxu0
        %v8190 = vadd.f32 %v7895, %v8189
        %v8191 = vpop.f32.mrb[0].mxu0
        %8192 = vmatprep.mubr.f32.mxu0 0.0
        %8193 = vmatmul.mubr.f32.gmra.mrb[0].mxu0 %v7979
        %v8194 = vpop.f32.mrb[0].mxu0
        %v8195 = vadd.f32 %v7895, %v8194
        %v8196 = vpop.f32.mrb[0].mxu0
        %8197 = vmatprep.mubr.f32.mxu0 0.0
        %8198 = vmatmul.mubr.f32.gmra.mrb[0].mxu0 %v7982
        %v8199 = vpop.f32.mrb[0].mxu0
        %v8200 = vadd.f32 %v7895, %v8199
        %v8201 = vpop.f32.mrb[0].mxu0
        %8202 = vmatprep.mubr.f32.mxu0 0.0
        %8203 = vmatmul.mubr.f32.gmra.mrb[0].mxu0 %v7985
        %v8204 = vpop.f32.mrb[0].mxu0
        %v8205 = vadd.f32 %v7895, %v8204
        %v8206 = vpop.f32.mrb[0].mxu0
        %8207 = vmatprep.mubr.f32.mxu0 0.0
        %8208 = vmatmul.mubr.f32.gmra.mrb[0].mxu0 %v7988
        %v8209 = vpop.f32.mrb[0].mxu0
        %v8210 = vadd.f32 %v7895, %v8209
        %v8211 = vpop.f32.mrb[0].mxu0
        %8212 = vmatprep.mubr.f32.mxu0 0.0
        %8213 = vmatmul.mubr.f32.gmra.mrb[0].mxu0 %v7991
        %v8214 = vpop.f32.mrb[0].mxu0
        %v8215 = vadd.f32 %v7895, %v8214
        %v8216 = vpop.f32.mrb[0].mxu0
        %8217 = vdwg.mxu0
        %8218 = vst [vmem:[%s245] sm:$0xff] %v8060
        %8219 = vst [vmem:[%s245 + $0x8] sm:$0xff] %v8065
        %8220 = vst [vmem:[%s245 + $0x10] sm:$0xff] %v8070
        %8221 = vst [vmem:[%s245 + $0x18] sm:$0xff] %v8075
        %8222 = vst [vmem:[%s245 + $0x20] sm:$0xff] %v8080
        %8223 = vst [vmem:[%s245 + $0x28] sm:$0xff] %v8085
        %8224 = vst [vmem:[%s245 + $0x30] sm:$0xff] %v8090
        %8225 = vst [vmem:[%s245 + $0x38] sm:$0xff] %v8095
        %8226 = vst [vmem:[%s245 + $0x40] sm:$0xff] %v8100
        %8227 = vst [vmem:[%s245 + $0x48] sm:$0xff] %v8105
        %8228 = vst [vmem:[%s245 + $0x50] sm:$0xff] %v8110
        %8229 = vst [vmem:[%s245 + $0x58] sm:$0xff] %v8115
        %8230 = vst [vmem:[%s245 + $0x60] sm:$0xff] %v8120
        %8231 = vst [vmem:[%s245 + $0x68] sm:$0xff] %v8125
        %8232 = vst [vmem:[%s245 + $0x70] sm:$0xff] %v8130
        %8233 = vst [vmem:[%s245 + $0x78] sm:$0xff] %v8135
        %8234 = vst [vmem:[%s245 + $0x80] sm:$0xff] %v8140
        %8235 = vst [vmem:[%s245 + $0x88] sm:$0xff] %v8145
        %8236 = vst [vmem:[%s245 + $0x90] sm:$0xff] %v8150
        %8237 = vst [vmem:[%s245 + $0x98] sm:$0xff] %v8155
        %8238 = vst [vmem:[%s245 + $0xa0] sm:$0xff] %v8160
        %8239 = vst [vmem:[%s245 + $0xa8] sm:$0xff] %v8165
        %8240 = vst [vmem:[%s245 + $0xb0] sm:$0xff] %v8170
        %8241 = vst [vmem:[%s245 + $0xb8] sm:$0xff] %v8175
        %8242 = vst [vmem:[%s245 + $0xc0] sm:$0xff] %v8180
        %8243 = vst [vmem:[%s245 + $0xc8] sm:$0xff] %v8185
        %8244 = vst [vmem:[%s245 + $0xd0] sm:$0xff] %v8190
        %8245 = vst [vmem:[%s245 + $0xd8] sm:$0xff] %v8195
        %8246 = vst [vmem:[%s245 + $0xe0] sm:$0xff] %v8200
        %8247 = vst [vmem:[%s245 + $0xe8] sm:$0xff] %v8205
        %8248 = vst [vmem:[%s245 + $0xf0] sm:$0xff] %v8210
        %8249 = vst [vmem:[%s245 + $0xf8] sm:$0xff] %v8215
        %s8250 = sand.u32 %s159, 1
        %s8251 = scalar_lea.sflag [#allocation3], %s8250
        %s8252 = sand.u32 %s159, 1
        %s8253 = smul.addr %s8252, 256
        %s8254 = scalar_lea.vmem [#allocation2], %s8253
        // Predicated region
        $region45: #{tpu_custom_call.1} parent=43 // pred_check
          %p8255 = pneg %p169
        $region46: #{tpu_custom_call.1} parent=43 // pred_check_branch
          %8257 = sbr.rel (%p8255) target = $region48
        $region47: #{tpu_custom_call.1} parent=43 // pred_region
          %s8258 = smul.u32 32, %s20
          %s8260 = ssub.s32 4096, 4096
          %8261 = vsyncadd %s8251, %s8260
          %s8262 = smul.addr %s8258, 128
          %s8263 = scalar_lea.hbm %s6, %s8262
          %s8264 = sshll.u32 %s8254, 4
          %s8265 = int_to_ptr.vmem [resolvable:$true] %s8264
          %8270 = dma.vmem_to_hbm [thread:$0]  %s8265, 4096, %s8263, %s8251, 128, 128, 8
        $region48: #{tpu_custom_call.1} parent=43 // pred_fallthru
          _
      $region44: #{tpu_custom_call.1} parent=5 // pred_fallthru
        _
      %p8271 = scmp.le.s32.totalorder 2, %s15
      // Predicated region
      $region49: #{tpu_custom_call.1} parent=5 // pred_check
        %p8272 = pneg %p8271
      $region50: #{tpu_custom_call.1} parent=5 // pred_check_branch
        %8274 = sbr.rel (%p8272) target = $region52
      $region51: #{tpu_custom_call.1} parent=5 // pred_region
        %s8275 = ssub.s32 %s15, 2
        // Predicated region
        $region53: #{tpu_custom_call.1} parent=51 // pred_check
          %p8276 = pneg %p175
        $region54: #{tpu_custom_call.1} parent=51 // pred_check_branch
          %8278 = sbr.rel (%p8276) target = $region56
        $region55: #{tpu_custom_call.1} parent=51 // pred_region
          %s8279 = sand.u32 %s160, 1
          %s8280 = scalar_lea.sflag [#allocation3], %s8279
          %s8281 = sand.u32 %s160, 1
          %s8282 = smul.addr %s8281, 256
          %s8283 = scalar_lea.vmem [#allocation2], %s8282
          %8284 = dma.done %s8280, 4096
        $region56: #{tpu_custom_call.1} parent=51 // pred_fallthru
          _
      $region52: #{tpu_custom_call.1} parent=5 // pred_fallthru
        _
    $region6: #{tpu_custom_call.1} parent=1 // loop_footer
      %s19 = sadd.s32 1, %s15
    $region7: #{tpu_custom_call.1} parent=1 // loop_footer_branch
      %14 = sbr.rel target = $region3
    $region8: #{tpu_custom_call.1} parent=1 // loop_exit
      _
    %8285 = vsyncpa [#allocation3], 1
    %s8286 = scalar_lea.sflag [#allocation3], 1
    %8287 = vsyncpa %s8286, 1

</llo_original>
